<compile_context>
chip_gen: v7x
topology: tpu7x:2x2x1
jax: 0.10.0
libtpu: 0.0.40
codegen_flags: <defaults>
</compile_context>

<pallas_src>
import functools

import jax
import jax.numpy as jnp
from jax import lax
from jax.experimental import pallas as pl
from jax.experimental.pallas import tpu as pltpu

LN_EPS = 1e-5  # torch.nn.LayerNorm default

_ATTN_KEYS = ("g", "bln", "wq", "bq", "wk", "bk", "wvp", "bvp", "bp", "ls")
_MLP_KEYS = ("g", "bln", "w1", "b1", "w2", "b2", "ls")


# ----------------------------------------------------------------------------
# Shared math helpers (used both in-kernel and in the pure-JAX reference)
# ----------------------------------------------------------------------------
def _ln_math(x, gamma, beta):
    mu = jnp.mean(x, axis=-1, keepdims=True)
    xc = x - mu
    var = jnp.mean(xc * xc, axis=-1, keepdims=True)
    return xc * lax.rsqrt(var + LN_EPS) * gamma + beta


def _apply_act(x, activation):
    if activation == "gelu":
        return jax.nn.gelu(x, approximate=True)
    if activation == "relu":
        return jnp.maximum(x, 0.0)
    raise ValueError(f"unsupported activation: {activation}")


# ----------------------------------------------------------------------------
# The single fused kernel: full decoder forward for one batch element.
# ----------------------------------------------------------------------------
def _transformer_kernel(*refs, depth, num_heads, pre_norm, activation):
    state_ref, sq_ref, patches_ref, pos_ref = refs[:4]
    rest = refs[4:]
    na, nm = len(_ATTN_KEYS), len(_MLP_KEYS)
    cross_p = dict(zip(_ATTN_KEYS, rest[:na])); rest = rest[na:]
    self_p = dict(zip(_ATTN_KEYS, rest[:na])); rest = rest[na:]
    mlp_p = dict(zip(_MLP_KEYS, rest[:nm])); rest = rest[nm:]
    gf_ref, bf_ref, o_ref = rest

    state = state_ref[...].astype(jnp.float32)          # (N, D)
    sq = sq_ref[...].astype(jnp.float32)                # (N, D)
    patches = patches_ref[...].astype(jnp.float32)      # (M, D)  (attn value)
    kv_key = patches + pos_ref[...].astype(jnp.float32)  # (M, D)  (attn key)

    def mha(qn, k_in, v_in, p, l):
        """Multi-head attention with output projection folded per head."""
        acc = None
        for h in range(num_heads):
            # Per-head projections off pre-split / pre-multiplied weights.
            q = jnp.dot(qn, p["wq"][l, h],
                        preferred_element_type=jnp.float32) + p["bq"][l, h]
            k = jnp.dot(k_in, p["wk"][l, h],
                        preferred_element_type=jnp.float32) + p["bk"][l, h]
            # vp == (v_in @ Wv_h + bv_h) @ Wp_h  (lane-dense (M, D) slab)
            vp = jnp.dot(v_in, p["wvp"][l, h],
                         preferred_element_type=jnp.float32) + p["bvp"][l, h]
            # Scores: contract the head dim directly (no transpose).
            s = lax.dot_general(q, k, (((1,), (1,)), ((), ())),
                                preferred_element_type=jnp.float32)   # (N, M)
            s = s - jnp.max(s, axis=-1, keepdims=True)
            e = jnp.exp(s)
            prob = e / jnp.sum(e, axis=-1, keepdims=True)             # exact
            contrib = jnp.dot(prob, vp,
                              preferred_element_type=jnp.float32)     # (N, D)
            acc = contrib if acc is None else acc + contrib
        return acc + p["bp"][l]

    def attn_block(x, p, l, k_raw=None, v_raw=None):
        qn = _ln_math(x, p["g"][l], p["bln"][l]) if pre_norm else x
        k_in = qn if k_raw is None else k_raw
        v_in = qn if v_raw is None else v_raw
        out = mha(qn, k_in, v_in, p, l)
        if pre_norm:
            return x + p["ls"][l] * out
        return x + _ln_math(out, p["g"][l], p["bln"][l])

    def mlp_block(x, p, l):
        h_in = _ln_math(x, p["g"][l], p["bln"][l]) if pre_norm else x
        h = jnp.dot(h_in, p["w1"][l],
                    preferred_element_type=jnp.float32) + p["b1"][l]
        h = _apply_act(h, activation)
        y = jnp.dot(h, p["w2"][l],
                    preferred_element_type=jnp.float32) + p["b2"][l]
        if pre_norm:
            return x + p["ls"][l] * y
        return x + _ln_math(y, p["g"][l], p["bln"][l])

    for l in range(depth):                  # unrolled at trace time
        state = state + sq                  # fused `state = state + state_query`
        state = attn_block(state, cross_p, l, k_raw=kv_key, v_raw=patches)
        state = attn_block(state, self_p, l)
        state = mlp_block(state, mlp_p, l)

    o_ref[...] = _ln_math(state, gf_ref[...], bf_ref[...]).astype(o_ref.dtype)


# ----------------------------------------------------------------------------
# Full Transformer forward (one pallas_call)
# ----------------------------------------------------------------------------
def transformer_forward(kparams, state, patches, patches_pos_embed, state_query,
                        *, num_heads, pre_norm, activation):
    B, N, D = state.shape
    M = patches.shape[1]
    depth = kparams["cross"]["g"].shape[0]

    weights = ([kparams["cross"][k] for k in _ATTN_KEYS]
               + [kparams["self_attn"][k] for k in _ATTN_KEYS]
               + [kparams["mlp"][k] for k in _MLP_KEYS]
               + [kparams["gf"], kparams["bf"]])

    def seq_spec(S):
        return pl.BlockSpec((None, S, D), lambda b: (b, 0, 0))

    def const_spec(a):
        zeros = (0,) * a.ndim
        return pl.BlockSpec(a.shape, lambda b: zeros)

    kernel = functools.partial(_transformer_kernel, depth=depth,
                               num_heads=num_heads, pre_norm=pre_norm,
                               activation=activation)
    return pl.pallas_call(
        kernel,
        out_shape=jax.ShapeDtypeStruct((B, N, D), state.dtype),
        grid=(B,),
        in_specs=[seq_spec(N), seq_spec(N), seq_spec(M), seq_spec(M)]
                 + [const_spec(a) for a in weights],
        out_specs=seq_spec(N),
        compiler_params=pltpu.CompilerParams(
            dimension_semantics=("parallel",)),
    )(state, state_query, patches, patches_pos_embed, *weights)


# ----------------------------------------------------------------------------
# Parameter init (torch Linear layout) + kernel-ready preparation
# ----------------------------------------------------------------------------
def init_raw_params(key, D, F, depth, pre_norm, dtype):
    keys = iter(jax.random.split(key, 1024))

    def linear(in_dim, out_dim):
        bound = 1.0 / (in_dim ** 0.5)
        w = jax.random.uniform(next(keys), (out_dim, in_dim), dtype, -bound, bound)
        b = jax.random.uniform(next(keys), (out_dim,), dtype, -bound, bound)
        return w, b

    def layernorm_p():
        g = jax.random.uniform(next(keys), (D,), dtype, 0.5, 1.5)
        b = jax.random.uniform(next(keys), (D,), dtype, -0.5, 0.5)
        return g, b

    def attn_p():
        wq, bq = linear(D, D)
        wk, bk = linear(D, D)
        wv, bv = linear(D, D)
        wp, bp = linear(D, D)
        return dict(wq=wq, bq=bq, wk=wk, bk=bk, wv=wv, bv=bv, wp=wp, bp=bp)

    layers = []
    for _ in range(depth):
        g1, b1 = layernorm_p()
        g2, b2 = layernorm_p()
        g3, b3 = layernorm_p()
        w1, bb1 = linear(D, F)
        w2, bb2 = linear(F, D)
        lp = dict(cross=attn_p(), self_attn=attn_p(),
                  g1=g1, b1=b1, g2=g2, b2=b2, g3=g3, b3=b3,
                  w1=w1, bb1=bb1, w2=w2, bb2=bb2)
        if pre_norm:
            # torch init is 1e-5; random values here to exercise the math path.
            lp["ls1"] = jax.random.uniform(next(keys), (D,), dtype, 0.5, 1.5)
            lp["ls2"] = jax.random.uniform(next(keys), (D,), dtype, 0.5, 1.5)
            lp["ls3"] = jax.random.uniform(next(keys), (D,), dtype, 0.5, 1.5)
        layers.append(lp)
    gf, bf = layernorm_p()
    return dict(layers=layers, gf=gf, bf=bf)


def prepare_params(raw, num_heads, D):
    """Build layer-stacked, per-head-split kernel weights.

    * weights transposed to (in, out)
    * 1/sqrt(head_dim) folded into Wq / bq
    * Wq/Wk split per head into (H, D, hd)
    * Wv_h @ Wp_h pre-multiplied into (H, D, D) (bias folded -> (H, 1, D))
    """
    hd = D // num_heads
    scale = hd ** (-0.5)
    L = len(raw["layers"])
    row = lambda v: v.reshape(1, -1)

    def per_head_qk(w, b, s=1.0):
        wt = jnp.transpose(w) * s                                   # (D, D) in,out
        wh = wt.reshape(D, num_heads, hd).transpose(1, 0, 2)        # (H, D, hd)
        bh = (b * s).reshape(num_heads, 1, hd)                      # (H, 1, hd)
        return wh, bh

    def per_head_vp(wv, bv, wp):
        wvt = jnp.transpose(wv)                                     # (D, D) in,out
        wpt = jnp.transpose(wp)                                     # (D, D) in,out
        wv_h = wvt.reshape(D, num_heads, hd).transpose(1, 0, 2)     # (H, D, hd)
        wp_h = wpt.reshape(num_heads, hd, D)                        # (H, hd, D)
        wvp = jnp.einsum("hdk,hke->hde", wv_h, wp_h)                # (H, D, D)
        bvp = jnp.einsum("hk,hke->he", bv.reshape(num_heads, hd),
                         wp_h).reshape(num_heads, 1, D)             # (H, 1, D)
        return wvp, bvp

    def attn_stack(which, g_key, b_key, ls_key):
        acc = {k: [] for k in _ATTN_KEYS}
        for lp in raw["layers"]:
            a = lp[which]
            wq, bq = per_head_qk(a["wq"], a["bq"], scale)
            wk, bk = per_head_qk(a["wk"], a["bk"])
            wvp, bvp = per_head_vp(a["wv"], a["bv"], a["wp"])
            ls = lp.get(ls_key, jnp.ones_like(lp[g_key]))
            acc["g"].append(row(lp[g_key]))
            acc["bln"].append(row(lp[b_key]))
            acc["wq"].append(wq); acc["bq"].append(bq)
            acc["wk"].append(wk); acc["bk"].append(bk)
            acc["wvp"].append(wvp); acc["bvp"].append(bvp)
            acc["bp"].append(row(a["bp"]))
            acc["ls"].append(row(ls))
        return {k: jnp.stack(v) for k, v in acc.items()}

    mlp = {k: [] for k in _MLP_KEYS}
    for lp in raw["layers"]:
        ls3 = lp.get("ls3", jnp.ones_like(lp["g3"]))
        mlp["g"].append(row(lp["g3"]))
        mlp["bln"].append(row(lp["b3"]))
        mlp["w1"].append(jnp.transpose(lp["w1"]))
        mlp["b1"].append(row(lp["bb1"]))
        mlp["w2"].append(jnp.transpose(lp["w2"]))
        mlp["b2"].append(row(lp["bb2"]))
        mlp["ls"].append(row(ls3))
    mlp = {k: jnp.stack(v) for k, v in mlp.items()}

    return dict(
        cross=attn_stack("cross", "g1", "b1", "ls1"),
        self_attn=attn_stack("self_attn", "g2", "b2", "ls2"),
        mlp=mlp,
        gf=row(raw["gf"]), bf=row(raw["bf"]),
    )


# ----------------------------------------------------------------------------
# Pure-JAX reference (mirrors the PyTorch module exactly)
# ----------------------------------------------------------------------------
def _attention_ref(p, query, key, value, num_heads):
    B, N, D = query.shape
    M = key.shape[1]
    hd = D // num_heads
    scale = hd ** (-0.5)
    lin = lambda x, w, b: x @ w.T + b
    q = (lin(query, p["wq"], p["bq"])
         .reshape(B, N, num_heads, hd).transpose(0, 2, 1, 3)) * scale
    k = lin(key, p["wk"], p["bk"]).reshape(B, M, num_heads, hd).transpose(0, 2, 1, 3)
    v = lin(value, p["wv"], p["bv"]).reshape(B, M, num_heads, hd).transpose(0, 2, 1, 3)
    attn = jnp.einsum("bhnd,bhmd->bhnm", q, k)
    attn = jax.nn.softmax(attn, axis=-1)
    out = jnp.einsum("bhnm,bhmd->bnhd", attn, v).reshape(B, N, D)
    return lin(out, p["wp"], p["bp"])


def _mlp_ref(x, w1, b1, w2, b2, activation):
    h = _apply_act(x @ w1.T + b1, activation)
    return h @ w2.T + b2


def transformer_reference(raw, state, patches, pos, state_query,
                          num_heads, pre_norm, activation):
    out = state
    kv_key = patches + pos
    for lp in raw["layers"]:
        out = out + state_query
        if pre_norm:
            ca = _attention_ref(lp["cross"], _ln_math(out, lp["g1"], lp["b1"]),
                                kv_key, patches, num_heads) * lp["ls1"]
            out = out + ca
            ns = _ln_math(out, lp["g2"], lp["b2"])
            sa = _attention_ref(lp["self_attn"], ns, ns, ns, num_heads) * lp["ls2"]
            out = out + sa
            ff = _mlp_ref(_ln_math(out, lp["g3"], lp["b3"]),
                          lp["w1"], lp["bb1"], lp["w2"], lp["bb2"],
                          activation) * lp["ls3"]
            out = out + ff
        else:
            ca = _attention_ref(lp["cross"], out, kv_key, patches, num_heads)
            out = out + _ln_math(ca, lp["g1"], lp["b1"])
            sa = _attention_ref(lp["self_attn"], out, out, out, num_heads)
            out = out + _ln_math(sa, lp["g2"], lp["b2"])
            ff = _mlp_ref(out, lp["w1"], lp["bb1"], lp["w2"], lp["bb2"], activation)
            out = out + _ln_math(ff, lp["g3"], lp["b3"])
    return _ln_math(out, raw["gf"], raw["bf"])


# ----------------------------------------------------------------------------
# Demo / self-check
# ----------------------------------------------------------------------------
if __name__ == "__main__":
    # Small config consistent with the module: embed_dim=32, num_heads=4,
    # depth=2, mlp_ratio=4.0, pre_norm=True.
    B, N, M, D, H = 2, 8, 16, 32, 4
    DEPTH = 2
    MLP_RATIO = 4.0
    F = int(D * MLP_RATIO)
    PRE_NORM = True
    ACTIVATION = "gelu"
    dtype = jnp.float32

    root = jax.random.PRNGKey(0)
    k_param, k_state, k_patch, k_pos, k_sq = jax.random.split(root, 5)

    raw = init_raw_params(k_param, D, F, DEPTH, PRE_NORM, dtype)
    kparams = prepare_params(raw, H, D)

    state = jax.random.normal(k_state, (B, N, D), dtype)
    patches = jax.random.normal(k_patch, (B, M, D), dtype)
    patches_pos_embed = jax.random.normal(k_pos, (B, M, D), dtype)
    state_query = jax.random.normal(k_sq, (B, N, D), dtype)

    fwd = jax.jit(functools.partial(transformer_forward, num_heads=H,
                                    pre_norm=PRE_NORM, activation=ACTIVATION))
    out = jax.block_until_ready(fwd(kparams, state, patches,
                                    patches_pos_embed, state_query))

    ref = transformer_reference(raw, state, patches, patches_pos_embed,
                                state_query, H, PRE_NORM, ACTIVATION)
    ref = jax.block_until_ready(ref)

    assert out.shape == (B, N, D)
    # Exact softmax divide now -> tolerance only absorbs f32 re-association
    # from the folded scale / pre-multiplied Wv@Wp / per-head accumulation.
    assert jnp.allclose(out, ref, atol=1e-3, rtol=1e-3), (
        f"mismatch vs reference: max abs diff = {jnp.max(jnp.abs(out - ref))}")
    print("KERNEL_OK")
</pallas_src>

<mosaic_0001>
module attributes {stable_mosaic.version = 11 : i64} {
  func.func @_transformer_kernel(%arg0: i32, %arg1: memref<1x8x32xf32, #tpu.memory_space<vmem>>, %arg2: memref<1x8x32xf32, #tpu.memory_space<vmem>>, %arg3: memref<1x16x32xf32, #tpu.memory_space<vmem>>, %arg4: memref<1x16x32xf32, #tpu.memory_space<vmem>>, %arg5: memref<2x1x32xf32, #tpu.memory_space<vmem>>, %arg6: memref<2x1x32xf32, #tpu.memory_space<vmem>>, %arg7: memref<2x4x32x8xf32, #tpu.memory_space<vmem>>, %arg8: memref<2x4x1x8xf32, #tpu.memory_space<vmem>>, %arg9: memref<2x4x32x8xf32, #tpu.memory_space<vmem>>, %arg10: memref<2x4x1x8xf32, #tpu.memory_space<vmem>>, %arg11: memref<2x4x32x32xf32, #tpu.memory_space<vmem>>, %arg12: memref<2x4x1x32xf32, #tpu.memory_space<vmem>>, %arg13: memref<2x1x32xf32, #tpu.memory_space<vmem>>, %arg14: memref<2x1x32xf32, #tpu.memory_space<vmem>>, %arg15: memref<2x1x32xf32, #tpu.memory_space<vmem>>, %arg16: memref<2x1x32xf32, #tpu.memory_space<vmem>>, %arg17: memref<2x4x32x8xf32, #tpu.memory_space<vmem>>, %arg18: memref<2x4x1x8xf32, #tpu.memory_space<vmem>>, %arg19: memref<2x4x32x8xf32, #tpu.memory_space<vmem>>, %arg20: memref<2x4x1x8xf32, #tpu.memory_space<vmem>>, %arg21: memref<2x4x32x32xf32, #tpu.memory_space<vmem>>, %arg22: memref<2x4x1x32xf32, #tpu.memory_space<vmem>>, %arg23: memref<2x1x32xf32, #tpu.memory_space<vmem>>, %arg24: memref<2x1x32xf32, #tpu.memory_space<vmem>>, %arg25: memref<2x1x32xf32, #tpu.memory_space<vmem>>, %arg26: memref<2x1x32xf32, #tpu.memory_space<vmem>>, %arg27: memref<2x32x128xf32, #tpu.memory_space<vmem>>, %arg28: memref<2x1x128xf32, #tpu.memory_space<vmem>>, %arg29: memref<2x128x32xf32, #tpu.memory_space<vmem>>, %arg30: memref<2x1x32xf32, #tpu.memory_space<vmem>>, %arg31: memref<2x1x32xf32, #tpu.memory_space<vmem>>, %arg32: memref<1x32xf32, #tpu.memory_space<vmem>>, %arg33: memref<1x32xf32, #tpu.memory_space<vmem>>, %arg34: memref<1x8x32xf32, #tpu.memory_space<vmem>>) attributes {dimension_semantics = [#tpu.dimension_semantics<parallel>], iteration_bounds = array<i64: 2>, scalar_prefetch = 0 : i64, scratch_operands = 0 : i64, tpu.core_type = #tpu.core_type<tc>, window_params = [{transform_indices = @transform_0, window_bounds = array<i64: 1, 8, 32>}, {transform_indices = @transform_1, window_bounds = array<i64: 1, 8, 32>}, {transform_indices = @transform_2, window_bounds = array<i64: 1, 16, 32>}, {transform_indices = @transform_3, window_bounds = array<i64: 1, 16, 32>}, {pipeline_mode = #tpu.pipeline_mode<synchronous>, transform_indices = @transform_4, window_bounds = array<i64: 2, 1, 32>}, {pipeline_mode = #tpu.pipeline_mode<synchronous>, transform_indices = @transform_5, window_bounds = array<i64: 2, 1, 32>}, {pipeline_mode = #tpu.pipeline_mode<synchronous>, transform_indices = @transform_6, window_bounds = array<i64: 2, 4, 32, 8>}, {pipeline_mode = #tpu.pipeline_mode<synchronous>, transform_indices = @transform_7, window_bounds = array<i64: 2, 4, 1, 8>}, {pipeline_mode = #tpu.pipeline_mode<synchronous>, transform_indices = @transform_8, window_bounds = array<i64: 2, 4, 32, 8>}, {pipeline_mode = #tpu.pipeline_mode<synchronous>, transform_indices = @transform_9, window_bounds = array<i64: 2, 4, 1, 8>}, {pipeline_mode = #tpu.pipeline_mode<synchronous>, transform_indices = @transform_10, window_bounds = array<i64: 2, 4, 32, 32>}, {pipeline_mode = #tpu.pipeline_mode<synchronous>, transform_indices = @transform_11, window_bounds = array<i64: 2, 4, 1, 32>}, {pipeline_mode = #tpu.pipeline_mode<synchronous>, transform_indices = @transform_12, window_bounds = array<i64: 2, 1, 32>}, {pipeline_mode = #tpu.pipeline_mode<synchronous>, transform_indices = @transform_13, window_bounds = array<i64: 2, 1, 32>}, {pipeline_mode = #tpu.pipeline_mode<synchronous>, transform_indices = @transform_14, window_bounds = array<i64: 2, 1, 32>}, {pipeline_mode = #tpu.pipeline_mode<synchronous>, transform_indices = @transform_15, window_bounds = array<i64: 2, 1, 32>}, {pipeline_mode = #tpu.pipeline_mode<synchronous>, transform_indices = @transform_16, window_bounds = array<i64: 2, 4, 32, 8>}, {pipeline_mode = #tpu.pipeline_mode<synchronous>, transform_indices = @transform_17, window_bounds = array<i64: 2, 4, 1, 8>}, {pipeline_mode = #tpu.pipeline_mode<synchronous>, transform_indices = @transform_18, window_bounds = array<i64: 2, 4, 32, 8>}, {pipeline_mode = #tpu.pipeline_mode<synchronous>, transform_indices = @transform_19, window_bounds = array<i64: 2, 4, 1, 8>}, {pipeline_mode = #tpu.pipeline_mode<synchronous>, transform_indices = @transform_20, window_bounds = array<i64: 2, 4, 32, 32>}, {pipeline_mode = #tpu.pipeline_mode<synchronous>, transform_indices = @transform_21, window_bounds = array<i64: 2, 4, 1, 32>}, {pipeline_mode = #tpu.pipeline_mode<synchronous>, transform_indices = @transform_22, window_bounds = array<i64: 2, 1, 32>}, {pipeline_mode = #tpu.pipeline_mode<synchronous>, transform_indices = @transform_23, window_bounds = array<i64: 2, 1, 32>}, {pipeline_mode = #tpu.pipeline_mode<synchronous>, transform_indices = @transform_24, window_bounds = array<i64: 2, 1, 32>}, {pipeline_mode = #tpu.pipeline_mode<synchronous>, transform_indices = @transform_25, window_bounds = array<i64: 2, 1, 32>}, {pipeline_mode = #tpu.pipeline_mode<synchronous>, transform_indices = @transform_26, window_bounds = array<i64: 2, 32, 128>}, {pipeline_mode = #tpu.pipeline_mode<synchronous>, transform_indices = @transform_27, window_bounds = array<i64: 2, 1, 128>}, {pipeline_mode = #tpu.pipeline_mode<synchronous>, transform_indices = @transform_28, window_bounds = array<i64: 2, 128, 32>}, {pipeline_mode = #tpu.pipeline_mode<synchronous>, transform_indices = @transform_29, window_bounds = array<i64: 2, 1, 32>}, {pipeline_mode = #tpu.pipeline_mode<synchronous>, transform_indices = @transform_30, window_bounds = array<i64: 2, 1, 32>}, {pipeline_mode = #tpu.pipeline_mode<synchronous>, transform_indices = @transform_31, window_bounds = array<i64: 1, 32>}, {pipeline_mode = #tpu.pipeline_mode<synchronous>, transform_indices = @transform_32, window_bounds = array<i64: 1, 32>}, {transform_indices = @transform_33, window_bounds = array<i64: 1, 8, 32>}]} {
    %c0 = arith.constant 0 : index
    %c0_0 = arith.constant 0 : index
    %c0_1 = arith.constant 0 : index
    %0 = vector.load %arg1[%c0, %c0_0, %c0_1] : memref<1x8x32xf32, #tpu.memory_space<vmem>>, vector<1x8x32xf32>
    %1 = vector.shape_cast %0 : vector<1x8x32xf32> to vector<8x32xf32>
    %c0_2 = arith.constant 0 : index
    %c0_3 = arith.constant 0 : index
    %c0_4 = arith.constant 0 : index
    %2 = vector.load %arg2[%c0_2, %c0_3, %c0_4] : memref<1x8x32xf32, #tpu.memory_space<vmem>>, vector<1x8x32xf32>
    %3 = vector.shape_cast %2 : vector<1x8x32xf32> to vector<8x32xf32>
    %c0_5 = arith.constant 0 : index
    %c0_6 = arith.constant 0 : index
    %c0_7 = arith.constant 0 : index
    %4 = vector.load %arg3[%c0_5, %c0_6, %c0_7] : memref<1x16x32xf32, #tpu.memory_space<vmem>>, vector<1x16x32xf32>
    %5 = vector.shape_cast %4 : vector<1x16x32xf32> to vector<16x32xf32>
    %c0_8 = arith.constant 0 : index
    %c0_9 = arith.constant 0 : index
    %c0_10 = arith.constant 0 : index
    %6 = vector.load %arg4[%c0_8, %c0_9, %c0_10] : memref<1x16x32xf32, #tpu.memory_space<vmem>>, vector<1x16x32xf32>
    %7 = vector.shape_cast %6 : vector<1x16x32xf32> to vector<16x32xf32>
    %8 = arith.addf %5, %7 : vector<16x32xf32>
    %9 = arith.addf %1, %3 : vector<8x32xf32>
    %c0_11 = arith.constant 0 : index
    %c0_12 = arith.constant 0 : index
    %c0_13 = arith.constant 0 : index
    %10 = vector.load %arg5[%c0_11, %c0_12, %c0_13] : memref<2x1x32xf32, #tpu.memory_space<vmem>>, vector<1x1x32xf32>
    %11 = vector.shape_cast %10 : vector<1x1x32xf32> to vector<1x32xf32>
    %c0_14 = arith.constant 0 : index
    %c0_15 = arith.constant 0 : index
    %c0_16 = arith.constant 0 : index
    %12 = vector.load %arg6[%c0_14, %c0_15, %c0_16] : memref<2x1x32xf32, #tpu.memory_space<vmem>>, vector<1x1x32xf32>
    %13 = vector.shape_cast %12 : vector<1x1x32xf32> to vector<1x32xf32>
    %cst = arith.constant dense<0.000000e+00> : vector<8xf32>
    %14 = vector.multi_reduction <add>, %9, %cst [1] : vector<8x32xf32> to vector<8xf32>
    %15 = vector.shape_cast %14 : vector<8xf32> to vector<8x1xf32>
    %cst_17 = arith.constant 3.200000e+01 : f32
    %16 = vector.broadcast %cst_17 : f32 to vector<8x1xf32>
    %17 = arith.divf %15, %16 : vector<8x1xf32>
    %18 = vector.broadcast %17 : vector<8x1xf32> to vector<8x32xf32>
    %19 = arith.subf %9, %18 : vector<8x32xf32>
    %20 = arith.mulf %19, %19 : vector<8x32xf32>
    %cst_18 = arith.constant dense<0.000000e+00> : vector<8xf32>
    %21 = vector.multi_reduction <add>, %20, %cst_18 [1] : vector<8x32xf32> to vector<8xf32>
    %22 = vector.shape_cast %21 : vector<8xf32> to vector<8x1xf32>
    %cst_19 = arith.constant 3.200000e+01 : f32
    %23 = vector.broadcast %cst_19 : f32 to vector<8x1xf32>
    %24 = arith.divf %22, %23 : vector<8x1xf32>
    %cst_20 = arith.constant 9.99999974E-6 : f32
    %25 = vector.broadcast %cst_20 : f32 to vector<8x1xf32>
    %26 = arith.addf %24, %25 : vector<8x1xf32>
    %27 = math.rsqrt %26 : vector<8x1xf32>
    %28 = vector.broadcast %27 : vector<8x1xf32> to vector<8x32xf32>
    %29 = arith.mulf %19, %28 : vector<8x32xf32>
    %30 = vector.broadcast %11 : vector<1x32xf32> to vector<8x32xf32>
    %31 = arith.mulf %29, %30 : vector<8x32xf32>
    %32 = vector.broadcast %13 : vector<1x32xf32> to vector<8x32xf32>
    %33 = arith.addf %31, %32 : vector<8x32xf32>
    %c0_21 = arith.constant 0 : index
    %c0_22 = arith.constant 0 : index
    %c0_23 = arith.constant 0 : index
    %c0_24 = arith.constant 0 : index
    %34 = vector.load %arg7[%c0_21, %c0_22, %c0_23, %c0_24] : memref<2x4x32x8xf32, #tpu.memory_space<vmem>>, vector<1x1x32x8xf32>
    %35 = vector.shape_cast %34 : vector<1x1x32x8xf32> to vector<32x8xf32>
    %cst_25 = arith.constant dense<0.000000e+00> : vector<8x8xf32>
    %36 = tpu.matmul %33, %35, %cst_25 {dimension_numbers = #tpu.dot_dimension_numbers<[1], [0], [0], [1], [0, 0, 1, 1], [], []>} : vector<8x32xf32>, vector<32x8xf32>, vector<8x8xf32> -> vector<8x8xf32>
    %c0_26 = arith.constant 0 : index
    %c0_27 = arith.constant 0 : index
    %c0_28 = arith.constant 0 : index
    %c0_29 = arith.constant 0 : index
    %37 = vector.load %arg8[%c0_26, %c0_27, %c0_28, %c0_29] : memref<2x4x1x8xf32, #tpu.memory_space<vmem>>, vector<1x1x1x8xf32>
    %38 = vector.shape_cast %37 : vector<1x1x1x8xf32> to vector<1x8xf32>
    %39 = vector.broadcast %38 : vector<1x8xf32> to vector<8x8xf32>
    %40 = arith.addf %36, %39 : vector<8x8xf32>
    %c0_30 = arith.constant 0 : index
    %c0_31 = arith.constant 0 : index
    %c0_32 = arith.constant 0 : index
    %c0_33 = arith.constant 0 : index
    %41 = vector.load %arg9[%c0_30, %c0_31, %c0_32, %c0_33] : memref<2x4x32x8xf32, #tpu.memory_space<vmem>>, vector<1x1x32x8xf32>
    %42 = vector.shape_cast %41 : vector<1x1x32x8xf32> to vector<32x8xf32>
    %cst_34 = arith.constant dense<0.000000e+00> : vector<16x8xf32>
    %43 = tpu.matmul %8, %42, %cst_34 {dimension_numbers = #tpu.dot_dimension_numbers<[1], [0], [0], [1], [0, 0, 1, 1], [], []>} : vector<16x32xf32>, vector<32x8xf32>, vector<16x8xf32> -> vector<16x8xf32>
    %c0_35 = arith.constant 0 : index
    %c0_36 = arith.constant 0 : index
    %c0_37 = arith.constant 0 : index
    %c0_38 = arith.constant 0 : index
    %44 = vector.load %arg10[%c0_35, %c0_36, %c0_37, %c0_38] : memref<2x4x1x8xf32, #tpu.memory_space<vmem>>, vector<1x1x1x8xf32>
    %45 = vector.shape_cast %44 : vector<1x1x1x8xf32> to vector<1x8xf32>
    %46 = vector.broadcast %45 : vector<1x8xf32> to vector<16x8xf32>
    %47 = arith.addf %43, %46 : vector<16x8xf32>
    %c0_39 = arith.constant 0 : index
    %c0_40 = arith.constant 0 : index
    %c0_41 = arith.constant 0 : index
    %c0_42 = arith.constant 0 : index
    %48 = vector.load %arg11[%c0_39, %c0_40, %c0_41, %c0_42] : memref<2x4x32x32xf32, #tpu.memory_space<vmem>>, vector<1x1x32x32xf32>
    %49 = vector.shape_cast %48 : vector<1x1x32x32xf32> to vector<32x32xf32>
    %cst_43 = arith.constant dense<0.000000e+00> : vector<16x32xf32>
    %50 = tpu.matmul %5, %49, %cst_43 {dimension_numbers = #tpu.dot_dimension_numbers<[1], [0], [0], [1], [0, 0, 1, 1], [], []>} : vector<16x32xf32>, vector<32x32xf32>, vector<16x32xf32> -> vector<16x32xf32>
    %c0_44 = arith.constant 0 : index
    %c0_45 = arith.constant 0 : index
    %c0_46 = arith.constant 0 : index
    %c0_47 = arith.constant 0 : index
    %51 = vector.load %arg12[%c0_44, %c0_45, %c0_46, %c0_47] : memref<2x4x1x32xf32, #tpu.memory_space<vmem>>, vector<1x1x1x32xf32>
    %52 = vector.shape_cast %51 : vector<1x1x1x32xf32> to vector<1x32xf32>
    %53 = vector.broadcast %52 : vector<1x32xf32> to vector<16x32xf32>
    %54 = arith.addf %50, %53 : vector<16x32xf32>
    %cst_48 = arith.constant dense<0.000000e+00> : vector<8x16xf32>
    %55 = tpu.matmul %40, %47, %cst_48 {dimension_numbers = #tpu.dot_dimension_numbers<[1], [1], [0], [0], [0, 0, 1, 0], [], []>} : vector<8x8xf32>, vector<16x8xf32>, vector<8x16xf32> -> vector<8x16xf32>
    %cst_49 = arith.constant dense<0xFF800000> : vector<8xf32>
    %56 = vector.multi_reduction <maximumf>, %55, %cst_49 [1] : vector<8x16xf32> to vector<8xf32>
    %57 = vector.shape_cast %56 : vector<8xf32> to vector<8x1xf32>
    %58 = vector.broadcast %57 : vector<8x1xf32> to vector<8x16xf32>
    %59 = arith.subf %55, %58 : vector<8x16xf32>
    %60 = math.exp %59 : vector<8x16xf32>
    %cst_50 = arith.constant dense<0.000000e+00> : vector<8xf32>
    %61 = vector.multi_reduction <add>, %60, %cst_50 [1] : vector<8x16xf32> to vector<8xf32>
    %62 = vector.shape_cast %61 : vector<8xf32> to vector<8x1xf32>
    %63 = vector.broadcast %62 : vector<8x1xf32> to vector<8x16xf32>
    %64 = arith.divf %60, %63 : vector<8x16xf32>
    %cst_51 = arith.constant dense<0.000000e+00> : vector<8x32xf32>
    %65 = tpu.matmul %64, %54, %cst_51 {dimension_numbers = #tpu.dot_dimension_numbers<[1], [0], [0], [1], [0, 0, 1, 1], [], []>} : vector<8x16xf32>, vector<16x32xf32>, vector<8x32xf32> -> vector<8x32xf32>
    %c0_52 = arith.constant 0 : index
    %c1 = arith.constant 1 : index
    %c0_53 = arith.constant 0 : index
    %c0_54 = arith.constant 0 : index
    %66 = vector.load %arg7[%c0_52, %c1, %c0_53, %c0_54] : memref<2x4x32x8xf32, #tpu.memory_space<vmem>>, vector<1x1x32x8xf32>
    %67 = vector.shape_cast %66 : vector<1x1x32x8xf32> to vector<32x8xf32>
    %cst_55 = arith.constant dense<0.000000e+00> : vector<8x8xf32>
    %68 = tpu.matmul %33, %67, %cst_55 {dimension_numbers = #tpu.dot_dimension_numbers<[1], [0], [0], [1], [0, 0, 1, 1], [], []>} : vector<8x32xf32>, vector<32x8xf32>, vector<8x8xf32> -> vector<8x8xf32>
    %c0_56 = arith.constant 0 : index
    %c1_57 = arith.constant 1 : index
    %c0_58 = arith.constant 0 : index
    %c0_59 = arith.constant 0 : index
    %69 = vector.load %arg8[%c0_56, %c1_57, %c0_58, %c0_59] : memref<2x4x1x8xf32, #tpu.memory_space<vmem>>, vector<1x1x1x8xf32>
    %70 = vector.shape_cast %69 : vector<1x1x1x8xf32> to vector<1x8xf32>
    %71 = vector.broadcast %70 : vector<1x8xf32> to vector<8x8xf32>
    %72 = arith.addf %68, %71 : vector<8x8xf32>
    %c0_60 = arith.constant 0 : index
    %c1_61 = arith.constant 1 : index
    %c0_62 = arith.constant 0 : index
    %c0_63 = arith.constant 0 : index
    %73 = vector.load %arg9[%c0_60, %c1_61, %c0_62, %c0_63] : memref<2x4x32x8xf32, #tpu.memory_space<vmem>>, vector<1x1x32x8xf32>
    %74 = vector.shape_cast %73 : vector<1x1x32x8xf32> to vector<32x8xf32>
    %cst_64 = arith.constant dense<0.000000e+00> : vector<16x8xf32>
    %75 = tpu.matmul %8, %74, %cst_64 {dimension_numbers = #tpu.dot_dimension_numbers<[1], [0], [0], [1], [0, 0, 1, 1], [], []>} : vector<16x32xf32>, vector<32x8xf32>, vector<16x8xf32> -> vector<16x8xf32>
    %c0_65 = arith.constant 0 : index
    %c1_66 = arith.constant 1 : index
    %c0_67 = arith.constant 0 : index
    %c0_68 = arith.constant 0 : index
    %76 = vector.load %arg10[%c0_65, %c1_66, %c0_67, %c0_68] : memref<2x4x1x8xf32, #tpu.memory_space<vmem>>, vector<1x1x1x8xf32>
    %77 = vector.shape_cast %76 : vector<1x1x1x8xf32> to vector<1x8xf32>
    %78 = vector.broadcast %77 : vector<1x8xf32> to vector<16x8xf32>
    %79 = arith.addf %75, %78 : vector<16x8xf32>
    %c0_69 = arith.constant 0 : index
    %c1_70 = arith.constant 1 : index
    %c0_71 = arith.constant 0 : index
    %c0_72 = arith.constant 0 : index
    %80 = vector.load %arg11[%c0_69, %c1_70, %c0_71, %c0_72] : memref<2x4x32x32xf32, #tpu.memory_space<vmem>>, vector<1x1x32x32xf32>
    %81 = vector.shape_cast %80 : vector<1x1x32x32xf32> to vector<32x32xf32>
    %cst_73 = arith.constant dense<0.000000e+00> : vector<16x32xf32>
    %82 = tpu.matmul %5, %81, %cst_73 {dimension_numbers = #tpu.dot_dimension_numbers<[1], [0], [0], [1], [0, 0, 1, 1], [], []>} : vector<16x32xf32>, vector<32x32xf32>, vector<16x32xf32> -> vector<16x32xf32>
    %c0_74 = arith.constant 0 : index
    %c1_75 = arith.constant 1 : index
    %c0_76 = arith.constant 0 : index
    %c0_77 = arith.constant 0 : index
    %83 = vector.load %arg12[%c0_74, %c1_75, %c0_76, %c0_77] : memref<2x4x1x32xf32, #tpu.memory_space<vmem>>, vector<1x1x1x32xf32>
    %84 = vector.shape_cast %83 : vector<1x1x1x32xf32> to vector<1x32xf32>
    %85 = vector.broadcast %84 : vector<1x32xf32> to vector<16x32xf32>
    %86 = arith.addf %82, %85 : vector<16x32xf32>
    %cst_78 = arith.constant dense<0.000000e+00> : vector<8x16xf32>
    %87 = tpu.matmul %72, %79, %cst_78 {dimension_numbers = #tpu.dot_dimension_numbers<[1], [1], [0], [0], [0, 0, 1, 0], [], []>} : vector<8x8xf32>, vector<16x8xf32>, vector<8x16xf32> -> vector<8x16xf32>
    %cst_79 = arith.constant dense<0xFF800000> : vector<8xf32>
    %88 = vector.multi_reduction <maximumf>, %87, %cst_79 [1] : vector<8x16xf32> to vector<8xf32>
    %89 = vector.shape_cast %88 : vector<8xf32> to vector<8x1xf32>
    %90 = vector.broadcast %89 : vector<8x1xf32> to vector<8x16xf32>
    %91 = arith.subf %87, %90 : vector<8x16xf32>
    %92 = math.exp %91 : vector<8x16xf32>
    %cst_80 = arith.constant dense<0.000000e+00> : vector<8xf32>
    %93 = vector.multi_reduction <add>, %92, %cst_80 [1] : vector<8x16xf32> to vector<8xf32>
    %94 = vector.shape_cast %93 : vector<8xf32> to vector<8x1xf32>
    %95 = vector.broadcast %94 : vector<8x1xf32> to vector<8x16xf32>
    %96 = arith.divf %92, %95 : vector<8x16xf32>
    %cst_81 = arith.constant dense<0.000000e+00> : vector<8x32xf32>
    %97 = tpu.matmul %96, %86, %cst_81 {dimension_numbers = #tpu.dot_dimension_numbers<[1], [0], [0], [1], [0, 0, 1, 1], [], []>} : vector<8x16xf32>, vector<16x32xf32>, vector<8x32xf32> -> vector<8x32xf32>
    %98 = arith.addf %65, %97 : vector<8x32xf32>
    %c0_82 = arith.constant 0 : index
    %c2 = arith.constant 2 : index
    %c0_83 = arith.constant 0 : index
    %c0_84 = arith.constant 0 : index
    %99 = vector.load %arg7[%c0_82, %c2, %c0_83, %c0_84] : memref<2x4x32x8xf32, #tpu.memory_space<vmem>>, vector<1x1x32x8xf32>
    %100 = vector.shape_cast %99 : vector<1x1x32x8xf32> to vector<32x8xf32>
    %cst_85 = arith.constant dense<0.000000e+00> : vector<8x8xf32>
    %101 = tpu.matmul %33, %100, %cst_85 {dimension_numbers = #tpu.dot_dimension_numbers<[1], [0], [0], [1], [0, 0, 1, 1], [], []>} : vector<8x32xf32>, vector<32x8xf32>, vector<8x8xf32> -> vector<8x8xf32>
    %c0_86 = arith.constant 0 : index
    %c2_87 = arith.constant 2 : index
    %c0_88 = arith.constant 0 : index
    %c0_89 = arith.constant 0 : index
    %102 = vector.load %arg8[%c0_86, %c2_87, %c0_88, %c0_89] : memref<2x4x1x8xf32, #tpu.memory_space<vmem>>, vector<1x1x1x8xf32>
    %103 = vector.shape_cast %102 : vector<1x1x1x8xf32> to vector<1x8xf32>
    %104 = vector.broadcast %103 : vector<1x8xf32> to vector<8x8xf32>
    %105 = arith.addf %101, %104 : vector<8x8xf32>
    %c0_90 = arith.constant 0 : index
    %c2_91 = arith.constant 2 : index
    %c0_92 = arith.constant 0 : index
    %c0_93 = arith.constant 0 : index
    %106 = vector.load %arg9[%c0_90, %c2_91, %c0_92, %c0_93] : memref<2x4x32x8xf32, #tpu.memory_space<vmem>>, vector<1x1x32x8xf32>
    %107 = vector.shape_cast %106 : vector<1x1x32x8xf32> to vector<32x8xf32>
    %cst_94 = arith.constant dense<0.000000e+00> : vector<16x8xf32>
    %108 = tpu.matmul %8, %107, %cst_94 {dimension_numbers = #tpu.dot_dimension_numbers<[1], [0], [0], [1], [0, 0, 1, 1], [], []>} : vector<16x32xf32>, vector<32x8xf32>, vector<16x8xf32> -> vector<16x8xf32>
    %c0_95 = arith.constant 0 : index
    %c2_96 = arith.constant 2 : index
    %c0_97 = arith.constant 0 : index
    %c0_98 = arith.constant 0 : index
    %109 = vector.load %arg10[%c0_95, %c2_96, %c0_97, %c0_98] : memref<2x4x1x8xf32, #tpu.memory_space<vmem>>, vector<1x1x1x8xf32>
    %110 = vector.shape_cast %109 : vector<1x1x1x8xf32> to vector<1x8xf32>
    %111 = vector.broadcast %110 : vector<1x8xf32> to vector<16x8xf32>
    %112 = arith.addf %108, %111 : vector<16x8xf32>
    %c0_99 = arith.constant 0 : index
    %c2_100 = arith.constant 2 : index
    %c0_101 = arith.constant 0 : index
    %c0_102 = arith.constant 0 : index
    %113 = vector.load %arg11[%c0_99, %c2_100, %c0_101, %c0_102] : memref<2x4x32x32xf32, #tpu.memory_space<vmem>>, vector<1x1x32x32xf32>
    %114 = vector.shape_cast %113 : vector<1x1x32x32xf32> to vector<32x32xf32>
    %cst_103 = arith.constant dense<0.000000e+00> : vector<16x32xf32>
    %115 = tpu.matmul %5, %114, %cst_103 {dimension_numbers = #tpu.dot_dimension_numbers<[1], [0], [0], [1], [0, 0, 1, 1], [], []>} : vector<16x32xf32>, vector<32x32xf32>, vector<16x32xf32> -> vector<16x32xf32>
    %c0_104 = arith.constant 0 : index
    %c2_105 = arith.constant 2 : index
    %c0_106 = arith.constant 0 : index
    %c0_107 = arith.constant 0 : index
    %116 = vector.load %arg12[%c0_104, %c2_105, %c0_106, %c0_107] : memref<2x4x1x32xf32, #tpu.memory_space<vmem>>, vector<1x1x1x32xf32>
    %117 = vector.shape_cast %116 : vector<1x1x1x32xf32> to vector<1x32xf32>
    %118 = vector.broadcast %117 : vector<1x32xf32> to vector<16x32xf32>
    %119 = arith.addf %115, %118 : vector<16x32xf32>
    %cst_108 = arith.constant dense<0.000000e+00> : vector<8x16xf32>
    %120 = tpu.matmul %105, %112, %cst_108 {dimension_numbers = #tpu.dot_dimension_numbers<[1], [1], [0], [0], [0, 0, 1, 0], [], []>} : vector<8x8xf32>, vector<16x8xf32>, vector<8x16xf32> -> vector<8x16xf32>
    %cst_109 = arith.constant dense<0xFF800000> : vector<8xf32>
    %121 = vector.multi_reduction <maximumf>, %120, %cst_109 [1] : vector<8x16xf32> to vector<8xf32>
    %122 = vector.shape_cast %121 : vector<8xf32> to vector<8x1xf32>
    %123 = vector.broadcast %122 : vector<8x1xf32> to vector<8x16xf32>
    %124 = arith.subf %120, %123 : vector<8x16xf32>
    %125 = math.exp %124 : vector<8x16xf32>
    %cst_110 = arith.constant dense<0.000000e+00> : vector<8xf32>
    %126 = vector.multi_reduction <add>, %125, %cst_110 [1] : vector<8x16xf32> to vector<8xf32>
    %127 = vector.shape_cast %126 : vector<8xf32> to vector<8x1xf32>
    %128 = vector.broadcast %127 : vector<8x1xf32> to vector<8x16xf32>
    %129 = arith.divf %125, %128 : vector<8x16xf32>
    %cst_111 = arith.constant dense<0.000000e+00> : vector<8x32xf32>
    %130 = tpu.matmul %129, %119, %cst_111 {dimension_numbers = #tpu.dot_dimension_numbers<[1], [0], [0], [1], [0, 0, 1, 1], [], []>} : vector<8x16xf32>, vector<16x32xf32>, vector<8x32xf32> -> vector<8x32xf32>
    %131 = arith.addf %98, %130 : vector<8x32xf32>
    %c0_112 = arith.constant 0 : index
    %c3 = arith.constant 3 : index
    %c0_113 = arith.constant 0 : index
    %c0_114 = arith.constant 0 : index
    %132 = vector.load %arg7[%c0_112, %c3, %c0_113, %c0_114] : memref<2x4x32x8xf32, #tpu.memory_space<vmem>>, vector<1x1x32x8xf32>
    %133 = vector.shape_cast %132 : vector<1x1x32x8xf32> to vector<32x8xf32>
    %cst_115 = arith.constant dense<0.000000e+00> : vector<8x8xf32>
    %134 = tpu.matmul %33, %133, %cst_115 {dimension_numbers = #tpu.dot_dimension_numbers<[1], [0], [0], [1], [0, 0, 1, 1], [], []>} : vector<8x32xf32>, vector<32x8xf32>, vector<8x8xf32> -> vector<8x8xf32>
    %c0_116 = arith.constant 0 : index
    %c3_117 = arith.constant 3 : index
    %c0_118 = arith.constant 0 : index
    %c0_119 = arith.constant 0 : index
    %135 = vector.load %arg8[%c0_116, %c3_117, %c0_118, %c0_119] : memref<2x4x1x8xf32, #tpu.memory_space<vmem>>, vector<1x1x1x8xf32>
    %136 = vector.shape_cast %135 : vector<1x1x1x8xf32> to vector<1x8xf32>
    %137 = vector.broadcast %136 : vector<1x8xf32> to vector<8x8xf32>
    %138 = arith.addf %134, %137 : vector<8x8xf32>
    %c0_120 = arith.constant 0 : index
    %c3_121 = arith.constant 3 : index
    %c0_122 = arith.constant 0 : index
    %c0_123 = arith.constant 0 : index
    %139 = vector.load %arg9[%c0_120, %c3_121, %c0_122, %c0_123] : memref<2x4x32x8xf32, #tpu.memory_space<vmem>>, vector<1x1x32x8xf32>
    %140 = vector.shape_cast %139 : vector<1x1x32x8xf32> to vector<32x8xf32>
    %cst_124 = arith.constant dense<0.000000e+00> : vector<16x8xf32>
    %141 = tpu.matmul %8, %140, %cst_124 {dimension_numbers = #tpu.dot_dimension_numbers<[1], [0], [0], [1], [0, 0, 1, 1], [], []>} : vector<16x32xf32>, vector<32x8xf32>, vector<16x8xf32> -> vector<16x8xf32>
    %c0_125 = arith.constant 0 : index
    %c3_126 = arith.constant 3 : index
    %c0_127 = arith.constant 0 : index
    %c0_128 = arith.constant 0 : index
    %142 = vector.load %arg10[%c0_125, %c3_126, %c0_127, %c0_128] : memref<2x4x1x8xf32, #tpu.memory_space<vmem>>, vector<1x1x1x8xf32>
    %143 = vector.shape_cast %142 : vector<1x1x1x8xf32> to vector<1x8xf32>
    %144 = vector.broadcast %143 : vector<1x8xf32> to vector<16x8xf32>
    %145 = arith.addf %141, %144 : vector<16x8xf32>
    %c0_129 = arith.constant 0 : index
    %c3_130 = arith.constant 3 : index
    %c0_131 = arith.constant 0 : index
    %c0_132 = arith.constant 0 : index
    %146 = vector.load %arg11[%c0_129, %c3_130, %c0_131, %c0_132] : memref<2x4x32x32xf32, #tpu.memory_space<vmem>>, vector<1x1x32x32xf32>
    %147 = vector.shape_cast %146 : vector<1x1x32x32xf32> to vector<32x32xf32>
    %cst_133 = arith.constant dense<0.000000e+00> : vector<16x32xf32>
    %148 = tpu.matmul %5, %147, %cst_133 {dimension_numbers = #tpu.dot_dimension_numbers<[1], [0], [0], [1], [0, 0, 1, 1], [], []>} : vector<16x32xf32>, vector<32x32xf32>, vector<16x32xf32> -> vector<16x32xf32>
    %c0_134 = arith.constant 0 : index
    %c3_135 = arith.constant 3 : index
    %c0_136 = arith.constant 0 : index
    %c0_137 = arith.constant 0 : index
    %149 = vector.load %arg12[%c0_134, %c3_135, %c0_136, %c0_137] : memref<2x4x1x32xf32, #tpu.memory_space<vmem>>, vector<1x1x1x32xf32>
    %150 = vector.shape_cast %149 : vector<1x1x1x32xf32> to vector<1x32xf32>
    %151 = vector.broadcast %150 : vector<1x32xf32> to vector<16x32xf32>
    %152 = arith.addf %148, %151 : vector<16x32xf32>
    %cst_138 = arith.constant dense<0.000000e+00> : vector<8x16xf32>
    %153 = tpu.matmul %138, %145, %cst_138 {dimension_numbers = #tpu.dot_dimension_numbers<[1], [1], [0], [0], [0, 0, 1, 0], [], []>} : vector<8x8xf32>, vector<16x8xf32>, vector<8x16xf32> -> vector<8x16xf32>
    %cst_139 = arith.constant dense<0xFF800000> : vector<8xf32>
    %154 = vector.multi_reduction <maximumf>, %153, %cst_139 [1] : vector<8x16xf32> to vector<8xf32>
    %155 = vector.shape_cast %154 : vector<8xf32> to vector<8x1xf32>
    %156 = vector.broadcast %155 : vector<8x1xf32> to vector<8x16xf32>
    %157 = arith.subf %153, %156 : vector<8x16xf32>
    %158 = math.exp %157 : vector<8x16xf32>
    %cst_140 = arith.constant dense<0.000000e+00> : vector<8xf32>
    %159 = vector.multi_reduction <add>, %158, %cst_140 [1] : vector<8x16xf32> to vector<8xf32>
    %160 = vector.shape_cast %159 : vector<8xf32> to vector<8x1xf32>
    %161 = vector.broadcast %160 : vector<8x1xf32> to vector<8x16xf32>
    %162 = arith.divf %158, %161 : vector<8x16xf32>
    %cst_141 = arith.constant dense<0.000000e+00> : vector<8x32xf32>
    %163 = tpu.matmul %162, %152, %cst_141 {dimension_numbers = #tpu.dot_dimension_numbers<[1], [0], [0], [1], [0, 0, 1, 1], [], []>} : vector<8x16xf32>, vector<16x32xf32>, vector<8x32xf32> -> vector<8x32xf32>
    %164 = arith.addf %131, %163 : vector<8x32xf32>
    %c0_142 = arith.constant 0 : index
    %c0_143 = arith.constant 0 : index
    %c0_144 = arith.constant 0 : index
    %165 = vector.load %arg13[%c0_142, %c0_143, %c0_144] : memref<2x1x32xf32, #tpu.memory_space<vmem>>, vector<1x1x32xf32>
    %166 = vector.shape_cast %165 : vector<1x1x32xf32> to vector<1x32xf32>
    %167 = vector.broadcast %166 : vector<1x32xf32> to vector<8x32xf32>
    %168 = arith.addf %164, %167 : vector<8x32xf32>
    %c0_145 = arith.constant 0 : index
    %c0_146 = arith.constant 0 : index
    %c0_147 = arith.constant 0 : index
    %169 = vector.load %arg14[%c0_145, %c0_146, %c0_147] : memref<2x1x32xf32, #tpu.memory_space<vmem>>, vector<1x1x32xf32>
    %170 = vector.shape_cast %169 : vector<1x1x32xf32> to vector<1x32xf32>
    %171 = vector.broadcast %170 : vector<1x32xf32> to vector<8x32xf32>
    %172 = arith.mulf %171, %168 : vector<8x32xf32>
    %173 = arith.addf %9, %172 : vector<8x32xf32>
    %c0_148 = arith.constant 0 : index
    %c0_149 = arith.constant 0 : index
    %c0_150 = arith.constant 0 : index
    %174 = vector.load %arg15[%c0_148, %c0_149, %c0_150] : memref<2x1x32xf32, #tpu.memory_space<vmem>>, vector<1x1x32xf32>
    %175 = vector.shape_cast %174 : vector<1x1x32xf32> to vector<1x32xf32>
    %c0_151 = arith.constant 0 : index
    %c0_152 = arith.constant 0 : index
    %c0_153 = arith.constant 0 : index
    %176 = vector.load %arg16[%c0_151, %c0_152, %c0_153] : memref<2x1x32xf32, #tpu.memory_space<vmem>>, vector<1x1x32xf32>
    %177 = vector.shape_cast %176 : vector<1x1x32xf32> to vector<1x32xf32>
    %cst_154 = arith.constant dense<0.000000e+00> : vector<8xf32>
    %178 = vector.multi_reduction <add>, %173, %cst_154 [1] : vector<8x32xf32> to vector<8xf32>
    %179 = vector.shape_cast %178 : vector<8xf32> to vector<8x1xf32>
    %cst_155 = arith.constant 3.200000e+01 : f32
    %180 = vector.broadcast %cst_155 : f32 to vector<8x1xf32>
    %181 = arith.divf %179, %180 : vector<8x1xf32>
    %182 = vector.broadcast %181 : vector<8x1xf32> to vector<8x32xf32>
    %183 = arith.subf %173, %182 : vector<8x32xf32>
    %184 = arith.mulf %183, %183 : vector<8x32xf32>
    %cst_156 = arith.constant dense<0.000000e+00> : vector<8xf32>
    %185 = vector.multi_reduction <add>, %184, %cst_156 [1] : vector<8x32xf32> to vector<8xf32>
    %186 = vector.shape_cast %185 : vector<8xf32> to vector<8x1xf32>
    %cst_157 = arith.constant 3.200000e+01 : f32
    %187 = vector.broadcast %cst_157 : f32 to vector<8x1xf32>
    %188 = arith.divf %186, %187 : vector<8x1xf32>
    %cst_158 = arith.constant 9.99999974E-6 : f32
    %189 = vector.broadcast %cst_158 : f32 to vector<8x1xf32>
    %190 = arith.addf %188, %189 : vector<8x1xf32>
    %191 = math.rsqrt %190 : vector<8x1xf32>
    %192 = vector.broadcast %191 : vector<8x1xf32> to vector<8x32xf32>
    %193 = arith.mulf %183, %192 : vector<8x32xf32>
    %194 = vector.broadcast %175 : vector<1x32xf32> to vector<8x32xf32>
    %195 = arith.mulf %193, %194 : vector<8x32xf32>
    %196 = vector.broadcast %177 : vector<1x32xf32> to vector<8x32xf32>
    %197 = arith.addf %195, %196 : vector<8x32xf32>
    %c0_159 = arith.constant 0 : index
    %c0_160 = arith.constant 0 : index
    %c0_161 = arith.constant 0 : index
    %c0_162 = arith.constant 0 : index
    %198 = vector.load %arg17[%c0_159, %c0_160, %c0_161, %c0_162] : memref<2x4x32x8xf32, #tpu.memory_space<vmem>>, vector<1x1x32x8xf32>
    %199 = vector.shape_cast %198 : vector<1x1x32x8xf32> to vector<32x8xf32>
    %cst_163 = arith.constant dense<0.000000e+00> : vector<8x8xf32>
    %200 = tpu.matmul %197, %199, %cst_163 {dimension_numbers = #tpu.dot_dimension_numbers<[1], [0], [0], [1], [0, 0, 1, 1], [], []>} : vector<8x32xf32>, vector<32x8xf32>, vector<8x8xf32> -> vector<8x8xf32>
    %c0_164 = arith.constant 0 : index
    %c0_165 = arith.constant 0 : index
    %c0_166 = arith.constant 0 : index
    %c0_167 = arith.constant 0 : index
    %201 = vector.load %arg18[%c0_164, %c0_165, %c0_166, %c0_167] : memref<2x4x1x8xf32, #tpu.memory_space<vmem>>, vector<1x1x1x8xf32>
    %202 = vector.shape_cast %201 : vector<1x1x1x8xf32> to vector<1x8xf32>
    %203 = vector.broadcast %202 : vector<1x8xf32> to vector<8x8xf32>
    %204 = arith.addf %200, %203 : vector<8x8xf32>
    %c0_168 = arith.constant 0 : index
    %c0_169 = arith.constant 0 : index
    %c0_170 = arith.constant 0 : index
    %c0_171 = arith.constant 0 : index
    %205 = vector.load %arg19[%c0_168, %c0_169, %c0_170, %c0_171] : memref<2x4x32x8xf32, #tpu.memory_space<vmem>>, vector<1x1x32x8xf32>
    %206 = vector.shape_cast %205 : vector<1x1x32x8xf32> to vector<32x8xf32>
    %cst_172 = arith.constant dense<0.000000e+00> : vector<8x8xf32>
    %207 = tpu.matmul %197, %206, %cst_172 {dimension_numbers = #tpu.dot_dimension_numbers<[1], [0], [0], [1], [0, 0, 1, 1], [], []>} : vector<8x32xf32>, vector<32x8xf32>, vector<8x8xf32> -> vector<8x8xf32>
    %c0_173 = arith.constant 0 : index
    %c0_174 = arith.constant 0 : index
    %c0_175 = arith.constant 0 : index
    %c0_176 = arith.constant 0 : index
    %208 = vector.load %arg20[%c0_173, %c0_174, %c0_175, %c0_176] : memref<2x4x1x8xf32, #tpu.memory_space<vmem>>, vector<1x1x1x8xf32>
    %209 = vector.shape_cast %208 : vector<1x1x1x8xf32> to vector<1x8xf32>
    %210 = vector.broadcast %209 : vector<1x8xf32> to vector<8x8xf32>
    %211 = arith.addf %207, %210 : vector<8x8xf32>
    %c0_177 = arith.constant 0 : index
    %c0_178 = arith.constant 0 : index
    %c0_179 = arith.constant 0 : index
    %c0_180 = arith.constant 0 : index
    %212 = vector.load %arg21[%c0_177, %c0_178, %c0_179, %c0_180] : memref<2x4x32x32xf32, #tpu.memory_space<vmem>>, vector<1x1x32x32xf32>
    %213 = vector.shape_cast %212 : vector<1x1x32x32xf32> to vector<32x32xf32>
    %cst_181 = arith.constant dense<0.000000e+00> : vector<8x32xf32>
    %214 = tpu.matmul %197, %213, %cst_181 {dimension_numbers = #tpu.dot_dimension_numbers<[1], [0], [0], [1], [0, 0, 1, 1], [], []>} : vector<8x32xf32>, vector<32x32xf32>, vector<8x32xf32> -> vector<8x32xf32>
    %c0_182 = arith.constant 0 : index
    %c0_183 = arith.constant 0 : index
    %c0_184 = arith.constant 0 : index
    %c0_185 = arith.constant 0 : index
    %215 = vector.load %arg22[%c0_182, %c0_183, %c0_184, %c0_185] : memref<2x4x1x32xf32, #tpu.memory_space<vmem>>, vector<1x1x1x32xf32>
    %216 = vector.shape_cast %215 : vector<1x1x1x32xf32> to vector<1x32xf32>
    %217 = vector.broadcast %216 : vector<1x32xf32> to vector<8x32xf32>
    %218 = arith.addf %214, %217 : vector<8x32xf32>
    %cst_186 = arith.constant dense<0.000000e+00> : vector<8x8xf32>
    %219 = tpu.matmul %204, %211, %cst_186 {dimension_numbers = #tpu.dot_dimension_numbers<[1], [1], [0], [0], [0, 0, 1, 0], [], []>} : vector<8x8xf32>, vector<8x8xf32>, vector<8x8xf32> -> vector<8x8xf32>
    %cst_187 = arith.constant dense<0xFF800000> : vector<8xf32>
    %220 = vector.multi_reduction <maximumf>, %219, %cst_187 [1] : vector<8x8xf32> to vector<8xf32>
    %221 = vector.shape_cast %220 : vector<8xf32> to vector<8x1xf32>
    %222 = vector.broadcast %221 : vector<8x1xf32> to vector<8x8xf32>
    %223 = arith.subf %219, %222 : vector<8x8xf32>
    %224 = math.exp %223 : vector<8x8xf32>
    %cst_188 = arith.constant dense<0.000000e+00> : vector<8xf32>
    %225 = vector.multi_reduction <add>, %224, %cst_188 [1] : vector<8x8xf32> to vector<8xf32>
    %226 = vector.shape_cast %225 : vector<8xf32> to vector<8x1xf32>
    %227 = vector.broadcast %226 : vector<8x1xf32> to vector<8x8xf32>
    %228 = arith.divf %224, %227 : vector<8x8xf32>
    %cst_189 = arith.constant dense<0.000000e+00> : vector<8x32xf32>
    %229 = tpu.matmul %228, %218, %cst_189 {dimension_numbers = #tpu.dot_dimension_numbers<[1], [0], [0], [1], [0, 0, 1, 1], [], []>} : vector<8x8xf32>, vector<8x32xf32>, vector<8x32xf32> -> vector<8x32xf32>
    %c0_190 = arith.constant 0 : index
    %c1_191 = arith.constant 1 : index
    %c0_192 = arith.constant 0 : index
    %c0_193 = arith.constant 0 : index
    %230 = vector.load %arg17[%c0_190, %c1_191, %c0_192, %c0_193] : memref<2x4x32x8xf32, #tpu.memory_space<vmem>>, vector<1x1x32x8xf32>
    %231 = vector.shape_cast %230 : vector<1x1x32x8xf32> to vector<32x8xf32>
    %cst_194 = arith.constant dense<0.000000e+00> : vector<8x8xf32>
    %232 = tpu.matmul %197, %231, %cst_194 {dimension_numbers = #tpu.dot_dimension_numbers<[1], [0], [0], [1], [0, 0, 1, 1], [], []>} : vector<8x32xf32>, vector<32x8xf32>, vector<8x8xf32> -> vector<8x8xf32>
    %c0_195 = arith.constant 0 : index
    %c1_196 = arith.constant 1 : index
    %c0_197 = arith.constant 0 : index
    %c0_198 = arith.constant 0 : index
    %233 = vector.load %arg18[%c0_195, %c1_196, %c0_197, %c0_198] : memref<2x4x1x8xf32, #tpu.memory_space<vmem>>, vector<1x1x1x8xf32>
    %234 = vector.shape_cast %233 : vector<1x1x1x8xf32> to vector<1x8xf32>
    %235 = vector.broadcast %234 : vector<1x8xf32> to vector<8x8xf32>
    %236 = arith.addf %232, %235 : vector<8x8xf32>
    %c0_199 = arith.constant 0 : index
    %c1_200 = arith.constant 1 : index
    %c0_201 = arith.constant 0 : index
    %c0_202 = arith.constant 0 : index
    %237 = vector.load %arg19[%c0_199, %c1_200, %c0_201, %c0_202] : memref<2x4x32x8xf32, #tpu.memory_space<vmem>>, vector<1x1x32x8xf32>
    %238 = vector.shape_cast %237 : vector<1x1x32x8xf32> to vector<32x8xf32>
    %cst_203 = arith.constant dense<0.000000e+00> : vector<8x8xf32>
    %239 = tpu.matmul %197, %238, %cst_203 {dimension_numbers = #tpu.dot_dimension_numbers<[1], [0], [0], [1], [0, 0, 1, 1], [], []>} : vector<8x32xf32>, vector<32x8xf32>, vector<8x8xf32> -> vector<8x8xf32>
    %c0_204 = arith.constant 0 : index
    %c1_205 = arith.constant 1 : index
    %c0_206 = arith.constant 0 : index
    %c0_207 = arith.constant 0 : index
    %240 = vector.load %arg20[%c0_204, %c1_205, %c0_206, %c0_207] : memref<2x4x1x8xf32, #tpu.memory_space<vmem>>, vector<1x1x1x8xf32>
    %241 = vector.shape_cast %240 : vector<1x1x1x8xf32> to vector<1x8xf32>
    %242 = vector.broadcast %241 : vector<1x8xf32> to vector<8x8xf32>
    %243 = arith.addf %239, %242 : vector<8x8xf32>
    %c0_208 = arith.constant 0 : index
    %c1_209 = arith.constant 1 : index
    %c0_210 = arith.constant 0 : index
    %c0_211 = arith.constant 0 : index
    %244 = vector.load %arg21[%c0_208, %c1_209, %c0_210, %c0_211] : memref<2x4x32x32xf32, #tpu.memory_space<vmem>>, vector<1x1x32x32xf32>
    %245 = vector.shape_cast %244 : vector<1x1x32x32xf32> to vector<32x32xf32>
    %cst_212 = arith.constant dense<0.000000e+00> : vector<8x32xf32>
    %246 = tpu.matmul %197, %245, %cst_212 {dimension_numbers = #tpu.dot_dimension_numbers<[1], [0], [0], [1], [0, 0, 1, 1], [], []>} : vector<8x32xf32>, vector<32x32xf32>, vector<8x32xf32> -> vector<8x32xf32>
    %c0_213 = arith.constant 0 : index
    %c1_214 = arith.constant 1 : index
    %c0_215 = arith.constant 0 : index
    %c0_216 = arith.constant 0 : index
    %247 = vector.load %arg22[%c0_213, %c1_214, %c0_215, %c0_216] : memref<2x4x1x32xf32, #tpu.memory_space<vmem>>, vector<1x1x1x32xf32>
    %248 = vector.shape_cast %247 : vector<1x1x1x32xf32> to vector<1x32xf32>
    %249 = vector.broadcast %248 : vector<1x32xf32> to vector<8x32xf32>
    %250 = arith.addf %246, %249 : vector<8x32xf32>
    %cst_217 = arith.constant dense<0.000000e+00> : vector<8x8xf32>
    %251 = tpu.matmul %236, %243, %cst_217 {dimension_numbers = #tpu.dot_dimension_numbers<[1], [1], [0], [0], [0, 0, 1, 0], [], []>} : vector<8x8xf32>, vector<8x8xf32>, vector<8x8xf32> -> vector<8x8xf32>
    %cst_218 = arith.constant dense<0xFF800000> : vector<8xf32>
    %252 = vector.multi_reduction <maximumf>, %251, %cst_218 [1] : vector<8x8xf32> to vector<8xf32>
    %253 = vector.shape_cast %252 : vector<8xf32> to vector<8x1xf32>
    %254 = vector.broadcast %253 : vector<8x1xf32> to vector<8x8xf32>
    %255 = arith.subf %251, %254 : vector<8x8xf32>
    %256 = math.exp %255 : vector<8x8xf32>
    %cst_219 = arith.constant dense<0.000000e+00> : vector<8xf32>
    %257 = vector.multi_reduction <add>, %256, %cst_219 [1] : vector<8x8xf32> to vector<8xf32>
    %258 = vector.shape_cast %257 : vector<8xf32> to vector<8x1xf32>
    %259 = vector.broadcast %258 : vector<8x1xf32> to vector<8x8xf32>
    %260 = arith.divf %256, %259 : vector<8x8xf32>
    %cst_220 = arith.constant dense<0.000000e+00> : vector<8x32xf32>
    %261 = tpu.matmul %260, %250, %cst_220 {dimension_numbers = #tpu.dot_dimension_numbers<[1], [0], [0], [1], [0, 0, 1, 1], [], []>} : vector<8x8xf32>, vector<8x32xf32>, vector<8x32xf32> -> vector<8x32xf32>
    %262 = arith.addf %229, %261 : vector<8x32xf32>
    %c0_221 = arith.constant 0 : index
    %c2_222 = arith.constant 2 : index
    %c0_223 = arith.constant 0 : index
    %c0_224 = arith.constant 0 : index
    %263 = vector.load %arg17[%c0_221, %c2_222, %c0_223, %c0_224] : memref<2x4x32x8xf32, #tpu.memory_space<vmem>>, vector<1x1x32x8xf32>
    %264 = vector.shape_cast %263 : vector<1x1x32x8xf32> to vector<32x8xf32>
    %cst_225 = arith.constant dense<0.000000e+00> : vector<8x8xf32>
    %265 = tpu.matmul %197, %264, %cst_225 {dimension_numbers = #tpu.dot_dimension_numbers<[1], [0], [0], [1], [0, 0, 1, 1], [], []>} : vector<8x32xf32>, vector<32x8xf32>, vector<8x8xf32> -> vector<8x8xf32>
    %c0_226 = arith.constant 0 : index
    %c2_227 = arith.constant 2 : index
    %c0_228 = arith.constant 0 : index
    %c0_229 = arith.constant 0 : index
    %266 = vector.load %arg18[%c0_226, %c2_227, %c0_228, %c0_229] : memref<2x4x1x8xf32, #tpu.memory_space<vmem>>, vector<1x1x1x8xf32>
    %267 = vector.shape_cast %266 : vector<1x1x1x8xf32> to vector<1x8xf32>
    %268 = vector.broadcast %267 : vector<1x8xf32> to vector<8x8xf32>
    %269 = arith.addf %265, %268 : vector<8x8xf32>
    %c0_230 = arith.constant 0 : index
    %c2_231 = arith.constant 2 : index
    %c0_232 = arith.constant 0 : index
    %c0_233 = arith.constant 0 : index
    %270 = vector.load %arg19[%c0_230, %c2_231, %c0_232, %c0_233] : memref<2x4x32x8xf32, #tpu.memory_space<vmem>>, vector<1x1x32x8xf32>
    %271 = vector.shape_cast %270 : vector<1x1x32x8xf32> to vector<32x8xf32>
    %cst_234 = arith.constant dense<0.000000e+00> : vector<8x8xf32>
    %272 = tpu.matmul %197, %271, %cst_234 {dimension_numbers = #tpu.dot_dimension_numbers<[1], [0], [0], [1], [0, 0, 1, 1], [], []>} : vector<8x32xf32>, vector<32x8xf32>, vector<8x8xf32> -> vector<8x8xf32>
    %c0_235 = arith.constant 0 : index
    %c2_236 = arith.constant 2 : index
    %c0_237 = arith.constant 0 : index
    %c0_238 = arith.constant 0 : index
    %273 = vector.load %arg20[%c0_235, %c2_236, %c0_237, %c0_238] : memref<2x4x1x8xf32, #tpu.memory_space<vmem>>, vector<1x1x1x8xf32>
    %274 = vector.shape_cast %273 : vector<1x1x1x8xf32> to vector<1x8xf32>
    %275 = vector.broadcast %274 : vector<1x8xf32> to vector<8x8xf32>
    %276 = arith.addf %272, %275 : vector<8x8xf32>
    %c0_239 = arith.constant 0 : index
    %c2_240 = arith.constant 2 : index
    %c0_241 = arith.constant 0 : index
    %c0_242 = arith.constant 0 : index
    %277 = vector.load %arg21[%c0_239, %c2_240, %c0_241, %c0_242] : memref<2x4x32x32xf32, #tpu.memory_space<vmem>>, vector<1x1x32x32xf32>
    %278 = vector.shape_cast %277 : vector<1x1x32x32xf32> to vector<32x32xf32>
    %cst_243 = arith.constant dense<0.000000e+00> : vector<8x32xf32>
    %279 = tpu.matmul %197, %278, %cst_243 {dimension_numbers = #tpu.dot_dimension_numbers<[1], [0], [0], [1], [0, 0, 1, 1], [], []>} : vector<8x32xf32>, vector<32x32xf32>, vector<8x32xf32> -> vector<8x32xf32>
    %c0_244 = arith.constant 0 : index
    %c2_245 = arith.constant 2 : index
    %c0_246 = arith.constant 0 : index
    %c0_247 = arith.constant 0 : index
    %280 = vector.load %arg22[%c0_244, %c2_245, %c0_246, %c0_247] : memref<2x4x1x32xf32, #tpu.memory_space<vmem>>, vector<1x1x1x32xf32>
    %281 = vector.shape_cast %280 : vector<1x1x1x32xf32> to vector<1x32xf32>
    %282 = vector.broadcast %281 : vector<1x32xf32> to vector<8x32xf32>
    %283 = arith.addf %279, %282 : vector<8x32xf32>
    %cst_248 = arith.constant dense<0.000000e+00> : vector<8x8xf32>
    %284 = tpu.matmul %269, %276, %cst_248 {dimension_numbers = #tpu.dot_dimension_numbers<[1], [1], [0], [0], [0, 0, 1, 0], [], []>} : vector<8x8xf32>, vector<8x8xf32>, vector<8x8xf32> -> vector<8x8xf32>
    %cst_249 = arith.constant dense<0xFF800000> : vector<8xf32>
    %285 = vector.multi_reduction <maximumf>, %284, %cst_249 [1] : vector<8x8xf32> to vector<8xf32>
    %286 = vector.shape_cast %285 : vector<8xf32> to vector<8x1xf32>
    %287 = vector.broadcast %286 : vector<8x1xf32> to vector<8x8xf32>
    %288 = arith.subf %284, %287 : vector<8x8xf32>
    %289 = math.exp %288 : vector<8x8xf32>
    %cst_250 = arith.constant dense<0.000000e+00> : vector<8xf32>
    %290 = vector.multi_reduction <add>, %289, %cst_250 [1] : vector<8x8xf32> to vector<8xf32>
    %291 = vector.shape_cast %290 : vector<8xf32> to vector<8x1xf32>
    %292 = vector.broadcast %291 : vector<8x1xf32> to vector<8x8xf32>
    %293 = arith.divf %289, %292 : vector<8x8xf32>
    %cst_251 = arith.constant dense<0.000000e+00> : vector<8x32xf32>
    %294 = tpu.matmul %293, %283, %cst_251 {dimension_numbers = #tpu.dot_dimension_numbers<[1], [0], [0], [1], [0, 0, 1, 1], [], []>} : vector<8x8xf32>, vector<8x32xf32>, vector<8x32xf32> -> vector<8x32xf32>
    %295 = arith.addf %262, %294 : vector<8x32xf32>
    %c0_252 = arith.constant 0 : index
    %c3_253 = arith.constant 3 : index
    %c0_254 = arith.constant 0 : index
    %c0_255 = arith.constant 0 : index
    %296 = vector.load %arg17[%c0_252, %c3_253, %c0_254, %c0_255] : memref<2x4x32x8xf32, #tpu.memory_space<vmem>>, vector<1x1x32x8xf32>
    %297 = vector.shape_cast %296 : vector<1x1x32x8xf32> to vector<32x8xf32>
    %cst_256 = arith.constant dense<0.000000e+00> : vector<8x8xf32>
    %298 = tpu.matmul %197, %297, %cst_256 {dimension_numbers = #tpu.dot_dimension_numbers<[1], [0], [0], [1], [0, 0, 1, 1], [], []>} : vector<8x32xf32>, vector<32x8xf32>, vector<8x8xf32> -> vector<8x8xf32>
    %c0_257 = arith.constant 0 : index
    %c3_258 = arith.constant 3 : index
    %c0_259 = arith.constant 0 : index
    %c0_260 = arith.constant 0 : index
    %299 = vector.load %arg18[%c0_257, %c3_258, %c0_259, %c0_260] : memref<2x4x1x8xf32, #tpu.memory_space<vmem>>, vector<1x1x1x8xf32>
    %300 = vector.shape_cast %299 : vector<1x1x1x8xf32> to vector<1x8xf32>
    %301 = vector.broadcast %300 : vector<1x8xf32> to vector<8x8xf32>
    %302 = arith.addf %298, %301 : vector<8x8xf32>
    %c0_261 = arith.constant 0 : index
    %c3_262 = arith.constant 3 : index
    %c0_263 = arith.constant 0 : index
    %c0_264 = arith.constant 0 : index
    %303 = vector.load %arg19[%c0_261, %c3_262, %c0_263, %c0_264] : memref<2x4x32x8xf32, #tpu.memory_space<vmem>>, vector<1x1x32x8xf32>
    %304 = vector.shape_cast %303 : vector<1x1x32x8xf32> to vector<32x8xf32>
    %cst_265 = arith.constant dense<0.000000e+00> : vector<8x8xf32>
    %305 = tpu.matmul %197, %304, %cst_265 {dimension_numbers = #tpu.dot_dimension_numbers<[1], [0], [0], [1], [0, 0, 1, 1], [], []>} : vector<8x32xf32>, vector<32x8xf32>, vector<8x8xf32> -> vector<8x8xf32>
    %c0_266 = arith.constant 0 : index
    %c3_267 = arith.constant 3 : index
    %c0_268 = arith.constant 0 : index
    %c0_269 = arith.constant 0 : index
    %306 = vector.load %arg20[%c0_266, %c3_267, %c0_268, %c0_269] : memref<2x4x1x8xf32, #tpu.memory_space<vmem>>, vector<1x1x1x8xf32>
    %307 = vector.shape_cast %306 : vector<1x1x1x8xf32> to vector<1x8xf32>
    %308 = vector.broadcast %307 : vector<1x8xf32> to vector<8x8xf32>
    %309 = arith.addf %305, %308 : vector<8x8xf32>
    %c0_270 = arith.constant 0 : index
    %c3_271 = arith.constant 3 : index
    %c0_272 = arith.constant 0 : index
    %c0_273 = arith.constant 0 : index
    %310 = vector.load %arg21[%c0_270, %c3_271, %c0_272, %c0_273] : memref<2x4x32x32xf32, #tpu.memory_space<vmem>>, vector<1x1x32x32xf32>
    %311 = vector.shape_cast %310 : vector<1x1x32x32xf32> to vector<32x32xf32>
    %cst_274 = arith.constant dense<0.000000e+00> : vector<8x32xf32>
    %312 = tpu.matmul %197, %311, %cst_274 {dimension_numbers = #tpu.dot_dimension_numbers<[1], [0], [0], [1], [0, 0, 1, 1], [], []>} : vector<8x32xf32>, vector<32x32xf32>, vector<8x32xf32> -> vector<8x32xf32>
    %c0_275 = arith.constant 0 : index
    %c3_276 = arith.constant 3 : index
    %c0_277 = arith.constant 0 : index
    %c0_278 = arith.constant 0 : index
    %313 = vector.load %arg22[%c0_275, %c3_276, %c0_277, %c0_278] : memref<2x4x1x32xf32, #tpu.memory_space<vmem>>, vector<1x1x1x32xf32>
    %314 = vector.shape_cast %313 : vector<1x1x1x32xf32> to vector<1x32xf32>
    %315 = vector.broadcast %314 : vector<1x32xf32> to vector<8x32xf32>
    %316 = arith.addf %312, %315 : vector<8x32xf32>
    %cst_279 = arith.constant dense<0.000000e+00> : vector<8x8xf32>
    %317 = tpu.matmul %302, %309, %cst_279 {dimension_numbers = #tpu.dot_dimension_numbers<[1], [1], [0], [0], [0, 0, 1, 0], [], []>} : vector<8x8xf32>, vector<8x8xf32>, vector<8x8xf32> -> vector<8x8xf32>
    %cst_280 = arith.constant dense<0xFF800000> : vector<8xf32>
    %318 = vector.multi_reduction <maximumf>, %317, %cst_280 [1] : vector<8x8xf32> to vector<8xf32>
    %319 = vector.shape_cast %318 : vector<8xf32> to vector<8x1xf32>
    %320 = vector.broadcast %319 : vector<8x1xf32> to vector<8x8xf32>
    %321 = arith.subf %317, %320 : vector<8x8xf32>
    %322 = math.exp %321 : vector<8x8xf32>
    %cst_281 = arith.constant dense<0.000000e+00> : vector<8xf32>
    %323 = vector.multi_reduction <add>, %322, %cst_281 [1] : vector<8x8xf32> to vector<8xf32>
    %324 = vector.shape_cast %323 : vector<8xf32> to vector<8x1xf32>
    %325 = vector.broadcast %324 : vector<8x1xf32> to vector<8x8xf32>
    %326 = arith.divf %322, %325 : vector<8x8xf32>
    %cst_282 = arith.constant dense<0.000000e+00> : vector<8x32xf32>
    %327 = tpu.matmul %326, %316, %cst_282 {dimension_numbers = #tpu.dot_dimension_numbers<[1], [0], [0], [1], [0, 0, 1, 1], [], []>} : vector<8x8xf32>, vector<8x32xf32>, vector<8x32xf32> -> vector<8x32xf32>
    %328 = arith.addf %295, %327 : vector<8x32xf32>
    %c0_283 = arith.constant 0 : index
    %c0_284 = arith.constant 0 : index
    %c0_285 = arith.constant 0 : index
    %329 = vector.load %arg23[%c0_283, %c0_284, %c0_285] : memref<2x1x32xf32, #tpu.memory_space<vmem>>, vector<1x1x32xf32>
    %330 = vector.shape_cast %329 : vector<1x1x32xf32> to vector<1x32xf32>
    %331 = vector.broadcast %330 : vector<1x32xf32> to vector<8x32xf32>
    %332 = arith.addf %328, %331 : vector<8x32xf32>
    %c0_286 = arith.constant 0 : index
    %c0_287 = arith.constant 0 : index
    %c0_288 = arith.constant 0 : index
    %333 = vector.load %arg24[%c0_286, %c0_287, %c0_288] : memref<2x1x32xf32, #tpu.memory_space<vmem>>, vector<1x1x32xf32>
    %334 = vector.shape_cast %333 : vector<1x1x32xf32> to vector<1x32xf32>
    %335 = vector.broadcast %334 : vector<1x32xf32> to vector<8x32xf32>
    %336 = arith.mulf %335, %332 : vector<8x32xf32>
    %337 = arith.addf %173, %336 : vector<8x32xf32>
    %c0_289 = arith.constant 0 : index
    %c0_290 = arith.constant 0 : index
    %c0_291 = arith.constant 0 : index
    %338 = vector.load %arg25[%c0_289, %c0_290, %c0_291] : memref<2x1x32xf32, #tpu.memory_space<vmem>>, vector<1x1x32xf32>
    %339 = vector.shape_cast %338 : vector<1x1x32xf32> to vector<1x32xf32>
    %c0_292 = arith.constant 0 : index
    %c0_293 = arith.constant 0 : index
    %c0_294 = arith.constant 0 : index
    %340 = vector.load %arg26[%c0_292, %c0_293, %c0_294] : memref<2x1x32xf32, #tpu.memory_space<vmem>>, vector<1x1x32xf32>
    %341 = vector.shape_cast %340 : vector<1x1x32xf32> to vector<1x32xf32>
    %cst_295 = arith.constant dense<0.000000e+00> : vector<8xf32>
    %342 = vector.multi_reduction <add>, %337, %cst_295 [1] : vector<8x32xf32> to vector<8xf32>
    %343 = vector.shape_cast %342 : vector<8xf32> to vector<8x1xf32>
    %cst_296 = arith.constant 3.200000e+01 : f32
    %344 = vector.broadcast %cst_296 : f32 to vector<8x1xf32>
    %345 = arith.divf %343, %344 : vector<8x1xf32>
    %346 = vector.broadcast %345 : vector<8x1xf32> to vector<8x32xf32>
    %347 = arith.subf %337, %346 : vector<8x32xf32>
    %348 = arith.mulf %347, %347 : vector<8x32xf32>
    %cst_297 = arith.constant dense<0.000000e+00> : vector<8xf32>
    %349 = vector.multi_reduction <add>, %348, %cst_297 [1] : vector<8x32xf32> to vector<8xf32>
    %350 = vector.shape_cast %349 : vector<8xf32> to vector<8x1xf32>
    %cst_298 = arith.constant 3.200000e+01 : f32
    %351 = vector.broadcast %cst_298 : f32 to vector<8x1xf32>
    %352 = arith.divf %350, %351 : vector<8x1xf32>
    %cst_299 = arith.constant 9.99999974E-6 : f32
    %353 = vector.broadcast %cst_299 : f32 to vector<8x1xf32>
    %354 = arith.addf %352, %353 : vector<8x1xf32>
    %355 = math.rsqrt %354 : vector<8x1xf32>
    %356 = vector.broadcast %355 : vector<8x1xf32> to vector<8x32xf32>
    %357 = arith.mulf %347, %356 : vector<8x32xf32>
    %358 = vector.broadcast %339 : vector<1x32xf32> to vector<8x32xf32>
    %359 = arith.mulf %357, %358 : vector<8x32xf32>
    %360 = vector.broadcast %341 : vector<1x32xf32> to vector<8x32xf32>
    %361 = arith.addf %359, %360 : vector<8x32xf32>
    %c0_300 = arith.constant 0 : index
    %c0_301 = arith.constant 0 : index
    %c0_302 = arith.constant 0 : index
    %362 = vector.load %arg27[%c0_300, %c0_301, %c0_302] : memref<2x32x128xf32, #tpu.memory_space<vmem>>, vector<1x32x128xf32>
    %363 = vector.shape_cast %362 : vector<1x32x128xf32> to vector<32x128xf32>
    %cst_303 = arith.constant dense<0.000000e+00> : vector<8x128xf32>
    %364 = tpu.matmul %361, %363, %cst_303 {dimension_numbers = #tpu.dot_dimension_numbers<[1], [0], [0], [1], [0, 0, 1, 1], [], []>} : vector<8x32xf32>, vector<32x128xf32>, vector<8x128xf32> -> vector<8x128xf32>
    %c0_304 = arith.constant 0 : index
    %c0_305 = arith.constant 0 : index
    %c0_306 = arith.constant 0 : index
    %365 = vector.load %arg28[%c0_304, %c0_305, %c0_306] : memref<2x1x128xf32, #tpu.memory_space<vmem>>, vector<1x1x128xf32>
    %366 = vector.shape_cast %365 : vector<1x1x128xf32> to vector<1x128xf32>
    %367 = vector.broadcast %366 : vector<1x128xf32> to vector<8x128xf32>
    %368 = arith.addf %364, %367 : vector<8x128xf32>
    %369 = arith.mulf %368, %368 : vector<8x128xf32>
    %370 = arith.mulf %368, %369 : vector<8x128xf32>
    %cst_307 = arith.constant 4.471500e-02 : f32
    %371 = vector.broadcast %cst_307 : f32 to vector<8x128xf32>
    %372 = arith.mulf %371, %370 : vector<8x128xf32>
    %373 = arith.addf %368, %372 : vector<8x128xf32>
    %cst_308 = arith.constant 0.797884583 : f32
    %374 = vector.broadcast %cst_308 : f32 to vector<8x128xf32>
    %375 = arith.mulf %374, %373 : vector<8x128xf32>
    %376 = math.tanh %375 : vector<8x128xf32>
    %cst_309 = arith.constant 1.000000e+00 : f32
    %377 = vector.broadcast %cst_309 : f32 to vector<8x128xf32>
    %378 = arith.addf %377, %376 : vector<8x128xf32>
    %cst_310 = arith.constant 5.000000e-01 : f32
    %379 = vector.broadcast %cst_310 : f32 to vector<8x128xf32>
    %380 = arith.mulf %379, %378 : vector<8x128xf32>
    %381 = arith.mulf %368, %380 : vector<8x128xf32>
    %c0_311 = arith.constant 0 : index
    %c0_312 = arith.constant 0 : index
    %c0_313 = arith.constant 0 : index
    %382 = vector.load %arg29[%c0_311, %c0_312, %c0_313] : memref<2x128x32xf32, #tpu.memory_space<vmem>>, vector<1x128x32xf32>
    %383 = vector.shape_cast %382 : vector<1x128x32xf32> to vector<128x32xf32>
    %cst_314 = arith.constant dense<0.000000e+00> : vector<8x32xf32>
    %384 = tpu.matmul %381, %383, %cst_314 {dimension_numbers = #tpu.dot_dimension_numbers<[1], [0], [0], [1], [0, 0, 1, 1], [], []>} : vector<8x128xf32>, vector<128x32xf32>, vector<8x32xf32> -> vector<8x32xf32>
    %c0_315 = arith.constant 0 : index
    %c0_316 = arith.constant 0 : index
    %c0_317 = arith.constant 0 : index
    %385 = vector.load %arg30[%c0_315, %c0_316, %c0_317] : memref<2x1x32xf32, #tpu.memory_space<vmem>>, vector<1x1x32xf32>
    %386 = vector.shape_cast %385 : vector<1x1x32xf32> to vector<1x32xf32>
    %387 = vector.broadcast %386 : vector<1x32xf32> to vector<8x32xf32>
    %388 = arith.addf %384, %387 : vector<8x32xf32>
    %c0_318 = arith.constant 0 : index
    %c0_319 = arith.constant 0 : index
    %c0_320 = arith.constant 0 : index
    %389 = vector.load %arg31[%c0_318, %c0_319, %c0_320] : memref<2x1x32xf32, #tpu.memory_space<vmem>>, vector<1x1x32xf32>
    %390 = vector.shape_cast %389 : vector<1x1x32xf32> to vector<1x32xf32>
    %391 = vector.broadcast %390 : vector<1x32xf32> to vector<8x32xf32>
    %392 = arith.mulf %391, %388 : vector<8x32xf32>
    %393 = arith.addf %337, %392 : vector<8x32xf32>
    %394 = arith.addf %393, %3 : vector<8x32xf32>
    %c1_321 = arith.constant 1 : index
    %c0_322 = arith.constant 0 : index
    %c0_323 = arith.constant 0 : index
    %395 = vector.load %arg5[%c1_321, %c0_322, %c0_323] : memref<2x1x32xf32, #tpu.memory_space<vmem>>, vector<1x1x32xf32>
    %396 = vector.shape_cast %395 : vector<1x1x32xf32> to vector<1x32xf32>
    %c1_324 = arith.constant 1 : index
    %c0_325 = arith.constant 0 : index
    %c0_326 = arith.constant 0 : index
    %397 = vector.load %arg6[%c1_324, %c0_325, %c0_326] : memref<2x1x32xf32, #tpu.memory_space<vmem>>, vector<1x1x32xf32>
    %398 = vector.shape_cast %397 : vector<1x1x32xf32> to vector<1x32xf32>
    %cst_327 = arith.constant dense<0.000000e+00> : vector<8xf32>
    %399 = vector.multi_reduction <add>, %394, %cst_327 [1] : vector<8x32xf32> to vector<8xf32>
    %400 = vector.shape_cast %399 : vector<8xf32> to vector<8x1xf32>
    %cst_328 = arith.constant 3.200000e+01 : f32
    %401 = vector.broadcast %cst_328 : f32 to vector<8x1xf32>
    %402 = arith.divf %400, %401 : vector<8x1xf32>
    %403 = vector.broadcast %402 : vector<8x1xf32> to vector<8x32xf32>
    %404 = arith.subf %394, %403 : vector<8x32xf32>
    %405 = arith.mulf %404, %404 : vector<8x32xf32>
    %cst_329 = arith.constant dense<0.000000e+00> : vector<8xf32>
    %406 = vector.multi_reduction <add>, %405, %cst_329 [1] : vector<8x32xf32> to vector<8xf32>
    %407 = vector.shape_cast %406 : vector<8xf32> to vector<8x1xf32>
    %cst_330 = arith.constant 3.200000e+01 : f32
    %408 = vector.broadcast %cst_330 : f32 to vector<8x1xf32>
    %409 = arith.divf %407, %408 : vector<8x1xf32>
    %cst_331 = arith.constant 9.99999974E-6 : f32
    %410 = vector.broadcast %cst_331 : f32 to vector<8x1xf32>
    %411 = arith.addf %409, %410 : vector<8x1xf32>
    %412 = math.rsqrt %411 : vector<8x1xf32>
    %413 = vector.broadcast %412 : vector<8x1xf32> to vector<8x32xf32>
    %414 = arith.mulf %404, %413 : vector<8x32xf32>
    %415 = vector.broadcast %396 : vector<1x32xf32> to vector<8x32xf32>
    %416 = arith.mulf %414, %415 : vector<8x32xf32>
    %417 = vector.broadcast %398 : vector<1x32xf32> to vector<8x32xf32>
    %418 = arith.addf %416, %417 : vector<8x32xf32>
    %c1_332 = arith.constant 1 : index
    %c0_333 = arith.constant 0 : index
    %c0_334 = arith.constant 0 : index
    %c0_335 = arith.constant 0 : index
    %419 = vector.load %arg7[%c1_332, %c0_333, %c0_334, %c0_335] : memref<2x4x32x8xf32, #tpu.memory_space<vmem>>, vector<1x1x32x8xf32>
    %420 = vector.shape_cast %419 : vector<1x1x32x8xf32> to vector<32x8xf32>
    %cst_336 = arith.constant dense<0.000000e+00> : vector<8x8xf32>
    %421 = tpu.matmul %418, %420, %cst_336 {dimension_numbers = #tpu.dot_dimension_numbers<[1], [0], [0], [1], [0, 0, 1, 1], [], []>} : vector<8x32xf32>, vector<32x8xf32>, vector<8x8xf32> -> vector<8x8xf32>
    %c1_337 = arith.constant 1 : index
    %c0_338 = arith.constant 0 : index
    %c0_339 = arith.constant 0 : index
    %c0_340 = arith.constant 0 : index
    %422 = vector.load %arg8[%c1_337, %c0_338, %c0_339, %c0_340] : memref<2x4x1x8xf32, #tpu.memory_space<vmem>>, vector<1x1x1x8xf32>
    %423 = vector.shape_cast %422 : vector<1x1x1x8xf32> to vector<1x8xf32>
    %424 = vector.broadcast %423 : vector<1x8xf32> to vector<8x8xf32>
    %425 = arith.addf %421, %424 : vector<8x8xf32>
    %c1_341 = arith.constant 1 : index
    %c0_342 = arith.constant 0 : index
    %c0_343 = arith.constant 0 : index
    %c0_344 = arith.constant 0 : index
    %426 = vector.load %arg9[%c1_341, %c0_342, %c0_343, %c0_344] : memref<2x4x32x8xf32, #tpu.memory_space<vmem>>, vector<1x1x32x8xf32>
    %427 = vector.shape_cast %426 : vector<1x1x32x8xf32> to vector<32x8xf32>
    %cst_345 = arith.constant dense<0.000000e+00> : vector<16x8xf32>
    %428 = tpu.matmul %8, %427, %cst_345 {dimension_numbers = #tpu.dot_dimension_numbers<[1], [0], [0], [1], [0, 0, 1, 1], [], []>} : vector<16x32xf32>, vector<32x8xf32>, vector<16x8xf32> -> vector<16x8xf32>
    %c1_346 = arith.constant 1 : index
    %c0_347 = arith.constant 0 : index
    %c0_348 = arith.constant 0 : index
    %c0_349 = arith.constant 0 : index
    %429 = vector.load %arg10[%c1_346, %c0_347, %c0_348, %c0_349] : memref<2x4x1x8xf32, #tpu.memory_space<vmem>>, vector<1x1x1x8xf32>
    %430 = vector.shape_cast %429 : vector<1x1x1x8xf32> to vector<1x8xf32>
    %431 = vector.broadcast %430 : vector<1x8xf32> to vector<16x8xf32>
    %432 = arith.addf %428, %431 : vector<16x8xf32>
    %c1_350 = arith.constant 1 : index
    %c0_351 = arith.constant 0 : index
    %c0_352 = arith.constant 0 : index
    %c0_353 = arith.constant 0 : index
    %433 = vector.load %arg11[%c1_350, %c0_351, %c0_352, %c0_353] : memref<2x4x32x32xf32, #tpu.memory_space<vmem>>, vector<1x1x32x32xf32>
    %434 = vector.shape_cast %433 : vector<1x1x32x32xf32> to vector<32x32xf32>
    %cst_354 = arith.constant dense<0.000000e+00> : vector<16x32xf32>
    %435 = tpu.matmul %5, %434, %cst_354 {dimension_numbers = #tpu.dot_dimension_numbers<[1], [0], [0], [1], [0, 0, 1, 1], [], []>} : vector<16x32xf32>, vector<32x32xf32>, vector<16x32xf32> -> vector<16x32xf32>
    %c1_355 = arith.constant 1 : index
    %c0_356 = arith.constant 0 : index
    %c0_357 = arith.constant 0 : index
    %c0_358 = arith.constant 0 : index
    %436 = vector.load %arg12[%c1_355, %c0_356, %c0_357, %c0_358] : memref<2x4x1x32xf32, #tpu.memory_space<vmem>>, vector<1x1x1x32xf32>
    %437 = vector.shape_cast %436 : vector<1x1x1x32xf32> to vector<1x32xf32>
    %438 = vector.broadcast %437 : vector<1x32xf32> to vector<16x32xf32>
    %439 = arith.addf %435, %438 : vector<16x32xf32>
    %cst_359 = arith.constant dense<0.000000e+00> : vector<8x16xf32>
    %440 = tpu.matmul %425, %432, %cst_359 {dimension_numbers = #tpu.dot_dimension_numbers<[1], [1], [0], [0], [0, 0, 1, 0], [], []>} : vector<8x8xf32>, vector<16x8xf32>, vector<8x16xf32> -> vector<8x16xf32>
    %cst_360 = arith.constant dense<0xFF800000> : vector<8xf32>
    %441 = vector.multi_reduction <maximumf>, %440, %cst_360 [1] : vector<8x16xf32> to vector<8xf32>
    %442 = vector.shape_cast %441 : vector<8xf32> to vector<8x1xf32>
    %443 = vector.broadcast %442 : vector<8x1xf32> to vector<8x16xf32>
    %444 = arith.subf %440, %443 : vector<8x16xf32>
    %445 = math.exp %444 : vector<8x16xf32>
    %cst_361 = arith.constant dense<0.000000e+00> : vector<8xf32>
    %446 = vector.multi_reduction <add>, %445, %cst_361 [1] : vector<8x16xf32> to vector<8xf32>
    %447 = vector.shape_cast %446 : vector<8xf32> to vector<8x1xf32>
    %448 = vector.broadcast %447 : vector<8x1xf32> to vector<8x16xf32>
    %449 = arith.divf %445, %448 : vector<8x16xf32>
    %cst_362 = arith.constant dense<0.000000e+00> : vector<8x32xf32>
    %450 = tpu.matmul %449, %439, %cst_362 {dimension_numbers = #tpu.dot_dimension_numbers<[1], [0], [0], [1], [0, 0, 1, 1], [], []>} : vector<8x16xf32>, vector<16x32xf32>, vector<8x32xf32> -> vector<8x32xf32>
    %c1_363 = arith.constant 1 : index
    %c1_364 = arith.constant 1 : index
    %c0_365 = arith.constant 0 : index
    %c0_366 = arith.constant 0 : index
    %451 = vector.load %arg7[%c1_363, %c1_364, %c0_365, %c0_366] : memref<2x4x32x8xf32, #tpu.memory_space<vmem>>, vector<1x1x32x8xf32>
    %452 = vector.shape_cast %451 : vector<1x1x32x8xf32> to vector<32x8xf32>
    %cst_367 = arith.constant dense<0.000000e+00> : vector<8x8xf32>
    %453 = tpu.matmul %418, %452, %cst_367 {dimension_numbers = #tpu.dot_dimension_numbers<[1], [0], [0], [1], [0, 0, 1, 1], [], []>} : vector<8x32xf32>, vector<32x8xf32>, vector<8x8xf32> -> vector<8x8xf32>
    %c1_368 = arith.constant 1 : index
    %c1_369 = arith.constant 1 : index
    %c0_370 = arith.constant 0 : index
    %c0_371 = arith.constant 0 : index
    %454 = vector.load %arg8[%c1_368, %c1_369, %c0_370, %c0_371] : memref<2x4x1x8xf32, #tpu.memory_space<vmem>>, vector<1x1x1x8xf32>
    %455 = vector.shape_cast %454 : vector<1x1x1x8xf32> to vector<1x8xf32>
    %456 = vector.broadcast %455 : vector<1x8xf32> to vector<8x8xf32>
    %457 = arith.addf %453, %456 : vector<8x8xf32>
    %c1_372 = arith.constant 1 : index
    %c1_373 = arith.constant 1 : index
    %c0_374 = arith.constant 0 : index
    %c0_375 = arith.constant 0 : index
    %458 = vector.load %arg9[%c1_372, %c1_373, %c0_374, %c0_375] : memref<2x4x32x8xf32, #tpu.memory_space<vmem>>, vector<1x1x32x8xf32>
    %459 = vector.shape_cast %458 : vector<1x1x32x8xf32> to vector<32x8xf32>
    %cst_376 = arith.constant dense<0.000000e+00> : vector<16x8xf32>
    %460 = tpu.matmul %8, %459, %cst_376 {dimension_numbers = #tpu.dot_dimension_numbers<[1], [0], [0], [1], [0, 0, 1, 1], [], []>} : vector<16x32xf32>, vector<32x8xf32>, vector<16x8xf32> -> vector<16x8xf32>
    %c1_377 = arith.constant 1 : index
    %c1_378 = arith.constant 1 : index
    %c0_379 = arith.constant 0 : index
    %c0_380 = arith.constant 0 : index
    %461 = vector.load %arg10[%c1_377, %c1_378, %c0_379, %c0_380] : memref<2x4x1x8xf32, #tpu.memory_space<vmem>>, vector<1x1x1x8xf32>
    %462 = vector.shape_cast %461 : vector<1x1x1x8xf32> to vector<1x8xf32>
    %463 = vector.broadcast %462 : vector<1x8xf32> to vector<16x8xf32>
    %464 = arith.addf %460, %463 : vector<16x8xf32>
    %c1_381 = arith.constant 1 : index
    %c1_382 = arith.constant 1 : index
    %c0_383 = arith.constant 0 : index
    %c0_384 = arith.constant 0 : index
    %465 = vector.load %arg11[%c1_381, %c1_382, %c0_383, %c0_384] : memref<2x4x32x32xf32, #tpu.memory_space<vmem>>, vector<1x1x32x32xf32>
    %466 = vector.shape_cast %465 : vector<1x1x32x32xf32> to vector<32x32xf32>
    %cst_385 = arith.constant dense<0.000000e+00> : vector<16x32xf32>
    %467 = tpu.matmul %5, %466, %cst_385 {dimension_numbers = #tpu.dot_dimension_numbers<[1], [0], [0], [1], [0, 0, 1, 1], [], []>} : vector<16x32xf32>, vector<32x32xf32>, vector<16x32xf32> -> vector<16x32xf32>
    %c1_386 = arith.constant 1 : index
    %c1_387 = arith.constant 1 : index
    %c0_388 = arith.constant 0 : index
    %c0_389 = arith.constant 0 : index
    %468 = vector.load %arg12[%c1_386, %c1_387, %c0_388, %c0_389] : memref<2x4x1x32xf32, #tpu.memory_space<vmem>>, vector<1x1x1x32xf32>
    %469 = vector.shape_cast %468 : vector<1x1x1x32xf32> to vector<1x32xf32>
    %470 = vector.broadcast %469 : vector<1x32xf32> to vector<16x32xf32>
    %471 = arith.addf %467, %470 : vector<16x32xf32>
    %cst_390 = arith.constant dense<0.000000e+00> : vector<8x16xf32>
    %472 = tpu.matmul %457, %464, %cst_390 {dimension_numbers = #tpu.dot_dimension_numbers<[1], [1], [0], [0], [0, 0, 1, 0], [], []>} : vector<8x8xf32>, vector<16x8xf32>, vector<8x16xf32> -> vector<8x16xf32>
    %cst_391 = arith.constant dense<0xFF800000> : vector<8xf32>
    %473 = vector.multi_reduction <maximumf>, %472, %cst_391 [1] : vector<8x16xf32> to vector<8xf32>
    %474 = vector.shape_cast %473 : vector<8xf32> to vector<8x1xf32>
    %475 = vector.broadcast %474 : vector<8x1xf32> to vector<8x16xf32>
    %476 = arith.subf %472, %475 : vector<8x16xf32>
    %477 = math.exp %476 : vector<8x16xf32>
    %cst_392 = arith.constant dense<0.000000e+00> : vector<8xf32>
    %478 = vector.multi_reduction <add>, %477, %cst_392 [1] : vector<8x16xf32> to vector<8xf32>
    %479 = vector.shape_cast %478 : vector<8xf32> to vector<8x1xf32>
    %480 = vector.broadcast %479 : vector<8x1xf32> to vector<8x16xf32>
    %481 = arith.divf %477, %480 : vector<8x16xf32>
    %cst_393 = arith.constant dense<0.000000e+00> : vector<8x32xf32>
    %482 = tpu.matmul %481, %471, %cst_393 {dimension_numbers = #tpu.dot_dimension_numbers<[1], [0], [0], [1], [0, 0, 1, 1], [], []>} : vector<8x16xf32>, vector<16x32xf32>, vector<8x32xf32> -> vector<8x32xf32>
    %483 = arith.addf %450, %482 : vector<8x32xf32>
    %c1_394 = arith.constant 1 : index
    %c2_395 = arith.constant 2 : index
    %c0_396 = arith.constant 0 : index
    %c0_397 = arith.constant 0 : index
    %484 = vector.load %arg7[%c1_394, %c2_395, %c0_396, %c0_397] : memref<2x4x32x8xf32, #tpu.memory_space<vmem>>, vector<1x1x32x8xf32>
    %485 = vector.shape_cast %484 : vector<1x1x32x8xf32> to vector<32x8xf32>
    %cst_398 = arith.constant dense<0.000000e+00> : vector<8x8xf32>
    %486 = tpu.matmul %418, %485, %cst_398 {dimension_numbers = #tpu.dot_dimension_numbers<[1], [0], [0], [1], [0, 0, 1, 1], [], []>} : vector<8x32xf32>, vector<32x8xf32>, vector<8x8xf32> -> vector<8x8xf32>
    %c1_399 = arith.constant 1 : index
    %c2_400 = arith.constant 2 : index
    %c0_401 = arith.constant 0 : index
    %c0_402 = arith.constant 0 : index
    %487 = vector.load %arg8[%c1_399, %c2_400, %c0_401, %c0_402] : memref<2x4x1x8xf32, #tpu.memory_space<vmem>>, vector<1x1x1x8xf32>
    %488 = vector.shape_cast %487 : vector<1x1x1x8xf32> to vector<1x8xf32>
    %489 = vector.broadcast %488 : vector<1x8xf32> to vector<8x8xf32>
    %490 = arith.addf %486, %489 : vector<8x8xf32>
    %c1_403 = arith.constant 1 : index
    %c2_404 = arith.constant 2 : index
    %c0_405 = arith.constant 0 : index
    %c0_406 = arith.constant 0 : index
    %491 = vector.load %arg9[%c1_403, %c2_404, %c0_405, %c0_406] : memref<2x4x32x8xf32, #tpu.memory_space<vmem>>, vector<1x1x32x8xf32>
    %492 = vector.shape_cast %491 : vector<1x1x32x8xf32> to vector<32x8xf32>
    %cst_407 = arith.constant dense<0.000000e+00> : vector<16x8xf32>
    %493 = tpu.matmul %8, %492, %cst_407 {dimension_numbers = #tpu.dot_dimension_numbers<[1], [0], [0], [1], [0, 0, 1, 1], [], []>} : vector<16x32xf32>, vector<32x8xf32>, vector<16x8xf32> -> vector<16x8xf32>
    %c1_408 = arith.constant 1 : index
    %c2_409 = arith.constant 2 : index
    %c0_410 = arith.constant 0 : index
    %c0_411 = arith.constant 0 : index
    %494 = vector.load %arg10[%c1_408, %c2_409, %c0_410, %c0_411] : memref<2x4x1x8xf32, #tpu.memory_space<vmem>>, vector<1x1x1x8xf32>
    %495 = vector.shape_cast %494 : vector<1x1x1x8xf32> to vector<1x8xf32>
    %496 = vector.broadcast %495 : vector<1x8xf32> to vector<16x8xf32>
    %497 = arith.addf %493, %496 : vector<16x8xf32>
    %c1_412 = arith.constant 1 : index
    %c2_413 = arith.constant 2 : index
    %c0_414 = arith.constant 0 : index
    %c0_415 = arith.constant 0 : index
    %498 = vector.load %arg11[%c1_412, %c2_413, %c0_414, %c0_415] : memref<2x4x32x32xf32, #tpu.memory_space<vmem>>, vector<1x1x32x32xf32>
    %499 = vector.shape_cast %498 : vector<1x1x32x32xf32> to vector<32x32xf32>
    %cst_416 = arith.constant dense<0.000000e+00> : vector<16x32xf32>
    %500 = tpu.matmul %5, %499, %cst_416 {dimension_numbers = #tpu.dot_dimension_numbers<[1], [0], [0], [1], [0, 0, 1, 1], [], []>} : vector<16x32xf32>, vector<32x32xf32>, vector<16x32xf32> -> vector<16x32xf32>
    %c1_417 = arith.constant 1 : index
    %c2_418 = arith.constant 2 : index
    %c0_419 = arith.constant 0 : index
    %c0_420 = arith.constant 0 : index
    %501 = vector.load %arg12[%c1_417, %c2_418, %c0_419, %c0_420] : memref<2x4x1x32xf32, #tpu.memory_space<vmem>>, vector<1x1x1x32xf32>
    %502 = vector.shape_cast %501 : vector<1x1x1x32xf32> to vector<1x32xf32>
    %503 = vector.broadcast %502 : vector<1x32xf32> to vector<16x32xf32>
    %504 = arith.addf %500, %503 : vector<16x32xf32>
    %cst_421 = arith.constant dense<0.000000e+00> : vector<8x16xf32>
    %505 = tpu.matmul %490, %497, %cst_421 {dimension_numbers = #tpu.dot_dimension_numbers<[1], [1], [0], [0], [0, 0, 1, 0], [], []>} : vector<8x8xf32>, vector<16x8xf32>, vector<8x16xf32> -> vector<8x16xf32>
    %cst_422 = arith.constant dense<0xFF800000> : vector<8xf32>
    %506 = vector.multi_reduction <maximumf>, %505, %cst_422 [1] : vector<8x16xf32> to vector<8xf32>
    %507 = vector.shape_cast %506 : vector<8xf32> to vector<8x1xf32>
    %508 = vector.broadcast %507 : vector<8x1xf32> to vector<8x16xf32>
    %509 = arith.subf %505, %508 : vector<8x16xf32>
    %510 = math.exp %509 : vector<8x16xf32>
    %cst_423 = arith.constant dense<0.000000e+00> : vector<8xf32>
    %511 = vector.multi_reduction <add>, %510, %cst_423 [1] : vector<8x16xf32> to vector<8xf32>
    %512 = vector.shape_cast %511 : vector<8xf32> to vector<8x1xf32>
    %513 = vector.broadcast %512 : vector<8x1xf32> to vector<8x16xf32>
    %514 = arith.divf %510, %513 : vector<8x16xf32>
    %cst_424 = arith.constant dense<0.000000e+00> : vector<8x32xf32>
    %515 = tpu.matmul %514, %504, %cst_424 {dimension_numbers = #tpu.dot_dimension_numbers<[1], [0], [0], [1], [0, 0, 1, 1], [], []>} : vector<8x16xf32>, vector<16x32xf32>, vector<8x32xf32> -> vector<8x32xf32>
    %516 = arith.addf %483, %515 : vector<8x32xf32>
    %c1_425 = arith.constant 1 : index
    %c3_426 = arith.constant 3 : index
    %c0_427 = arith.constant 0 : index
    %c0_428 = arith.constant 0 : index
    %517 = vector.load %arg7[%c1_425, %c3_426, %c0_427, %c0_428] : memref<2x4x32x8xf32, #tpu.memory_space<vmem>>, vector<1x1x32x8xf32>
    %518 = vector.shape_cast %517 : vector<1x1x32x8xf32> to vector<32x8xf32>
    %cst_429 = arith.constant dense<0.000000e+00> : vector<8x8xf32>
    %519 = tpu.matmul %418, %518, %cst_429 {dimension_numbers = #tpu.dot_dimension_numbers<[1], [0], [0], [1], [0, 0, 1, 1], [], []>} : vector<8x32xf32>, vector<32x8xf32>, vector<8x8xf32> -> vector<8x8xf32>
    %c1_430 = arith.constant 1 : index
    %c3_431 = arith.constant 3 : index
    %c0_432 = arith.constant 0 : index
    %c0_433 = arith.constant 0 : index
    %520 = vector.load %arg8[%c1_430, %c3_431, %c0_432, %c0_433] : memref<2x4x1x8xf32, #tpu.memory_space<vmem>>, vector<1x1x1x8xf32>
    %521 = vector.shape_cast %520 : vector<1x1x1x8xf32> to vector<1x8xf32>
    %522 = vector.broadcast %521 : vector<1x8xf32> to vector<8x8xf32>
    %523 = arith.addf %519, %522 : vector<8x8xf32>
    %c1_434 = arith.constant 1 : index
    %c3_435 = arith.constant 3 : index
    %c0_436 = arith.constant 0 : index
    %c0_437 = arith.constant 0 : index
    %524 = vector.load %arg9[%c1_434, %c3_435, %c0_436, %c0_437] : memref<2x4x32x8xf32, #tpu.memory_space<vmem>>, vector<1x1x32x8xf32>
    %525 = vector.shape_cast %524 : vector<1x1x32x8xf32> to vector<32x8xf32>
    %cst_438 = arith.constant dense<0.000000e+00> : vector<16x8xf32>
    %526 = tpu.matmul %8, %525, %cst_438 {dimension_numbers = #tpu.dot_dimension_numbers<[1], [0], [0], [1], [0, 0, 1, 1], [], []>} : vector<16x32xf32>, vector<32x8xf32>, vector<16x8xf32> -> vector<16x8xf32>
    %c1_439 = arith.constant 1 : index
    %c3_440 = arith.constant 3 : index
    %c0_441 = arith.constant 0 : index
    %c0_442 = arith.constant 0 : index
    %527 = vector.load %arg10[%c1_439, %c3_440, %c0_441, %c0_442] : memref<2x4x1x8xf32, #tpu.memory_space<vmem>>, vector<1x1x1x8xf32>
    %528 = vector.shape_cast %527 : vector<1x1x1x8xf32> to vector<1x8xf32>
    %529 = vector.broadcast %528 : vector<1x8xf32> to vector<16x8xf32>
    %530 = arith.addf %526, %529 : vector<16x8xf32>
    %c1_443 = arith.constant 1 : index
    %c3_444 = arith.constant 3 : index
    %c0_445 = arith.constant 0 : index
    %c0_446 = arith.constant 0 : index
    %531 = vector.load %arg11[%c1_443, %c3_444, %c0_445, %c0_446] : memref<2x4x32x32xf32, #tpu.memory_space<vmem>>, vector<1x1x32x32xf32>
    %532 = vector.shape_cast %531 : vector<1x1x32x32xf32> to vector<32x32xf32>
    %cst_447 = arith.constant dense<0.000000e+00> : vector<16x32xf32>
    %533 = tpu.matmul %5, %532, %cst_447 {dimension_numbers = #tpu.dot_dimension_numbers<[1], [0], [0], [1], [0, 0, 1, 1], [], []>} : vector<16x32xf32>, vector<32x32xf32>, vector<16x32xf32> -> vector<16x32xf32>
    %c1_448 = arith.constant 1 : index
    %c3_449 = arith.constant 3 : index
    %c0_450 = arith.constant 0 : index
    %c0_451 = arith.constant 0 : index
    %534 = vector.load %arg12[%c1_448, %c3_449, %c0_450, %c0_451] : memref<2x4x1x32xf32, #tpu.memory_space<vmem>>, vector<1x1x1x32xf32>
    %535 = vector.shape_cast %534 : vector<1x1x1x32xf32> to vector<1x32xf32>
    %536 = vector.broadcast %535 : vector<1x32xf32> to vector<16x32xf32>
    %537 = arith.addf %533, %536 : vector<16x32xf32>
    %cst_452 = arith.constant dense<0.000000e+00> : vector<8x16xf32>
    %538 = tpu.matmul %523, %530, %cst_452 {dimension_numbers = #tpu.dot_dimension_numbers<[1], [1], [0], [0], [0, 0, 1, 0], [], []>} : vector<8x8xf32>, vector<16x8xf32>, vector<8x16xf32> -> vector<8x16xf32>
    %cst_453 = arith.constant dense<0xFF800000> : vector<8xf32>
    %539 = vector.multi_reduction <maximumf>, %538, %cst_453 [1] : vector<8x16xf32> to vector<8xf32>
    %540 = vector.shape_cast %539 : vector<8xf32> to vector<8x1xf32>
    %541 = vector.broadcast %540 : vector<8x1xf32> to vector<8x16xf32>
    %542 = arith.subf %538, %541 : vector<8x16xf32>
    %543 = math.exp %542 : vector<8x16xf32>
    %cst_454 = arith.constant dense<0.000000e+00> : vector<8xf32>
    %544 = vector.multi_reduction <add>, %543, %cst_454 [1] : vector<8x16xf32> to vector<8xf32>
    %545 = vector.shape_cast %544 : vector<8xf32> to vector<8x1xf32>
    %546 = vector.broadcast %545 : vector<8x1xf32> to vector<8x16xf32>
    %547 = arith.divf %543, %546 : vector<8x16xf32>
    %cst_455 = arith.constant dense<0.000000e+00> : vector<8x32xf32>
    %548 = tpu.matmul %547, %537, %cst_455 {dimension_numbers = #tpu.dot_dimension_numbers<[1], [0], [0], [1], [0, 0, 1, 1], [], []>} : vector<8x16xf32>, vector<16x32xf32>, vector<8x32xf32> -> vector<8x32xf32>
    %549 = arith.addf %516, %548 : vector<8x32xf32>
    %c1_456 = arith.constant 1 : index
    %c0_457 = arith.constant 0 : index
    %c0_458 = arith.constant 0 : index
    %550 = vector.load %arg13[%c1_456, %c0_457, %c0_458] : memref<2x1x32xf32, #tpu.memory_space<vmem>>, vector<1x1x32xf32>
    %551 = vector.shape_cast %550 : vector<1x1x32xf32> to vector<1x32xf32>
    %552 = vector.broadcast %551 : vector<1x32xf32> to vector<8x32xf32>
    %553 = arith.addf %549, %552 : vector<8x32xf32>
    %c1_459 = arith.constant 1 : index
    %c0_460 = arith.constant 0 : index
    %c0_461 = arith.constant 0 : index
    %554 = vector.load %arg14[%c1_459, %c0_460, %c0_461] : memref<2x1x32xf32, #tpu.memory_space<vmem>>, vector<1x1x32xf32>
    %555 = vector.shape_cast %554 : vector<1x1x32xf32> to vector<1x32xf32>
    %556 = vector.broadcast %555 : vector<1x32xf32> to vector<8x32xf32>
    %557 = arith.mulf %556, %553 : vector<8x32xf32>
    %558 = arith.addf %394, %557 : vector<8x32xf32>
    %c1_462 = arith.constant 1 : index
    %c0_463 = arith.constant 0 : index
    %c0_464 = arith.constant 0 : index
    %559 = vector.load %arg15[%c1_462, %c0_463, %c0_464] : memref<2x1x32xf32, #tpu.memory_space<vmem>>, vector<1x1x32xf32>
    %560 = vector.shape_cast %559 : vector<1x1x32xf32> to vector<1x32xf32>
    %c1_465 = arith.constant 1 : index
    %c0_466 = arith.constant 0 : index
    %c0_467 = arith.constant 0 : index
    %561 = vector.load %arg16[%c1_465, %c0_466, %c0_467] : memref<2x1x32xf32, #tpu.memory_space<vmem>>, vector<1x1x32xf32>
    %562 = vector.shape_cast %561 : vector<1x1x32xf32> to vector<1x32xf32>
    %cst_468 = arith.constant dense<0.000000e+00> : vector<8xf32>
    %563 = vector.multi_reduction <add>, %558, %cst_468 [1] : vector<8x32xf32> to vector<8xf32>
    %564 = vector.shape_cast %563 : vector<8xf32> to vector<8x1xf32>
    %cst_469 = arith.constant 3.200000e+01 : f32
    %565 = vector.broadcast %cst_469 : f32 to vector<8x1xf32>
    %566 = arith.divf %564, %565 : vector<8x1xf32>
    %567 = vector.broadcast %566 : vector<8x1xf32> to vector<8x32xf32>
    %568 = arith.subf %558, %567 : vector<8x32xf32>
    %569 = arith.mulf %568, %568 : vector<8x32xf32>
    %cst_470 = arith.constant dense<0.000000e+00> : vector<8xf32>
    %570 = vector.multi_reduction <add>, %569, %cst_470 [1] : vector<8x32xf32> to vector<8xf32>
    %571 = vector.shape_cast %570 : vector<8xf32> to vector<8x1xf32>
    %cst_471 = arith.constant 3.200000e+01 : f32
    %572 = vector.broadcast %cst_471 : f32 to vector<8x1xf32>
    %573 = arith.divf %571, %572 : vector<8x1xf32>
    %cst_472 = arith.constant 9.99999974E-6 : f32
    %574 = vector.broadcast %cst_472 : f32 to vector<8x1xf32>
    %575 = arith.addf %573, %574 : vector<8x1xf32>
    %576 = math.rsqrt %575 : vector<8x1xf32>
    %577 = vector.broadcast %576 : vector<8x1xf32> to vector<8x32xf32>
    %578 = arith.mulf %568, %577 : vector<8x32xf32>
    %579 = vector.broadcast %560 : vector<1x32xf32> to vector<8x32xf32>
    %580 = arith.mulf %578, %579 : vector<8x32xf32>
    %581 = vector.broadcast %562 : vector<1x32xf32> to vector<8x32xf32>
    %582 = arith.addf %580, %581 : vector<8x32xf32>
    %c1_473 = arith.constant 1 : index
    %c0_474 = arith.constant 0 : index
    %c0_475 = arith.constant 0 : index
    %c0_476 = arith.constant 0 : index
    %583 = vector.load %arg17[%c1_473, %c0_474, %c0_475, %c0_476] : memref<2x4x32x8xf32, #tpu.memory_space<vmem>>, vector<1x1x32x8xf32>
    %584 = vector.shape_cast %583 : vector<1x1x32x8xf32> to vector<32x8xf32>
    %cst_477 = arith.constant dense<0.000000e+00> : vector<8x8xf32>
    %585 = tpu.matmul %582, %584, %cst_477 {dimension_numbers = #tpu.dot_dimension_numbers<[1], [0], [0], [1], [0, 0, 1, 1], [], []>} : vector<8x32xf32>, vector<32x8xf32>, vector<8x8xf32> -> vector<8x8xf32>
    %c1_478 = arith.constant 1 : index
    %c0_479 = arith.constant 0 : index
    %c0_480 = arith.constant 0 : index
    %c0_481 = arith.constant 0 : index
    %586 = vector.load %arg18[%c1_478, %c0_479, %c0_480, %c0_481] : memref<2x4x1x8xf32, #tpu.memory_space<vmem>>, vector<1x1x1x8xf32>
    %587 = vector.shape_cast %586 : vector<1x1x1x8xf32> to vector<1x8xf32>
    %588 = vector.broadcast %587 : vector<1x8xf32> to vector<8x8xf32>
    %589 = arith.addf %585, %588 : vector<8x8xf32>
    %c1_482 = arith.constant 1 : index
    %c0_483 = arith.constant 0 : index
    %c0_484 = arith.constant 0 : index
    %c0_485 = arith.constant 0 : index
    %590 = vector.load %arg19[%c1_482, %c0_483, %c0_484, %c0_485] : memref<2x4x32x8xf32, #tpu.memory_space<vmem>>, vector<1x1x32x8xf32>
    %591 = vector.shape_cast %590 : vector<1x1x32x8xf32> to vector<32x8xf32>
    %cst_486 = arith.constant dense<0.000000e+00> : vector<8x8xf32>
    %592 = tpu.matmul %582, %591, %cst_486 {dimension_numbers = #tpu.dot_dimension_numbers<[1], [0], [0], [1], [0, 0, 1, 1], [], []>} : vector<8x32xf32>, vector<32x8xf32>, vector<8x8xf32> -> vector<8x8xf32>
    %c1_487 = arith.constant 1 : index
    %c0_488 = arith.constant 0 : index
    %c0_489 = arith.constant 0 : index
    %c0_490 = arith.constant 0 : index
    %593 = vector.load %arg20[%c1_487, %c0_488, %c0_489, %c0_490] : memref<2x4x1x8xf32, #tpu.memory_space<vmem>>, vector<1x1x1x8xf32>
    %594 = vector.shape_cast %593 : vector<1x1x1x8xf32> to vector<1x8xf32>
    %595 = vector.broadcast %594 : vector<1x8xf32> to vector<8x8xf32>
    %596 = arith.addf %592, %595 : vector<8x8xf32>
    %c1_491 = arith.constant 1 : index
    %c0_492 = arith.constant 0 : index
    %c0_493 = arith.constant 0 : index
    %c0_494 = arith.constant 0 : index
    %597 = vector.load %arg21[%c1_491, %c0_492, %c0_493, %c0_494] : memref<2x4x32x32xf32, #tpu.memory_space<vmem>>, vector<1x1x32x32xf32>
    %598 = vector.shape_cast %597 : vector<1x1x32x32xf32> to vector<32x32xf32>
    %cst_495 = arith.constant dense<0.000000e+00> : vector<8x32xf32>
    %599 = tpu.matmul %582, %598, %cst_495 {dimension_numbers = #tpu.dot_dimension_numbers<[1], [0], [0], [1], [0, 0, 1, 1], [], []>} : vector<8x32xf32>, vector<32x32xf32>, vector<8x32xf32> -> vector<8x32xf32>
    %c1_496 = arith.constant 1 : index
    %c0_497 = arith.constant 0 : index
    %c0_498 = arith.constant 0 : index
    %c0_499 = arith.constant 0 : index
    %600 = vector.load %arg22[%c1_496, %c0_497, %c0_498, %c0_499] : memref<2x4x1x32xf32, #tpu.memory_space<vmem>>, vector<1x1x1x32xf32>
    %601 = vector.shape_cast %600 : vector<1x1x1x32xf32> to vector<1x32xf32>
    %602 = vector.broadcast %601 : vector<1x32xf32> to vector<8x32xf32>
    %603 = arith.addf %599, %602 : vector<8x32xf32>
    %cst_500 = arith.constant dense<0.000000e+00> : vector<8x8xf32>
    %604 = tpu.matmul %589, %596, %cst_500 {dimension_numbers = #tpu.dot_dimension_numbers<[1], [1], [0], [0], [0, 0, 1, 0], [], []>} : vector<8x8xf32>, vector<8x8xf32>, vector<8x8xf32> -> vector<8x8xf32>
    %cst_501 = arith.constant dense<0xFF800000> : vector<8xf32>
    %605 = vector.multi_reduction <maximumf>, %604, %cst_501 [1] : vector<8x8xf32> to vector<8xf32>
    %606 = vector.shape_cast %605 : vector<8xf32> to vector<8x1xf32>
    %607 = vector.broadcast %606 : vector<8x1xf32> to vector<8x8xf32>
    %608 = arith.subf %604, %607 : vector<8x8xf32>
    %609 = math.exp %608 : vector<8x8xf32>
    %cst_502 = arith.constant dense<0.000000e+00> : vector<8xf32>
    %610 = vector.multi_reduction <add>, %609, %cst_502 [1] : vector<8x8xf32> to vector<8xf32>
    %611 = vector.shape_cast %610 : vector<8xf32> to vector<8x1xf32>
    %612 = vector.broadcast %611 : vector<8x1xf32> to vector<8x8xf32>
    %613 = arith.divf %609, %612 : vector<8x8xf32>
    %cst_503 = arith.constant dense<0.000000e+00> : vector<8x32xf32>
    %614 = tpu.matmul %613, %603, %cst_503 {dimension_numbers = #tpu.dot_dimension_numbers<[1], [0], [0], [1], [0, 0, 1, 1], [], []>} : vector<8x8xf32>, vector<8x32xf32>, vector<8x32xf32> -> vector<8x32xf32>
    %c1_504 = arith.constant 1 : index
    %c1_505 = arith.constant 1 : index
    %c0_506 = arith.constant 0 : index
    %c0_507 = arith.constant 0 : index
    %615 = vector.load %arg17[%c1_504, %c1_505, %c0_506, %c0_507] : memref<2x4x32x8xf32, #tpu.memory_space<vmem>>, vector<1x1x32x8xf32>
    %616 = vector.shape_cast %615 : vector<1x1x32x8xf32> to vector<32x8xf32>
    %cst_508 = arith.constant dense<0.000000e+00> : vector<8x8xf32>
    %617 = tpu.matmul %582, %616, %cst_508 {dimension_numbers = #tpu.dot_dimension_numbers<[1], [0], [0], [1], [0, 0, 1, 1], [], []>} : vector<8x32xf32>, vector<32x8xf32>, vector<8x8xf32> -> vector<8x8xf32>
    %c1_509 = arith.constant 1 : index
    %c1_510 = arith.constant 1 : index
    %c0_511 = arith.constant 0 : index
    %c0_512 = arith.constant 0 : index
    %618 = vector.load %arg18[%c1_509, %c1_510, %c0_511, %c0_512] : memref<2x4x1x8xf32, #tpu.memory_space<vmem>>, vector<1x1x1x8xf32>
    %619 = vector.shape_cast %618 : vector<1x1x1x8xf32> to vector<1x8xf32>
    %620 = vector.broadcast %619 : vector<1x8xf32> to vector<8x8xf32>
    %621 = arith.addf %617, %620 : vector<8x8xf32>
    %c1_513 = arith.constant 1 : index
    %c1_514 = arith.constant 1 : index
    %c0_515 = arith.constant 0 : index
    %c0_516 = arith.constant 0 : index
    %622 = vector.load %arg19[%c1_513, %c1_514, %c0_515, %c0_516] : memref<2x4x32x8xf32, #tpu.memory_space<vmem>>, vector<1x1x32x8xf32>
    %623 = vector.shape_cast %622 : vector<1x1x32x8xf32> to vector<32x8xf32>
    %cst_517 = arith.constant dense<0.000000e+00> : vector<8x8xf32>
    %624 = tpu.matmul %582, %623, %cst_517 {dimension_numbers = #tpu.dot_dimension_numbers<[1], [0], [0], [1], [0, 0, 1, 1], [], []>} : vector<8x32xf32>, vector<32x8xf32>, vector<8x8xf32> -> vector<8x8xf32>
    %c1_518 = arith.constant 1 : index
    %c1_519 = arith.constant 1 : index
    %c0_520 = arith.constant 0 : index
    %c0_521 = arith.constant 0 : index
    %625 = vector.load %arg20[%c1_518, %c1_519, %c0_520, %c0_521] : memref<2x4x1x8xf32, #tpu.memory_space<vmem>>, vector<1x1x1x8xf32>
    %626 = vector.shape_cast %625 : vector<1x1x1x8xf32> to vector<1x8xf32>
    %627 = vector.broadcast %626 : vector<1x8xf32> to vector<8x8xf32>
    %628 = arith.addf %624, %627 : vector<8x8xf32>
    %c1_522 = arith.constant 1 : index
    %c1_523 = arith.constant 1 : index
    %c0_524 = arith.constant 0 : index
    %c0_525 = arith.constant 0 : index
    %629 = vector.load %arg21[%c1_522, %c1_523, %c0_524, %c0_525] : memref<2x4x32x32xf32, #tpu.memory_space<vmem>>, vector<1x1x32x32xf32>
    %630 = vector.shape_cast %629 : vector<1x1x32x32xf32> to vector<32x32xf32>
    %cst_526 = arith.constant dense<0.000000e+00> : vector<8x32xf32>
    %631 = tpu.matmul %582, %630, %cst_526 {dimension_numbers = #tpu.dot_dimension_numbers<[1], [0], [0], [1], [0, 0, 1, 1], [], []>} : vector<8x32xf32>, vector<32x32xf32>, vector<8x32xf32> -> vector<8x32xf32>
    %c1_527 = arith.constant 1 : index
    %c1_528 = arith.constant 1 : index
    %c0_529 = arith.constant 0 : index
    %c0_530 = arith.constant 0 : index
    %632 = vector.load %arg22[%c1_527, %c1_528, %c0_529, %c0_530] : memref<2x4x1x32xf32, #tpu.memory_space<vmem>>, vector<1x1x1x32xf32>
    %633 = vector.shape_cast %632 : vector<1x1x1x32xf32> to vector<1x32xf32>
    %634 = vector.broadcast %633 : vector<1x32xf32> to vector<8x32xf32>
    %635 = arith.addf %631, %634 : vector<8x32xf32>
    %cst_531 = arith.constant dense<0.000000e+00> : vector<8x8xf32>
    %636 = tpu.matmul %621, %628, %cst_531 {dimension_numbers = #tpu.dot_dimension_numbers<[1], [1], [0], [0], [0, 0, 1, 0], [], []>} : vector<8x8xf32>, vector<8x8xf32>, vector<8x8xf32> -> vector<8x8xf32>
    %cst_532 = arith.constant dense<0xFF800000> : vector<8xf32>
    %637 = vector.multi_reduction <maximumf>, %636, %cst_532 [1] : vector<8x8xf32> to vector<8xf32>
    %638 = vector.shape_cast %637 : vector<8xf32> to vector<8x1xf32>
    %639 = vector.broadcast %638 : vector<8x1xf32> to vector<8x8xf32>
    %640 = arith.subf %636, %639 : vector<8x8xf32>
    %641 = math.exp %640 : vector<8x8xf32>
    %cst_533 = arith.constant dense<0.000000e+00> : vector<8xf32>
    %642 = vector.multi_reduction <add>, %641, %cst_533 [1] : vector<8x8xf32> to vector<8xf32>
    %643 = vector.shape_cast %642 : vector<8xf32> to vector<8x1xf32>
    %644 = vector.broadcast %643 : vector<8x1xf32> to vector<8x8xf32>
    %645 = arith.divf %641, %644 : vector<8x8xf32>
    %cst_534 = arith.constant dense<0.000000e+00> : vector<8x32xf32>
    %646 = tpu.matmul %645, %635, %cst_534 {dimension_numbers = #tpu.dot_dimension_numbers<[1], [0], [0], [1], [0, 0, 1, 1], [], []>} : vector<8x8xf32>, vector<8x32xf32>, vector<8x32xf32> -> vector<8x32xf32>
    %647 = arith.addf %614, %646 : vector<8x32xf32>
    %c1_535 = arith.constant 1 : index
    %c2_536 = arith.constant 2 : index
    %c0_537 = arith.constant 0 : index
    %c0_538 = arith.constant 0 : index
    %648 = vector.load %arg17[%c1_535, %c2_536, %c0_537, %c0_538] : memref<2x4x32x8xf32, #tpu.memory_space<vmem>>, vector<1x1x32x8xf32>
    %649 = vector.shape_cast %648 : vector<1x1x32x8xf32> to vector<32x8xf32>
    %cst_539 = arith.constant dense<0.000000e+00> : vector<8x8xf32>
    %650 = tpu.matmul %582, %649, %cst_539 {dimension_numbers = #tpu.dot_dimension_numbers<[1], [0], [0], [1], [0, 0, 1, 1], [], []>} : vector<8x32xf32>, vector<32x8xf32>, vector<8x8xf32> -> vector<8x8xf32>
    %c1_540 = arith.constant 1 : index
    %c2_541 = arith.constant 2 : index
    %c0_542 = arith.constant 0 : index
    %c0_543 = arith.constant 0 : index
    %651 = vector.load %arg18[%c1_540, %c2_541, %c0_542, %c0_543] : memref<2x4x1x8xf32, #tpu.memory_space<vmem>>, vector<1x1x1x8xf32>
    %652 = vector.shape_cast %651 : vector<1x1x1x8xf32> to vector<1x8xf32>
    %653 = vector.broadcast %652 : vector<1x8xf32> to vector<8x8xf32>
    %654 = arith.addf %650, %653 : vector<8x8xf32>
    %c1_544 = arith.constant 1 : index
    %c2_545 = arith.constant 2 : index
    %c0_546 = arith.constant 0 : index
    %c0_547 = arith.constant 0 : index
    %655 = vector.load %arg19[%c1_544, %c2_545, %c0_546, %c0_547] : memref<2x4x32x8xf32, #tpu.memory_space<vmem>>, vector<1x1x32x8xf32>
    %656 = vector.shape_cast %655 : vector<1x1x32x8xf32> to vector<32x8xf32>
    %cst_548 = arith.constant dense<0.000000e+00> : vector<8x8xf32>
    %657 = tpu.matmul %582, %656, %cst_548 {dimension_numbers = #tpu.dot_dimension_numbers<[1], [0], [0], [1], [0, 0, 1, 1], [], []>} : vector<8x32xf32>, vector<32x8xf32>, vector<8x8xf32> -> vector<8x8xf32>
    %c1_549 = arith.constant 1 : index
    %c2_550 = arith.constant 2 : index
    %c0_551 = arith.constant 0 : index
    %c0_552 = arith.constant 0 : index
    %658 = vector.load %arg20[%c1_549, %c2_550, %c0_551, %c0_552] : memref<2x4x1x8xf32, #tpu.memory_space<vmem>>, vector<1x1x1x8xf32>
    %659 = vector.shape_cast %658 : vector<1x1x1x8xf32> to vector<1x8xf32>
    %660 = vector.broadcast %659 : vector<1x8xf32> to vector<8x8xf32>
    %661 = arith.addf %657, %660 : vector<8x8xf32>
    %c1_553 = arith.constant 1 : index
    %c2_554 = arith.constant 2 : index
    %c0_555 = arith.constant 0 : index
    %c0_556 = arith.constant 0 : index
    %662 = vector.load %arg21[%c1_553, %c2_554, %c0_555, %c0_556] : memref<2x4x32x32xf32, #tpu.memory_space<vmem>>, vector<1x1x32x32xf32>
    %663 = vector.shape_cast %662 : vector<1x1x32x32xf32> to vector<32x32xf32>
    %cst_557 = arith.constant dense<0.000000e+00> : vector<8x32xf32>
    %664 = tpu.matmul %582, %663, %cst_557 {dimension_numbers = #tpu.dot_dimension_numbers<[1], [0], [0], [1], [0, 0, 1, 1], [], []>} : vector<8x32xf32>, vector<32x32xf32>, vector<8x32xf32> -> vector<8x32xf32>
    %c1_558 = arith.constant 1 : index
    %c2_559 = arith.constant 2 : index
    %c0_560 = arith.constant 0 : index
    %c0_561 = arith.constant 0 : index
    %665 = vector.load %arg22[%c1_558, %c2_559, %c0_560, %c0_561] : memref<2x4x1x32xf32, #tpu.memory_space<vmem>>, vector<1x1x1x32xf32>
    %666 = vector.shape_cast %665 : vector<1x1x1x32xf32> to vector<1x32xf32>
    %667 = vector.broadcast %666 : vector<1x32xf32> to vector<8x32xf32>
    %668 = arith.addf %664, %667 : vector<8x32xf32>
    %cst_562 = arith.constant dense<0.000000e+00> : vector<8x8xf32>
    %669 = tpu.matmul %654, %661, %cst_562 {dimension_numbers = #tpu.dot_dimension_numbers<[1], [1], [0], [0], [0, 0, 1, 0], [], []>} : vector<8x8xf32>, vector<8x8xf32>, vector<8x8xf32> -> vector<8x8xf32>
    %cst_563 = arith.constant dense<0xFF800000> : vector<8xf32>
    %670 = vector.multi_reduction <maximumf>, %669, %cst_563 [1] : vector<8x8xf32> to vector<8xf32>
    %671 = vector.shape_cast %670 : vector<8xf32> to vector<8x1xf32>
    %672 = vector.broadcast %671 : vector<8x1xf32> to vector<8x8xf32>
    %673 = arith.subf %669, %672 : vector<8x8xf32>
    %674 = math.exp %673 : vector<8x8xf32>
    %cst_564 = arith.constant dense<0.000000e+00> : vector<8xf32>
    %675 = vector.multi_reduction <add>, %674, %cst_564 [1] : vector<8x8xf32> to vector<8xf32>
    %676 = vector.shape_cast %675 : vector<8xf32> to vector<8x1xf32>
    %677 = vector.broadcast %676 : vector<8x1xf32> to vector<8x8xf32>
    %678 = arith.divf %674, %677 : vector<8x8xf32>
    %cst_565 = arith.constant dense<0.000000e+00> : vector<8x32xf32>
    %679 = tpu.matmul %678, %668, %cst_565 {dimension_numbers = #tpu.dot_dimension_numbers<[1], [0], [0], [1], [0, 0, 1, 1], [], []>} : vector<8x8xf32>, vector<8x32xf32>, vector<8x32xf32> -> vector<8x32xf32>
    %680 = arith.addf %647, %679 : vector<8x32xf32>
    %c1_566 = arith.constant 1 : index
    %c3_567 = arith.constant 3 : index
    %c0_568 = arith.constant 0 : index
    %c0_569 = arith.constant 0 : index
    %681 = vector.load %arg17[%c1_566, %c3_567, %c0_568, %c0_569] : memref<2x4x32x8xf32, #tpu.memory_space<vmem>>, vector<1x1x32x8xf32>
    %682 = vector.shape_cast %681 : vector<1x1x32x8xf32> to vector<32x8xf32>
    %cst_570 = arith.constant dense<0.000000e+00> : vector<8x8xf32>
    %683 = tpu.matmul %582, %682, %cst_570 {dimension_numbers = #tpu.dot_dimension_numbers<[1], [0], [0], [1], [0, 0, 1, 1], [], []>} : vector<8x32xf32>, vector<32x8xf32>, vector<8x8xf32> -> vector<8x8xf32>
    %c1_571 = arith.constant 1 : index
    %c3_572 = arith.constant 3 : index
    %c0_573 = arith.constant 0 : index
    %c0_574 = arith.constant 0 : index
    %684 = vector.load %arg18[%c1_571, %c3_572, %c0_573, %c0_574] : memref<2x4x1x8xf32, #tpu.memory_space<vmem>>, vector<1x1x1x8xf32>
    %685 = vector.shape_cast %684 : vector<1x1x1x8xf32> to vector<1x8xf32>
    %686 = vector.broadcast %685 : vector<1x8xf32> to vector<8x8xf32>
    %687 = arith.addf %683, %686 : vector<8x8xf32>
    %c1_575 = arith.constant 1 : index
    %c3_576 = arith.constant 3 : index
    %c0_577 = arith.constant 0 : index
    %c0_578 = arith.constant 0 : index
    %688 = vector.load %arg19[%c1_575, %c3_576, %c0_577, %c0_578] : memref<2x4x32x8xf32, #tpu.memory_space<vmem>>, vector<1x1x32x8xf32>
    %689 = vector.shape_cast %688 : vector<1x1x32x8xf32> to vector<32x8xf32>
    %cst_579 = arith.constant dense<0.000000e+00> : vector<8x8xf32>
    %690 = tpu.matmul %582, %689, %cst_579 {dimension_numbers = #tpu.dot_dimension_numbers<[1], [0], [0], [1], [0, 0, 1, 1], [], []>} : vector<8x32xf32>, vector<32x8xf32>, vector<8x8xf32> -> vector<8x8xf32>
    %c1_580 = arith.constant 1 : index
    %c3_581 = arith.constant 3 : index
    %c0_582 = arith.constant 0 : index
    %c0_583 = arith.constant 0 : index
    %691 = vector.load %arg20[%c1_580, %c3_581, %c0_582, %c0_583] : memref<2x4x1x8xf32, #tpu.memory_space<vmem>>, vector<1x1x1x8xf32>
    %692 = vector.shape_cast %691 : vector<1x1x1x8xf32> to vector<1x8xf32>
    %693 = vector.broadcast %692 : vector<1x8xf32> to vector<8x8xf32>
    %694 = arith.addf %690, %693 : vector<8x8xf32>
    %c1_584 = arith.constant 1 : index
    %c3_585 = arith.constant 3 : index
    %c0_586 = arith.constant 0 : index
    %c0_587 = arith.constant 0 : index
    %695 = vector.load %arg21[%c1_584, %c3_585, %c0_586, %c0_587] : memref<2x4x32x32xf32, #tpu.memory_space<vmem>>, vector<1x1x32x32xf32>
    %696 = vector.shape_cast %695 : vector<1x1x32x32xf32> to vector<32x32xf32>
    %cst_588 = arith.constant dense<0.000000e+00> : vector<8x32xf32>
    %697 = tpu.matmul %582, %696, %cst_588 {dimension_numbers = #tpu.dot_dimension_numbers<[1], [0], [0], [1], [0, 0, 1, 1], [], []>} : vector<8x32xf32>, vector<32x32xf32>, vector<8x32xf32> -> vector<8x32xf32>
    %c1_589 = arith.constant 1 : index
    %c3_590 = arith.constant 3 : index
    %c0_591 = arith.constant 0 : index
    %c0_592 = arith.constant 0 : index
    %698 = vector.load %arg22[%c1_589, %c3_590, %c0_591, %c0_592] : memref<2x4x1x32xf32, #tpu.memory_space<vmem>>, vector<1x1x1x32xf32>
    %699 = vector.shape_cast %698 : vector<1x1x1x32xf32> to vector<1x32xf32>
    %700 = vector.broadcast %699 : vector<1x32xf32> to vector<8x32xf32>
    %701 = arith.addf %697, %700 : vector<8x32xf32>
    %cst_593 = arith.constant dense<0.000000e+00> : vector<8x8xf32>
    %702 = tpu.matmul %687, %694, %cst_593 {dimension_numbers = #tpu.dot_dimension_numbers<[1], [1], [0], [0], [0, 0, 1, 0], [], []>} : vector<8x8xf32>, vector<8x8xf32>, vector<8x8xf32> -> vector<8x8xf32>
    %cst_594 = arith.constant dense<0xFF800000> : vector<8xf32>
    %703 = vector.multi_reduction <maximumf>, %702, %cst_594 [1] : vector<8x8xf32> to vector<8xf32>
    %704 = vector.shape_cast %703 : vector<8xf32> to vector<8x1xf32>
    %705 = vector.broadcast %704 : vector<8x1xf32> to vector<8x8xf32>
    %706 = arith.subf %702, %705 : vector<8x8xf32>
    %707 = math.exp %706 : vector<8x8xf32>
    %cst_595 = arith.constant dense<0.000000e+00> : vector<8xf32>
    %708 = vector.multi_reduction <add>, %707, %cst_595 [1] : vector<8x8xf32> to vector<8xf32>
    %709 = vector.shape_cast %708 : vector<8xf32> to vector<8x1xf32>
    %710 = vector.broadcast %709 : vector<8x1xf32> to vector<8x8xf32>
    %711 = arith.divf %707, %710 : vector<8x8xf32>
    %cst_596 = arith.constant dense<0.000000e+00> : vector<8x32xf32>
    %712 = tpu.matmul %711, %701, %cst_596 {dimension_numbers = #tpu.dot_dimension_numbers<[1], [0], [0], [1], [0, 0, 1, 1], [], []>} : vector<8x8xf32>, vector<8x32xf32>, vector<8x32xf32> -> vector<8x32xf32>
    %713 = arith.addf %680, %712 : vector<8x32xf32>
    %c1_597 = arith.constant 1 : index
    %c0_598 = arith.constant 0 : index
    %c0_599 = arith.constant 0 : index
    %714 = vector.load %arg23[%c1_597, %c0_598, %c0_599] : memref<2x1x32xf32, #tpu.memory_space<vmem>>, vector<1x1x32xf32>
    %715 = vector.shape_cast %714 : vector<1x1x32xf32> to vector<1x32xf32>
    %716 = vector.broadcast %715 : vector<1x32xf32> to vector<8x32xf32>
    %717 = arith.addf %713, %716 : vector<8x32xf32>
    %c1_600 = arith.constant 1 : index
    %c0_601 = arith.constant 0 : index
    %c0_602 = arith.constant 0 : index
    %718 = vector.load %arg24[%c1_600, %c0_601, %c0_602] : memref<2x1x32xf32, #tpu.memory_space<vmem>>, vector<1x1x32xf32>
    %719 = vector.shape_cast %718 : vector<1x1x32xf32> to vector<1x32xf32>
    %720 = vector.broadcast %719 : vector<1x32xf32> to vector<8x32xf32>
    %721 = arith.mulf %720, %717 : vector<8x32xf32>
    %722 = arith.addf %558, %721 : vector<8x32xf32>
    %c1_603 = arith.constant 1 : index
    %c0_604 = arith.constant 0 : index
    %c0_605 = arith.constant 0 : index
    %723 = vector.load %arg25[%c1_603, %c0_604, %c0_605] : memref<2x1x32xf32, #tpu.memory_space<vmem>>, vector<1x1x32xf32>
    %724 = vector.shape_cast %723 : vector<1x1x32xf32> to vector<1x32xf32>
    %c1_606 = arith.constant 1 : index
    %c0_607 = arith.constant 0 : index
    %c0_608 = arith.constant 0 : index
    %725 = vector.load %arg26[%c1_606, %c0_607, %c0_608] : memref<2x1x32xf32, #tpu.memory_space<vmem>>, vector<1x1x32xf32>
    %726 = vector.shape_cast %725 : vector<1x1x32xf32> to vector<1x32xf32>
    %cst_609 = arith.constant dense<0.000000e+00> : vector<8xf32>
    %727 = vector.multi_reduction <add>, %722, %cst_609 [1] : vector<8x32xf32> to vector<8xf32>
    %728 = vector.shape_cast %727 : vector<8xf32> to vector<8x1xf32>
    %cst_610 = arith.constant 3.200000e+01 : f32
    %729 = vector.broadcast %cst_610 : f32 to vector<8x1xf32>
    %730 = arith.divf %728, %729 : vector<8x1xf32>
    %731 = vector.broadcast %730 : vector<8x1xf32> to vector<8x32xf32>
    %732 = arith.subf %722, %731 : vector<8x32xf32>
    %733 = arith.mulf %732, %732 : vector<8x32xf32>
    %cst_611 = arith.constant dense<0.000000e+00> : vector<8xf32>
    %734 = vector.multi_reduction <add>, %733, %cst_611 [1] : vector<8x32xf32> to vector<8xf32>
    %735 = vector.shape_cast %734 : vector<8xf32> to vector<8x1xf32>
    %cst_612 = arith.constant 3.200000e+01 : f32
    %736 = vector.broadcast %cst_612 : f32 to vector<8x1xf32>
    %737 = arith.divf %735, %736 : vector<8x1xf32>
    %cst_613 = arith.constant 9.99999974E-6 : f32
    %738 = vector.broadcast %cst_613 : f32 to vector<8x1xf32>
    %739 = arith.addf %737, %738 : vector<8x1xf32>
    %740 = math.rsqrt %739 : vector<8x1xf32>
    %741 = vector.broadcast %740 : vector<8x1xf32> to vector<8x32xf32>
    %742 = arith.mulf %732, %741 : vector<8x32xf32>
    %743 = vector.broadcast %724 : vector<1x32xf32> to vector<8x32xf32>
    %744 = arith.mulf %742, %743 : vector<8x32xf32>
    %745 = vector.broadcast %726 : vector<1x32xf32> to vector<8x32xf32>
    %746 = arith.addf %744, %745 : vector<8x32xf32>
    %c1_614 = arith.constant 1 : index
    %c0_615 = arith.constant 0 : index
    %c0_616 = arith.constant 0 : index
    %747 = vector.load %arg27[%c1_614, %c0_615, %c0_616] : memref<2x32x128xf32, #tpu.memory_space<vmem>>, vector<1x32x128xf32>
    %748 = vector.shape_cast %747 : vector<1x32x128xf32> to vector<32x128xf32>
    %cst_617 = arith.constant dense<0.000000e+00> : vector<8x128xf32>
    %749 = tpu.matmul %746, %748, %cst_617 {dimension_numbers = #tpu.dot_dimension_numbers<[1], [0], [0], [1], [0, 0, 1, 1], [], []>} : vector<8x32xf32>, vector<32x128xf32>, vector<8x128xf32> -> vector<8x128xf32>
    %c1_618 = arith.constant 1 : index
    %c0_619 = arith.constant 0 : index
    %c0_620 = arith.constant 0 : index
    %750 = vector.load %arg28[%c1_618, %c0_619, %c0_620] : memref<2x1x128xf32, #tpu.memory_space<vmem>>, vector<1x1x128xf32>
    %751 = vector.shape_cast %750 : vector<1x1x128xf32> to vector<1x128xf32>
    %752 = vector.broadcast %751 : vector<1x128xf32> to vector<8x128xf32>
    %753 = arith.addf %749, %752 : vector<8x128xf32>
    %754 = arith.mulf %753, %753 : vector<8x128xf32>
    %755 = arith.mulf %753, %754 : vector<8x128xf32>
    %cst_621 = arith.constant 4.471500e-02 : f32
    %756 = vector.broadcast %cst_621 : f32 to vector<8x128xf32>
    %757 = arith.mulf %756, %755 : vector<8x128xf32>
    %758 = arith.addf %753, %757 : vector<8x128xf32>
    %cst_622 = arith.constant 0.797884583 : f32
    %759 = vector.broadcast %cst_622 : f32 to vector<8x128xf32>
    %760 = arith.mulf %759, %758 : vector<8x128xf32>
    %761 = math.tanh %760 : vector<8x128xf32>
    %cst_623 = arith.constant 1.000000e+00 : f32
    %762 = vector.broadcast %cst_623 : f32 to vector<8x128xf32>
    %763 = arith.addf %762, %761 : vector<8x128xf32>
    %cst_624 = arith.constant 5.000000e-01 : f32
    %764 = vector.broadcast %cst_624 : f32 to vector<8x128xf32>
    %765 = arith.mulf %764, %763 : vector<8x128xf32>
    %766 = arith.mulf %753, %765 : vector<8x128xf32>
    %c1_625 = arith.constant 1 : index
    %c0_626 = arith.constant 0 : index
    %c0_627 = arith.constant 0 : index
    %767 = vector.load %arg29[%c1_625, %c0_626, %c0_627] : memref<2x128x32xf32, #tpu.memory_space<vmem>>, vector<1x128x32xf32>
    %768 = vector.shape_cast %767 : vector<1x128x32xf32> to vector<128x32xf32>
    %cst_628 = arith.constant dense<0.000000e+00> : vector<8x32xf32>
    %769 = tpu.matmul %766, %768, %cst_628 {dimension_numbers = #tpu.dot_dimension_numbers<[1], [0], [0], [1], [0, 0, 1, 1], [], []>} : vector<8x128xf32>, vector<128x32xf32>, vector<8x32xf32> -> vector<8x32xf32>
    %c1_629 = arith.constant 1 : index
    %c0_630 = arith.constant 0 : index
    %c0_631 = arith.constant 0 : index
    %770 = vector.load %arg30[%c1_629, %c0_630, %c0_631] : memref<2x1x32xf32, #tpu.memory_space<vmem>>, vector<1x1x32xf32>
    %771 = vector.shape_cast %770 : vector<1x1x32xf32> to vector<1x32xf32>
    %772 = vector.broadcast %771 : vector<1x32xf32> to vector<8x32xf32>
    %773 = arith.addf %769, %772 : vector<8x32xf32>
    %c1_632 = arith.constant 1 : index
    %c0_633 = arith.constant 0 : index
    %c0_634 = arith.constant 0 : index
    %774 = vector.load %arg31[%c1_632, %c0_633, %c0_634] : memref<2x1x32xf32, #tpu.memory_space<vmem>>, vector<1x1x32xf32>
    %775 = vector.shape_cast %774 : vector<1x1x32xf32> to vector<1x32xf32>
    %776 = vector.broadcast %775 : vector<1x32xf32> to vector<8x32xf32>
    %777 = arith.mulf %776, %773 : vector<8x32xf32>
    %778 = arith.addf %722, %777 : vector<8x32xf32>
    %c0_635 = arith.constant 0 : index
    %c0_636 = arith.constant 0 : index
    %779 = vector.load %arg32[%c0_635, %c0_636] : memref<1x32xf32, #tpu.memory_space<vmem>>, vector<1x32xf32>
    %c0_637 = arith.constant 0 : index
    %c0_638 = arith.constant 0 : index
    %780 = vector.load %arg33[%c0_637, %c0_638] : memref<1x32xf32, #tpu.memory_space<vmem>>, vector<1x32xf32>
    %cst_639 = arith.constant dense<0.000000e+00> : vector<8xf32>
    %781 = vector.multi_reduction <add>, %778, %cst_639 [1] : vector<8x32xf32> to vector<8xf32>
    %782 = vector.shape_cast %781 : vector<8xf32> to vector<8x1xf32>
    %cst_640 = arith.constant 3.200000e+01 : f32
    %783 = vector.broadcast %cst_640 : f32 to vector<8x1xf32>
    %784 = arith.divf %782, %783 : vector<8x1xf32>
    %785 = vector.broadcast %784 : vector<8x1xf32> to vector<8x32xf32>
    %786 = arith.subf %778, %785 : vector<8x32xf32>
    %787 = arith.mulf %786, %786 : vector<8x32xf32>
    %cst_641 = arith.constant dense<0.000000e+00> : vector<8xf32>
    %788 = vector.multi_reduction <add>, %787, %cst_641 [1] : vector<8x32xf32> to vector<8xf32>
    %789 = vector.shape_cast %788 : vector<8xf32> to vector<8x1xf32>
    %cst_642 = arith.constant 3.200000e+01 : f32
    %790 = vector.broadcast %cst_642 : f32 to vector<8x1xf32>
    %791 = arith.divf %789, %790 : vector<8x1xf32>
    %cst_643 = arith.constant 9.99999974E-6 : f32
    %792 = vector.broadcast %cst_643 : f32 to vector<8x1xf32>
    %793 = arith.addf %791, %792 : vector<8x1xf32>
    %794 = math.rsqrt %793 : vector<8x1xf32>
    %795 = vector.broadcast %794 : vector<8x1xf32> to vector<8x32xf32>
    %796 = arith.mulf %786, %795 : vector<8x32xf32>
    %797 = vector.broadcast %779 : vector<1x32xf32> to vector<8x32xf32>
    %798 = arith.mulf %796, %797 : vector<8x32xf32>
    %799 = vector.broadcast %780 : vector<1x32xf32> to vector<8x32xf32>
    %800 = arith.addf %798, %799 : vector<8x32xf32>
    %c0_644 = arith.constant 0 : index
    %c0_645 = arith.constant 0 : index
    %c0_646 = arith.constant 0 : index
    %801 = vector.load %arg34[%c0_644, %c0_645, %c0_646] : memref<1x8x32xf32, #tpu.memory_space<vmem>>, vector<1x8x32xf32>
    %802 = vector.shape_cast %801 : vector<1x8x32xf32> to vector<8x32xf32>
    %803 = vector.shape_cast %800 : vector<8x32xf32> to vector<1x8x32xf32>
    tpu.vector_store %arg34[%c0_644, %c0_645, %c0_646], %803 {strides = array<i32>} : memref<1x8x32xf32, #tpu.memory_space<vmem>>, vector<1x8x32xf32>,
    return
  }
  func.func @transform_0(%arg0: i32) -> (i32, i32, i32) {
    %c0_i32 = arith.constant 0 : i32
    %c0_i32_0 = arith.constant 0 : i32
    %c0_i32_1 = arith.constant 0 : i32
    return %arg0, %c0_i32, %c0_i32_0 : i32, i32, i32
  }
  func.func @transform_1(%arg0: i32) -> (i32, i32, i32) {
    %c0_i32 = arith.constant 0 : i32
    %c0_i32_0 = arith.constant 0 : i32
    %c0_i32_1 = arith.constant 0 : i32
    return %arg0, %c0_i32, %c0_i32_0 : i32, i32, i32
  }
  func.func @transform_2(%arg0: i32) -> (i32, i32, i32) {
    %c0_i32 = arith.constant 0 : i32
    %c0_i32_0 = arith.constant 0 : i32
    %c0_i32_1 = arith.constant 0 : i32
    return %arg0, %c0_i32, %c0_i32_0 : i32, i32, i32
  }
  func.func @transform_3(%arg0: i32) -> (i32, i32, i32) {
    %c0_i32 = arith.constant 0 : i32
    %c0_i32_0 = arith.constant 0 : i32
    %c0_i32_1 = arith.constant 0 : i32
    return %arg0, %c0_i32, %c0_i32_0 : i32, i32, i32
  }
  func.func @transform_4(%arg0: i32) -> (i32, i32, i32) {
    %c0_i32 = arith.constant 0 : i32
    %c0_i32_0 = arith.constant 0 : i32
    %c0_i32_1 = arith.constant 0 : i32
    %c0_i32_2 = arith.constant 0 : i32
    return %c0_i32, %c0_i32_0, %c0_i32_1 : i32, i32, i32
  }
  func.func @transform_5(%arg0: i32) -> (i32, i32, i32) {
    %c0_i32 = arith.constant 0 : i32
    %c0_i32_0 = arith.constant 0 : i32
    %c0_i32_1 = arith.constant 0 : i32
    %c0_i32_2 = arith.constant 0 : i32
    return %c0_i32, %c0_i32_0, %c0_i32_1 : i32, i32, i32
  }
  func.func @transform_6(%arg0: i32) -> (i32, i32, i32, i32) {
    %c0_i32 = arith.constant 0 : i32
    %c0_i32_0 = arith.constant 0 : i32
    %c0_i32_1 = arith.constant 0 : i32
    %c0_i32_2 = arith.constant 0 : i32
    %c0_i32_3 = arith.constant 0 : i32
    return %c0_i32, %c0_i32_0, %c0_i32_1, %c0_i32_2 : i32, i32, i32, i32
  }
  func.func @transform_7(%arg0: i32) -> (i32, i32, i32, i32) {
    %c0_i32 = arith.constant 0 : i32
    %c0_i32_0 = arith.constant 0 : i32
    %c0_i32_1 = arith.constant 0 : i32
    %c0_i32_2 = arith.constant 0 : i32
    %c0_i32_3 = arith.constant 0 : i32
    return %c0_i32, %c0_i32_0, %c0_i32_1, %c0_i32_2 : i32, i32, i32, i32
  }
  func.func @transform_8(%arg0: i32) -> (i32, i32, i32, i32) {
    %c0_i32 = arith.constant 0 : i32
    %c0_i32_0 = arith.constant 0 : i32
    %c0_i32_1 = arith.constant 0 : i32
    %c0_i32_2 = arith.constant 0 : i32
    %c0_i32_3 = arith.constant 0 : i32
    return %c0_i32, %c0_i32_0, %c0_i32_1, %c0_i32_2 : i32, i32, i32, i32
  }
  func.func @transform_9(%arg0: i32) -> (i32, i32, i32, i32) {
    %c0_i32 = arith.constant 0 : i32
    %c0_i32_0 = arith.constant 0 : i32
    %c0_i32_1 = arith.constant 0 : i32
    %c0_i32_2 = arith.constant 0 : i32
    %c0_i32_3 = arith.constant 0 : i32
    return %c0_i32, %c0_i32_0, %c0_i32_1, %c0_i32_2 : i32, i32, i32, i32
  }
  func.func @transform_10(%arg0: i32) -> (i32, i32, i32, i32) {
    %c0_i32 = arith.constant 0 : i32
    %c0_i32_0 = arith.constant 0 : i32
    %c0_i32_1 = arith.constant 0 : i32
    %c0_i32_2 = arith.constant 0 : i32
    %c0_i32_3 = arith.constant 0 : i32
    return %c0_i32, %c0_i32_0, %c0_i32_1, %c0_i32_2 : i32, i32, i32, i32
  }
  func.func @transform_11(%arg0: i32) -> (i32, i32, i32, i32) {
    %c0_i32 = arith.constant 0 : i32
    %c0_i32_0 = arith.constant 0 : i32
    %c0_i32_1 = arith.constant 0 : i32
    %c0_i32_2 = arith.constant 0 : i32
    %c0_i32_3 = arith.constant 0 : i32
    return %c0_i32, %c0_i32_0, %c0_i32_1, %c0_i32_2 : i32, i32, i32, i32
  }
  func.func @transform_12(%arg0: i32) -> (i32, i32, i32) {
    %c0_i32 = arith.constant 0 : i32
    %c0_i32_0 = arith.constant 0 : i32
    %c0_i32_1 = arith.constant 0 : i32
    %c0_i32_2 = arith.constant 0 : i32
    return %c0_i32, %c0_i32_0, %c0_i32_1 : i32, i32, i32
  }
  func.func @transform_13(%arg0: i32) -> (i32, i32, i32) {
    %c0_i32 = arith.constant 0 : i32
    %c0_i32_0 = arith.constant 0 : i32
    %c0_i32_1 = arith.constant 0 : i32
    %c0_i32_2 = arith.constant 0 : i32
    return %c0_i32, %c0_i32_0, %c0_i32_1 : i32, i32, i32
  }
  func.func @transform_14(%arg0: i32) -> (i32, i32, i32) {
    %c0_i32 = arith.constant 0 : i32
    %c0_i32_0 = arith.constant 0 : i32
    %c0_i32_1 = arith.constant 0 : i32
    %c0_i32_2 = arith.constant 0 : i32
    return %c0_i32, %c0_i32_0, %c0_i32_1 : i32, i32, i32
  }
  func.func @transform_15(%arg0: i32) -> (i32, i32, i32) {
    %c0_i32 = arith.constant 0 : i32
    %c0_i32_0 = arith.constant 0 : i32
    %c0_i32_1 = arith.constant 0 : i32
    %c0_i32_2 = arith.constant 0 : i32
    return %c0_i32, %c0_i32_0, %c0_i32_1 : i32, i32, i32
  }
  func.func @transform_16(%arg0: i32) -> (i32, i32, i32, i32) {
    %c0_i32 = arith.constant 0 : i32
    %c0_i32_0 = arith.constant 0 : i32
    %c0_i32_1 = arith.constant 0 : i32
    %c0_i32_2 = arith.constant 0 : i32
    %c0_i32_3 = arith.constant 0 : i32
    return %c0_i32, %c0_i32_0, %c0_i32_1, %c0_i32_2 : i32, i32, i32, i32
  }
  func.func @transform_17(%arg0: i32) -> (i32, i32, i32, i32) {
    %c0_i32 = arith.constant 0 : i32
    %c0_i32_0 = arith.constant 0 : i32
    %c0_i32_1 = arith.constant 0 : i32
    %c0_i32_2 = arith.constant 0 : i32
    %c0_i32_3 = arith.constant 0 : i32
    return %c0_i32, %c0_i32_0, %c0_i32_1, %c0_i32_2 : i32, i32, i32, i32
  }
  func.func @transform_18(%arg0: i32) -> (i32, i32, i32, i32) {
    %c0_i32 = arith.constant 0 : i32
    %c0_i32_0 = arith.constant 0 : i32
    %c0_i32_1 = arith.constant 0 : i32
    %c0_i32_2 = arith.constant 0 : i32
    %c0_i32_3 = arith.constant 0 : i32
    return %c0_i32, %c0_i32_0, %c0_i32_1, %c0_i32_2 : i32, i32, i32, i32
  }
  func.func @transform_19(%arg0: i32) -> (i32, i32, i32, i32) {
    %c0_i32 = arith.constant 0 : i32
    %c0_i32_0 = arith.constant 0 : i32
    %c0_i32_1 = arith.constant 0 : i32
    %c0_i32_2 = arith.constant 0 : i32
    %c0_i32_3 = arith.constant 0 : i32
    return %c0_i32, %c0_i32_0, %c0_i32_1, %c0_i32_2 : i32, i32, i32, i32
  }
  func.func @transform_20(%arg0: i32) -> (i32, i32, i32, i32) {
    %c0_i32 = arith.constant 0 : i32
    %c0_i32_0 = arith.constant 0 : i32
    %c0_i32_1 = arith.constant 0 : i32
    %c0_i32_2 = arith.constant 0 : i32
    %c0_i32_3 = arith.constant 0 : i32
    return %c0_i32, %c0_i32_0, %c0_i32_1, %c0_i32_2 : i32, i32, i32, i32
  }
  func.func @transform_21(%arg0: i32) -> (i32, i32, i32, i32) {
    %c0_i32 = arith.constant 0 : i32
    %c0_i32_0 = arith.constant 0 : i32
    %c0_i32_1 = arith.constant 0 : i32
    %c0_i32_2 = arith.constant 0 : i32
    %c0_i32_3 = arith.constant 0 : i32
    return %c0_i32, %c0_i32_0, %c0_i32_1, %c0_i32_2 : i32, i32, i32, i32
  }
  func.func @transform_22(%arg0: i32) -> (i32, i32, i32) {
    %c0_i32 = arith.constant 0 : i32
    %c0_i32_0 = arith.constant 0 : i32
    %c0_i32_1 = arith.constant 0 : i32
    %c0_i32_2 = arith.constant 0 : i32
    return %c0_i32, %c0_i32_0, %c0_i32_1 : i32, i32, i32
  }
  func.func @transform_23(%arg0: i32) -> (i32, i32, i32) {
    %c0_i32 = arith.constant 0 : i32
    %c0_i32_0 = arith.constant 0 : i32
    %c0_i32_1 = arith.constant 0 : i32
    %c0_i32_2 = arith.constant 0 : i32
    return %c0_i32, %c0_i32_0, %c0_i32_1 : i32, i32, i32
  }
  func.func @transform_24(%arg0: i32) -> (i32, i32, i32) {
    %c0_i32 = arith.constant 0 : i32
    %c0_i32_0 = arith.constant 0 : i32
    %c0_i32_1 = arith.constant 0 : i32
    %c0_i32_2 = arith.constant 0 : i32
    return %c0_i32, %c0_i32_0, %c0_i32_1 : i32, i32, i32
  }
  func.func @transform_25(%arg0: i32) -> (i32, i32, i32) {
    %c0_i32 = arith.constant 0 : i32
    %c0_i32_0 = arith.constant 0 : i32
    %c0_i32_1 = arith.constant 0 : i32
    %c0_i32_2 = arith.constant 0 : i32
    return %c0_i32, %c0_i32_0, %c0_i32_1 : i32, i32, i32
  }
  func.func @transform_26(%arg0: i32) -> (i32, i32, i32) {
    %c0_i32 = arith.constant 0 : i32
    %c0_i32_0 = arith.constant 0 : i32
    %c0_i32_1 = arith.constant 0 : i32
    %c0_i32_2 = arith.constant 0 : i32
    return %c0_i32, %c0_i32_0, %c0_i32_1 : i32, i32, i32
  }
  func.func @transform_27(%arg0: i32) -> (i32, i32, i32) {
    %c0_i32 = arith.constant 0 : i32
    %c0_i32_0 = arith.constant 0 : i32
    %c0_i32_1 = arith.constant 0 : i32
    %c0_i32_2 = arith.constant 0 : i32
    return %c0_i32, %c0_i32_0, %c0_i32_1 : i32, i32, i32
  }
  func.func @transform_28(%arg0: i32) -> (i32, i32, i32) {
    %c0_i32 = arith.constant 0 : i32
    %c0_i32_0 = arith.constant 0 : i32
    %c0_i32_1 = arith.constant 0 : i32
    %c0_i32_2 = arith.constant 0 : i32
    return %c0_i32, %c0_i32_0, %c0_i32_1 : i32, i32, i32
  }
  func.func @transform_29(%arg0: i32) -> (i32, i32, i32) {
    %c0_i32 = arith.constant 0 : i32
    %c0_i32_0 = arith.constant 0 : i32
    %c0_i32_1 = arith.constant 0 : i32
    %c0_i32_2 = arith.constant 0 : i32
    return %c0_i32, %c0_i32_0, %c0_i32_1 : i32, i32, i32
  }
  func.func @transform_30(%arg0: i32) -> (i32, i32, i32) {
    %c0_i32 = arith.constant 0 : i32
    %c0_i32_0 = arith.constant 0 : i32
    %c0_i32_1 = arith.constant 0 : i32
    %c0_i32_2 = arith.constant 0 : i32
    return %c0_i32, %c0_i32_0, %c0_i32_1 : i32, i32, i32
  }
  func.func @transform_31(%arg0: i32) -> (i32, i32) {
    %c0_i32 = arith.constant 0 : i32
    %c0_i32_0 = arith.constant 0 : i32
    %c0_i32_1 = arith.constant 0 : i32
    return %c0_i32, %c0_i32_0 : i32, i32
  }
  func.func @transform_32(%arg0: i32) -> (i32, i32) {
    %c0_i32 = arith.constant 0 : i32
    %c0_i32_0 = arith.constant 0 : i32
    %c0_i32_1 = arith.constant 0 : i32
    return %c0_i32, %c0_i32_0 : i32, i32
  }
  func.func @transform_33(%arg0: i32) -> (i32, i32, i32) {
    %c0_i32 = arith.constant 0 : i32
    %c0_i32_0 = arith.constant 0 : i32
    %c0_i32_1 = arith.constant 0 : i32
    return %arg0, %c0_i32, %c0_i32_0 : i32, i32, i32
  }
}

</mosaic_0001>

<llo_original>
// kernel: transformer_forward.1
$region0: #{transformer_forward.1}
  #allocation0 [shape = 'u32[]', space=smem, size = 0x4, offset = 0x4, fixed_abs, tag = 'smem constant byte address 0x4 - core index']
  #allocation1 [shape = 'u32[144,128]{1,0:T(1,128)}', space=vmem, size = 0x12000, scoped, tag = 'internal scratch']
  %s0 = inlined_call_operand.smem [shape: u32[34], index: -1, kind: input, shape index: {}]
  %s1 = sld [smem:[%s0]]
  %s2 = scalar_lea.smem %s0, 1
  %s3 = sld [smem:[%s2]]
  %s4 = scalar_lea.smem %s0, 2
  %s5 = sld [smem:[%s4]]
  %s6 = scalar_lea.smem %s0, 3
  %s7 = sld [smem:[%s6]]
  %s8 = scalar_lea.smem %s0, 4
  %s9 = sld [smem:[%s8]]
  %s10 = scalar_lea.smem %s0, 5
  %s11 = sld [smem:[%s10]]
  %s12 = scalar_lea.smem %s0, 6
  %s13 = sld [smem:[%s12]]
  %s14 = scalar_lea.smem %s0, 7
  %s15 = sld [smem:[%s14]]
  %s16 = scalar_lea.smem %s0, 8
  %s17 = sld [smem:[%s16]]
  %s18 = scalar_lea.smem %s0, 9
  %s19 = sld [smem:[%s18]]
  %s20 = scalar_lea.smem %s0, 10
  %s21 = sld [smem:[%s20]]
  %s22 = scalar_lea.smem %s0, 11
  %s23 = sld [smem:[%s22]]
  %s24 = scalar_lea.smem %s0, 12
  %s25 = sld [smem:[%s24]]
  %s26 = scalar_lea.smem %s0, 13
  %s27 = sld [smem:[%s26]]
  %s28 = scalar_lea.smem %s0, 14
  %s29 = sld [smem:[%s28]]
  %s30 = scalar_lea.smem %s0, 15
  %s31 = sld [smem:[%s30]]
  %s32 = scalar_lea.smem %s0, 16
  %s33 = sld [smem:[%s32]]
  %s34 = scalar_lea.smem %s0, 17
  %s35 = sld [smem:[%s34]]
  %s36 = scalar_lea.smem %s0, 18
  %s37 = sld [smem:[%s36]]
  %s38 = scalar_lea.smem %s0, 19
  %s39 = sld [smem:[%s38]]
  %s40 = scalar_lea.smem %s0, 20
  %s41 = sld [smem:[%s40]]
  %s42 = scalar_lea.smem %s0, 21
  %s43 = sld [smem:[%s42]]
  %s44 = scalar_lea.smem %s0, 22
  %s45 = sld [smem:[%s44]]
  %s46 = scalar_lea.smem %s0, 23
  %s47 = sld [smem:[%s46]]
  %s48 = scalar_lea.smem %s0, 24
  %s49 = sld [smem:[%s48]]
  %s50 = scalar_lea.smem %s0, 25
  %s51 = sld [smem:[%s50]]
  %s52 = scalar_lea.smem %s0, 26
  %s53 = sld [smem:[%s52]]
  %s54 = scalar_lea.smem %s0, 27
  %s55 = sld [smem:[%s54]]
  %s56 = scalar_lea.smem %s0, 28
  %s57 = sld [smem:[%s56]]
  %s58 = scalar_lea.smem %s0, 29
  %s59 = sld [smem:[%s58]]
  %s60 = scalar_lea.smem %s0, 30
  %s61 = sld [smem:[%s60]]
  %s62 = scalar_lea.smem %s0, 31
  %s63 = sld [smem:[%s62]]
  %s64 = scalar_lea.smem %s0, 32
  %s65 = sld [smem:[%s64]]
  %s66 = scalar_lea.smem %s0, 33
  %s67 = sld [smem:[%s66]]
  %s68 = sld [smem:[#allocation0]]
  $region165: #{transformer_forward.1} parent=0
    _
  %s70 = ssub.s32 1, %s68
  %s71 = scalar_select 0, %s70, %s68
  $region1: #{transformer_forward.1} parent=0
    #allocation2 [shape = 'u8[8192]{0}', space=vmem, size = 0x2000, scoped, tag = 'output window, operand 0']
    #allocation3 [shape = 's32[2]{0}', space=sflag, size = 0x8, scoped, tag = 'scoped memory for transformer_forward.1']
    %72 = vsyncpa [#allocation3], 0
    %s73 = scalar_lea.sflag [#allocation3], 1
    %74 = vsyncpa %s73, 0
    loop: start=0, step=1, limit=4
    $region2: #{transformer_forward.1} parent=1 // loop_pre_header
      _
    $region3: #{transformer_forward.1} parent=1 // loop_header
      %s76 = sphi 0, %s80
      %p77 = scmp.ge.s32.totalorder %s76, 4
      %s86 = sphi 0, %s88
      %s89 = sphi 0, %s86
      %s90 = sphi 0, %s89
      %s106 = sphi 0, %s90
      %s112 = sphi 0, %s114
      %s115 = sphi 0, %s112
      %s116 = sphi 0, %s115
      %s132 = sphi 0, %s116
      %s138 = sphi 0, %s140
      %s141 = sphi 0, %s138
      %s142 = sphi 0, %s141
      %s158 = sphi 0, %s142
      %s164 = sphi 0, %s166
      %s167 = sphi 0, %s164
      %s168 = sphi 0, %s167
      %s184 = sphi 0, %s168
      %s188 = sphi 0, %s188
      %s190 = sphi 0, %s188
      %s191 = sphi 0, %s190
      %s205 = sphi 0, %s191
      %s209 = sphi 0, %s209
      %s211 = sphi 0, %s209
      %s212 = sphi 0, %s211
      %s226 = sphi 0, %s212
      %s230 = sphi 0, %s230
      %s232 = sphi 0, %s230
      %s233 = sphi 0, %s232
      %s247 = sphi 0, %s233
      %s251 = sphi 0, %s251
      %s253 = sphi 0, %s251
      %s254 = sphi 0, %s253
      %s268 = sphi 0, %s254
      %s272 = sphi 0, %s272
      %s274 = sphi 0, %s272
      %s275 = sphi 0, %s274
      %s289 = sphi 0, %s275
      %s293 = sphi 0, %s293
      %s295 = sphi 0, %s293
      %s296 = sphi 0, %s295
      %s310 = sphi 0, %s296
      %s314 = sphi 0, %s314
      %s316 = sphi 0, %s314
      %s317 = sphi 0, %s316
      %s331 = sphi 0, %s317
      %s335 = sphi 0, %s335
      %s337 = sphi 0, %s335
      %s338 = sphi 0, %s337
      %s352 = sphi 0, %s338
      %s356 = sphi 0, %s356
      %s358 = sphi 0, %s356
      %s359 = sphi 0, %s358
      %s373 = sphi 0, %s359
      %s377 = sphi 0, %s377
      %s379 = sphi 0, %s377
      %s380 = sphi 0, %s379
      %s394 = sphi 0, %s380
      %s398 = sphi 0, %s398
      %s400 = sphi 0, %s398
      %s401 = sphi 0, %s400
      %s415 = sphi 0, %s401
      %s419 = sphi 0, %s419
      %s421 = sphi 0, %s419
      %s422 = sphi 0, %s421
      %s436 = sphi 0, %s422
      %s440 = sphi 0, %s440
      %s442 = sphi 0, %s440
      %s443 = sphi 0, %s442
      %s457 = sphi 0, %s443
      %s461 = sphi 0, %s461
      %s463 = sphi 0, %s461
      %s464 = sphi 0, %s463
      %s478 = sphi 0, %s464
      %s482 = sphi 0, %s482
      %s484 = sphi 0, %s482
      %s485 = sphi 0, %s484
      %s499 = sphi 0, %s485
      %s503 = sphi 0, %s503
      %s505 = sphi 0, %s503
      %s506 = sphi 0, %s505
      %s520 = sphi 0, %s506
      %s524 = sphi 0, %s524
      %s526 = sphi 0, %s524
      %s527 = sphi 0, %s526
      %s541 = sphi 0, %s527
      %s545 = sphi 0, %s545
      %s547 = sphi 0, %s545
      %s548 = sphi 0, %s547
      %s562 = sphi 0, %s548
      %s566 = sphi 0, %s566
      %s568 = sphi 0, %s566
      %s569 = sphi 0, %s568
      %s583 = sphi 0, %s569
      %s587 = sphi 0, %s587
      %s589 = sphi 0, %s587
      %s590 = sphi 0, %s589
      %s604 = sphi 0, %s590
      %s608 = sphi 0, %s608
      %s610 = sphi 0, %s608
      %s611 = sphi 0, %s610
      %s625 = sphi 0, %s611
      %s629 = sphi 0, %s629
      %s631 = sphi 0, %s629
      %s632 = sphi 0, %s631
      %s646 = sphi 0, %s632
      %s650 = sphi 0, %s650
      %s652 = sphi 0, %s650
      %s653 = sphi 0, %s652
      %s667 = sphi 0, %s653
      %s671 = sphi 0, %s671
      %s673 = sphi 0, %s671
      %s674 = sphi 0, %s673
      %s688 = sphi 0, %s674
      %s692 = sphi 0, %s692
      %s694 = sphi 0, %s692
      %s695 = sphi 0, %s694
      %s709 = sphi 0, %s695
      %s713 = sphi 0, %s713
      %s715 = sphi 0, %s713
      %s716 = sphi 0, %s715
      %s730 = sphi 0, %s716
      %s734 = sphi 0, %s734
      %s736 = sphi 0, %s734
      %s737 = sphi 0, %s736
      %s751 = sphi 0, %s737
      %s755 = sphi 0, %s755
      %s757 = sphi 0, %s755
      %s758 = sphi 0, %s757
      %s772 = sphi 0, %s758
      %s776 = sphi 0, %s776
      %s778 = sphi 0, %s776
      %s779 = sphi 0, %s778
      %s793 = sphi 0, %s779
      %s799 = sphi 0, %s801
      %s802 = sphi 0, %s799
      %s803 = sphi 0, %s802
      %s819 = sphi 0, %s803
    $region4: #{transformer_forward.1} parent=1 // loop_header_branch
      %79 = sbr.rel (%p77) target = $region8
    $region5: #{transformer_forward.1} parent=1 // loop_body
      %s81 = ssub.s32 %s76, 1
      %s82 = ssub.s32 %s76, 2
      %s83 = sadd.s32 %s76, 1
      %s84 = ssub.s32 %s76, %s83
      %p85 = scmp.eq.s32.totalorder %s84, 0
      %s87 = sadd.s32 %s86, 1
      %s88 = scalar_select %p85, %s86, %s87
      %p91 = pneg %p85
      %p92 = scmp.eq.s32.totalorder %s76, 1
      %p93 = por %p91, %p92
      %p94 = scmp.ne.s32.totalorder %s86, %s89
      %p95 = scmp.eq.s32.totalorder %s76, 0
      %p96 = por %p94, %p95
      %p97 = scmp.ne.s32.totalorder %s86, %s89
      %p98 = scmp.eq.s32.totalorder %s81, 1
      %p99 = por %p97, %p98
      %p100 = scmp.ne.s32.totalorder %s89, %s90
      %p101 = scmp.eq.s32.totalorder %s81, 0
      %p102 = por %p100, %p101
      %p103 = scmp.ne.s32.totalorder %s89, %s90
      %p104 = scmp.eq.s32.totalorder %s82, 1
      %p105 = por %p103, %p104
      %p107 = scmp.ne.s32.totalorder %s90, %s106
      %p108 = scmp.eq.s32.totalorder %s82, 0
      %p109 = por %p107, %p108
      %s110 = ssub.s32 %s76, %s83
      %p111 = scmp.eq.s32.totalorder %s110, 0
      %s113 = sadd.s32 %s112, 1
      %s114 = scalar_select %p111, %s112, %s113
      %p117 = pneg %p111
      %p118 = scmp.eq.s32.totalorder %s76, 1
      %p119 = por %p117, %p118
      %p120 = scmp.ne.s32.totalorder %s112, %s115
      %p121 = scmp.eq.s32.totalorder %s76, 0
      %p122 = por %p120, %p121
      %p123 = scmp.ne.s32.totalorder %s112, %s115
      %p124 = scmp.eq.s32.totalorder %s81, 1
      %p125 = por %p123, %p124
      %p126 = scmp.ne.s32.totalorder %s115, %s116
      %p127 = scmp.eq.s32.totalorder %s81, 0
      %p128 = por %p126, %p127
      %p129 = scmp.ne.s32.totalorder %s115, %s116
      %p130 = scmp.eq.s32.totalorder %s82, 1
      %p131 = por %p129, %p130
      %p133 = scmp.ne.s32.totalorder %s116, %s132
      %p134 = scmp.eq.s32.totalorder %s82, 0
      %p135 = por %p133, %p134
      %s136 = ssub.s32 %s76, %s83
      %p137 = scmp.eq.s32.totalorder %s136, 0
      %s139 = sadd.s32 %s138, 1
      %s140 = scalar_select %p137, %s138, %s139
      %p143 = pneg %p137
      %p144 = scmp.eq.s32.totalorder %s76, 1
      %p145 = por %p143, %p144
      %p146 = scmp.ne.s32.totalorder %s138, %s141
      %p147 = scmp.eq.s32.totalorder %s76, 0
      %p148 = por %p146, %p147
      %p149 = scmp.ne.s32.totalorder %s138, %s141
      %p150 = scmp.eq.s32.totalorder %s81, 1
      %p151 = por %p149, %p150
      %p152 = scmp.ne.s32.totalorder %s141, %s142
      %p153 = scmp.eq.s32.totalorder %s81, 0
      %p154 = por %p152, %p153
      %p155 = scmp.ne.s32.totalorder %s141, %s142
      %p156 = scmp.eq.s32.totalorder %s82, 1
      %p157 = por %p155, %p156
      %p159 = scmp.ne.s32.totalorder %s142, %s158
      %p160 = scmp.eq.s32.totalorder %s82, 0
      %p161 = por %p159, %p160
      %s162 = ssub.s32 %s76, %s83
      %p163 = scmp.eq.s32.totalorder %s162, 0
      %s165 = sadd.s32 %s164, 1
      %s166 = scalar_select %p163, %s164, %s165
      %p169 = pneg %p163
      %p170 = scmp.eq.s32.totalorder %s76, 1
      %p171 = por %p169, %p170
      %p172 = scmp.ne.s32.totalorder %s164, %s167
      %p173 = scmp.eq.s32.totalorder %s76, 0
      %p174 = por %p172, %p173
      %p175 = scmp.ne.s32.totalorder %s164, %s167
      %p176 = scmp.eq.s32.totalorder %s81, 1
      %p177 = por %p175, %p176
      %p178 = scmp.ne.s32.totalorder %s167, %s168
      %p179 = scmp.eq.s32.totalorder %s81, 0
      %p180 = por %p178, %p179
      %p181 = scmp.ne.s32.totalorder %s167, %s168
      %p182 = scmp.eq.s32.totalorder %s82, 1
      %p183 = por %p181, %p182
      %p185 = scmp.ne.s32.totalorder %s168, %s184
      %p186 = scmp.eq.s32.totalorder %s82, 0
      %p187 = por %p185, %p186
      %s189 = sadd.s32 %s188, 1
      %p192 = scmp.eq.s32.totalorder %s76, 1
      %p193 = scmp.ne.s32.totalorder %s188, %s190
      %p194 = scmp.eq.s32.totalorder %s76, 0
      %p195 = por %p193, %p194
      %p196 = scmp.ne.s32.totalorder %s188, %s190
      %p197 = scmp.eq.s32.totalorder %s81, 1
      %p198 = por %p196, %p197
      %p199 = scmp.ne.s32.totalorder %s190, %s191
      %p200 = scmp.eq.s32.totalorder %s81, 0
      %p201 = por %p199, %p200
      %p202 = scmp.ne.s32.totalorder %s190, %s191
      %p203 = scmp.eq.s32.totalorder %s82, 1
      %p204 = por %p202, %p203
      %p206 = scmp.ne.s32.totalorder %s191, %s205
      %p207 = scmp.eq.s32.totalorder %s82, 0
      %p208 = por %p206, %p207
      %s210 = sadd.s32 %s209, 1
      %p213 = scmp.eq.s32.totalorder %s76, 1
      %p214 = scmp.ne.s32.totalorder %s209, %s211
      %p215 = scmp.eq.s32.totalorder %s76, 0
      %p216 = por %p214, %p215
      %p217 = scmp.ne.s32.totalorder %s209, %s211
      %p218 = scmp.eq.s32.totalorder %s81, 1
      %p219 = por %p217, %p218
      %p220 = scmp.ne.s32.totalorder %s211, %s212
      %p221 = scmp.eq.s32.totalorder %s81, 0
      %p222 = por %p220, %p221
      %p223 = scmp.ne.s32.totalorder %s211, %s212
      %p224 = scmp.eq.s32.totalorder %s82, 1
      %p225 = por %p223, %p224
      %p227 = scmp.ne.s32.totalorder %s212, %s226
      %p228 = scmp.eq.s32.totalorder %s82, 0
      %p229 = por %p227, %p228
      %s231 = sadd.s32 %s230, 1
      %p234 = scmp.eq.s32.totalorder %s76, 1
      %p235 = scmp.ne.s32.totalorder %s230, %s232
      %p236 = scmp.eq.s32.totalorder %s76, 0
      %p237 = por %p235, %p236
      %p238 = scmp.ne.s32.totalorder %s230, %s232
      %p239 = scmp.eq.s32.totalorder %s81, 1
      %p240 = por %p238, %p239
      %p241 = scmp.ne.s32.totalorder %s232, %s233
      %p242 = scmp.eq.s32.totalorder %s81, 0
      %p243 = por %p241, %p242
      %p244 = scmp.ne.s32.totalorder %s232, %s233
      %p245 = scmp.eq.s32.totalorder %s82, 1
      %p246 = por %p244, %p245
      %p248 = scmp.ne.s32.totalorder %s233, %s247
      %p249 = scmp.eq.s32.totalorder %s82, 0
      %p250 = por %p248, %p249
      %s252 = sadd.s32 %s251, 1
      %p255 = scmp.eq.s32.totalorder %s76, 1
      %p256 = scmp.ne.s32.totalorder %s251, %s253
      %p257 = scmp.eq.s32.totalorder %s76, 0
      %p258 = por %p256, %p257
      %p259 = scmp.ne.s32.totalorder %s251, %s253
      %p260 = scmp.eq.s32.totalorder %s81, 1
      %p261 = por %p259, %p260
      %p262 = scmp.ne.s32.totalorder %s253, %s254
      %p263 = scmp.eq.s32.totalorder %s81, 0
      %p264 = por %p262, %p263
      %p265 = scmp.ne.s32.totalorder %s253, %s254
      %p266 = scmp.eq.s32.totalorder %s82, 1
      %p267 = por %p265, %p266
      %p269 = scmp.ne.s32.totalorder %s254, %s268
      %p270 = scmp.eq.s32.totalorder %s82, 0
      %p271 = por %p269, %p270
      %s273 = sadd.s32 %s272, 1
      %p276 = scmp.eq.s32.totalorder %s76, 1
      %p277 = scmp.ne.s32.totalorder %s272, %s274
      %p278 = scmp.eq.s32.totalorder %s76, 0
      %p279 = por %p277, %p278
      %p280 = scmp.ne.s32.totalorder %s272, %s274
      %p281 = scmp.eq.s32.totalorder %s81, 1
      %p282 = por %p280, %p281
      %p283 = scmp.ne.s32.totalorder %s274, %s275
      %p284 = scmp.eq.s32.totalorder %s81, 0
      %p285 = por %p283, %p284
      %p286 = scmp.ne.s32.totalorder %s274, %s275
      %p287 = scmp.eq.s32.totalorder %s82, 1
      %p288 = por %p286, %p287
      %p290 = scmp.ne.s32.totalorder %s275, %s289
      %p291 = scmp.eq.s32.totalorder %s82, 0
      %p292 = por %p290, %p291
      %s294 = sadd.s32 %s293, 1
      %p297 = scmp.eq.s32.totalorder %s76, 1
      %p298 = scmp.ne.s32.totalorder %s293, %s295
      %p299 = scmp.eq.s32.totalorder %s76, 0
      %p300 = por %p298, %p299
      %p301 = scmp.ne.s32.totalorder %s293, %s295
      %p302 = scmp.eq.s32.totalorder %s81, 1
      %p303 = por %p301, %p302
      %p304 = scmp.ne.s32.totalorder %s295, %s296
      %p305 = scmp.eq.s32.totalorder %s81, 0
      %p306 = por %p304, %p305
      %p307 = scmp.ne.s32.totalorder %s295, %s296
      %p308 = scmp.eq.s32.totalorder %s82, 1
      %p309 = por %p307, %p308
      %p311 = scmp.ne.s32.totalorder %s296, %s310
      %p312 = scmp.eq.s32.totalorder %s82, 0
      %p313 = por %p311, %p312
      %s315 = sadd.s32 %s314, 1
      %p318 = scmp.eq.s32.totalorder %s76, 1
      %p319 = scmp.ne.s32.totalorder %s314, %s316
      %p320 = scmp.eq.s32.totalorder %s76, 0
      %p321 = por %p319, %p320
      %p322 = scmp.ne.s32.totalorder %s314, %s316
      %p323 = scmp.eq.s32.totalorder %s81, 1
      %p324 = por %p322, %p323
      %p325 = scmp.ne.s32.totalorder %s316, %s317
      %p326 = scmp.eq.s32.totalorder %s81, 0
      %p327 = por %p325, %p326
      %p328 = scmp.ne.s32.totalorder %s316, %s317
      %p329 = scmp.eq.s32.totalorder %s82, 1
      %p330 = por %p328, %p329
      %p332 = scmp.ne.s32.totalorder %s317, %s331
      %p333 = scmp.eq.s32.totalorder %s82, 0
      %p334 = por %p332, %p333
      %s336 = sadd.s32 %s335, 1
      %p339 = scmp.eq.s32.totalorder %s76, 1
      %p340 = scmp.ne.s32.totalorder %s335, %s337
      %p341 = scmp.eq.s32.totalorder %s76, 0
      %p342 = por %p340, %p341
      %p343 = scmp.ne.s32.totalorder %s335, %s337
      %p344 = scmp.eq.s32.totalorder %s81, 1
      %p345 = por %p343, %p344
      %p346 = scmp.ne.s32.totalorder %s337, %s338
      %p347 = scmp.eq.s32.totalorder %s81, 0
      %p348 = por %p346, %p347
      %p349 = scmp.ne.s32.totalorder %s337, %s338
      %p350 = scmp.eq.s32.totalorder %s82, 1
      %p351 = por %p349, %p350
      %p353 = scmp.ne.s32.totalorder %s338, %s352
      %p354 = scmp.eq.s32.totalorder %s82, 0
      %p355 = por %p353, %p354
      %s357 = sadd.s32 %s356, 1
      %p360 = scmp.eq.s32.totalorder %s76, 1
      %p361 = scmp.ne.s32.totalorder %s356, %s358
      %p362 = scmp.eq.s32.totalorder %s76, 0
      %p363 = por %p361, %p362
      %p364 = scmp.ne.s32.totalorder %s356, %s358
      %p365 = scmp.eq.s32.totalorder %s81, 1
      %p366 = por %p364, %p365
      %p367 = scmp.ne.s32.totalorder %s358, %s359
      %p368 = scmp.eq.s32.totalorder %s81, 0
      %p369 = por %p367, %p368
      %p370 = scmp.ne.s32.totalorder %s358, %s359
      %p371 = scmp.eq.s32.totalorder %s82, 1
      %p372 = por %p370, %p371
      %p374 = scmp.ne.s32.totalorder %s359, %s373
      %p375 = scmp.eq.s32.totalorder %s82, 0
      %p376 = por %p374, %p375
      %s378 = sadd.s32 %s377, 1
      %p381 = scmp.eq.s32.totalorder %s76, 1
      %p382 = scmp.ne.s32.totalorder %s377, %s379
      %p383 = scmp.eq.s32.totalorder %s76, 0
      %p384 = por %p382, %p383
      %p385 = scmp.ne.s32.totalorder %s377, %s379
      %p386 = scmp.eq.s32.totalorder %s81, 1
      %p387 = por %p385, %p386
      %p388 = scmp.ne.s32.totalorder %s379, %s380
      %p389 = scmp.eq.s32.totalorder %s81, 0
      %p390 = por %p388, %p389
      %p391 = scmp.ne.s32.totalorder %s379, %s380
      %p392 = scmp.eq.s32.totalorder %s82, 1
      %p393 = por %p391, %p392
      %p395 = scmp.ne.s32.totalorder %s380, %s394
      %p396 = scmp.eq.s32.totalorder %s82, 0
      %p397 = por %p395, %p396
      %s399 = sadd.s32 %s398, 1
      %p402 = scmp.eq.s32.totalorder %s76, 1
      %p403 = scmp.ne.s32.totalorder %s398, %s400
      %p404 = scmp.eq.s32.totalorder %s76, 0
      %p405 = por %p403, %p404
      %p406 = scmp.ne.s32.totalorder %s398, %s400
      %p407 = scmp.eq.s32.totalorder %s81, 1
      %p408 = por %p406, %p407
      %p409 = scmp.ne.s32.totalorder %s400, %s401
      %p410 = scmp.eq.s32.totalorder %s81, 0
      %p411 = por %p409, %p410
      %p412 = scmp.ne.s32.totalorder %s400, %s401
      %p413 = scmp.eq.s32.totalorder %s82, 1
      %p414 = por %p412, %p413
      %p416 = scmp.ne.s32.totalorder %s401, %s415
      %p417 = scmp.eq.s32.totalorder %s82, 0
      %p418 = por %p416, %p417
      %s420 = sadd.s32 %s419, 1
      %p423 = scmp.eq.s32.totalorder %s76, 1
      %p424 = scmp.ne.s32.totalorder %s419, %s421
      %p425 = scmp.eq.s32.totalorder %s76, 0
      %p426 = por %p424, %p425
      %p427 = scmp.ne.s32.totalorder %s419, %s421
      %p428 = scmp.eq.s32.totalorder %s81, 1
      %p429 = por %p427, %p428
      %p430 = scmp.ne.s32.totalorder %s421, %s422
      %p431 = scmp.eq.s32.totalorder %s81, 0
      %p432 = por %p430, %p431
      %p433 = scmp.ne.s32.totalorder %s421, %s422
      %p434 = scmp.eq.s32.totalorder %s82, 1
      %p435 = por %p433, %p434
      %p437 = scmp.ne.s32.totalorder %s422, %s436
      %p438 = scmp.eq.s32.totalorder %s82, 0
      %p439 = por %p437, %p438
      %s441 = sadd.s32 %s440, 1
      %p444 = scmp.eq.s32.totalorder %s76, 1
      %p445 = scmp.ne.s32.totalorder %s440, %s442
      %p446 = scmp.eq.s32.totalorder %s76, 0
      %p447 = por %p445, %p446
      %p448 = scmp.ne.s32.totalorder %s440, %s442
      %p449 = scmp.eq.s32.totalorder %s81, 1
      %p450 = por %p448, %p449
      %p451 = scmp.ne.s32.totalorder %s442, %s443
      %p452 = scmp.eq.s32.totalorder %s81, 0
      %p453 = por %p451, %p452
      %p454 = scmp.ne.s32.totalorder %s442, %s443
      %p455 = scmp.eq.s32.totalorder %s82, 1
      %p456 = por %p454, %p455
      %p458 = scmp.ne.s32.totalorder %s443, %s457
      %p459 = scmp.eq.s32.totalorder %s82, 0
      %p460 = por %p458, %p459
      %s462 = sadd.s32 %s461, 1
      %p465 = scmp.eq.s32.totalorder %s76, 1
      %p466 = scmp.ne.s32.totalorder %s461, %s463
      %p467 = scmp.eq.s32.totalorder %s76, 0
      %p468 = por %p466, %p467
      %p469 = scmp.ne.s32.totalorder %s461, %s463
      %p470 = scmp.eq.s32.totalorder %s81, 1
      %p471 = por %p469, %p470
      %p472 = scmp.ne.s32.totalorder %s463, %s464
      %p473 = scmp.eq.s32.totalorder %s81, 0
      %p474 = por %p472, %p473
      %p475 = scmp.ne.s32.totalorder %s463, %s464
      %p476 = scmp.eq.s32.totalorder %s82, 1
      %p477 = por %p475, %p476
      %p479 = scmp.ne.s32.totalorder %s464, %s478
      %p480 = scmp.eq.s32.totalorder %s82, 0
      %p481 = por %p479, %p480
      %s483 = sadd.s32 %s482, 1
      %p486 = scmp.eq.s32.totalorder %s76, 1
      %p487 = scmp.ne.s32.totalorder %s482, %s484
      %p488 = scmp.eq.s32.totalorder %s76, 0
      %p489 = por %p487, %p488
      %p490 = scmp.ne.s32.totalorder %s482, %s484
      %p491 = scmp.eq.s32.totalorder %s81, 1
      %p492 = por %p490, %p491
      %p493 = scmp.ne.s32.totalorder %s484, %s485
      %p494 = scmp.eq.s32.totalorder %s81, 0
      %p495 = por %p493, %p494
      %p496 = scmp.ne.s32.totalorder %s484, %s485
      %p497 = scmp.eq.s32.totalorder %s82, 1
      %p498 = por %p496, %p497
      %p500 = scmp.ne.s32.totalorder %s485, %s499
      %p501 = scmp.eq.s32.totalorder %s82, 0
      %p502 = por %p500, %p501
      %s504 = sadd.s32 %s503, 1
      %p507 = scmp.eq.s32.totalorder %s76, 1
      %p508 = scmp.ne.s32.totalorder %s503, %s505
      %p509 = scmp.eq.s32.totalorder %s76, 0
      %p510 = por %p508, %p509
      %p511 = scmp.ne.s32.totalorder %s503, %s505
      %p512 = scmp.eq.s32.totalorder %s81, 1
      %p513 = por %p511, %p512
      %p514 = scmp.ne.s32.totalorder %s505, %s506
      %p515 = scmp.eq.s32.totalorder %s81, 0
      %p516 = por %p514, %p515
      %p517 = scmp.ne.s32.totalorder %s505, %s506
      %p518 = scmp.eq.s32.totalorder %s82, 1
      %p519 = por %p517, %p518
      %p521 = scmp.ne.s32.totalorder %s506, %s520
      %p522 = scmp.eq.s32.totalorder %s82, 0
      %p523 = por %p521, %p522
      %s525 = sadd.s32 %s524, 1
      %p528 = scmp.eq.s32.totalorder %s76, 1
      %p529 = scmp.ne.s32.totalorder %s524, %s526
      %p530 = scmp.eq.s32.totalorder %s76, 0
      %p531 = por %p529, %p530
      %p532 = scmp.ne.s32.totalorder %s524, %s526
      %p533 = scmp.eq.s32.totalorder %s81, 1
      %p534 = por %p532, %p533
      %p535 = scmp.ne.s32.totalorder %s526, %s527
      %p536 = scmp.eq.s32.totalorder %s81, 0
      %p537 = por %p535, %p536
      %p538 = scmp.ne.s32.totalorder %s526, %s527
      %p539 = scmp.eq.s32.totalorder %s82, 1
      %p540 = por %p538, %p539
      %p542 = scmp.ne.s32.totalorder %s527, %s541
      %p543 = scmp.eq.s32.totalorder %s82, 0
      %p544 = por %p542, %p543
      %s546 = sadd.s32 %s545, 1
      %p549 = scmp.eq.s32.totalorder %s76, 1
      %p550 = scmp.ne.s32.totalorder %s545, %s547
      %p551 = scmp.eq.s32.totalorder %s76, 0
      %p552 = por %p550, %p551
      %p553 = scmp.ne.s32.totalorder %s545, %s547
      %p554 = scmp.eq.s32.totalorder %s81, 1
      %p555 = por %p553, %p554
      %p556 = scmp.ne.s32.totalorder %s547, %s548
      %p557 = scmp.eq.s32.totalorder %s81, 0
      %p558 = por %p556, %p557
      %p559 = scmp.ne.s32.totalorder %s547, %s548
      %p560 = scmp.eq.s32.totalorder %s82, 1
      %p561 = por %p559, %p560
      %p563 = scmp.ne.s32.totalorder %s548, %s562
      %p564 = scmp.eq.s32.totalorder %s82, 0
      %p565 = por %p563, %p564
      %s567 = sadd.s32 %s566, 1
      %p570 = scmp.eq.s32.totalorder %s76, 1
      %p571 = scmp.ne.s32.totalorder %s566, %s568
      %p572 = scmp.eq.s32.totalorder %s76, 0
      %p573 = por %p571, %p572
      %p574 = scmp.ne.s32.totalorder %s566, %s568
      %p575 = scmp.eq.s32.totalorder %s81, 1
      %p576 = por %p574, %p575
      %p577 = scmp.ne.s32.totalorder %s568, %s569
      %p578 = scmp.eq.s32.totalorder %s81, 0
      %p579 = por %p577, %p578
      %p580 = scmp.ne.s32.totalorder %s568, %s569
      %p581 = scmp.eq.s32.totalorder %s82, 1
      %p582 = por %p580, %p581
      %p584 = scmp.ne.s32.totalorder %s569, %s583
      %p585 = scmp.eq.s32.totalorder %s82, 0
      %p586 = por %p584, %p585
      %s588 = sadd.s32 %s587, 1
      %p591 = scmp.eq.s32.totalorder %s76, 1
      %p592 = scmp.ne.s32.totalorder %s587, %s589
      %p593 = scmp.eq.s32.totalorder %s76, 0
      %p594 = por %p592, %p593
      %p595 = scmp.ne.s32.totalorder %s587, %s589
      %p596 = scmp.eq.s32.totalorder %s81, 1
      %p597 = por %p595, %p596
      %p598 = scmp.ne.s32.totalorder %s589, %s590
      %p599 = scmp.eq.s32.totalorder %s81, 0
      %p600 = por %p598, %p599
      %p601 = scmp.ne.s32.totalorder %s589, %s590
      %p602 = scmp.eq.s32.totalorder %s82, 1
      %p603 = por %p601, %p602
      %p605 = scmp.ne.s32.totalorder %s590, %s604
      %p606 = scmp.eq.s32.totalorder %s82, 0
      %p607 = por %p605, %p606
      %s609 = sadd.s32 %s608, 1
      %p612 = scmp.eq.s32.totalorder %s76, 1
      %p613 = scmp.ne.s32.totalorder %s608, %s610
      %p614 = scmp.eq.s32.totalorder %s76, 0
      %p615 = por %p613, %p614
      %p616 = scmp.ne.s32.totalorder %s608, %s610
      %p617 = scmp.eq.s32.totalorder %s81, 1
      %p618 = por %p616, %p617
      %p619 = scmp.ne.s32.totalorder %s610, %s611
      %p620 = scmp.eq.s32.totalorder %s81, 0
      %p621 = por %p619, %p620
      %p622 = scmp.ne.s32.totalorder %s610, %s611
      %p623 = scmp.eq.s32.totalorder %s82, 1
      %p624 = por %p622, %p623
      %p626 = scmp.ne.s32.totalorder %s611, %s625
      %p627 = scmp.eq.s32.totalorder %s82, 0
      %p628 = por %p626, %p627
      %s630 = sadd.s32 %s629, 1
      %p633 = scmp.eq.s32.totalorder %s76, 1
      %p634 = scmp.ne.s32.totalorder %s629, %s631
      %p635 = scmp.eq.s32.totalorder %s76, 0
      %p636 = por %p634, %p635
      %p637 = scmp.ne.s32.totalorder %s629, %s631
      %p638 = scmp.eq.s32.totalorder %s81, 1
      %p639 = por %p637, %p638
      %p640 = scmp.ne.s32.totalorder %s631, %s632
      %p641 = scmp.eq.s32.totalorder %s81, 0
      %p642 = por %p640, %p641
      %p643 = scmp.ne.s32.totalorder %s631, %s632
      %p644 = scmp.eq.s32.totalorder %s82, 1
      %p645 = por %p643, %p644
      %p647 = scmp.ne.s32.totalorder %s632, %s646
      %p648 = scmp.eq.s32.totalorder %s82, 0
      %p649 = por %p647, %p648
      %s651 = sadd.s32 %s650, 1
      %p654 = scmp.eq.s32.totalorder %s76, 1
      %p655 = scmp.ne.s32.totalorder %s650, %s652
      %p656 = scmp.eq.s32.totalorder %s76, 0
      %p657 = por %p655, %p656
      %p658 = scmp.ne.s32.totalorder %s650, %s652
      %p659 = scmp.eq.s32.totalorder %s81, 1
      %p660 = por %p658, %p659
      %p661 = scmp.ne.s32.totalorder %s652, %s653
      %p662 = scmp.eq.s32.totalorder %s81, 0
      %p663 = por %p661, %p662
      %p664 = scmp.ne.s32.totalorder %s652, %s653
      %p665 = scmp.eq.s32.totalorder %s82, 1
      %p666 = por %p664, %p665
      %p668 = scmp.ne.s32.totalorder %s653, %s667
      %p669 = scmp.eq.s32.totalorder %s82, 0
      %p670 = por %p668, %p669
      %s672 = sadd.s32 %s671, 1
      %p675 = scmp.eq.s32.totalorder %s76, 1
      %p676 = scmp.ne.s32.totalorder %s671, %s673
      %p677 = scmp.eq.s32.totalorder %s76, 0
      %p678 = por %p676, %p677
      %p679 = scmp.ne.s32.totalorder %s671, %s673
      %p680 = scmp.eq.s32.totalorder %s81, 1
      %p681 = por %p679, %p680
      %p682 = scmp.ne.s32.totalorder %s673, %s674
      %p683 = scmp.eq.s32.totalorder %s81, 0
      %p684 = por %p682, %p683
      %p685 = scmp.ne.s32.totalorder %s673, %s674
      %p686 = scmp.eq.s32.totalorder %s82, 1
      %p687 = por %p685, %p686
      %p689 = scmp.ne.s32.totalorder %s674, %s688
      %p690 = scmp.eq.s32.totalorder %s82, 0
      %p691 = por %p689, %p690
      %s693 = sadd.s32 %s692, 1
      %p696 = scmp.eq.s32.totalorder %s76, 1
      %p697 = scmp.ne.s32.totalorder %s692, %s694
      %p698 = scmp.eq.s32.totalorder %s76, 0
      %p699 = por %p697, %p698
      %p700 = scmp.ne.s32.totalorder %s692, %s694
      %p701 = scmp.eq.s32.totalorder %s81, 1
      %p702 = por %p700, %p701
      %p703 = scmp.ne.s32.totalorder %s694, %s695
      %p704 = scmp.eq.s32.totalorder %s81, 0
      %p705 = por %p703, %p704
      %p706 = scmp.ne.s32.totalorder %s694, %s695
      %p707 = scmp.eq.s32.totalorder %s82, 1
      %p708 = por %p706, %p707
      %p710 = scmp.ne.s32.totalorder %s695, %s709
      %p711 = scmp.eq.s32.totalorder %s82, 0
      %p712 = por %p710, %p711
      %s714 = sadd.s32 %s713, 1
      %p717 = scmp.eq.s32.totalorder %s76, 1
      %p718 = scmp.ne.s32.totalorder %s713, %s715
      %p719 = scmp.eq.s32.totalorder %s76, 0
      %p720 = por %p718, %p719
      %p721 = scmp.ne.s32.totalorder %s713, %s715
      %p722 = scmp.eq.s32.totalorder %s81, 1
      %p723 = por %p721, %p722
      %p724 = scmp.ne.s32.totalorder %s715, %s716
      %p725 = scmp.eq.s32.totalorder %s81, 0
      %p726 = por %p724, %p725
      %p727 = scmp.ne.s32.totalorder %s715, %s716
      %p728 = scmp.eq.s32.totalorder %s82, 1
      %p729 = por %p727, %p728
      %p731 = scmp.ne.s32.totalorder %s716, %s730
      %p732 = scmp.eq.s32.totalorder %s82, 0
      %p733 = por %p731, %p732
      %s735 = sadd.s32 %s734, 1
      %p738 = scmp.eq.s32.totalorder %s76, 1
      %p739 = scmp.ne.s32.totalorder %s734, %s736
      %p740 = scmp.eq.s32.totalorder %s76, 0
      %p741 = por %p739, %p740
      %p742 = scmp.ne.s32.totalorder %s734, %s736
      %p743 = scmp.eq.s32.totalorder %s81, 1
      %p744 = por %p742, %p743
      %p745 = scmp.ne.s32.totalorder %s736, %s737
      %p746 = scmp.eq.s32.totalorder %s81, 0
      %p747 = por %p745, %p746
      %p748 = scmp.ne.s32.totalorder %s736, %s737
      %p749 = scmp.eq.s32.totalorder %s82, 1
      %p750 = por %p748, %p749
      %p752 = scmp.ne.s32.totalorder %s737, %s751
      %p753 = scmp.eq.s32.totalorder %s82, 0
      %p754 = por %p752, %p753
      %s756 = sadd.s32 %s755, 1
      %p759 = scmp.eq.s32.totalorder %s76, 1
      %p760 = scmp.ne.s32.totalorder %s755, %s757
      %p761 = scmp.eq.s32.totalorder %s76, 0
      %p762 = por %p760, %p761
      %p763 = scmp.ne.s32.totalorder %s755, %s757
      %p764 = scmp.eq.s32.totalorder %s81, 1
      %p765 = por %p763, %p764
      %p766 = scmp.ne.s32.totalorder %s757, %s758
      %p767 = scmp.eq.s32.totalorder %s81, 0
      %p768 = por %p766, %p767
      %p769 = scmp.ne.s32.totalorder %s757, %s758
      %p770 = scmp.eq.s32.totalorder %s82, 1
      %p771 = por %p769, %p770
      %p773 = scmp.ne.s32.totalorder %s758, %s772
      %p774 = scmp.eq.s32.totalorder %s82, 0
      %p775 = por %p773, %p774
      %s777 = sadd.s32 %s776, 1
      %p780 = scmp.eq.s32.totalorder %s76, 1
      %p781 = scmp.ne.s32.totalorder %s776, %s778
      %p782 = scmp.eq.s32.totalorder %s76, 0
      %p783 = por %p781, %p782
      %p784 = scmp.ne.s32.totalorder %s776, %s778
      %p785 = scmp.eq.s32.totalorder %s81, 1
      %p786 = por %p784, %p785
      %p787 = scmp.ne.s32.totalorder %s778, %s779
      %p788 = scmp.eq.s32.totalorder %s81, 0
      %p789 = por %p787, %p788
      %p790 = scmp.ne.s32.totalorder %s778, %s779
      %p791 = scmp.eq.s32.totalorder %s82, 1
      %p792 = por %p790, %p791
      %p794 = scmp.ne.s32.totalorder %s779, %s793
      %p795 = scmp.eq.s32.totalorder %s82, 0
      %p796 = por %p794, %p795
      %s797 = ssub.s32 %s76, %s83
      %p798 = scmp.eq.s32.totalorder %s797, 0
      %s800 = sadd.s32 %s799, 1
      %s801 = scalar_select %p798, %s799, %s800
      %p804 = pneg %p798
      %p805 = scmp.eq.s32.totalorder %s76, 1
      %p806 = por %p804, %p805
      %p807 = scmp.ne.s32.totalorder %s799, %s802
      %p808 = scmp.eq.s32.totalorder %s76, 0
      %p809 = por %p807, %p808
      %p810 = scmp.ne.s32.totalorder %s799, %s802
      %p811 = scmp.eq.s32.totalorder %s81, 1
      %p812 = por %p810, %p811
      %p813 = scmp.ne.s32.totalorder %s802, %s803
      %p814 = scmp.eq.s32.totalorder %s81, 0
      %p815 = por %p813, %p814
      %p816 = scmp.ne.s32.totalorder %s802, %s803
      %p817 = scmp.eq.s32.totalorder %s82, 1
      %p818 = por %p816, %p817
      %p820 = scmp.ne.s32.totalorder %s803, %s819
      %p821 = scmp.eq.s32.totalorder %s82, 0
      %p822 = por %p820, %p821
      %p823 = scmp.le.s32.totalorder 1, %s76
      %p824 = scmp.lt.s32.totalorder %s76, 3
      %p825 = pnand %p823, %p824
      %p826 = pneg %p825
      // Predicated region
      $region9: #{transformer_forward.1} parent=5 // pred_check
        _
      $region10: #{transformer_forward.1} parent=5 // pred_check_branch
        %828 = sbr.rel (%p825) target = $region12
      $region11: #{transformer_forward.1} parent=5 // pred_region
        %s829 = ssub.s32 %s76, 1
        // Predicated region
        $region13: #{transformer_forward.1} parent=11 // pred_check
          %p830 = pneg %p201
        $region14: #{transformer_forward.1} parent=11 // pred_check_branch
          %832 = sbr.rel (%p830) target = $region16
        $region15: #{transformer_forward.1} parent=11 // pred_region
          _
        $region16: #{transformer_forward.1} parent=11 // pred_fallthru
          _
        // Predicated region
        $region17: #{transformer_forward.1} parent=11 // pred_check
          %p833 = pneg %p222
        $region18: #{transformer_forward.1} parent=11 // pred_check_branch
          %835 = sbr.rel (%p833) target = $region20
        $region19: #{transformer_forward.1} parent=11 // pred_region
          _
        $region20: #{transformer_forward.1} parent=11 // pred_fallthru
          _
        // Predicated region
        $region21: #{transformer_forward.1} parent=11 // pred_check
          %p836 = pneg %p243
        $region22: #{transformer_forward.1} parent=11 // pred_check_branch
          %838 = sbr.rel (%p836) target = $region24
        $region23: #{transformer_forward.1} parent=11 // pred_region
          _
        $region24: #{transformer_forward.1} parent=11 // pred_fallthru
          _
        // Predicated region
        $region25: #{transformer_forward.1} parent=11 // pred_check
          %p839 = pneg %p264
        $region26: #{transformer_forward.1} parent=11 // pred_check_branch
          %841 = sbr.rel (%p839) target = $region28
        $region27: #{transformer_forward.1} parent=11 // pred_region
          _
        $region28: #{transformer_forward.1} parent=11 // pred_fallthru
          _
        // Predicated region
        $region29: #{transformer_forward.1} parent=11 // pred_check
          %p842 = pneg %p285
        $region30: #{transformer_forward.1} parent=11 // pred_check_branch
          %844 = sbr.rel (%p842) target = $region32
        $region31: #{transformer_forward.1} parent=11 // pred_region
          _
        $region32: #{transformer_forward.1} parent=11 // pred_fallthru
          _
        // Predicated region
        $region33: #{transformer_forward.1} parent=11 // pred_check
          %p845 = pneg %p306
        $region34: #{transformer_forward.1} parent=11 // pred_check_branch
          %847 = sbr.rel (%p845) target = $region36
        $region35: #{transformer_forward.1} parent=11 // pred_region
          _
        $region36: #{transformer_forward.1} parent=11 // pred_fallthru
          _
        // Predicated region
        $region37: #{transformer_forward.1} parent=11 // pred_check
          %p848 = pneg %p327
        $region38: #{transformer_forward.1} parent=11 // pred_check_branch
          %850 = sbr.rel (%p848) target = $region40
        $region39: #{transformer_forward.1} parent=11 // pred_region
          _
        $region40: #{transformer_forward.1} parent=11 // pred_fallthru
          _
        // Predicated region
        $region41: #{transformer_forward.1} parent=11 // pred_check
          %p851 = pneg %p348
        $region42: #{transformer_forward.1} parent=11 // pred_check_branch
          %853 = sbr.rel (%p851) target = $region44
        $region43: #{transformer_forward.1} parent=11 // pred_region
          _
        $region44: #{transformer_forward.1} parent=11 // pred_fallthru
          _
        // Predicated region
        $region45: #{transformer_forward.1} parent=11 // pred_check
          %p854 = pneg %p369
        $region46: #{transformer_forward.1} parent=11 // pred_check_branch
          %856 = sbr.rel (%p854) target = $region48
        $region47: #{transformer_forward.1} parent=11 // pred_region
          _
        $region48: #{transformer_forward.1} parent=11 // pred_fallthru
          _
        // Predicated region
        $region49: #{transformer_forward.1} parent=11 // pred_check
          %p857 = pneg %p390
        $region50: #{transformer_forward.1} parent=11 // pred_check_branch
          %859 = sbr.rel (%p857) target = $region52
        $region51: #{transformer_forward.1} parent=11 // pred_region
          _
        $region52: #{transformer_forward.1} parent=11 // pred_fallthru
          _
        // Predicated region
        $region53: #{transformer_forward.1} parent=11 // pred_check
          %p860 = pneg %p411
        $region54: #{transformer_forward.1} parent=11 // pred_check_branch
          %862 = sbr.rel (%p860) target = $region56
        $region55: #{transformer_forward.1} parent=11 // pred_region
          _
        $region56: #{transformer_forward.1} parent=11 // pred_fallthru
          _
        // Predicated region
        $region57: #{transformer_forward.1} parent=11 // pred_check
          %p863 = pneg %p432
        $region58: #{transformer_forward.1} parent=11 // pred_check_branch
          %865 = sbr.rel (%p863) target = $region60
        $region59: #{transformer_forward.1} parent=11 // pred_region
          _
        $region60: #{transformer_forward.1} parent=11 // pred_fallthru
          _
        // Predicated region
        $region61: #{transformer_forward.1} parent=11 // pred_check
          %p866 = pneg %p453
        $region62: #{transformer_forward.1} parent=11 // pred_check_branch
          %868 = sbr.rel (%p866) target = $region64
        $region63: #{transformer_forward.1} parent=11 // pred_region
          _
        $region64: #{transformer_forward.1} parent=11 // pred_fallthru
          _
        // Predicated region
        $region65: #{transformer_forward.1} parent=11 // pred_check
          %p869 = pneg %p474
        $region66: #{transformer_forward.1} parent=11 // pred_check_branch
          %871 = sbr.rel (%p869) target = $region68
        $region67: #{transformer_forward.1} parent=11 // pred_region
          _
        $region68: #{transformer_forward.1} parent=11 // pred_fallthru
          _
        // Predicated region
        $region69: #{transformer_forward.1} parent=11 // pred_check
          %p872 = pneg %p495
        $region70: #{transformer_forward.1} parent=11 // pred_check_branch
          %874 = sbr.rel (%p872) target = $region72
        $region71: #{transformer_forward.1} parent=11 // pred_region
          _
        $region72: #{transformer_forward.1} parent=11 // pred_fallthru
          _
        // Predicated region
        $region73: #{transformer_forward.1} parent=11 // pred_check
          %p875 = pneg %p516
        $region74: #{transformer_forward.1} parent=11 // pred_check_branch
          %877 = sbr.rel (%p875) target = $region76
        $region75: #{transformer_forward.1} parent=11 // pred_region
          _
        $region76: #{transformer_forward.1} parent=11 // pred_fallthru
          _
        // Predicated region
        $region77: #{transformer_forward.1} parent=11 // pred_check
          %p878 = pneg %p537
        $region78: #{transformer_forward.1} parent=11 // pred_check_branch
          %880 = sbr.rel (%p878) target = $region80
        $region79: #{transformer_forward.1} parent=11 // pred_region
          _
        $region80: #{transformer_forward.1} parent=11 // pred_fallthru
          _
        // Predicated region
        $region81: #{transformer_forward.1} parent=11 // pred_check
          %p881 = pneg %p558
        $region82: #{transformer_forward.1} parent=11 // pred_check_branch
          %883 = sbr.rel (%p881) target = $region84
        $region83: #{transformer_forward.1} parent=11 // pred_region
          _
        $region84: #{transformer_forward.1} parent=11 // pred_fallthru
          _
        // Predicated region
        $region85: #{transformer_forward.1} parent=11 // pred_check
          %p884 = pneg %p579
        $region86: #{transformer_forward.1} parent=11 // pred_check_branch
          %886 = sbr.rel (%p884) target = $region88
        $region87: #{transformer_forward.1} parent=11 // pred_region
          _
        $region88: #{transformer_forward.1} parent=11 // pred_fallthru
          _
        // Predicated region
        $region89: #{transformer_forward.1} parent=11 // pred_check
          %p887 = pneg %p600
        $region90: #{transformer_forward.1} parent=11 // pred_check_branch
          %889 = sbr.rel (%p887) target = $region92
        $region91: #{transformer_forward.1} parent=11 // pred_region
          _
        $region92: #{transformer_forward.1} parent=11 // pred_fallthru
          _
        // Predicated region
        $region93: #{transformer_forward.1} parent=11 // pred_check
          %p890 = pneg %p621
        $region94: #{transformer_forward.1} parent=11 // pred_check_branch
          %892 = sbr.rel (%p890) target = $region96
        $region95: #{transformer_forward.1} parent=11 // pred_region
          _
        $region96: #{transformer_forward.1} parent=11 // pred_fallthru
          _
        // Predicated region
        $region97: #{transformer_forward.1} parent=11 // pred_check
          %p893 = pneg %p642
        $region98: #{transformer_forward.1} parent=11 // pred_check_branch
          %895 = sbr.rel (%p893) target = $region100
        $region99: #{transformer_forward.1} parent=11 // pred_region
          _
        $region100: #{transformer_forward.1} parent=11 // pred_fallthru
          _
        // Predicated region
        $region101: #{transformer_forward.1} parent=11 // pred_check
          %p896 = pneg %p663
        $region102: #{transformer_forward.1} parent=11 // pred_check_branch
          %898 = sbr.rel (%p896) target = $region104
        $region103: #{transformer_forward.1} parent=11 // pred_region
          _
        $region104: #{transformer_forward.1} parent=11 // pred_fallthru
          _
        // Predicated region
        $region105: #{transformer_forward.1} parent=11 // pred_check
          %p899 = pneg %p684
        $region106: #{transformer_forward.1} parent=11 // pred_check_branch
          %901 = sbr.rel (%p899) target = $region108
        $region107: #{transformer_forward.1} parent=11 // pred_region
          _
        $region108: #{transformer_forward.1} parent=11 // pred_fallthru
          _
        // Predicated region
        $region109: #{transformer_forward.1} parent=11 // pred_check
          %p902 = pneg %p705
        $region110: #{transformer_forward.1} parent=11 // pred_check_branch
          %904 = sbr.rel (%p902) target = $region112
        $region111: #{transformer_forward.1} parent=11 // pred_region
          _
        $region112: #{transformer_forward.1} parent=11 // pred_fallthru
          _
        // Predicated region
        $region113: #{transformer_forward.1} parent=11 // pred_check
          %p905 = pneg %p726
        $region114: #{transformer_forward.1} parent=11 // pred_check_branch
          %907 = sbr.rel (%p905) target = $region116
        $region115: #{transformer_forward.1} parent=11 // pred_region
          _
        $region116: #{transformer_forward.1} parent=11 // pred_fallthru
          _
        // Predicated region
        $region117: #{transformer_forward.1} parent=11 // pred_check
          %p908 = pneg %p747
        $region118: #{transformer_forward.1} parent=11 // pred_check_branch
          %910 = sbr.rel (%p908) target = $region120
        $region119: #{transformer_forward.1} parent=11 // pred_region
          _
        $region120: #{transformer_forward.1} parent=11 // pred_fallthru
          _
        // Predicated region
        $region121: #{transformer_forward.1} parent=11 // pred_check
          %p911 = pneg %p768
        $region122: #{transformer_forward.1} parent=11 // pred_check_branch
          %913 = sbr.rel (%p911) target = $region124
        $region123: #{transformer_forward.1} parent=11 // pred_region
          _
        $region124: #{transformer_forward.1} parent=11 // pred_fallthru
          _
        // Predicated region
        $region125: #{transformer_forward.1} parent=11 // pred_check
          %p914 = pneg %p789
        $region126: #{transformer_forward.1} parent=11 // pred_check_branch
          %916 = sbr.rel (%p914) target = $region128
        $region127: #{transformer_forward.1} parent=11 // pred_region
          _
        $region128: #{transformer_forward.1} parent=11 // pred_fallthru
          _
      $region12: #{transformer_forward.1} parent=5 // pred_fallthru
        _
      %p917 = scmp.lt.s32.totalorder %s76, 2
      // Predicated region
      $region129: #{transformer_forward.1} parent=5 // pred_check
        %p918 = pneg %p917
      $region130: #{transformer_forward.1} parent=5 // pred_check_branch
        %920 = sbr.rel (%p918) target = $region132
      $region131: #{transformer_forward.1} parent=5 // pred_region
        // Predicated region
        $region133: #{transformer_forward.1} parent=131 // pred_check
          %p921 = pneg %p96
        $region134: #{transformer_forward.1} parent=131 // pred_check_branch
          %923 = sbr.rel (%p921) target = $region136
        $region135: #{transformer_forward.1} parent=131 // pred_region
          %p924 = scmp.lt.s32.totalorder %s76, 1
          %s925 = scalar_select %p924, %s76, 1
          %s926 = smul.addr %s925, 8
          %s927 = scalar_lea.vmem %s1, %s926
        $region136: #{transformer_forward.1} parent=131 // pred_fallthru
          _
        // Predicated region
        $region137: #{transformer_forward.1} parent=131 // pred_check
          %p928 = pneg %p122
        $region138: #{transformer_forward.1} parent=131 // pred_check_branch
          %930 = sbr.rel (%p928) target = $region140
        $region139: #{transformer_forward.1} parent=131 // pred_region
          %p931 = scmp.lt.s32.totalorder %s76, 1
          %s932 = scalar_select %p931, %s76, 1
          %s933 = smul.addr %s932, 8
          %s934 = scalar_lea.vmem %s3, %s933
        $region140: #{transformer_forward.1} parent=131 // pred_fallthru
          _
        // Predicated region
        $region141: #{transformer_forward.1} parent=131 // pred_check
          %p935 = pneg %p148
        $region142: #{transformer_forward.1} parent=131 // pred_check_branch
          %937 = sbr.rel (%p935) target = $region144
        $region143: #{transformer_forward.1} parent=131 // pred_region
          %p938 = scmp.lt.s32.totalorder %s76, 1
          %s939 = scalar_select %p938, %s76, 1
          %s940 = smul.addr %s939, 2
          %s941 = smul.addr %s940, 8
          %s942 = scalar_lea.vmem %s5, %s941
        $region144: #{transformer_forward.1} parent=131 // pred_fallthru
          _
        // Predicated region
        $region145: #{transformer_forward.1} parent=131 // pred_check
          %p943 = pneg %p174
        $region146: #{transformer_forward.1} parent=131 // pred_check_branch
          %945 = sbr.rel (%p943) target = $region148
        $region147: #{transformer_forward.1} parent=131 // pred_region
          %p946 = scmp.lt.s32.totalorder %s76, 1
          %s947 = scalar_select %p946, %s76, 1
          %s948 = smul.addr %s947, 2
          %s949 = smul.addr %s948, 8
          %s950 = scalar_lea.vmem %s7, %s949
        $region148: #{transformer_forward.1} parent=131 // pred_fallthru
          _
      $region132: #{transformer_forward.1} parent=5 // pred_fallthru
        _
      %p951 = scmp.le.s32.totalorder 1, %s76
      %p952 = scmp.lt.s32.totalorder %s76, 3
      %p953 = pnand %p951, %p952
      %p954 = pneg %p953
      // Predicated region
      $region149: #{transformer_forward.1} parent=5 // pred_check
        _
      $region150: #{transformer_forward.1} parent=5 // pred_check_branch
        %956 = sbr.rel (%p953) target = $region152
      $region151: #{transformer_forward.1} parent=5 // pred_region
        %s957 = ssub.s32 %s76, 1
        %p958 = scmp.lt.s32.totalorder %s81, 1
        %s959 = scalar_select %p958, %s81, 1
        %s960 = smul.addr %s959, 8
        %s961 = scalar_lea.vmem %s1, %s960
        %p962 = pneg %p102
        %p963 = pneg %p99
        %p964 = scmp.lt.s32.totalorder %s81, 1
        %s965 = scalar_select %p964, %s81, 1
        %s966 = smul.addr %s965, 8
        %s967 = scalar_lea.vmem %s3, %s966
        %p968 = pneg %p128
        %p969 = pneg %p125
        %p970 = scmp.lt.s32.totalorder %s81, 1
        %s971 = scalar_select %p970, %s81, 1
        %s972 = smul.addr %s971, 2
        %s973 = smul.addr %s972, 8
        %s974 = scalar_lea.vmem %s5, %s973
        %p975 = pneg %p154
        %p976 = pneg %p151
        %p977 = scmp.lt.s32.totalorder %s81, 1
        %s978 = scalar_select %p977, %s81, 1
        %s979 = smul.addr %s978, 2
        %s980 = smul.addr %s979, 8
        %s981 = scalar_lea.vmem %s7, %s980
        %p982 = pneg %p180
        %p983 = pneg %p177
        %p984 = pneg %p201
        %p985 = pneg %p198
        %p986 = pneg %p222
        %p987 = pneg %p219
        %p988 = pneg %p243
        %p989 = pneg %p240
        %p990 = pneg %p264
        %p991 = pneg %p261
        %p992 = pneg %p285
        %p993 = pneg %p282
        %p994 = pneg %p306
        %p995 = pneg %p303
        %p996 = pneg %p327
        %p997 = pneg %p324
        %p998 = pneg %p348
        %p999 = pneg %p345
        %p1000 = pneg %p369
        %p1001 = pneg %p366
        %p1002 = pneg %p390
        %p1003 = pneg %p387
        %p1004 = pneg %p411
        %p1005 = pneg %p408
        %p1006 = pneg %p432
        %p1007 = pneg %p429
        %p1008 = pneg %p453
        %p1009 = pneg %p450
        %p1010 = pneg %p474
        %p1011 = pneg %p471
        %p1012 = pneg %p495
        %p1013 = pneg %p492
        %p1014 = pneg %p516
        %p1015 = pneg %p513
        %p1016 = pneg %p537
        %p1017 = pneg %p534
        %p1018 = pneg %p558
        %p1019 = pneg %p555
        %p1020 = pneg %p579
        %p1021 = pneg %p576
        %p1022 = pneg %p600
        %p1023 = pneg %p597
        %p1024 = pneg %p621
        %p1025 = pneg %p618
        %p1026 = pneg %p642
        %p1027 = pneg %p639
        %p1028 = pneg %p663
        %p1029 = pneg %p660
        %p1030 = pneg %p684
        %p1031 = pneg %p681
        %p1032 = pneg %p705
        %p1033 = pneg %p702
        %p1034 = pneg %p726
        %p1035 = pneg %p723
        %p1036 = pneg %p747
        %p1037 = pneg %p744
        %p1038 = pneg %p768
        %p1039 = pneg %p765
        %p1040 = pneg %p789
        %p1041 = pneg %p786
        %p1042 = pneg %p815
        %p1043 = pneg %p812
        %s1044 = sand.u32 %s802, 1
        %s1045 = scalar_lea.sflag [#allocation3], %s1044
        %s1046 = sand.u32 %s802, 1
        %s1047 = smul.addr %s1046, 8
        %s1048 = scalar_lea.vmem [#allocation2], %s1047
        %p1049 = scmp.lt.s32.totalorder %s81, 1
        %s1050 = scalar_select %p1049, %s81, 1
        %s1051 = smul.addr %s1050, 8
        %s1052 = scalar_lea.vmem %s1, %s1051
        %p1053 = scmp.lt.s32.totalorder %s81, 1
        %s1054 = scalar_select %p1053, %s81, 1
        %s1055 = smul.addr %s1054, 8
        %s1056 = scalar_lea.vmem %s3, %s1055
        %p1057 = scmp.lt.s32.totalorder %s81, 1
        %s1058 = scalar_select %p1057, %s81, 1
        %s1059 = smul.addr %s1058, 2
        %s1060 = smul.addr %s1059, 8
        %s1061 = scalar_lea.vmem %s5, %s1060
        %p1062 = scmp.lt.s32.totalorder %s81, 1
        %s1063 = scalar_select %p1062, %s81, 1
        %s1064 = smul.addr %s1063, 2
        %s1065 = smul.addr %s1064, 8
        %s1066 = scalar_lea.vmem %s7, %s1065
        %v1067 = vld [vmem:[%s1052] sm:$0xff]
        %v1068 = vld [vmem:[%s1056] sm:$0xff]
        %v1069 = vld [vmem:[%s1061] sm:$0xff]
        %v1070 = vld [vmem:[%s1061 + $0x8] sm:$0xff]
        %v1071 = vld [vmem:[%s1066] sm:$0xff]
        %v1072 = vld [vmem:[%s1066 + $0x8] sm:$0xff]
        %v1073 = vadd.f32 %v1069, %v1071
        %v1074 = vadd.f32 %v1070, %v1072
        %v1075 = vadd.f32 %v1067, %v1068
        %v1076 = vld [vmem:[%s9] sm:$0x1]
        %v1077 = vld [vmem:[%s11] sm:$0x1]
        %vm1078 = vcmask 261120
        %v1079 = vsel %vm1078, %v1075, 0.0
        %1080 = vadd.xlane.f32.xlu0 %v1079
        %v1081 = vpop.xlane.xlu0 %1080
        %v1082 = vrcp.pop 32.0
        %v1083 = vmul.f32 %v1081, %v1082
        %v1084 = vsub.f32 %v1075, %v1083
        %v1085 = vmul.f32 %v1084, %v1084
        %v1086 = vsel %vm1078, %v1085, 0.0
        %1087 = vadd.xlane.f32.xlu0 %v1086
        %v1088 = vpop.xlane.xlu0 %1087
        %v1089 = vmul.f32 %v1088, %v1082
        %v1090 = vadd.f32 %v1089, 1e-05
        %v1091 = vrsqrt.pop %v1090
        %v1092 = vmul.f32 %v1084, %v1091
        %v1094 = vlaneseq
        %v1095 = vshrl.u32 %v1094, 7
        %v1096 = vsub.s32 0, %v1095
        %v1097 = vrot.slane %v1076, %v1096
        %v1099 = vmul.f32 %v1092, %v1097
        %v1101 = vlaneseq
        %v1102 = vshrl.u32 %v1101, 7
        %v1103 = vsub.s32 0, %v1102
        %v1104 = vrot.slane %v1077, %v1103
        %v1106 = vadd.f32 %v1099, %v1104
        %v1107 = vld [vmem:[%s13] sm:$0xff]
        %v1108 = vld [vmem:[%s13 + $0x8] sm:$0xff]
        %v1109 = vld [vmem:[%s13 + $0x10] sm:$0xff]
        %v1110 = vld [vmem:[%s13 + $0x18] sm:$0xff]
        %v1111 = vld [vmem:[%s15] sm:$0x1]
        %v1113 = vlaneseq
        %v1114 = vshrl.u32 %v1113, 7
        %v1115 = vsub.s32 0, %v1114
        %v1116 = vrot.slane %v1111, %v1115
        %v1119 = vsel %vm1078, %v1106, 0
        %1121 = vmatprep.subr.mxu0 0.0
        %1122 = vmatpush1.msra.mxu0 %v1107
        %1123 = vmatprep.subr.mxu0 0.0
        %1124 = vmatpush1.msra.mxu0 %v1108
        %1125 = vmatprep.subr.mxu0 0.0
        %1126 = vmatpush1.msra.mxu0 %v1109
        %1127 = vmatprep.subr.mxu0 0.0
        %1128 = vmatpush1.msra.mxu0 %v1110
        %1129 = vmatprep.subr.mxu0 0.0
        %1130 = vmatpush1.msra.mxu0 0.0
        %1131 = vmatprep.subr.mxu0 0.0
        %1132 = vmatpush1.msra.mxu0 0.0
        %1133 = vmatprep.subr.mxu0 0.0
        %1134 = vmatpush1.msra.mxu0 0.0
        %1135 = vmatprep.subr.mxu0 0.0
        %1136 = vmatpush1.msra.mxu0 0.0
        %1137 = vmatprep.subr.mxu0 0.0
        %1138 = vmatpush1.msra.mxu0 0.0
        %1139 = vmatprep.subr.mxu0 0.0
        %1140 = vmatpush1.msra.mxu0 0.0
        %1141 = vmatprep.subr.mxu0 0.0
        %1142 = vmatpush1.msra.mxu0 0.0
        %1143 = vmatprep.subr.mxu0 0.0
        %1144 = vmatpush1.msra.mxu0 0.0
        %1145 = vmatprep.subr.mxu0 0.0
        %1146 = vmatpush1.msra.mxu0 0.0
        %1147 = vmatprep.subr.mxu0 0.0
        %1148 = vmatpush1.msra.mxu0 0.0
        %1149 = vmatprep.subr.mxu0 0.0
        %1150 = vmatpush1.msra.mxu0 0.0
        %1151 = vmatprep.subr.mxu0 0.0
        %1152 = vmatpush1.msra.mxu0 0.0
        %1153 = vmatprep.subr.mxu0 0.0
        %1154 = vmatpush1.msra.mxu0 0.0
        %1155 = vmatprep.subr.mxu0 0.0
        %1156 = vmatpush1.msra.mxu0 0.0
        %1157 = vmatprep.subr.mxu0 0.0
        %1158 = vmatpush1.msra.mxu0 0.0
        %1159 = vmatprep.subr.mxu0 0.0
        %1160 = vmatpush1.msra.mxu0 0.0
        %1161 = vmatprep.subr.mxu0 0.0
        %1162 = vmatpush1.msra.mxu0 0.0
        %1163 = vmatprep.subr.mxu0 0.0
        %1164 = vmatpush1.msra.mxu0 0.0
        %1165 = vmatprep.subr.mxu0 0.0
        %1166 = vmatpush1.msra.mxu0 0.0
        %1167 = vmatprep.subr.mxu0 0.0
        %1168 = vmatpush1.msra.mxu0 0.0
        %1169 = vmatprep.subr.mxu0 0.0
        %1170 = vmatpush1.msra.mxu0 0.0
        %1171 = vmatprep.subr.mxu0 0.0
        %1172 = vmatpush1.msra.mxu0 0.0
        %1173 = vmatprep.subr.mxu0 0.0
        %1174 = vmatpush1.msra.mxu0 0.0
        %1175 = vmatprep.subr.mxu0 0.0
        %1176 = vmatpush1.msra.mxu0 0.0
        %1177 = vmatprep.subr.mxu0 0.0
        %1178 = vmatpush1.msra.mxu0 0.0
        %1179 = vmatprep.subr.mxu0 0.0
        %1180 = vmatpush1.msra.mxu0 0.0
        %1181 = vmatprep.subr.mxu0 0.0
        %1182 = vmatpush1.msra.mxu0 0.0
        %1183 = vmatprep.subr.mxu0 0.0
        %1184 = vmatpush1.msra.mxu0 0.0
        %1185 = vmatprep.mubr.f32.mxu0 0.0
        %1186 = vmatmul.mubr.f32.gmra.mrb[0].mxu0 %v1119
        %v1187 = vpop.f32.mrb[0].mxu0
        %v1188 = vadd.f32 %v1116, %v1187
        %v1189 = vpop.f32.mrb[0].mxu0
        %1190 = vdwg.mxu0
        %v1191 = vld [vmem:[%s17] sm:$0xff]
        %v1192 = vld [vmem:[%s17 + $0x8] sm:$0xff]
        %v1193 = vld [vmem:[%s17 + $0x10] sm:$0xff]
        %v1194 = vld [vmem:[%s17 + $0x18] sm:$0xff]
        %v1195 = vld [vmem:[%s19] sm:$0x1]
        %v1197 = vlaneseq
        %v1198 = vshrl.u32 %v1197, 7
        %v1199 = vsub.s32 0, %v1198
        %v1200 = vrot.slane %v1195, %v1199
        %v1203 = vsel %vm1078, %v1073, 0
        %v1206 = vsel %vm1078, %v1074, 0
        %1208 = vmatprep.subr.mxu0 0.0
        %1209 = vmatpush1.msra.mxu0 %v1191
        %1210 = vmatprep.subr.mxu0 0.0
        %1211 = vmatpush1.msra.mxu0 %v1192
        %1212 = vmatprep.subr.mxu0 0.0
        %1213 = vmatpush1.msra.mxu0 %v1193
        %1214 = vmatprep.subr.mxu0 0.0
        %1215 = vmatpush1.msra.mxu0 %v1194
        %1216 = vmatprep.subr.mxu0 0.0
        %1217 = vmatpush1.msra.mxu0 0.0
        %1218 = vmatprep.subr.mxu0 0.0
        %1219 = vmatpush1.msra.mxu0 0.0
        %1220 = vmatprep.subr.mxu0 0.0
        %1221 = vmatpush1.msra.mxu0 0.0
        %1222 = vmatprep.subr.mxu0 0.0
        %1223 = vmatpush1.msra.mxu0 0.0
        %1224 = vmatprep.subr.mxu0 0.0
        %1225 = vmatpush1.msra.mxu0 0.0
        %1226 = vmatprep.subr.mxu0 0.0
        %1227 = vmatpush1.msra.mxu0 0.0
        %1228 = vmatprep.subr.mxu0 0.0
        %1229 = vmatpush1.msra.mxu0 0.0
        %1230 = vmatprep.subr.mxu0 0.0
        %1231 = vmatpush1.msra.mxu0 0.0
        %1232 = vmatprep.subr.mxu0 0.0
        %1233 = vmatpush1.msra.mxu0 0.0
        %1234 = vmatprep.subr.mxu0 0.0
        %1235 = vmatpush1.msra.mxu0 0.0
        %1236 = vmatprep.subr.mxu0 0.0
        %1237 = vmatpush1.msra.mxu0 0.0
        %1238 = vmatprep.subr.mxu0 0.0
        %1239 = vmatpush1.msra.mxu0 0.0
        %1240 = vmatprep.subr.mxu0 0.0
        %1241 = vmatpush1.msra.mxu0 0.0
        %1242 = vmatprep.subr.mxu0 0.0
        %1243 = vmatpush1.msra.mxu0 0.0
        %1244 = vmatprep.subr.mxu0 0.0
        %1245 = vmatpush1.msra.mxu0 0.0
        %1246 = vmatprep.subr.mxu0 0.0
        %1247 = vmatpush1.msra.mxu0 0.0
        %1248 = vmatprep.subr.mxu0 0.0
        %1249 = vmatpush1.msra.mxu0 0.0
        %1250 = vmatprep.subr.mxu0 0.0
        %1251 = vmatpush1.msra.mxu0 0.0
        %1252 = vmatprep.subr.mxu0 0.0
        %1253 = vmatpush1.msra.mxu0 0.0
        %1254 = vmatprep.subr.mxu0 0.0
        %1255 = vmatpush1.msra.mxu0 0.0
        %1256 = vmatprep.subr.mxu0 0.0
        %1257 = vmatpush1.msra.mxu0 0.0
        %1258 = vmatprep.subr.mxu0 0.0
        %1259 = vmatpush1.msra.mxu0 0.0
        %1260 = vmatprep.subr.mxu0 0.0
        %1261 = vmatpush1.msra.mxu0 0.0
        %1262 = vmatprep.subr.mxu0 0.0
        %1263 = vmatpush1.msra.mxu0 0.0
        %1264 = vmatprep.subr.mxu0 0.0
        %1265 = vmatpush1.msra.mxu0 0.0
        %1266 = vmatprep.subr.mxu0 0.0
        %1267 = vmatpush1.msra.mxu0 0.0
        %1268 = vmatprep.subr.mxu0 0.0
        %1269 = vmatpush1.msra.mxu0 0.0
        %1270 = vmatprep.subr.mxu0 0.0
        %1271 = vmatpush1.msra.mxu0 0.0
        %1272 = vmatprep.mubr.f32.mxu0 0.0
        %1273 = vmatmul.mubr.f32.gmra.mrb[0].mxu0 %v1203
        %v1274 = vpop.f32.mrb[0].mxu0
        %v1275 = vadd.f32 %v1200, %v1274
        %v1276 = vpop.f32.mrb[0].mxu0
        %1277 = vmatprep.mubr.f32.mxu0 0.0
        %1278 = vmatmul.mubr.f32.gmra.mrb[0].mxu0 %v1206
        %v1279 = vpop.f32.mrb[0].mxu0
        %v1280 = vadd.f32 %v1200, %v1279
        %v1281 = vpop.f32.mrb[0].mxu0
        %1282 = vdwg.mxu0
        %v1283 = vld [vmem:[%s21] sm:$0xff]
        %v1284 = vld [vmem:[%s21 + $0x8] sm:$0xff]
        %v1285 = vld [vmem:[%s21 + $0x10] sm:$0xff]
        %v1286 = vld [vmem:[%s21 + $0x18] sm:$0xff]
        %v1287 = vld [vmem:[%s23] sm:$0x1]
        %v1289 = vlaneseq
        %v1290 = vshrl.u32 %v1289, 7
        %v1291 = vsub.s32 0, %v1290
        %v1292 = vrot.slane %v1287, %v1291
        %v1295 = vsel %vm1078, %v1069, 0
        %v1298 = vsel %vm1078, %v1070, 0
        %1300 = vmatprep.subr.mxu0 0.0
        %1301 = vmatpush1.msra.mxu0 %v1283
        %1302 = vmatprep.subr.mxu0 0.0
        %1303 = vmatpush1.msra.mxu0 %v1284
        %1304 = vmatprep.subr.mxu0 0.0
        %1305 = vmatpush1.msra.mxu0 %v1285
        %1306 = vmatprep.subr.mxu0 0.0
        %1307 = vmatpush1.msra.mxu0 %v1286
        %1308 = vmatprep.subr.mxu0 0.0
        %1309 = vmatpush1.msra.mxu0 0.0
        %1310 = vmatprep.subr.mxu0 0.0
        %1311 = vmatpush1.msra.mxu0 0.0
        %1312 = vmatprep.subr.mxu0 0.0
        %1313 = vmatpush1.msra.mxu0 0.0
        %1314 = vmatprep.subr.mxu0 0.0
        %1315 = vmatpush1.msra.mxu0 0.0
        %1316 = vmatprep.subr.mxu0 0.0
        %1317 = vmatpush1.msra.mxu0 0.0
        %1318 = vmatprep.subr.mxu0 0.0
        %1319 = vmatpush1.msra.mxu0 0.0
        %1320 = vmatprep.subr.mxu0 0.0
        %1321 = vmatpush1.msra.mxu0 0.0
        %1322 = vmatprep.subr.mxu0 0.0
        %1323 = vmatpush1.msra.mxu0 0.0
        %1324 = vmatprep.subr.mxu0 0.0
        %1325 = vmatpush1.msra.mxu0 0.0
        %1326 = vmatprep.subr.mxu0 0.0
        %1327 = vmatpush1.msra.mxu0 0.0
        %1328 = vmatprep.subr.mxu0 0.0
        %1329 = vmatpush1.msra.mxu0 0.0
        %1330 = vmatprep.subr.mxu0 0.0
        %1331 = vmatpush1.msra.mxu0 0.0
        %1332 = vmatprep.subr.mxu0 0.0
        %1333 = vmatpush1.msra.mxu0 0.0
        %1334 = vmatprep.subr.mxu0 0.0
        %1335 = vmatpush1.msra.mxu0 0.0
        %1336 = vmatprep.subr.mxu0 0.0
        %1337 = vmatpush1.msra.mxu0 0.0
        %1338 = vmatprep.subr.mxu0 0.0
        %1339 = vmatpush1.msra.mxu0 0.0
        %1340 = vmatprep.subr.mxu0 0.0
        %1341 = vmatpush1.msra.mxu0 0.0
        %1342 = vmatprep.subr.mxu0 0.0
        %1343 = vmatpush1.msra.mxu0 0.0
        %1344 = vmatprep.subr.mxu0 0.0
        %1345 = vmatpush1.msra.mxu0 0.0
        %1346 = vmatprep.subr.mxu0 0.0
        %1347 = vmatpush1.msra.mxu0 0.0
        %1348 = vmatprep.subr.mxu0 0.0
        %1349 = vmatpush1.msra.mxu0 0.0
        %1350 = vmatprep.subr.mxu0 0.0
        %1351 = vmatpush1.msra.mxu0 0.0
        %1352 = vmatprep.subr.mxu0 0.0
        %1353 = vmatpush1.msra.mxu0 0.0
        %1354 = vmatprep.subr.mxu0 0.0
        %1355 = vmatpush1.msra.mxu0 0.0
        %1356 = vmatprep.subr.mxu0 0.0
        %1357 = vmatpush1.msra.mxu0 0.0
        %1358 = vmatprep.subr.mxu0 0.0
        %1359 = vmatpush1.msra.mxu0 0.0
        %1360 = vmatprep.subr.mxu0 0.0
        %1361 = vmatpush1.msra.mxu0 0.0
        %1362 = vmatprep.subr.mxu0 0.0
        %1363 = vmatpush1.msra.mxu0 0.0
        %1364 = vmatprep.mubr.f32.mxu0 0.0
        %1365 = vmatmul.mubr.f32.gmra.mrb[0].mxu0 %v1295
        %v1366 = vpop.f32.mrb[0].mxu0
        %v1367 = vadd.f32 %v1292, %v1366
        %v1368 = vpop.f32.mrb[0].mxu0
        %1369 = vmatprep.mubr.f32.mxu0 0.0
        %1370 = vmatmul.mubr.f32.gmra.mrb[0].mxu0 %v1298
        %v1371 = vpop.f32.mrb[0].mxu0
        %v1372 = vadd.f32 %v1292, %v1371
        %v1373 = vpop.f32.mrb[0].mxu0
        %1374 = vdwg.mxu0
        %vm1375 = vcmask 64512
        %v1377 = vsel %vm1375, %v1188, 0
        %v1380 = vsel %vm1375, %v1275, 0
        %v1383 = vsel %vm1375, %v1280, 0
        %1385 = vmatprep.subr.mxu0 0.0
        %1386 = vmatpush1.xpose.msra.mxu0 %v1380
        %1387 = vmatprep.subr.mxu0 0.0
        %1388 = vmatpush1.xpose.msra.mxu0 %v1383
        %1389 = vmatprep.subr.mxu0 0.0
        %1390 = vmatpush1.xpose.msra.mxu0 0.0
        %1391 = vmatprep.subr.mxu0 0.0
        %1392 = vmatpush1.xpose.msra.mxu0 0.0
        %1393 = vmatprep.subr.mxu0 0.0
        %1394 = vmatpush1.xpose.msra.mxu0 0.0
        %1395 = vmatprep.subr.mxu0 0.0
        %1396 = vmatpush1.xpose.msra.mxu0 0.0
        %1397 = vmatprep.subr.mxu0 0.0
        %1398 = vmatpush1.xpose.msra.mxu0 0.0
        %1399 = vmatprep.subr.mxu0 0.0
        %1400 = vmatpush1.xpose.msra.mxu0 0.0
        %1401 = vmatprep.subr.mxu0 0.0
        %1402 = vmatpush1.xpose.msra.mxu0 0.0
        %1403 = vmatprep.subr.mxu0 0.0
        %1404 = vmatpush1.xpose.msra.mxu0 0.0
        %1405 = vmatprep.subr.mxu0 0.0
        %1406 = vmatpush1.xpose.msra.mxu0 0.0
        %1407 = vmatprep.subr.mxu0 0.0
        %1408 = vmatpush1.xpose.msra.mxu0 0.0
        %1409 = vmatprep.subr.mxu0 0.0
        %1410 = vmatpush1.xpose.msra.mxu0 0.0
        %1411 = vmatprep.subr.mxu0 0.0
        %1412 = vmatpush1.xpose.msra.mxu0 0.0
        %1413 = vmatprep.subr.mxu0 0.0
        %1414 = vmatpush1.xpose.msra.mxu0 0.0
        %1415 = vmatprep.subr.mxu0 0.0
        %1416 = vmatpush1.xpose.msra.mxu0 0.0
        %1417 = vmatprep.subr.mxu0 0.0
        %1418 = vmatpush1.xpose.msra.mxu0 0.0
        %1419 = vmatprep.subr.mxu0 0.0
        %1420 = vmatpush1.xpose.msra.mxu0 0.0
        %1421 = vmatprep.subr.mxu0 0.0
        %1422 = vmatpush1.xpose.msra.mxu0 0.0
        %1423 = vmatprep.subr.mxu0 0.0
        %1424 = vmatpush1.xpose.msra.mxu0 0.0
        %1425 = vmatprep.subr.mxu0 0.0
        %1426 = vmatpush1.xpose.msra.mxu0 0.0
        %1427 = vmatprep.subr.mxu0 0.0
        %1428 = vmatpush1.xpose.msra.mxu0 0.0
        %1429 = vmatprep.subr.mxu0 0.0
        %1430 = vmatpush1.xpose.msra.mxu0 0.0
        %1431 = vmatprep.subr.mxu0 0.0
        %1432 = vmatpush1.xpose.msra.mxu0 0.0
        %1433 = vmatprep.subr.mxu0 0.0
        %1434 = vmatpush1.xpose.msra.mxu0 0.0
        %1435 = vmatprep.subr.mxu0 0.0
        %1436 = vmatpush1.xpose.msra.mxu0 0.0
        %1437 = vmatprep.subr.mxu0 0.0
        %1438 = vmatpush1.xpose.msra.mxu0 0.0
        %1439 = vmatprep.subr.mxu0 0.0
        %1440 = vmatpush1.xpose.msra.mxu0 0.0
        %1441 = vmatprep.subr.mxu0 0.0
        %1442 = vmatpush1.xpose.msra.mxu0 0.0
        %1443 = vmatprep.subr.mxu0 0.0
        %1444 = vmatpush1.xpose.msra.mxu0 0.0
        %1445 = vmatprep.subr.mxu0 0.0
        %1446 = vmatpush1.xpose.msra.mxu0 0.0
        %1447 = vmatprep.subr.mxu0 0.0
        %1448 = vmatpush1.xpose.msra.mxu0 0.0
        %1449 = vmatprep.mubr.f32.mxu0 0.0
        %1450 = vmatmul.mubr.f32.gmra.mrb[0].mxu0 %v1377
        %v1451 = vpop.f32.mrb[0].mxu0
        %v1452 = vadd.f32 0.0, %v1451
        %v1453 = vpop.f32.mrb[0].mxu0
        %1454 = vdwg.mxu0
        %vm1455 = vcmask 130048
        %v1456 = vsel %vm1455, %v1452, -inf
        %1457 = vmax.xlane.f32.xlu0 %v1456
        %v1458 = vpop.xlane.xlu0 %1457
        %v1459 = vsub.f32 %v1452, %v1458
        %v1460 = vmul.f32 %v1459, 1.442695
        %v1461 = vpow.pop %v1460
        %v1462 = vsel %vm1455, %v1461, 0.0
        %1463 = vadd.xlane.f32.xlu0 %v1462
        %v1464 = vpop.xlane.xlu0 %1463
        %v1465 = vrcp.pop %v1464
        %v1466 = vmul.f32 %v1461, %v1465
        %s1467 = scalar_lea.vmem %s13, 32
        %v1468 = vld [vmem:[%s1467] sm:$0xff]
        %v1469 = vld [vmem:[%s1467 + $0x8] sm:$0xff]
        %v1470 = vld [vmem:[%s1467 + $0x10] sm:$0xff]
        %v1471 = vld [vmem:[%s1467 + $0x18] sm:$0xff]
        %s1472 = scalar_lea.vmem %s15, 1
        %v1473 = vld [vmem:[%s1472] sm:$0x1]
        %v1475 = vlaneseq
        %v1476 = vshrl.u32 %v1475, 7
        %v1477 = vsub.s32 0, %v1476
        %v1478 = vrot.slane %v1473, %v1477
        %1480 = vmatprep.subr.mxu0 0.0
        %1481 = vmatpush1.msra.mxu0 %v1468
        %1482 = vmatprep.subr.mxu0 0.0
        %1483 = vmatpush1.msra.mxu0 %v1469
        %1484 = vmatprep.subr.mxu0 0.0
        %1485 = vmatpush1.msra.mxu0 %v1470
        %1486 = vmatprep.subr.mxu0 0.0
        %1487 = vmatpush1.msra.mxu0 %v1471
        %1488 = vmatprep.subr.mxu0 0.0
        %1489 = vmatpush1.msra.mxu0 0.0
        %1490 = vmatprep.subr.mxu0 0.0
        %1491 = vmatpush1.msra.mxu0 0.0
        %1492 = vmatprep.subr.mxu0 0.0
        %1493 = vmatpush1.msra.mxu0 0.0
        %1494 = vmatprep.subr.mxu0 0.0
        %1495 = vmatpush1.msra.mxu0 0.0
        %1496 = vmatprep.subr.mxu0 0.0
        %1497 = vmatpush1.msra.mxu0 0.0
        %1498 = vmatprep.subr.mxu0 0.0
        %1499 = vmatpush1.msra.mxu0 0.0
        %1500 = vmatprep.subr.mxu0 0.0
        %1501 = vmatpush1.msra.mxu0 0.0
        %1502 = vmatprep.subr.mxu0 0.0
        %1503 = vmatpush1.msra.mxu0 0.0
        %1504 = vmatprep.subr.mxu0 0.0
        %1505 = vmatpush1.msra.mxu0 0.0
        %1506 = vmatprep.subr.mxu0 0.0
        %1507 = vmatpush1.msra.mxu0 0.0
        %1508 = vmatprep.subr.mxu0 0.0
        %1509 = vmatpush1.msra.mxu0 0.0
        %1510 = vmatprep.subr.mxu0 0.0
        %1511 = vmatpush1.msra.mxu0 0.0
        %1512 = vmatprep.subr.mxu0 0.0
        %1513 = vmatpush1.msra.mxu0 0.0
        %1514 = vmatprep.subr.mxu0 0.0
        %1515 = vmatpush1.msra.mxu0 0.0
        %1516 = vmatprep.subr.mxu0 0.0
        %1517 = vmatpush1.msra.mxu0 0.0
        %1518 = vmatprep.subr.mxu0 0.0
        %1519 = vmatpush1.msra.mxu0 0.0
        %1520 = vmatprep.subr.mxu0 0.0
        %1521 = vmatpush1.msra.mxu0 0.0
        %1522 = vmatprep.subr.mxu0 0.0
        %1523 = vmatpush1.msra.mxu0 0.0
        %1524 = vmatprep.subr.mxu0 0.0
        %1525 = vmatpush1.msra.mxu0 0.0
        %1526 = vmatprep.subr.mxu0 0.0
        %1527 = vmatpush1.msra.mxu0 0.0
        %1528 = vmatprep.subr.mxu0 0.0
        %1529 = vmatpush1.msra.mxu0 0.0
        %1530 = vmatprep.subr.mxu0 0.0
        %1531 = vmatpush1.msra.mxu0 0.0
        %1532 = vmatprep.subr.mxu0 0.0
        %1533 = vmatpush1.msra.mxu0 0.0
        %1534 = vmatprep.subr.mxu0 0.0
        %1535 = vmatpush1.msra.mxu0 0.0
        %1536 = vmatprep.subr.mxu0 0.0
        %1537 = vmatpush1.msra.mxu0 0.0
        %1538 = vmatprep.subr.mxu0 0.0
        %1539 = vmatpush1.msra.mxu0 0.0
        %1540 = vmatprep.subr.mxu0 0.0
        %1541 = vmatpush1.msra.mxu0 0.0
        %1542 = vmatprep.subr.mxu0 0.0
        %1543 = vmatpush1.msra.mxu0 0.0
        %1544 = vmatprep.mubr.f32.mxu0 0.0
        %1545 = vmatmul.mubr.f32.gmra.mrb[0].mxu0 %v1119
        %v1546 = vpop.f32.mrb[0].mxu0
        %v1547 = vadd.f32 %v1478, %v1546
        %v1548 = vpop.f32.mrb[0].mxu0
        %1549 = vdwg.mxu0
        %s1550 = scalar_lea.vmem %s17, 32
        %v1551 = vld [vmem:[%s1550] sm:$0xff]
        %v1552 = vld [vmem:[%s1550 + $0x8] sm:$0xff]
        %v1553 = vld [vmem:[%s1550 + $0x10] sm:$0xff]
        %v1554 = vld [vmem:[%s1550 + $0x18] sm:$0xff]
        %s1555 = scalar_lea.vmem %s19, 1
        %v1556 = vld [vmem:[%s1555] sm:$0x1]
        %v1558 = vlaneseq
        %v1559 = vshrl.u32 %v1558, 7
        %v1560 = vsub.s32 0, %v1559
        %v1561 = vrot.slane %v1556, %v1560
        %1563 = vmatprep.subr.mxu0 0.0
        %1564 = vmatpush1.msra.mxu0 %v1551
        %1565 = vmatprep.subr.mxu0 0.0
        %1566 = vmatpush1.msra.mxu0 %v1552
        %1567 = vmatprep.subr.mxu0 0.0
        %1568 = vmatpush1.msra.mxu0 %v1553
        %1569 = vmatprep.subr.mxu0 0.0
        %1570 = vmatpush1.msra.mxu0 %v1554
        %1571 = vmatprep.subr.mxu0 0.0
        %1572 = vmatpush1.msra.mxu0 0.0
        %1573 = vmatprep.subr.mxu0 0.0
        %1574 = vmatpush1.msra.mxu0 0.0
        %1575 = vmatprep.subr.mxu0 0.0
        %1576 = vmatpush1.msra.mxu0 0.0
        %1577 = vmatprep.subr.mxu0 0.0
        %1578 = vmatpush1.msra.mxu0 0.0
        %1579 = vmatprep.subr.mxu0 0.0
        %1580 = vmatpush1.msra.mxu0 0.0
        %1581 = vmatprep.subr.mxu0 0.0
        %1582 = vmatpush1.msra.mxu0 0.0
        %1583 = vmatprep.subr.mxu0 0.0
        %1584 = vmatpush1.msra.mxu0 0.0
        %1585 = vmatprep.subr.mxu0 0.0
        %1586 = vmatpush1.msra.mxu0 0.0
        %1587 = vmatprep.subr.mxu0 0.0
        %1588 = vmatpush1.msra.mxu0 0.0
        %1589 = vmatprep.subr.mxu0 0.0
        %1590 = vmatpush1.msra.mxu0 0.0
        %1591 = vmatprep.subr.mxu0 0.0
        %1592 = vmatpush1.msra.mxu0 0.0
        %1593 = vmatprep.subr.mxu0 0.0
        %1594 = vmatpush1.msra.mxu0 0.0
        %1595 = vmatprep.subr.mxu0 0.0
        %1596 = vmatpush1.msra.mxu0 0.0
        %1597 = vmatprep.subr.mxu0 0.0
        %1598 = vmatpush1.msra.mxu0 0.0
        %1599 = vmatprep.subr.mxu0 0.0
        %1600 = vmatpush1.msra.mxu0 0.0
        %1601 = vmatprep.subr.mxu0 0.0
        %1602 = vmatpush1.msra.mxu0 0.0
        %1603 = vmatprep.subr.mxu0 0.0
        %1604 = vmatpush1.msra.mxu0 0.0
        %1605 = vmatprep.subr.mxu0 0.0
        %1606 = vmatpush1.msra.mxu0 0.0
        %1607 = vmatprep.subr.mxu0 0.0
        %1608 = vmatpush1.msra.mxu0 0.0
        %1609 = vmatprep.subr.mxu0 0.0
        %1610 = vmatpush1.msra.mxu0 0.0
        %1611 = vmatprep.subr.mxu0 0.0
        %1612 = vmatpush1.msra.mxu0 0.0
        %1613 = vmatprep.subr.mxu0 0.0
        %1614 = vmatpush1.msra.mxu0 0.0
        %1615 = vmatprep.subr.mxu0 0.0
        %1616 = vmatpush1.msra.mxu0 0.0
        %1617 = vmatprep.subr.mxu0 0.0
        %1618 = vmatpush1.msra.mxu0 0.0
        %1619 = vmatprep.subr.mxu0 0.0
        %1620 = vmatpush1.msra.mxu0 0.0
        %1621 = vmatprep.subr.mxu0 0.0
        %1622 = vmatpush1.msra.mxu0 0.0
        %1623 = vmatprep.subr.mxu0 0.0
        %1624 = vmatpush1.msra.mxu0 0.0
        %1625 = vmatprep.subr.mxu0 0.0
        %1626 = vmatpush1.msra.mxu0 0.0
        %1627 = vmatprep.mubr.f32.mxu0 0.0
        %1628 = vmatmul.mubr.f32.gmra.mrb[0].mxu0 %v1203
        %v1629 = vpop.f32.mrb[0].mxu0
        %v1630 = vadd.f32 %v1561, %v1629
        %v1631 = vpop.f32.mrb[0].mxu0
        %1632 = vmatprep.mubr.f32.mxu0 0.0
        %1633 = vmatmul.mubr.f32.gmra.mrb[0].mxu0 %v1206
        %v1634 = vpop.f32.mrb[0].mxu0
        %v1635 = vadd.f32 %v1561, %v1634
        %v1636 = vpop.f32.mrb[0].mxu0
        %1637 = vdwg.mxu0
        %s1638 = scalar_lea.vmem %s21, 32
        %v1639 = vld [vmem:[%s1638] sm:$0xff]
        %v1640 = vld [vmem:[%s1638 + $0x8] sm:$0xff]
        %v1641 = vld [vmem:[%s1638 + $0x10] sm:$0xff]
        %v1642 = vld [vmem:[%s1638 + $0x18] sm:$0xff]
        %s1643 = scalar_lea.vmem %s23, 1
        %v1644 = vld [vmem:[%s1643] sm:$0x1]
        %v1646 = vlaneseq
        %v1647 = vshrl.u32 %v1646, 7
        %v1648 = vsub.s32 0, %v1647
        %v1649 = vrot.slane %v1644, %v1648
        %1651 = vmatprep.subr.mxu0 0.0
        %1652 = vmatpush1.msra.mxu0 %v1639
        %1653 = vmatprep.subr.mxu0 0.0
        %1654 = vmatpush1.msra.mxu0 %v1640
        %1655 = vmatprep.subr.mxu0 0.0
        %1656 = vmatpush1.msra.mxu0 %v1641
        %1657 = vmatprep.subr.mxu0 0.0
        %1658 = vmatpush1.msra.mxu0 %v1642
        %1659 = vmatprep.subr.mxu0 0.0
        %1660 = vmatpush1.msra.mxu0 0.0
        %1661 = vmatprep.subr.mxu0 0.0
        %1662 = vmatpush1.msra.mxu0 0.0
        %1663 = vmatprep.subr.mxu0 0.0
        %1664 = vmatpush1.msra.mxu0 0.0
        %1665 = vmatprep.subr.mxu0 0.0
        %1666 = vmatpush1.msra.mxu0 0.0
        %1667 = vmatprep.subr.mxu0 0.0
        %1668 = vmatpush1.msra.mxu0 0.0
        %1669 = vmatprep.subr.mxu0 0.0
        %1670 = vmatpush1.msra.mxu0 0.0
        %1671 = vmatprep.subr.mxu0 0.0
        %1672 = vmatpush1.msra.mxu0 0.0
        %1673 = vmatprep.subr.mxu0 0.0
        %1674 = vmatpush1.msra.mxu0 0.0
        %1675 = vmatprep.subr.mxu0 0.0
        %1676 = vmatpush1.msra.mxu0 0.0
        %1677 = vmatprep.subr.mxu0 0.0
        %1678 = vmatpush1.msra.mxu0 0.0
        %1679 = vmatprep.subr.mxu0 0.0
        %1680 = vmatpush1.msra.mxu0 0.0
        %1681 = vmatprep.subr.mxu0 0.0
        %1682 = vmatpush1.msra.mxu0 0.0
        %1683 = vmatprep.subr.mxu0 0.0
        %1684 = vmatpush1.msra.mxu0 0.0
        %1685 = vmatprep.subr.mxu0 0.0
        %1686 = vmatpush1.msra.mxu0 0.0
        %1687 = vmatprep.subr.mxu0 0.0
        %1688 = vmatpush1.msra.mxu0 0.0
        %1689 = vmatprep.subr.mxu0 0.0
        %1690 = vmatpush1.msra.mxu0 0.0
        %1691 = vmatprep.subr.mxu0 0.0
        %1692 = vmatpush1.msra.mxu0 0.0
        %1693 = vmatprep.subr.mxu0 0.0
        %1694 = vmatpush1.msra.mxu0 0.0
        %1695 = vmatprep.subr.mxu0 0.0
        %1696 = vmatpush1.msra.mxu0 0.0
        %1697 = vmatprep.subr.mxu0 0.0
        %1698 = vmatpush1.msra.mxu0 0.0
        %1699 = vmatprep.subr.mxu0 0.0
        %1700 = vmatpush1.msra.mxu0 0.0
        %1701 = vmatprep.subr.mxu0 0.0
        %1702 = vmatpush1.msra.mxu0 0.0
        %1703 = vmatprep.subr.mxu0 0.0
        %1704 = vmatpush1.msra.mxu0 0.0
        %1705 = vmatprep.subr.mxu0 0.0
        %1706 = vmatpush1.msra.mxu0 0.0
        %1707 = vmatprep.subr.mxu0 0.0
        %1708 = vmatpush1.msra.mxu0 0.0
        %1709 = vmatprep.subr.mxu0 0.0
        %1710 = vmatpush1.msra.mxu0 0.0
        %1711 = vmatprep.subr.mxu0 0.0
        %1712 = vmatpush1.msra.mxu0 0.0
        %1713 = vmatprep.subr.mxu0 0.0
        %1714 = vmatpush1.msra.mxu0 0.0
        %1715 = vmatprep.mubr.f32.mxu0 0.0
        %1716 = vmatmul.mubr.f32.gmra.mrb[0].mxu0 %v1295
        %v1717 = vpop.f32.mrb[0].mxu0
        %v1718 = vadd.f32 %v1649, %v1717
        %v1719 = vpop.f32.mrb[0].mxu0
        %1720 = vmatprep.mubr.f32.mxu0 0.0
        %1721 = vmatmul.mubr.f32.gmra.mrb[0].mxu0 %v1298
        %v1722 = vpop.f32.mrb[0].mxu0
        %v1723 = vadd.f32 %v1649, %v1722
        %v1724 = vpop.f32.mrb[0].mxu0
        %1725 = vdwg.mxu0
        %v1727 = vsel %vm1375, %v1547, 0
        %v1730 = vsel %vm1375, %v1630, 0
        %v1733 = vsel %vm1375, %v1635, 0
        %1735 = vmatprep.subr.mxu0 0.0
        %1736 = vmatpush1.xpose.msra.mxu0 %v1730
        %1737 = vmatprep.subr.mxu0 0.0
        %1738 = vmatpush1.xpose.msra.mxu0 %v1733
        %1739 = vmatprep.subr.mxu0 0.0
        %1740 = vmatpush1.xpose.msra.mxu0 0.0
        %1741 = vmatprep.subr.mxu0 0.0
        %1742 = vmatpush1.xpose.msra.mxu0 0.0
        %1743 = vmatprep.subr.mxu0 0.0
        %1744 = vmatpush1.xpose.msra.mxu0 0.0
        %1745 = vmatprep.subr.mxu0 0.0
        %1746 = vmatpush1.xpose.msra.mxu0 0.0
        %1747 = vmatprep.subr.mxu0 0.0
        %1748 = vmatpush1.xpose.msra.mxu0 0.0
        %1749 = vmatprep.subr.mxu0 0.0
        %1750 = vmatpush1.xpose.msra.mxu0 0.0
        %1751 = vmatprep.subr.mxu0 0.0
        %1752 = vmatpush1.xpose.msra.mxu0 0.0
        %1753 = vmatprep.subr.mxu0 0.0
        %1754 = vmatpush1.xpose.msra.mxu0 0.0
        %1755 = vmatprep.subr.mxu0 0.0
        %1756 = vmatpush1.xpose.msra.mxu0 0.0
        %1757 = vmatprep.subr.mxu0 0.0
        %1758 = vmatpush1.xpose.msra.mxu0 0.0
        %1759 = vmatprep.subr.mxu0 0.0
        %1760 = vmatpush1.xpose.msra.mxu0 0.0
        %1761 = vmatprep.subr.mxu0 0.0
        %1762 = vmatpush1.xpose.msra.mxu0 0.0
        %1763 = vmatprep.subr.mxu0 0.0
        %1764 = vmatpush1.xpose.msra.mxu0 0.0
        %1765 = vmatprep.subr.mxu0 0.0
        %1766 = vmatpush1.xpose.msra.mxu0 0.0
        %1767 = vmatprep.subr.mxu0 0.0
        %1768 = vmatpush1.xpose.msra.mxu0 0.0
        %1769 = vmatprep.subr.mxu0 0.0
        %1770 = vmatpush1.xpose.msra.mxu0 0.0
        %1771 = vmatprep.subr.mxu0 0.0
        %1772 = vmatpush1.xpose.msra.mxu0 0.0
        %1773 = vmatprep.subr.mxu0 0.0
        %1774 = vmatpush1.xpose.msra.mxu0 0.0
        %1775 = vmatprep.subr.mxu0 0.0
        %1776 = vmatpush1.xpose.msra.mxu0 0.0
        %1777 = vmatprep.subr.mxu0 0.0
        %1778 = vmatpush1.xpose.msra.mxu0 0.0
        %1779 = vmatprep.subr.mxu0 0.0
        %1780 = vmatpush1.xpose.msra.mxu0 0.0
        %1781 = vmatprep.subr.mxu0 0.0
        %1782 = vmatpush1.xpose.msra.mxu0 0.0
        %1783 = vmatprep.subr.mxu0 0.0
        %1784 = vmatpush1.xpose.msra.mxu0 0.0
        %1785 = vmatprep.subr.mxu0 0.0
        %1786 = vmatpush1.xpose.msra.mxu0 0.0
        %1787 = vmatprep.subr.mxu0 0.0
        %1788 = vmatpush1.xpose.msra.mxu0 0.0
        %1789 = vmatprep.subr.mxu0 0.0
        %1790 = vmatpush1.xpose.msra.mxu0 0.0
        %1791 = vmatprep.subr.mxu0 0.0
        %1792 = vmatpush1.xpose.msra.mxu0 0.0
        %1793 = vmatprep.subr.mxu0 0.0
        %1794 = vmatpush1.xpose.msra.mxu0 0.0
        %1795 = vmatprep.subr.mxu0 0.0
        %1796 = vmatpush1.xpose.msra.mxu0 0.0
        %1797 = vmatprep.subr.mxu0 0.0
        %1798 = vmatpush1.xpose.msra.mxu0 0.0
        %1799 = vmatprep.mubr.f32.mxu0 0.0
        %1800 = vmatmul.mubr.f32.gmra.mrb[0].mxu0 %v1727
        %v1801 = vpop.f32.mrb[0].mxu0
        %v1802 = vadd.f32 0.0, %v1801
        %v1803 = vpop.f32.mrb[0].mxu0
        %1804 = vdwg.mxu0
        %v1805 = vsel %vm1455, %v1802, -inf
        %1806 = vmax.xlane.f32.xlu0 %v1805
        %v1807 = vpop.xlane.xlu0 %1806
        %v1808 = vsub.f32 %v1802, %v1807
        %v1809 = vmul.f32 %v1808, 1.442695
        %v1810 = vpow.pop %v1809
        %v1811 = vsel %vm1455, %v1810, 0.0
        %1812 = vadd.xlane.f32.xlu0 %v1811
        %v1813 = vpop.xlane.xlu0 %1812
        %v1814 = vrcp.pop %v1813
        %v1815 = vmul.f32 %v1810, %v1814
        %v1817 = vsel %vm1455, %v1815, 0
        %1819 = vmatprep.subr.mxu0 0.0
        %1820 = vmatpush1.msra.mxu0 %v1718
        %1821 = vmatprep.subr.mxu0 0.0
        %1822 = vmatpush1.msra.mxu0 %v1723
        %1823 = vmatprep.subr.mxu0 0.0
        %1824 = vmatpush1.msra.mxu0 0.0
        %1825 = vmatprep.subr.mxu0 0.0
        %1826 = vmatpush1.msra.mxu0 0.0
        %1827 = vmatprep.subr.mxu0 0.0
        %1828 = vmatpush1.msra.mxu0 0.0
        %1829 = vmatprep.subr.mxu0 0.0
        %1830 = vmatpush1.msra.mxu0 0.0
        %1831 = vmatprep.subr.mxu0 0.0
        %1832 = vmatpush1.msra.mxu0 0.0
        %1833 = vmatprep.subr.mxu0 0.0
        %1834 = vmatpush1.msra.mxu0 0.0
        %1835 = vmatprep.subr.mxu0 0.0
        %1836 = vmatpush1.msra.mxu0 0.0
        %1837 = vmatprep.subr.mxu0 0.0
        %1838 = vmatpush1.msra.mxu0 0.0
        %1839 = vmatprep.subr.mxu0 0.0
        %1840 = vmatpush1.msra.mxu0 0.0
        %1841 = vmatprep.subr.mxu0 0.0
        %1842 = vmatpush1.msra.mxu0 0.0
        %1843 = vmatprep.subr.mxu0 0.0
        %1844 = vmatpush1.msra.mxu0 0.0
        %1845 = vmatprep.subr.mxu0 0.0
        %1846 = vmatpush1.msra.mxu0 0.0
        %1847 = vmatprep.subr.mxu0 0.0
        %1848 = vmatpush1.msra.mxu0 0.0
        %1849 = vmatprep.subr.mxu0 0.0
        %1850 = vmatpush1.msra.mxu0 0.0
        %1851 = vmatprep.subr.mxu0 0.0
        %1852 = vmatpush1.msra.mxu0 0.0
        %1853 = vmatprep.subr.mxu0 0.0
        %1854 = vmatpush1.msra.mxu0 0.0
        %1855 = vmatprep.subr.mxu0 0.0
        %1856 = vmatpush1.msra.mxu0 0.0
        %1857 = vmatprep.subr.mxu0 0.0
        %1858 = vmatpush1.msra.mxu0 0.0
        %1859 = vmatprep.subr.mxu0 0.0
        %1860 = vmatpush1.msra.mxu0 0.0
        %1861 = vmatprep.subr.mxu0 0.0
        %1862 = vmatpush1.msra.mxu0 0.0
        %1863 = vmatprep.subr.mxu0 0.0
        %1864 = vmatpush1.msra.mxu0 0.0
        %1865 = vmatprep.subr.mxu0 0.0
        %1866 = vmatpush1.msra.mxu0 0.0
        %1867 = vmatprep.subr.mxu0 0.0
        %1868 = vmatpush1.msra.mxu0 0.0
        %1869 = vmatprep.subr.mxu0 0.0
        %1870 = vmatpush1.msra.mxu0 0.0
        %1871 = vmatprep.subr.mxu0 0.0
        %1872 = vmatpush1.msra.mxu0 0.0
        %1873 = vmatprep.subr.mxu0 0.0
        %1874 = vmatpush1.msra.mxu0 0.0
        %1875 = vmatprep.subr.mxu0 0.0
        %1876 = vmatpush1.msra.mxu0 0.0
        %1877 = vmatprep.subr.mxu0 0.0
        %1878 = vmatpush1.msra.mxu0 0.0
        %1879 = vmatprep.subr.mxu0 0.0
        %1880 = vmatpush1.msra.mxu0 0.0
        %1881 = vmatprep.subr.mxu0 0.0
        %1882 = vmatpush1.msra.mxu0 0.0
        %1883 = vmatprep.mubr.f32.mxu0 0.0
        %1884 = vmatmul.mubr.f32.gmra.mrb[0].mxu0 %v1817
        %v1885 = vpop.f32.mrb[0].mxu0
        %v1886 = vadd.f32 0.0, %v1885
        %v1887 = vpop.f32.mrb[0].mxu0
        %1888 = vdwg.mxu0
        %v1890 = vsel %vm1455, %v1466, 0
        %1892 = vmatprep.subr.mxu0 0.0
        %1893 = vmatpush1.msra.mxu0 %v1367
        %1894 = vmatprep.subr.mxu0 0.0
        %1895 = vmatpush1.msra.mxu0 %v1372
        %1896 = vmatprep.subr.mxu0 0.0
        %1897 = vmatpush1.msra.mxu0 0.0
        %1898 = vmatprep.subr.mxu0 0.0
        %1899 = vmatpush1.msra.mxu0 0.0
        %1900 = vmatprep.subr.mxu0 0.0
        %1901 = vmatpush1.msra.mxu0 0.0
        %1902 = vmatprep.subr.mxu0 0.0
        %1903 = vmatpush1.msra.mxu0 0.0
        %1904 = vmatprep.subr.mxu0 0.0
        %1905 = vmatpush1.msra.mxu0 0.0
        %1906 = vmatprep.subr.mxu0 0.0
        %1907 = vmatpush1.msra.mxu0 0.0
        %1908 = vmatprep.subr.mxu0 0.0
        %1909 = vmatpush1.msra.mxu0 0.0
        %1910 = vmatprep.subr.mxu0 0.0
        %1911 = vmatpush1.msra.mxu0 0.0
        %1912 = vmatprep.subr.mxu0 0.0
        %1913 = vmatpush1.msra.mxu0 0.0
        %1914 = vmatprep.subr.mxu0 0.0
        %1915 = vmatpush1.msra.mxu0 0.0
        %1916 = vmatprep.subr.mxu0 0.0
        %1917 = vmatpush1.msra.mxu0 0.0
        %1918 = vmatprep.subr.mxu0 0.0
        %1919 = vmatpush1.msra.mxu0 0.0
        %1920 = vmatprep.subr.mxu0 0.0
        %1921 = vmatpush1.msra.mxu0 0.0
        %1922 = vmatprep.subr.mxu0 0.0
        %1923 = vmatpush1.msra.mxu0 0.0
        %1924 = vmatprep.subr.mxu0 0.0
        %1925 = vmatpush1.msra.mxu0 0.0
        %1926 = vmatprep.subr.mxu0 0.0
        %1927 = vmatpush1.msra.mxu0 0.0
        %1928 = vmatprep.subr.mxu0 0.0
        %1929 = vmatpush1.msra.mxu0 0.0
        %1930 = vmatprep.subr.mxu0 0.0
        %1931 = vmatpush1.msra.mxu0 0.0
        %1932 = vmatprep.subr.mxu0 0.0
        %1933 = vmatpush1.msra.mxu0 0.0
        %1934 = vmatprep.subr.mxu0 0.0
        %1935 = vmatpush1.msra.mxu0 0.0
        %1936 = vmatprep.subr.mxu0 0.0
        %1937 = vmatpush1.msra.mxu0 0.0
        %1938 = vmatprep.subr.mxu0 0.0
        %1939 = vmatpush1.msra.mxu0 0.0
        %1940 = vmatprep.subr.mxu0 0.0
        %1941 = vmatpush1.msra.mxu0 0.0
        %1942 = vmatprep.subr.mxu0 0.0
        %1943 = vmatpush1.msra.mxu0 0.0
        %1944 = vmatprep.subr.mxu0 0.0
        %1945 = vmatpush1.msra.mxu0 0.0
        %1946 = vmatprep.subr.mxu0 0.0
        %1947 = vmatpush1.msra.mxu0 0.0
        %1948 = vmatprep.subr.mxu0 0.0
        %1949 = vmatpush1.msra.mxu0 0.0
        %1950 = vmatprep.subr.mxu0 0.0
        %1951 = vmatpush1.msra.mxu0 0.0
        %1952 = vmatprep.subr.mxu0 0.0
        %1953 = vmatpush1.msra.mxu0 0.0
        %1954 = vmatprep.subr.mxu0 0.0
        %1955 = vmatpush1.msra.mxu0 0.0
        %1956 = vmatprep.mubr.f32.mxu0 0.0
        %1957 = vmatmul.mubr.f32.gmra.mrb[0].mxu0 %v1890
        %v1958 = vpop.f32.mrb[0].mxu0
        %v1959 = vadd.f32 %v1886, %v1958
        %v1960 = vpop.f32.mrb[0].mxu0
        %1961 = vdwg.mxu0
        %s1962 = scalar_lea.vmem %s13, 64
        %v1963 = vld [vmem:[%s1962] sm:$0xff]
        %v1964 = vld [vmem:[%s1962 + $0x8] sm:$0xff]
        %v1965 = vld [vmem:[%s1962 + $0x10] sm:$0xff]
        %v1966 = vld [vmem:[%s1962 + $0x18] sm:$0xff]
        %s1967 = scalar_lea.vmem %s15, 2
        %v1968 = vld [vmem:[%s1967] sm:$0x1]
        %v1970 = vlaneseq
        %v1971 = vshrl.u32 %v1970, 7
        %v1972 = vsub.s32 0, %v1971
        %v1973 = vrot.slane %v1968, %v1972
        %1975 = vmatprep.subr.mxu0 0.0
        %1976 = vmatpush1.msra.mxu0 %v1963
        %1977 = vmatprep.subr.mxu0 0.0
        %1978 = vmatpush1.msra.mxu0 %v1964
        %1979 = vmatprep.subr.mxu0 0.0
        %1980 = vmatpush1.msra.mxu0 %v1965
        %1981 = vmatprep.subr.mxu0 0.0
        %1982 = vmatpush1.msra.mxu0 %v1966
        %1983 = vmatprep.subr.mxu0 0.0
        %1984 = vmatpush1.msra.mxu0 0.0
        %1985 = vmatprep.subr.mxu0 0.0
        %1986 = vmatpush1.msra.mxu0 0.0
        %1987 = vmatprep.subr.mxu0 0.0
        %1988 = vmatpush1.msra.mxu0 0.0
        %1989 = vmatprep.subr.mxu0 0.0
        %1990 = vmatpush1.msra.mxu0 0.0
        %1991 = vmatprep.subr.mxu0 0.0
        %1992 = vmatpush1.msra.mxu0 0.0
        %1993 = vmatprep.subr.mxu0 0.0
        %1994 = vmatpush1.msra.mxu0 0.0
        %1995 = vmatprep.subr.mxu0 0.0
        %1996 = vmatpush1.msra.mxu0 0.0
        %1997 = vmatprep.subr.mxu0 0.0
        %1998 = vmatpush1.msra.mxu0 0.0
        %1999 = vmatprep.subr.mxu0 0.0
        %2000 = vmatpush1.msra.mxu0 0.0
        %2001 = vmatprep.subr.mxu0 0.0
        %2002 = vmatpush1.msra.mxu0 0.0
        %2003 = vmatprep.subr.mxu0 0.0
        %2004 = vmatpush1.msra.mxu0 0.0
        %2005 = vmatprep.subr.mxu0 0.0
        %2006 = vmatpush1.msra.mxu0 0.0
        %2007 = vmatprep.subr.mxu0 0.0
        %2008 = vmatpush1.msra.mxu0 0.0
        %2009 = vmatprep.subr.mxu0 0.0
        %2010 = vmatpush1.msra.mxu0 0.0
        %2011 = vmatprep.subr.mxu0 0.0
        %2012 = vmatpush1.msra.mxu0 0.0
        %2013 = vmatprep.subr.mxu0 0.0
        %2014 = vmatpush1.msra.mxu0 0.0
        %2015 = vmatprep.subr.mxu0 0.0
        %2016 = vmatpush1.msra.mxu0 0.0
        %2017 = vmatprep.subr.mxu0 0.0
        %2018 = vmatpush1.msra.mxu0 0.0
        %2019 = vmatprep.subr.mxu0 0.0
        %2020 = vmatpush1.msra.mxu0 0.0
        %2021 = vmatprep.subr.mxu0 0.0
        %2022 = vmatpush1.msra.mxu0 0.0
        %2023 = vmatprep.subr.mxu0 0.0
        %2024 = vmatpush1.msra.mxu0 0.0
        %2025 = vmatprep.subr.mxu0 0.0
        %2026 = vmatpush1.msra.mxu0 0.0
        %2027 = vmatprep.subr.mxu0 0.0
        %2028 = vmatpush1.msra.mxu0 0.0
        %2029 = vmatprep.subr.mxu0 0.0
        %2030 = vmatpush1.msra.mxu0 0.0
        %2031 = vmatprep.subr.mxu0 0.0
        %2032 = vmatpush1.msra.mxu0 0.0
        %2033 = vmatprep.subr.mxu0 0.0
        %2034 = vmatpush1.msra.mxu0 0.0
        %2035 = vmatprep.subr.mxu0 0.0
        %2036 = vmatpush1.msra.mxu0 0.0
        %2037 = vmatprep.subr.mxu0 0.0
        %2038 = vmatpush1.msra.mxu0 0.0
        %2039 = vmatprep.mubr.f32.mxu0 0.0
        %2040 = vmatmul.mubr.f32.gmra.mrb[0].mxu0 %v1119
        %v2041 = vpop.f32.mrb[0].mxu0
        %v2042 = vadd.f32 %v1973, %v2041
        %v2043 = vpop.f32.mrb[0].mxu0
        %2044 = vdwg.mxu0
        %s2045 = scalar_lea.vmem %s17, 64
        %v2046 = vld [vmem:[%s2045] sm:$0xff]
        %v2047 = vld [vmem:[%s2045 + $0x8] sm:$0xff]
        %v2048 = vld [vmem:[%s2045 + $0x10] sm:$0xff]
        %v2049 = vld [vmem:[%s2045 + $0x18] sm:$0xff]
        %s2050 = scalar_lea.vmem %s19, 2
        %v2051 = vld [vmem:[%s2050] sm:$0x1]
        %v2053 = vlaneseq
        %v2054 = vshrl.u32 %v2053, 7
        %v2055 = vsub.s32 0, %v2054
        %v2056 = vrot.slane %v2051, %v2055
        %2058 = vmatprep.subr.mxu0 0.0
        %2059 = vmatpush1.msra.mxu0 %v2046
        %2060 = vmatprep.subr.mxu0 0.0
        %2061 = vmatpush1.msra.mxu0 %v2047
        %2062 = vmatprep.subr.mxu0 0.0
        %2063 = vmatpush1.msra.mxu0 %v2048
        %2064 = vmatprep.subr.mxu0 0.0
        %2065 = vmatpush1.msra.mxu0 %v2049
        %2066 = vmatprep.subr.mxu0 0.0
        %2067 = vmatpush1.msra.mxu0 0.0
        %2068 = vmatprep.subr.mxu0 0.0
        %2069 = vmatpush1.msra.mxu0 0.0
        %2070 = vmatprep.subr.mxu0 0.0
        %2071 = vmatpush1.msra.mxu0 0.0
        %2072 = vmatprep.subr.mxu0 0.0
        %2073 = vmatpush1.msra.mxu0 0.0
        %2074 = vmatprep.subr.mxu0 0.0
        %2075 = vmatpush1.msra.mxu0 0.0
        %2076 = vmatprep.subr.mxu0 0.0
        %2077 = vmatpush1.msra.mxu0 0.0
        %2078 = vmatprep.subr.mxu0 0.0
        %2079 = vmatpush1.msra.mxu0 0.0
        %2080 = vmatprep.subr.mxu0 0.0
        %2081 = vmatpush1.msra.mxu0 0.0
        %2082 = vmatprep.subr.mxu0 0.0
        %2083 = vmatpush1.msra.mxu0 0.0
        %2084 = vmatprep.subr.mxu0 0.0
        %2085 = vmatpush1.msra.mxu0 0.0
        %2086 = vmatprep.subr.mxu0 0.0
        %2087 = vmatpush1.msra.mxu0 0.0
        %2088 = vmatprep.subr.mxu0 0.0
        %2089 = vmatpush1.msra.mxu0 0.0
        %2090 = vmatprep.subr.mxu0 0.0
        %2091 = vmatpush1.msra.mxu0 0.0
        %2092 = vmatprep.subr.mxu0 0.0
        %2093 = vmatpush1.msra.mxu0 0.0
        %2094 = vmatprep.subr.mxu0 0.0
        %2095 = vmatpush1.msra.mxu0 0.0
        %2096 = vmatprep.subr.mxu0 0.0
        %2097 = vmatpush1.msra.mxu0 0.0
        %2098 = vmatprep.subr.mxu0 0.0
        %2099 = vmatpush1.msra.mxu0 0.0
        %2100 = vmatprep.subr.mxu0 0.0
        %2101 = vmatpush1.msra.mxu0 0.0
        %2102 = vmatprep.subr.mxu0 0.0
        %2103 = vmatpush1.msra.mxu0 0.0
        %2104 = vmatprep.subr.mxu0 0.0
        %2105 = vmatpush1.msra.mxu0 0.0
        %2106 = vmatprep.subr.mxu0 0.0
        %2107 = vmatpush1.msra.mxu0 0.0
        %2108 = vmatprep.subr.mxu0 0.0
        %2109 = vmatpush1.msra.mxu0 0.0
        %2110 = vmatprep.subr.mxu0 0.0
        %2111 = vmatpush1.msra.mxu0 0.0
        %2112 = vmatprep.subr.mxu0 0.0
        %2113 = vmatpush1.msra.mxu0 0.0
        %2114 = vmatprep.subr.mxu0 0.0
        %2115 = vmatpush1.msra.mxu0 0.0
        %2116 = vmatprep.subr.mxu0 0.0
        %2117 = vmatpush1.msra.mxu0 0.0
        %2118 = vmatprep.subr.mxu0 0.0
        %2119 = vmatpush1.msra.mxu0 0.0
        %2120 = vmatprep.subr.mxu0 0.0
        %2121 = vmatpush1.msra.mxu0 0.0
        %2122 = vmatprep.mubr.f32.mxu0 0.0
        %2123 = vmatmul.mubr.f32.gmra.mrb[0].mxu0 %v1203
        %v2124 = vpop.f32.mrb[0].mxu0
        %v2125 = vadd.f32 %v2056, %v2124
        %v2126 = vpop.f32.mrb[0].mxu0
        %2127 = vmatprep.mubr.f32.mxu0 0.0
        %2128 = vmatmul.mubr.f32.gmra.mrb[0].mxu0 %v1206
        %v2129 = vpop.f32.mrb[0].mxu0
        %v2130 = vadd.f32 %v2056, %v2129
        %v2131 = vpop.f32.mrb[0].mxu0
        %2132 = vdwg.mxu0
        %s2133 = scalar_lea.vmem %s21, 64
        %v2134 = vld [vmem:[%s2133] sm:$0xff]
        %v2135 = vld [vmem:[%s2133 + $0x8] sm:$0xff]
        %v2136 = vld [vmem:[%s2133 + $0x10] sm:$0xff]
        %v2137 = vld [vmem:[%s2133 + $0x18] sm:$0xff]
        %s2138 = scalar_lea.vmem %s23, 2
        %v2139 = vld [vmem:[%s2138] sm:$0x1]
        %v2141 = vlaneseq
        %v2142 = vshrl.u32 %v2141, 7
        %v2143 = vsub.s32 0, %v2142
        %v2144 = vrot.slane %v2139, %v2143
        %2146 = vmatprep.subr.mxu0 0.0
        %2147 = vmatpush1.msra.mxu0 %v2134
        %2148 = vmatprep.subr.mxu0 0.0
        %2149 = vmatpush1.msra.mxu0 %v2135
        %2150 = vmatprep.subr.mxu0 0.0
        %2151 = vmatpush1.msra.mxu0 %v2136
        %2152 = vmatprep.subr.mxu0 0.0
        %2153 = vmatpush1.msra.mxu0 %v2137
        %2154 = vmatprep.subr.mxu0 0.0
        %2155 = vmatpush1.msra.mxu0 0.0
        %2156 = vmatprep.subr.mxu0 0.0
        %2157 = vmatpush1.msra.mxu0 0.0
        %2158 = vmatprep.subr.mxu0 0.0
        %2159 = vmatpush1.msra.mxu0 0.0
        %2160 = vmatprep.subr.mxu0 0.0
        %2161 = vmatpush1.msra.mxu0 0.0
        %2162 = vmatprep.subr.mxu0 0.0
        %2163 = vmatpush1.msra.mxu0 0.0
        %2164 = vmatprep.subr.mxu0 0.0
        %2165 = vmatpush1.msra.mxu0 0.0
        %2166 = vmatprep.subr.mxu0 0.0
        %2167 = vmatpush1.msra.mxu0 0.0
        %2168 = vmatprep.subr.mxu0 0.0
        %2169 = vmatpush1.msra.mxu0 0.0
        %2170 = vmatprep.subr.mxu0 0.0
        %2171 = vmatpush1.msra.mxu0 0.0
        %2172 = vmatprep.subr.mxu0 0.0
        %2173 = vmatpush1.msra.mxu0 0.0
        %2174 = vmatprep.subr.mxu0 0.0
        %2175 = vmatpush1.msra.mxu0 0.0
        %2176 = vmatprep.subr.mxu0 0.0
        %2177 = vmatpush1.msra.mxu0 0.0
        %2178 = vmatprep.subr.mxu0 0.0
        %2179 = vmatpush1.msra.mxu0 0.0
        %2180 = vmatprep.subr.mxu0 0.0
        %2181 = vmatpush1.msra.mxu0 0.0
        %2182 = vmatprep.subr.mxu0 0.0
        %2183 = vmatpush1.msra.mxu0 0.0
        %2184 = vmatprep.subr.mxu0 0.0
        %2185 = vmatpush1.msra.mxu0 0.0
        %2186 = vmatprep.subr.mxu0 0.0
        %2187 = vmatpush1.msra.mxu0 0.0
        %2188 = vmatprep.subr.mxu0 0.0
        %2189 = vmatpush1.msra.mxu0 0.0
        %2190 = vmatprep.subr.mxu0 0.0
        %2191 = vmatpush1.msra.mxu0 0.0
        %2192 = vmatprep.subr.mxu0 0.0
        %2193 = vmatpush1.msra.mxu0 0.0
        %2194 = vmatprep.subr.mxu0 0.0
        %2195 = vmatpush1.msra.mxu0 0.0
        %2196 = vmatprep.subr.mxu0 0.0
        %2197 = vmatpush1.msra.mxu0 0.0
        %2198 = vmatprep.subr.mxu0 0.0
        %2199 = vmatpush1.msra.mxu0 0.0
        %2200 = vmatprep.subr.mxu0 0.0
        %2201 = vmatpush1.msra.mxu0 0.0
        %2202 = vmatprep.subr.mxu0 0.0
        %2203 = vmatpush1.msra.mxu0 0.0
        %2204 = vmatprep.subr.mxu0 0.0
        %2205 = vmatpush1.msra.mxu0 0.0
        %2206 = vmatprep.subr.mxu0 0.0
        %2207 = vmatpush1.msra.mxu0 0.0
        %2208 = vmatprep.subr.mxu0 0.0
        %2209 = vmatpush1.msra.mxu0 0.0
        %2210 = vmatprep.mubr.f32.mxu0 0.0
        %2211 = vmatmul.mubr.f32.gmra.mrb[0].mxu0 %v1295
        %v2212 = vpop.f32.mrb[0].mxu0
        %v2213 = vadd.f32 %v2144, %v2212
        %v2214 = vpop.f32.mrb[0].mxu0
        %2215 = vmatprep.mubr.f32.mxu0 0.0
        %2216 = vmatmul.mubr.f32.gmra.mrb[0].mxu0 %v1298
        %v2217 = vpop.f32.mrb[0].mxu0
        %v2218 = vadd.f32 %v2144, %v2217
        %v2219 = vpop.f32.mrb[0].mxu0
        %2220 = vdwg.mxu0
        %v2222 = vsel %vm1375, %v2042, 0
        %v2225 = vsel %vm1375, %v2125, 0
        %v2228 = vsel %vm1375, %v2130, 0
        %2230 = vmatprep.subr.mxu0 0.0
        %2231 = vmatpush1.xpose.msra.mxu0 %v2225
        %2232 = vmatprep.subr.mxu0 0.0
        %2233 = vmatpush1.xpose.msra.mxu0 %v2228
        %2234 = vmatprep.subr.mxu0 0.0
        %2235 = vmatpush1.xpose.msra.mxu0 0.0
        %2236 = vmatprep.subr.mxu0 0.0
        %2237 = vmatpush1.xpose.msra.mxu0 0.0
        %2238 = vmatprep.subr.mxu0 0.0
        %2239 = vmatpush1.xpose.msra.mxu0 0.0
        %2240 = vmatprep.subr.mxu0 0.0
        %2241 = vmatpush1.xpose.msra.mxu0 0.0
        %2242 = vmatprep.subr.mxu0 0.0
        %2243 = vmatpush1.xpose.msra.mxu0 0.0
        %2244 = vmatprep.subr.mxu0 0.0
        %2245 = vmatpush1.xpose.msra.mxu0 0.0
        %2246 = vmatprep.subr.mxu0 0.0
        %2247 = vmatpush1.xpose.msra.mxu0 0.0
        %2248 = vmatprep.subr.mxu0 0.0
        %2249 = vmatpush1.xpose.msra.mxu0 0.0
        %2250 = vmatprep.subr.mxu0 0.0
        %2251 = vmatpush1.xpose.msra.mxu0 0.0
        %2252 = vmatprep.subr.mxu0 0.0
        %2253 = vmatpush1.xpose.msra.mxu0 0.0
        %2254 = vmatprep.subr.mxu0 0.0
        %2255 = vmatpush1.xpose.msra.mxu0 0.0
        %2256 = vmatprep.subr.mxu0 0.0
        %2257 = vmatpush1.xpose.msra.mxu0 0.0
        %2258 = vmatprep.subr.mxu0 0.0
        %2259 = vmatpush1.xpose.msra.mxu0 0.0
        %2260 = vmatprep.subr.mxu0 0.0
        %2261 = vmatpush1.xpose.msra.mxu0 0.0
        %2262 = vmatprep.subr.mxu0 0.0
        %2263 = vmatpush1.xpose.msra.mxu0 0.0
        %2264 = vmatprep.subr.mxu0 0.0
        %2265 = vmatpush1.xpose.msra.mxu0 0.0
        %2266 = vmatprep.subr.mxu0 0.0
        %2267 = vmatpush1.xpose.msra.mxu0 0.0
        %2268 = vmatprep.subr.mxu0 0.0
        %2269 = vmatpush1.xpose.msra.mxu0 0.0
        %2270 = vmatprep.subr.mxu0 0.0
        %2271 = vmatpush1.xpose.msra.mxu0 0.0
        %2272 = vmatprep.subr.mxu0 0.0
        %2273 = vmatpush1.xpose.msra.mxu0 0.0
        %2274 = vmatprep.subr.mxu0 0.0
        %2275 = vmatpush1.xpose.msra.mxu0 0.0
        %2276 = vmatprep.subr.mxu0 0.0
        %2277 = vmatpush1.xpose.msra.mxu0 0.0
        %2278 = vmatprep.subr.mxu0 0.0
        %2279 = vmatpush1.xpose.msra.mxu0 0.0
        %2280 = vmatprep.subr.mxu0 0.0
        %2281 = vmatpush1.xpose.msra.mxu0 0.0
        %2282 = vmatprep.subr.mxu0 0.0
        %2283 = vmatpush1.xpose.msra.mxu0 0.0
        %2284 = vmatprep.subr.mxu0 0.0
        %2285 = vmatpush1.xpose.msra.mxu0 0.0
        %2286 = vmatprep.subr.mxu0 0.0
        %2287 = vmatpush1.xpose.msra.mxu0 0.0
        %2288 = vmatprep.subr.mxu0 0.0
        %2289 = vmatpush1.xpose.msra.mxu0 0.0
        %2290 = vmatprep.subr.mxu0 0.0
        %2291 = vmatpush1.xpose.msra.mxu0 0.0
        %2292 = vmatprep.subr.mxu0 0.0
        %2293 = vmatpush1.xpose.msra.mxu0 0.0
        %2294 = vmatprep.mubr.f32.mxu0 0.0
        %2295 = vmatmul.mubr.f32.gmra.mrb[0].mxu0 %v2222
        %v2296 = vpop.f32.mrb[0].mxu0
        %v2297 = vadd.f32 0.0, %v2296
        %v2298 = vpop.f32.mrb[0].mxu0
        %2299 = vdwg.mxu0
        %v2300 = vsel %vm1455, %v2297, -inf
        %2301 = vmax.xlane.f32.xlu0 %v2300
        %v2302 = vpop.xlane.xlu0 %2301
        %v2303 = vsub.f32 %v2297, %v2302
        %v2304 = vmul.f32 %v2303, 1.442695
        %v2305 = vpow.pop %v2304
        %v2306 = vsel %vm1455, %v2305, 0.0
        %2307 = vadd.xlane.f32.xlu0 %v2306
        %v2308 = vpop.xlane.xlu0 %2307
        %v2309 = vrcp.pop %v2308
        %v2310 = vmul.f32 %v2305, %v2309
        %v2312 = vsel %vm1455, %v2310, 0
        %2314 = vmatprep.subr.mxu0 0.0
        %2315 = vmatpush1.msra.mxu0 %v2213
        %2316 = vmatprep.subr.mxu0 0.0
        %2317 = vmatpush1.msra.mxu0 %v2218
        %2318 = vmatprep.subr.mxu0 0.0
        %2319 = vmatpush1.msra.mxu0 0.0
        %2320 = vmatprep.subr.mxu0 0.0
        %2321 = vmatpush1.msra.mxu0 0.0
        %2322 = vmatprep.subr.mxu0 0.0
        %2323 = vmatpush1.msra.mxu0 0.0
        %2324 = vmatprep.subr.mxu0 0.0
        %2325 = vmatpush1.msra.mxu0 0.0
        %2326 = vmatprep.subr.mxu0 0.0
        %2327 = vmatpush1.msra.mxu0 0.0
        %2328 = vmatprep.subr.mxu0 0.0
        %2329 = vmatpush1.msra.mxu0 0.0
        %2330 = vmatprep.subr.mxu0 0.0
        %2331 = vmatpush1.msra.mxu0 0.0
        %2332 = vmatprep.subr.mxu0 0.0
        %2333 = vmatpush1.msra.mxu0 0.0
        %2334 = vmatprep.subr.mxu0 0.0
        %2335 = vmatpush1.msra.mxu0 0.0
        %2336 = vmatprep.subr.mxu0 0.0
        %2337 = vmatpush1.msra.mxu0 0.0
        %2338 = vmatprep.subr.mxu0 0.0
        %2339 = vmatpush1.msra.mxu0 0.0
        %2340 = vmatprep.subr.mxu0 0.0
        %2341 = vmatpush1.msra.mxu0 0.0
        %2342 = vmatprep.subr.mxu0 0.0
        %2343 = vmatpush1.msra.mxu0 0.0
        %2344 = vmatprep.subr.mxu0 0.0
        %2345 = vmatpush1.msra.mxu0 0.0
        %2346 = vmatprep.subr.mxu0 0.0
        %2347 = vmatpush1.msra.mxu0 0.0
        %2348 = vmatprep.subr.mxu0 0.0
        %2349 = vmatpush1.msra.mxu0 0.0
        %2350 = vmatprep.subr.mxu0 0.0
        %2351 = vmatpush1.msra.mxu0 0.0
        %2352 = vmatprep.subr.mxu0 0.0
        %2353 = vmatpush1.msra.mxu0 0.0
        %2354 = vmatprep.subr.mxu0 0.0
        %2355 = vmatpush1.msra.mxu0 0.0
        %2356 = vmatprep.subr.mxu0 0.0
        %2357 = vmatpush1.msra.mxu0 0.0
        %2358 = vmatprep.subr.mxu0 0.0
        %2359 = vmatpush1.msra.mxu0 0.0
        %2360 = vmatprep.subr.mxu0 0.0
        %2361 = vmatpush1.msra.mxu0 0.0
        %2362 = vmatprep.subr.mxu0 0.0
        %2363 = vmatpush1.msra.mxu0 0.0
        %2364 = vmatprep.subr.mxu0 0.0
        %2365 = vmatpush1.msra.mxu0 0.0
        %2366 = vmatprep.subr.mxu0 0.0
        %2367 = vmatpush1.msra.mxu0 0.0
        %2368 = vmatprep.subr.mxu0 0.0
        %2369 = vmatpush1.msra.mxu0 0.0
        %2370 = vmatprep.subr.mxu0 0.0
        %2371 = vmatpush1.msra.mxu0 0.0
        %2372 = vmatprep.subr.mxu0 0.0
        %2373 = vmatpush1.msra.mxu0 0.0
        %2374 = vmatprep.subr.mxu0 0.0
        %2375 = vmatpush1.msra.mxu0 0.0
        %2376 = vmatprep.subr.mxu0 0.0
        %2377 = vmatpush1.msra.mxu0 0.0
        %2378 = vmatprep.mubr.f32.mxu0 0.0
        %2379 = vmatmul.mubr.f32.gmra.mrb[0].mxu0 %v2312
        %v2380 = vpop.f32.mrb[0].mxu0
        %v2381 = vadd.f32 0.0, %v2380
        %v2382 = vpop.f32.mrb[0].mxu0
        %2383 = vdwg.mxu0
        %v2384 = vadd.f32 %v1959, %v2381
        %s2385 = scalar_lea.vmem %s13, 96
        %v2386 = vld [vmem:[%s2385] sm:$0xff]
        %v2387 = vld [vmem:[%s2385 + $0x8] sm:$0xff]
        %v2388 = vld [vmem:[%s2385 + $0x10] sm:$0xff]
        %v2389 = vld [vmem:[%s2385 + $0x18] sm:$0xff]
        %s2390 = scalar_lea.vmem %s15, 3
        %v2391 = vld [vmem:[%s2390] sm:$0x1]
        %v2393 = vlaneseq
        %v2394 = vshrl.u32 %v2393, 7
        %v2395 = vsub.s32 0, %v2394
        %v2396 = vrot.slane %v2391, %v2395
        %2398 = vmatprep.subr.mxu0 0.0
        %2399 = vmatpush1.msra.mxu0 %v2386
        %2400 = vmatprep.subr.mxu0 0.0
        %2401 = vmatpush1.msra.mxu0 %v2387
        %2402 = vmatprep.subr.mxu0 0.0
        %2403 = vmatpush1.msra.mxu0 %v2388
        %2404 = vmatprep.subr.mxu0 0.0
        %2405 = vmatpush1.msra.mxu0 %v2389
        %2406 = vmatprep.subr.mxu0 0.0
        %2407 = vmatpush1.msra.mxu0 0.0
        %2408 = vmatprep.subr.mxu0 0.0
        %2409 = vmatpush1.msra.mxu0 0.0
        %2410 = vmatprep.subr.mxu0 0.0
        %2411 = vmatpush1.msra.mxu0 0.0
        %2412 = vmatprep.subr.mxu0 0.0
        %2413 = vmatpush1.msra.mxu0 0.0
        %2414 = vmatprep.subr.mxu0 0.0
        %2415 = vmatpush1.msra.mxu0 0.0
        %2416 = vmatprep.subr.mxu0 0.0
        %2417 = vmatpush1.msra.mxu0 0.0
        %2418 = vmatprep.subr.mxu0 0.0
        %2419 = vmatpush1.msra.mxu0 0.0
        %2420 = vmatprep.subr.mxu0 0.0
        %2421 = vmatpush1.msra.mxu0 0.0
        %2422 = vmatprep.subr.mxu0 0.0
        %2423 = vmatpush1.msra.mxu0 0.0
        %2424 = vmatprep.subr.mxu0 0.0
        %2425 = vmatpush1.msra.mxu0 0.0
        %2426 = vmatprep.subr.mxu0 0.0
        %2427 = vmatpush1.msra.mxu0 0.0
        %2428 = vmatprep.subr.mxu0 0.0
        %2429 = vmatpush1.msra.mxu0 0.0
        %2430 = vmatprep.subr.mxu0 0.0
        %2431 = vmatpush1.msra.mxu0 0.0
        %2432 = vmatprep.subr.mxu0 0.0
        %2433 = vmatpush1.msra.mxu0 0.0
        %2434 = vmatprep.subr.mxu0 0.0
        %2435 = vmatpush1.msra.mxu0 0.0
        %2436 = vmatprep.subr.mxu0 0.0
        %2437 = vmatpush1.msra.mxu0 0.0
        %2438 = vmatprep.subr.mxu0 0.0
        %2439 = vmatpush1.msra.mxu0 0.0
        %2440 = vmatprep.subr.mxu0 0.0
        %2441 = vmatpush1.msra.mxu0 0.0
        %2442 = vmatprep.subr.mxu0 0.0
        %2443 = vmatpush1.msra.mxu0 0.0
        %2444 = vmatprep.subr.mxu0 0.0
        %2445 = vmatpush1.msra.mxu0 0.0
        %2446 = vmatprep.subr.mxu0 0.0
        %2447 = vmatpush1.msra.mxu0 0.0
        %2448 = vmatprep.subr.mxu0 0.0
        %2449 = vmatpush1.msra.mxu0 0.0
        %2450 = vmatprep.subr.mxu0 0.0
        %2451 = vmatpush1.msra.mxu0 0.0
        %2452 = vmatprep.subr.mxu0 0.0
        %2453 = vmatpush1.msra.mxu0 0.0
        %2454 = vmatprep.subr.mxu0 0.0
        %2455 = vmatpush1.msra.mxu0 0.0
        %2456 = vmatprep.subr.mxu0 0.0
        %2457 = vmatpush1.msra.mxu0 0.0
        %2458 = vmatprep.subr.mxu0 0.0
        %2459 = vmatpush1.msra.mxu0 0.0
        %2460 = vmatprep.subr.mxu0 0.0
        %2461 = vmatpush1.msra.mxu0 0.0
        %2462 = vmatprep.mubr.f32.mxu0 0.0
        %2463 = vmatmul.mubr.f32.gmra.mrb[0].mxu0 %v1119
        %v2464 = vpop.f32.mrb[0].mxu0
        %v2465 = vadd.f32 %v2396, %v2464
        %v2466 = vpop.f32.mrb[0].mxu0
        %2467 = vdwg.mxu0
        %s2468 = scalar_lea.vmem %s17, 96
        %v2469 = vld [vmem:[%s2468] sm:$0xff]
        %v2470 = vld [vmem:[%s2468 + $0x8] sm:$0xff]
        %v2471 = vld [vmem:[%s2468 + $0x10] sm:$0xff]
        %v2472 = vld [vmem:[%s2468 + $0x18] sm:$0xff]
        %s2473 = scalar_lea.vmem %s19, 3
        %v2474 = vld [vmem:[%s2473] sm:$0x1]
        %v2476 = vlaneseq
        %v2477 = vshrl.u32 %v2476, 7
        %v2478 = vsub.s32 0, %v2477
        %v2479 = vrot.slane %v2474, %v2478
        %2481 = vmatprep.subr.mxu0 0.0
        %2482 = vmatpush1.msra.mxu0 %v2469
        %2483 = vmatprep.subr.mxu0 0.0
        %2484 = vmatpush1.msra.mxu0 %v2470
        %2485 = vmatprep.subr.mxu0 0.0
        %2486 = vmatpush1.msra.mxu0 %v2471
        %2487 = vmatprep.subr.mxu0 0.0
        %2488 = vmatpush1.msra.mxu0 %v2472
        %2489 = vmatprep.subr.mxu0 0.0
        %2490 = vmatpush1.msra.mxu0 0.0
        %2491 = vmatprep.subr.mxu0 0.0
        %2492 = vmatpush1.msra.mxu0 0.0
        %2493 = vmatprep.subr.mxu0 0.0
        %2494 = vmatpush1.msra.mxu0 0.0
        %2495 = vmatprep.subr.mxu0 0.0
        %2496 = vmatpush1.msra.mxu0 0.0
        %2497 = vmatprep.subr.mxu0 0.0
        %2498 = vmatpush1.msra.mxu0 0.0
        %2499 = vmatprep.subr.mxu0 0.0
        %2500 = vmatpush1.msra.mxu0 0.0
        %2501 = vmatprep.subr.mxu0 0.0
        %2502 = vmatpush1.msra.mxu0 0.0
        %2503 = vmatprep.subr.mxu0 0.0
        %2504 = vmatpush1.msra.mxu0 0.0
        %2505 = vmatprep.subr.mxu0 0.0
        %2506 = vmatpush1.msra.mxu0 0.0
        %2507 = vmatprep.subr.mxu0 0.0
        %2508 = vmatpush1.msra.mxu0 0.0
        %2509 = vmatprep.subr.mxu0 0.0
        %2510 = vmatpush1.msra.mxu0 0.0
        %2511 = vmatprep.subr.mxu0 0.0
        %2512 = vmatpush1.msra.mxu0 0.0
        %2513 = vmatprep.subr.mxu0 0.0
        %2514 = vmatpush1.msra.mxu0 0.0
        %2515 = vmatprep.subr.mxu0 0.0
        %2516 = vmatpush1.msra.mxu0 0.0
        %2517 = vmatprep.subr.mxu0 0.0
        %2518 = vmatpush1.msra.mxu0 0.0
        %2519 = vmatprep.subr.mxu0 0.0
        %2520 = vmatpush1.msra.mxu0 0.0
        %2521 = vmatprep.subr.mxu0 0.0
        %2522 = vmatpush1.msra.mxu0 0.0
        %2523 = vmatprep.subr.mxu0 0.0
        %2524 = vmatpush1.msra.mxu0 0.0
        %2525 = vmatprep.subr.mxu0 0.0
        %2526 = vmatpush1.msra.mxu0 0.0
        %2527 = vmatprep.subr.mxu0 0.0
        %2528 = vmatpush1.msra.mxu0 0.0
        %2529 = vmatprep.subr.mxu0 0.0
        %2530 = vmatpush1.msra.mxu0 0.0
        %2531 = vmatprep.subr.mxu0 0.0
        %2532 = vmatpush1.msra.mxu0 0.0
        %2533 = vmatprep.subr.mxu0 0.0
        %2534 = vmatpush1.msra.mxu0 0.0
        %2535 = vmatprep.subr.mxu0 0.0
        %2536 = vmatpush1.msra.mxu0 0.0
        %2537 = vmatprep.subr.mxu0 0.0
        %2538 = vmatpush1.msra.mxu0 0.0
        %2539 = vmatprep.subr.mxu0 0.0
        %2540 = vmatpush1.msra.mxu0 0.0
        %2541 = vmatprep.subr.mxu0 0.0
        %2542 = vmatpush1.msra.mxu0 0.0
        %2543 = vmatprep.subr.mxu0 0.0
        %2544 = vmatpush1.msra.mxu0 0.0
        %2545 = vmatprep.mubr.f32.mxu0 0.0
        %2546 = vmatmul.mubr.f32.gmra.mrb[0].mxu0 %v1203
        %v2547 = vpop.f32.mrb[0].mxu0
        %v2548 = vadd.f32 %v2479, %v2547
        %v2549 = vpop.f32.mrb[0].mxu0
        %2550 = vmatprep.mubr.f32.mxu0 0.0
        %2551 = vmatmul.mubr.f32.gmra.mrb[0].mxu0 %v1206
        %v2552 = vpop.f32.mrb[0].mxu0
        %v2553 = vadd.f32 %v2479, %v2552
        %v2554 = vpop.f32.mrb[0].mxu0
        %2555 = vdwg.mxu0
        %s2556 = scalar_lea.vmem %s21, 96
        %v2557 = vld [vmem:[%s2556] sm:$0xff]
        %v2558 = vld [vmem:[%s2556 + $0x8] sm:$0xff]
        %v2559 = vld [vmem:[%s2556 + $0x10] sm:$0xff]
        %v2560 = vld [vmem:[%s2556 + $0x18] sm:$0xff]
        %s2561 = scalar_lea.vmem %s23, 3
        %v2562 = vld [vmem:[%s2561] sm:$0x1]
        %v2564 = vlaneseq
        %v2565 = vshrl.u32 %v2564, 7
        %v2566 = vsub.s32 0, %v2565
        %v2567 = vrot.slane %v2562, %v2566
        %2569 = vmatprep.subr.mxu0 0.0
        %2570 = vmatpush1.msra.mxu0 %v2557
        %2571 = vmatprep.subr.mxu0 0.0
        %2572 = vmatpush1.msra.mxu0 %v2558
        %2573 = vmatprep.subr.mxu0 0.0
        %2574 = vmatpush1.msra.mxu0 %v2559
        %2575 = vmatprep.subr.mxu0 0.0
        %2576 = vmatpush1.msra.mxu0 %v2560
        %2577 = vmatprep.subr.mxu0 0.0
        %2578 = vmatpush1.msra.mxu0 0.0
        %2579 = vmatprep.subr.mxu0 0.0
        %2580 = vmatpush1.msra.mxu0 0.0
        %2581 = vmatprep.subr.mxu0 0.0
        %2582 = vmatpush1.msra.mxu0 0.0
        %2583 = vmatprep.subr.mxu0 0.0
        %2584 = vmatpush1.msra.mxu0 0.0
        %2585 = vmatprep.subr.mxu0 0.0
        %2586 = vmatpush1.msra.mxu0 0.0
        %2587 = vmatprep.subr.mxu0 0.0
        %2588 = vmatpush1.msra.mxu0 0.0
        %2589 = vmatprep.subr.mxu0 0.0
        %2590 = vmatpush1.msra.mxu0 0.0
        %2591 = vmatprep.subr.mxu0 0.0
        %2592 = vmatpush1.msra.mxu0 0.0
        %2593 = vmatprep.subr.mxu0 0.0
        %2594 = vmatpush1.msra.mxu0 0.0
        %2595 = vmatprep.subr.mxu0 0.0
        %2596 = vmatpush1.msra.mxu0 0.0
        %2597 = vmatprep.subr.mxu0 0.0
        %2598 = vmatpush1.msra.mxu0 0.0
        %2599 = vmatprep.subr.mxu0 0.0
        %2600 = vmatpush1.msra.mxu0 0.0
        %2601 = vmatprep.subr.mxu0 0.0
        %2602 = vmatpush1.msra.mxu0 0.0
        %2603 = vmatprep.subr.mxu0 0.0
        %2604 = vmatpush1.msra.mxu0 0.0
        %2605 = vmatprep.subr.mxu0 0.0
        %2606 = vmatpush1.msra.mxu0 0.0
        %2607 = vmatprep.subr.mxu0 0.0
        %2608 = vmatpush1.msra.mxu0 0.0
        %2609 = vmatprep.subr.mxu0 0.0
        %2610 = vmatpush1.msra.mxu0 0.0
        %2611 = vmatprep.subr.mxu0 0.0
        %2612 = vmatpush1.msra.mxu0 0.0
        %2613 = vmatprep.subr.mxu0 0.0
        %2614 = vmatpush1.msra.mxu0 0.0
        %2615 = vmatprep.subr.mxu0 0.0
        %2616 = vmatpush1.msra.mxu0 0.0
        %2617 = vmatprep.subr.mxu0 0.0
        %2618 = vmatpush1.msra.mxu0 0.0
        %2619 = vmatprep.subr.mxu0 0.0
        %2620 = vmatpush1.msra.mxu0 0.0
        %2621 = vmatprep.subr.mxu0 0.0
        %2622 = vmatpush1.msra.mxu0 0.0
        %2623 = vmatprep.subr.mxu0 0.0
        %2624 = vmatpush1.msra.mxu0 0.0
        %2625 = vmatprep.subr.mxu0 0.0
        %2626 = vmatpush1.msra.mxu0 0.0
        %2627 = vmatprep.subr.mxu0 0.0
        %2628 = vmatpush1.msra.mxu0 0.0
        %2629 = vmatprep.subr.mxu0 0.0
        %2630 = vmatpush1.msra.mxu0 0.0
        %2631 = vmatprep.subr.mxu0 0.0
        %2632 = vmatpush1.msra.mxu0 0.0
        %2633 = vmatprep.mubr.f32.mxu0 0.0
        %2634 = vmatmul.mubr.f32.gmra.mrb[0].mxu0 %v1295
        %v2635 = vpop.f32.mrb[0].mxu0
        %v2636 = vadd.f32 %v2567, %v2635
        %v2637 = vpop.f32.mrb[0].mxu0
        %2638 = vmatprep.mubr.f32.mxu0 0.0
        %2639 = vmatmul.mubr.f32.gmra.mrb[0].mxu0 %v1298
        %v2640 = vpop.f32.mrb[0].mxu0
        %v2641 = vadd.f32 %v2567, %v2640
        %v2642 = vpop.f32.mrb[0].mxu0
        %2643 = vdwg.mxu0
        %v2645 = vsel %vm1375, %v2465, 0
        %v2648 = vsel %vm1375, %v2548, 0
        %v2651 = vsel %vm1375, %v2553, 0
        %2653 = vmatprep.subr.mxu0 0.0
        %2654 = vmatpush1.xpose.msra.mxu0 %v2648
        %2655 = vmatprep.subr.mxu0 0.0
        %2656 = vmatpush1.xpose.msra.mxu0 %v2651
        %2657 = vmatprep.subr.mxu0 0.0
        %2658 = vmatpush1.xpose.msra.mxu0 0.0
        %2659 = vmatprep.subr.mxu0 0.0
        %2660 = vmatpush1.xpose.msra.mxu0 0.0
        %2661 = vmatprep.subr.mxu0 0.0
        %2662 = vmatpush1.xpose.msra.mxu0 0.0
        %2663 = vmatprep.subr.mxu0 0.0
        %2664 = vmatpush1.xpose.msra.mxu0 0.0
        %2665 = vmatprep.subr.mxu0 0.0
        %2666 = vmatpush1.xpose.msra.mxu0 0.0
        %2667 = vmatprep.subr.mxu0 0.0
        %2668 = vmatpush1.xpose.msra.mxu0 0.0
        %2669 = vmatprep.subr.mxu0 0.0
        %2670 = vmatpush1.xpose.msra.mxu0 0.0
        %2671 = vmatprep.subr.mxu0 0.0
        %2672 = vmatpush1.xpose.msra.mxu0 0.0
        %2673 = vmatprep.subr.mxu0 0.0
        %2674 = vmatpush1.xpose.msra.mxu0 0.0
        %2675 = vmatprep.subr.mxu0 0.0
        %2676 = vmatpush1.xpose.msra.mxu0 0.0
        %2677 = vmatprep.subr.mxu0 0.0
        %2678 = vmatpush1.xpose.msra.mxu0 0.0
        %2679 = vmatprep.subr.mxu0 0.0
        %2680 = vmatpush1.xpose.msra.mxu0 0.0
        %2681 = vmatprep.subr.mxu0 0.0
        %2682 = vmatpush1.xpose.msra.mxu0 0.0
        %2683 = vmatprep.subr.mxu0 0.0
        %2684 = vmatpush1.xpose.msra.mxu0 0.0
        %2685 = vmatprep.subr.mxu0 0.0
        %2686 = vmatpush1.xpose.msra.mxu0 0.0
        %2687 = vmatprep.subr.mxu0 0.0
        %2688 = vmatpush1.xpose.msra.mxu0 0.0
        %2689 = vmatprep.subr.mxu0 0.0
        %2690 = vmatpush1.xpose.msra.mxu0 0.0
        %2691 = vmatprep.subr.mxu0 0.0
        %2692 = vmatpush1.xpose.msra.mxu0 0.0
        %2693 = vmatprep.subr.mxu0 0.0
        %2694 = vmatpush1.xpose.msra.mxu0 0.0
        %2695 = vmatprep.subr.mxu0 0.0
        %2696 = vmatpush1.xpose.msra.mxu0 0.0
        %2697 = vmatprep.subr.mxu0 0.0
        %2698 = vmatpush1.xpose.msra.mxu0 0.0
        %2699 = vmatprep.subr.mxu0 0.0
        %2700 = vmatpush1.xpose.msra.mxu0 0.0
        %2701 = vmatprep.subr.mxu0 0.0
        %2702 = vmatpush1.xpose.msra.mxu0 0.0
        %2703 = vmatprep.subr.mxu0 0.0
        %2704 = vmatpush1.xpose.msra.mxu0 0.0
        %2705 = vmatprep.subr.mxu0 0.0
        %2706 = vmatpush1.xpose.msra.mxu0 0.0
        %2707 = vmatprep.subr.mxu0 0.0
        %2708 = vmatpush1.xpose.msra.mxu0 0.0
        %2709 = vmatprep.subr.mxu0 0.0
        %2710 = vmatpush1.xpose.msra.mxu0 0.0
        %2711 = vmatprep.subr.mxu0 0.0
        %2712 = vmatpush1.xpose.msra.mxu0 0.0
        %2713 = vmatprep.subr.mxu0 0.0
        %2714 = vmatpush1.xpose.msra.mxu0 0.0
        %2715 = vmatprep.subr.mxu0 0.0
        %2716 = vmatpush1.xpose.msra.mxu0 0.0
        %2717 = vmatprep.mubr.f32.mxu0 0.0
        %2718 = vmatmul.mubr.f32.gmra.mrb[0].mxu0 %v2645
        %v2719 = vpop.f32.mrb[0].mxu0
        %v2720 = vadd.f32 0.0, %v2719
        %v2721 = vpop.f32.mrb[0].mxu0
        %2722 = vdwg.mxu0
        %v2723 = vsel %vm1455, %v2720, -inf
        %2724 = vmax.xlane.f32.xlu0 %v2723
        %v2725 = vpop.xlane.xlu0 %2724
        %v2726 = vsub.f32 %v2720, %v2725
        %v2727 = vmul.f32 %v2726, 1.442695
        %v2728 = vpow.pop %v2727
        %v2729 = vsel %vm1455, %v2728, 0.0
        %2730 = vadd.xlane.f32.xlu0 %v2729
        %v2731 = vpop.xlane.xlu0 %2730
        %v2732 = vrcp.pop %v2731
        %v2733 = vmul.f32 %v2728, %v2732
        %v2735 = vsel %vm1455, %v2733, 0
        %2737 = vmatprep.subr.mxu0 0.0
        %2738 = vmatpush1.msra.mxu0 %v2636
        %2739 = vmatprep.subr.mxu0 0.0
        %2740 = vmatpush1.msra.mxu0 %v2641
        %2741 = vmatprep.subr.mxu0 0.0
        %2742 = vmatpush1.msra.mxu0 0.0
        %2743 = vmatprep.subr.mxu0 0.0
        %2744 = vmatpush1.msra.mxu0 0.0
        %2745 = vmatprep.subr.mxu0 0.0
        %2746 = vmatpush1.msra.mxu0 0.0
        %2747 = vmatprep.subr.mxu0 0.0
        %2748 = vmatpush1.msra.mxu0 0.0
        %2749 = vmatprep.subr.mxu0 0.0
        %2750 = vmatpush1.msra.mxu0 0.0
        %2751 = vmatprep.subr.mxu0 0.0
        %2752 = vmatpush1.msra.mxu0 0.0
        %2753 = vmatprep.subr.mxu0 0.0
        %2754 = vmatpush1.msra.mxu0 0.0
        %2755 = vmatprep.subr.mxu0 0.0
        %2756 = vmatpush1.msra.mxu0 0.0
        %2757 = vmatprep.subr.mxu0 0.0
        %2758 = vmatpush1.msra.mxu0 0.0
        %2759 = vmatprep.subr.mxu0 0.0
        %2760 = vmatpush1.msra.mxu0 0.0
        %2761 = vmatprep.subr.mxu0 0.0
        %2762 = vmatpush1.msra.mxu0 0.0
        %2763 = vmatprep.subr.mxu0 0.0
        %2764 = vmatpush1.msra.mxu0 0.0
        %2765 = vmatprep.subr.mxu0 0.0
        %2766 = vmatpush1.msra.mxu0 0.0
        %2767 = vmatprep.subr.mxu0 0.0
        %2768 = vmatpush1.msra.mxu0 0.0
        %2769 = vmatprep.subr.mxu0 0.0
        %2770 = vmatpush1.msra.mxu0 0.0
        %2771 = vmatprep.subr.mxu0 0.0
        %2772 = vmatpush1.msra.mxu0 0.0
        %2773 = vmatprep.subr.mxu0 0.0
        %2774 = vmatpush1.msra.mxu0 0.0
        %2775 = vmatprep.subr.mxu0 0.0
        %2776 = vmatpush1.msra.mxu0 0.0
        %2777 = vmatprep.subr.mxu0 0.0
        %2778 = vmatpush1.msra.mxu0 0.0
        %2779 = vmatprep.subr.mxu0 0.0
        %2780 = vmatpush1.msra.mxu0 0.0
        %2781 = vmatprep.subr.mxu0 0.0
        %2782 = vmatpush1.msra.mxu0 0.0
        %2783 = vmatprep.subr.mxu0 0.0
        %2784 = vmatpush1.msra.mxu0 0.0
        %2785 = vmatprep.subr.mxu0 0.0
        %2786 = vmatpush1.msra.mxu0 0.0
        %2787 = vmatprep.subr.mxu0 0.0
        %2788 = vmatpush1.msra.mxu0 0.0
        %2789 = vmatprep.subr.mxu0 0.0
        %2790 = vmatpush1.msra.mxu0 0.0
        %2791 = vmatprep.subr.mxu0 0.0
        %2792 = vmatpush1.msra.mxu0 0.0
        %2793 = vmatprep.subr.mxu0 0.0
        %2794 = vmatpush1.msra.mxu0 0.0
        %2795 = vmatprep.subr.mxu0 0.0
        %2796 = vmatpush1.msra.mxu0 0.0
        %2797 = vmatprep.subr.mxu0 0.0
        %2798 = vmatpush1.msra.mxu0 0.0
        %2799 = vmatprep.subr.mxu0 0.0
        %2800 = vmatpush1.msra.mxu0 0.0
        %2801 = vmatprep.mubr.f32.mxu0 0.0
        %2802 = vmatmul.mubr.f32.gmra.mrb[0].mxu0 %v2735
        %v2803 = vpop.f32.mrb[0].mxu0
        %v2804 = vadd.f32 0.0, %v2803
        %v2805 = vpop.f32.mrb[0].mxu0
        %2806 = vdwg.mxu0
        %v2807 = vadd.f32 %v2384, %v2804
        %v2808 = vld [vmem:[%s25] sm:$0x1]
        %v2810 = vlaneseq
        %v2811 = vshrl.u32 %v2810, 7
        %v2812 = vsub.s32 0, %v2811
        %v2813 = vrot.slane %v2808, %v2812
        %v2815 = vadd.f32 %v2807, %v2813
        %v2816 = vld [vmem:[%s27] sm:$0x1]
        %v2818 = vlaneseq
        %v2819 = vshrl.u32 %v2818, 7
        %v2820 = vsub.s32 0, %v2819
        %v2821 = vrot.slane %v2816, %v2820
        %v2823 = vmul.f32 %v2821, %v2815
        %v2824 = vadd.f32 %v1075, %v2823
        %v2825 = vld [vmem:[%s29] sm:$0x1]
        %v2826 = vld [vmem:[%s31] sm:$0x1]
        %v2827 = vsel %vm1078, %v2824, 0.0
        %2828 = vadd.xlane.f32.xlu0 %v2827
        %v2829 = vpop.xlane.xlu0 %2828
        %v2830 = vmul.f32 %v2829, %v1082
        %v2831 = vsub.f32 %v2824, %v2830
        %v2832 = vmul.f32 %v2831, %v2831
        %v2833 = vsel %vm1078, %v2832, 0.0
        %2834 = vadd.xlane.f32.xlu0 %v2833
        %v2835 = vpop.xlane.xlu0 %2834
        %v2836 = vmul.f32 %v2835, %v1082
        %v2837 = vadd.f32 %v2836, 1e-05
        %v2838 = vrsqrt.pop %v2837
        %v2839 = vmul.f32 %v2831, %v2838
        %v2841 = vlaneseq
        %v2842 = vshrl.u32 %v2841, 7
        %v2843 = vsub.s32 0, %v2842
        %v2844 = vrot.slane %v2825, %v2843
        %v2846 = vmul.f32 %v2839, %v2844
        %v2848 = vlaneseq
        %v2849 = vshrl.u32 %v2848, 7
        %v2850 = vsub.s32 0, %v2849
        %v2851 = vrot.slane %v2826, %v2850
        %v2853 = vadd.f32 %v2846, %v2851
        %v2854 = vld [vmem:[%s33] sm:$0xff]
        %v2855 = vld [vmem:[%s33 + $0x8] sm:$0xff]
        %v2856 = vld [vmem:[%s33 + $0x10] sm:$0xff]
        %v2857 = vld [vmem:[%s33 + $0x18] sm:$0xff]
        %v2858 = vld [vmem:[%s35] sm:$0x1]
        %v2860 = vlaneseq
        %v2861 = vshrl.u32 %v2860, 7
        %v2862 = vsub.s32 0, %v2861
        %v2863 = vrot.slane %v2858, %v2862
        %v2866 = vsel %vm1078, %v2853, 0
        %2868 = vmatprep.subr.mxu0 0.0
        %2869 = vmatpush1.msra.mxu0 %v2854
        %2870 = vmatprep.subr.mxu0 0.0
        %2871 = vmatpush1.msra.mxu0 %v2855
        %2872 = vmatprep.subr.mxu0 0.0
        %2873 = vmatpush1.msra.mxu0 %v2856
        %2874 = vmatprep.subr.mxu0 0.0
        %2875 = vmatpush1.msra.mxu0 %v2857
        %2876 = vmatprep.subr.mxu0 0.0
        %2877 = vmatpush1.msra.mxu0 0.0
        %2878 = vmatprep.subr.mxu0 0.0
        %2879 = vmatpush1.msra.mxu0 0.0
        %2880 = vmatprep.subr.mxu0 0.0
        %2881 = vmatpush1.msra.mxu0 0.0
        %2882 = vmatprep.subr.mxu0 0.0
        %2883 = vmatpush1.msra.mxu0 0.0
        %2884 = vmatprep.subr.mxu0 0.0
        %2885 = vmatpush1.msra.mxu0 0.0
        %2886 = vmatprep.subr.mxu0 0.0
        %2887 = vmatpush1.msra.mxu0 0.0
        %2888 = vmatprep.subr.mxu0 0.0
        %2889 = vmatpush1.msra.mxu0 0.0
        %2890 = vmatprep.subr.mxu0 0.0
        %2891 = vmatpush1.msra.mxu0 0.0
        %2892 = vmatprep.subr.mxu0 0.0
        %2893 = vmatpush1.msra.mxu0 0.0
        %2894 = vmatprep.subr.mxu0 0.0
        %2895 = vmatpush1.msra.mxu0 0.0
        %2896 = vmatprep.subr.mxu0 0.0
        %2897 = vmatpush1.msra.mxu0 0.0
        %2898 = vmatprep.subr.mxu0 0.0
        %2899 = vmatpush1.msra.mxu0 0.0
        %2900 = vmatprep.subr.mxu0 0.0
        %2901 = vmatpush1.msra.mxu0 0.0
        %2902 = vmatprep.subr.mxu0 0.0
        %2903 = vmatpush1.msra.mxu0 0.0
        %2904 = vmatprep.subr.mxu0 0.0
        %2905 = vmatpush1.msra.mxu0 0.0
        %2906 = vmatprep.subr.mxu0 0.0
        %2907 = vmatpush1.msra.mxu0 0.0
        %2908 = vmatprep.subr.mxu0 0.0
        %2909 = vmatpush1.msra.mxu0 0.0
        %2910 = vmatprep.subr.mxu0 0.0
        %2911 = vmatpush1.msra.mxu0 0.0
        %2912 = vmatprep.subr.mxu0 0.0
        %2913 = vmatpush1.msra.mxu0 0.0
        %2914 = vmatprep.subr.mxu0 0.0
        %2915 = vmatpush1.msra.mxu0 0.0
        %2916 = vmatprep.subr.mxu0 0.0
        %2917 = vmatpush1.msra.mxu0 0.0
        %2918 = vmatprep.subr.mxu0 0.0
        %2919 = vmatpush1.msra.mxu0 0.0
        %2920 = vmatprep.subr.mxu0 0.0
        %2921 = vmatpush1.msra.mxu0 0.0
        %2922 = vmatprep.subr.mxu0 0.0
        %2923 = vmatpush1.msra.mxu0 0.0
        %2924 = vmatprep.subr.mxu0 0.0
        %2925 = vmatpush1.msra.mxu0 0.0
        %2926 = vmatprep.subr.mxu0 0.0
        %2927 = vmatpush1.msra.mxu0 0.0
        %2928 = vmatprep.subr.mxu0 0.0
        %2929 = vmatpush1.msra.mxu0 0.0
        %2930 = vmatprep.subr.mxu0 0.0
        %2931 = vmatpush1.msra.mxu0 0.0
        %2932 = vmatprep.mubr.f32.mxu0 0.0
        %2933 = vmatmul.mubr.f32.gmra.mrb[0].mxu0 %v2866
        %v2934 = vpop.f32.mrb[0].mxu0
        %v2935 = vadd.f32 %v2863, %v2934
        %v2936 = vpop.f32.mrb[0].mxu0
        %2937 = vdwg.mxu0
        %v2938 = vld [vmem:[%s37] sm:$0xff]
        %v2939 = vld [vmem:[%s37 + $0x8] sm:$0xff]
        %v2940 = vld [vmem:[%s37 + $0x10] sm:$0xff]
        %v2941 = vld [vmem:[%s37 + $0x18] sm:$0xff]
        %v2942 = vld [vmem:[%s39] sm:$0x1]
        %v2944 = vlaneseq
        %v2945 = vshrl.u32 %v2944, 7
        %v2946 = vsub.s32 0, %v2945
        %v2947 = vrot.slane %v2942, %v2946
        %2949 = vmatprep.subr.mxu0 0.0
        %2950 = vmatpush1.msra.mxu0 %v2938
        %2951 = vmatprep.subr.mxu0 0.0
        %2952 = vmatpush1.msra.mxu0 %v2939
        %2953 = vmatprep.subr.mxu0 0.0
        %2954 = vmatpush1.msra.mxu0 %v2940
        %2955 = vmatprep.subr.mxu0 0.0
        %2956 = vmatpush1.msra.mxu0 %v2941
        %2957 = vmatprep.subr.mxu0 0.0
        %2958 = vmatpush1.msra.mxu0 0.0
        %2959 = vmatprep.subr.mxu0 0.0
        %2960 = vmatpush1.msra.mxu0 0.0
        %2961 = vmatprep.subr.mxu0 0.0
        %2962 = vmatpush1.msra.mxu0 0.0
        %2963 = vmatprep.subr.mxu0 0.0
        %2964 = vmatpush1.msra.mxu0 0.0
        %2965 = vmatprep.subr.mxu0 0.0
        %2966 = vmatpush1.msra.mxu0 0.0
        %2967 = vmatprep.subr.mxu0 0.0
        %2968 = vmatpush1.msra.mxu0 0.0
        %2969 = vmatprep.subr.mxu0 0.0
        %2970 = vmatpush1.msra.mxu0 0.0
        %2971 = vmatprep.subr.mxu0 0.0
        %2972 = vmatpush1.msra.mxu0 0.0
        %2973 = vmatprep.subr.mxu0 0.0
        %2974 = vmatpush1.msra.mxu0 0.0
        %2975 = vmatprep.subr.mxu0 0.0
        %2976 = vmatpush1.msra.mxu0 0.0
        %2977 = vmatprep.subr.mxu0 0.0
        %2978 = vmatpush1.msra.mxu0 0.0
        %2979 = vmatprep.subr.mxu0 0.0
        %2980 = vmatpush1.msra.mxu0 0.0
        %2981 = vmatprep.subr.mxu0 0.0
        %2982 = vmatpush1.msra.mxu0 0.0
        %2983 = vmatprep.subr.mxu0 0.0
        %2984 = vmatpush1.msra.mxu0 0.0
        %2985 = vmatprep.subr.mxu0 0.0
        %2986 = vmatpush1.msra.mxu0 0.0
        %2987 = vmatprep.subr.mxu0 0.0
        %2988 = vmatpush1.msra.mxu0 0.0
        %2989 = vmatprep.subr.mxu0 0.0
        %2990 = vmatpush1.msra.mxu0 0.0
        %2991 = vmatprep.subr.mxu0 0.0
        %2992 = vmatpush1.msra.mxu0 0.0
        %2993 = vmatprep.subr.mxu0 0.0
        %2994 = vmatpush1.msra.mxu0 0.0
        %2995 = vmatprep.subr.mxu0 0.0
        %2996 = vmatpush1.msra.mxu0 0.0
        %2997 = vmatprep.subr.mxu0 0.0
        %2998 = vmatpush1.msra.mxu0 0.0
        %2999 = vmatprep.subr.mxu0 0.0
        %3000 = vmatpush1.msra.mxu0 0.0
        %3001 = vmatprep.subr.mxu0 0.0
        %3002 = vmatpush1.msra.mxu0 0.0
        %3003 = vmatprep.subr.mxu0 0.0
        %3004 = vmatpush1.msra.mxu0 0.0
        %3005 = vmatprep.subr.mxu0 0.0
        %3006 = vmatpush1.msra.mxu0 0.0
        %3007 = vmatprep.subr.mxu0 0.0
        %3008 = vmatpush1.msra.mxu0 0.0
        %3009 = vmatprep.subr.mxu0 0.0
        %3010 = vmatpush1.msra.mxu0 0.0
        %3011 = vmatprep.subr.mxu0 0.0
        %3012 = vmatpush1.msra.mxu0 0.0
        %3013 = vmatprep.mubr.f32.mxu0 0.0
        %3014 = vmatmul.mubr.f32.gmra.mrb[0].mxu0 %v2866
        %v3015 = vpop.f32.mrb[0].mxu0
        %v3016 = vadd.f32 %v2947, %v3015
        %v3017 = vpop.f32.mrb[0].mxu0
        %3018 = vdwg.mxu0
        %v3019 = vld [vmem:[%s41] sm:$0xff]
        %v3020 = vld [vmem:[%s41 + $0x8] sm:$0xff]
        %v3021 = vld [vmem:[%s41 + $0x10] sm:$0xff]
        %v3022 = vld [vmem:[%s41 + $0x18] sm:$0xff]
        %v3023 = vld [vmem:[%s43] sm:$0x1]
        %v3025 = vlaneseq
        %v3026 = vshrl.u32 %v3025, 7
        %v3027 = vsub.s32 0, %v3026
        %v3028 = vrot.slane %v3023, %v3027
        %3030 = vmatprep.subr.mxu0 0.0
        %3031 = vmatpush1.msra.mxu0 %v3019
        %3032 = vmatprep.subr.mxu0 0.0
        %3033 = vmatpush1.msra.mxu0 %v3020
        %3034 = vmatprep.subr.mxu0 0.0
        %3035 = vmatpush1.msra.mxu0 %v3021
        %3036 = vmatprep.subr.mxu0 0.0
        %3037 = vmatpush1.msra.mxu0 %v3022
        %3038 = vmatprep.subr.mxu0 0.0
        %3039 = vmatpush1.msra.mxu0 0.0
        %3040 = vmatprep.subr.mxu0 0.0
        %3041 = vmatpush1.msra.mxu0 0.0
        %3042 = vmatprep.subr.mxu0 0.0
        %3043 = vmatpush1.msra.mxu0 0.0
        %3044 = vmatprep.subr.mxu0 0.0
        %3045 = vmatpush1.msra.mxu0 0.0
        %3046 = vmatprep.subr.mxu0 0.0
        %3047 = vmatpush1.msra.mxu0 0.0
        %3048 = vmatprep.subr.mxu0 0.0
        %3049 = vmatpush1.msra.mxu0 0.0
        %3050 = vmatprep.subr.mxu0 0.0
        %3051 = vmatpush1.msra.mxu0 0.0
        %3052 = vmatprep.subr.mxu0 0.0
        %3053 = vmatpush1.msra.mxu0 0.0
        %3054 = vmatprep.subr.mxu0 0.0
        %3055 = vmatpush1.msra.mxu0 0.0
        %3056 = vmatprep.subr.mxu0 0.0
        %3057 = vmatpush1.msra.mxu0 0.0
        %3058 = vmatprep.subr.mxu0 0.0
        %3059 = vmatpush1.msra.mxu0 0.0
        %3060 = vmatprep.subr.mxu0 0.0
        %3061 = vmatpush1.msra.mxu0 0.0
        %3062 = vmatprep.subr.mxu0 0.0
        %3063 = vmatpush1.msra.mxu0 0.0
        %3064 = vmatprep.subr.mxu0 0.0
        %3065 = vmatpush1.msra.mxu0 0.0
        %3066 = vmatprep.subr.mxu0 0.0
        %3067 = vmatpush1.msra.mxu0 0.0
        %3068 = vmatprep.subr.mxu0 0.0
        %3069 = vmatpush1.msra.mxu0 0.0
        %3070 = vmatprep.subr.mxu0 0.0
        %3071 = vmatpush1.msra.mxu0 0.0
        %3072 = vmatprep.subr.mxu0 0.0
        %3073 = vmatpush1.msra.mxu0 0.0
        %3074 = vmatprep.subr.mxu0 0.0
        %3075 = vmatpush1.msra.mxu0 0.0
        %3076 = vmatprep.subr.mxu0 0.0
        %3077 = vmatpush1.msra.mxu0 0.0
        %3078 = vmatprep.subr.mxu0 0.0
        %3079 = vmatpush1.msra.mxu0 0.0
        %3080 = vmatprep.subr.mxu0 0.0
        %3081 = vmatpush1.msra.mxu0 0.0
        %3082 = vmatprep.subr.mxu0 0.0
        %3083 = vmatpush1.msra.mxu0 0.0
        %3084 = vmatprep.subr.mxu0 0.0
        %3085 = vmatpush1.msra.mxu0 0.0
        %3086 = vmatprep.subr.mxu0 0.0
        %3087 = vmatpush1.msra.mxu0 0.0
        %3088 = vmatprep.subr.mxu0 0.0
        %3089 = vmatpush1.msra.mxu0 0.0
        %3090 = vmatprep.subr.mxu0 0.0
        %3091 = vmatpush1.msra.mxu0 0.0
        %3092 = vmatprep.subr.mxu0 0.0
        %3093 = vmatpush1.msra.mxu0 0.0
        %3094 = vmatprep.mubr.f32.mxu0 0.0
        %3095 = vmatmul.mubr.f32.gmra.mrb[0].mxu0 %v2866
        %v3096 = vpop.f32.mrb[0].mxu0
        %v3097 = vadd.f32 %v3028, %v3096
        %v3098 = vpop.f32.mrb[0].mxu0
        %3099 = vdwg.mxu0
        %v3101 = vsel %vm1375, %v2935, 0
        %v3104 = vsel %vm1375, %v3016, 0
        %3106 = vmatprep.subr.mxu0 0.0
        %3107 = vmatpush1.xpose.msra.mxu0 %v3104
        %3108 = vmatprep.subr.mxu0 0.0
        %3109 = vmatpush1.xpose.msra.mxu0 0.0
        %3110 = vmatprep.subr.mxu0 0.0
        %3111 = vmatpush1.xpose.msra.mxu0 0.0
        %3112 = vmatprep.subr.mxu0 0.0
        %3113 = vmatpush1.xpose.msra.mxu0 0.0
        %3114 = vmatprep.subr.mxu0 0.0
        %3115 = vmatpush1.xpose.msra.mxu0 0.0
        %3116 = vmatprep.subr.mxu0 0.0
        %3117 = vmatpush1.xpose.msra.mxu0 0.0
        %3118 = vmatprep.subr.mxu0 0.0
        %3119 = vmatpush1.xpose.msra.mxu0 0.0
        %3120 = vmatprep.subr.mxu0 0.0
        %3121 = vmatpush1.xpose.msra.mxu0 0.0
        %3122 = vmatprep.subr.mxu0 0.0
        %3123 = vmatpush1.xpose.msra.mxu0 0.0
        %3124 = vmatprep.subr.mxu0 0.0
        %3125 = vmatpush1.xpose.msra.mxu0 0.0
        %3126 = vmatprep.subr.mxu0 0.0
        %3127 = vmatpush1.xpose.msra.mxu0 0.0
        %3128 = vmatprep.subr.mxu0 0.0
        %3129 = vmatpush1.xpose.msra.mxu0 0.0
        %3130 = vmatprep.subr.mxu0 0.0
        %3131 = vmatpush1.xpose.msra.mxu0 0.0
        %3132 = vmatprep.subr.mxu0 0.0
        %3133 = vmatpush1.xpose.msra.mxu0 0.0
        %3134 = vmatprep.subr.mxu0 0.0
        %3135 = vmatpush1.xpose.msra.mxu0 0.0
        %3136 = vmatprep.subr.mxu0 0.0
        %3137 = vmatpush1.xpose.msra.mxu0 0.0
        %3138 = vmatprep.subr.mxu0 0.0
        %3139 = vmatpush1.xpose.msra.mxu0 0.0
        %3140 = vmatprep.subr.mxu0 0.0
        %3141 = vmatpush1.xpose.msra.mxu0 0.0
        %3142 = vmatprep.subr.mxu0 0.0
        %3143 = vmatpush1.xpose.msra.mxu0 0.0
        %3144 = vmatprep.subr.mxu0 0.0
        %3145 = vmatpush1.xpose.msra.mxu0 0.0
        %3146 = vmatprep.subr.mxu0 0.0
        %3147 = vmatpush1.xpose.msra.mxu0 0.0
        %3148 = vmatprep.subr.mxu0 0.0
        %3149 = vmatpush1.xpose.msra.mxu0 0.0
        %3150 = vmatprep.subr.mxu0 0.0
        %3151 = vmatpush1.xpose.msra.mxu0 0.0
        %3152 = vmatprep.subr.mxu0 0.0
        %3153 = vmatpush1.xpose.msra.mxu0 0.0
        %3154 = vmatprep.subr.mxu0 0.0
        %3155 = vmatpush1.xpose.msra.mxu0 0.0
        %3156 = vmatprep.subr.mxu0 0.0
        %3157 = vmatpush1.xpose.msra.mxu0 0.0
        %3158 = vmatprep.subr.mxu0 0.0
        %3159 = vmatpush1.xpose.msra.mxu0 0.0
        %3160 = vmatprep.subr.mxu0 0.0
        %3161 = vmatpush1.xpose.msra.mxu0 0.0
        %3162 = vmatprep.subr.mxu0 0.0
        %3163 = vmatpush1.xpose.msra.mxu0 0.0
        %3164 = vmatprep.subr.mxu0 0.0
        %3165 = vmatpush1.xpose.msra.mxu0 0.0
        %3166 = vmatprep.subr.mxu0 0.0
        %3167 = vmatpush1.xpose.msra.mxu0 0.0
        %3168 = vmatprep.subr.mxu0 0.0
        %3169 = vmatpush1.xpose.msra.mxu0 0.0
        %3170 = vmatprep.mubr.f32.mxu0 0.0
        %3171 = vmatmul.mubr.f32.gmra.mrb[0].mxu0 %v3101
        %v3172 = vpop.f32.mrb[0].mxu0
        %v3173 = vadd.f32 0.0, %v3172
        %v3174 = vpop.f32.mrb[0].mxu0
        %3175 = vdwg.mxu0
        %v3176 = vsel %vm1375, %v3173, -inf
        %3177 = vmax.xlane.f32.xlu0 %v3176
        %v3178 = vpop.xlane.xlu0 %3177
        %v3179 = vsub.f32 %v3173, %v3178
        %v3180 = vmul.f32 %v3179, 1.442695
        %v3181 = vpow.pop %v3180
        %v3182 = vsel %vm1375, %v3181, 0.0
        %3183 = vadd.xlane.f32.xlu0 %v3182
        %v3184 = vpop.xlane.xlu0 %3183
        %v3185 = vrcp.pop %v3184
        %v3186 = vmul.f32 %v3181, %v3185
        %s3187 = scalar_lea.vmem %s33, 32
        %v3188 = vld [vmem:[%s3187] sm:$0xff]
        %v3189 = vld [vmem:[%s3187 + $0x8] sm:$0xff]
        %v3190 = vld [vmem:[%s3187 + $0x10] sm:$0xff]
        %v3191 = vld [vmem:[%s3187 + $0x18] sm:$0xff]
        %s3192 = scalar_lea.vmem %s35, 1
        %v3193 = vld [vmem:[%s3192] sm:$0x1]
        %v3195 = vlaneseq
        %v3196 = vshrl.u32 %v3195, 7
        %v3197 = vsub.s32 0, %v3196
        %v3198 = vrot.slane %v3193, %v3197
        %3200 = vmatprep.subr.mxu0 0.0
        %3201 = vmatpush1.msra.mxu0 %v3188
        %3202 = vmatprep.subr.mxu0 0.0
        %3203 = vmatpush1.msra.mxu0 %v3189
        %3204 = vmatprep.subr.mxu0 0.0
        %3205 = vmatpush1.msra.mxu0 %v3190
        %3206 = vmatprep.subr.mxu0 0.0
        %3207 = vmatpush1.msra.mxu0 %v3191
        %3208 = vmatprep.subr.mxu0 0.0
        %3209 = vmatpush1.msra.mxu0 0.0
        %3210 = vmatprep.subr.mxu0 0.0
        %3211 = vmatpush1.msra.mxu0 0.0
        %3212 = vmatprep.subr.mxu0 0.0
        %3213 = vmatpush1.msra.mxu0 0.0
        %3214 = vmatprep.subr.mxu0 0.0
        %3215 = vmatpush1.msra.mxu0 0.0
        %3216 = vmatprep.subr.mxu0 0.0
        %3217 = vmatpush1.msra.mxu0 0.0
        %3218 = vmatprep.subr.mxu0 0.0
        %3219 = vmatpush1.msra.mxu0 0.0
        %3220 = vmatprep.subr.mxu0 0.0
        %3221 = vmatpush1.msra.mxu0 0.0
        %3222 = vmatprep.subr.mxu0 0.0
        %3223 = vmatpush1.msra.mxu0 0.0
        %3224 = vmatprep.subr.mxu0 0.0
        %3225 = vmatpush1.msra.mxu0 0.0
        %3226 = vmatprep.subr.mxu0 0.0
        %3227 = vmatpush1.msra.mxu0 0.0
        %3228 = vmatprep.subr.mxu0 0.0
        %3229 = vmatpush1.msra.mxu0 0.0
        %3230 = vmatprep.subr.mxu0 0.0
        %3231 = vmatpush1.msra.mxu0 0.0
        %3232 = vmatprep.subr.mxu0 0.0
        %3233 = vmatpush1.msra.mxu0 0.0
        %3234 = vmatprep.subr.mxu0 0.0
        %3235 = vmatpush1.msra.mxu0 0.0
        %3236 = vmatprep.subr.mxu0 0.0
        %3237 = vmatpush1.msra.mxu0 0.0
        %3238 = vmatprep.subr.mxu0 0.0
        %3239 = vmatpush1.msra.mxu0 0.0
        %3240 = vmatprep.subr.mxu0 0.0
        %3241 = vmatpush1.msra.mxu0 0.0
        %3242 = vmatprep.subr.mxu0 0.0
        %3243 = vmatpush1.msra.mxu0 0.0
        %3244 = vmatprep.subr.mxu0 0.0
        %3245 = vmatpush1.msra.mxu0 0.0
        %3246 = vmatprep.subr.mxu0 0.0
        %3247 = vmatpush1.msra.mxu0 0.0
        %3248 = vmatprep.subr.mxu0 0.0
        %3249 = vmatpush1.msra.mxu0 0.0
        %3250 = vmatprep.subr.mxu0 0.0
        %3251 = vmatpush1.msra.mxu0 0.0
        %3252 = vmatprep.subr.mxu0 0.0
        %3253 = vmatpush1.msra.mxu0 0.0
        %3254 = vmatprep.subr.mxu0 0.0
        %3255 = vmatpush1.msra.mxu0 0.0
        %3256 = vmatprep.subr.mxu0 0.0
        %3257 = vmatpush1.msra.mxu0 0.0
        %3258 = vmatprep.subr.mxu0 0.0
        %3259 = vmatpush1.msra.mxu0 0.0
        %3260 = vmatprep.subr.mxu0 0.0
        %3261 = vmatpush1.msra.mxu0 0.0
        %3262 = vmatprep.subr.mxu0 0.0
        %3263 = vmatpush1.msra.mxu0 0.0
        %3264 = vmatprep.mubr.f32.mxu0 0.0
        %3265 = vmatmul.mubr.f32.gmra.mrb[0].mxu0 %v2866
        %v3266 = vpop.f32.mrb[0].mxu0
        %v3267 = vadd.f32 %v3198, %v3266
        %v3268 = vpop.f32.mrb[0].mxu0
        %3269 = vdwg.mxu0
        %s3270 = scalar_lea.vmem %s37, 32
        %v3271 = vld [vmem:[%s3270] sm:$0xff]
        %v3272 = vld [vmem:[%s3270 + $0x8] sm:$0xff]
        %v3273 = vld [vmem:[%s3270 + $0x10] sm:$0xff]
        %v3274 = vld [vmem:[%s3270 + $0x18] sm:$0xff]
        %s3275 = scalar_lea.vmem %s39, 1
        %v3276 = vld [vmem:[%s3275] sm:$0x1]
        %v3278 = vlaneseq
        %v3279 = vshrl.u32 %v3278, 7
        %v3280 = vsub.s32 0, %v3279
        %v3281 = vrot.slane %v3276, %v3280
        %3283 = vmatprep.subr.mxu0 0.0
        %3284 = vmatpush1.msra.mxu0 %v3271
        %3285 = vmatprep.subr.mxu0 0.0
        %3286 = vmatpush1.msra.mxu0 %v3272
        %3287 = vmatprep.subr.mxu0 0.0
        %3288 = vmatpush1.msra.mxu0 %v3273
        %3289 = vmatprep.subr.mxu0 0.0
        %3290 = vmatpush1.msra.mxu0 %v3274
        %3291 = vmatprep.subr.mxu0 0.0
        %3292 = vmatpush1.msra.mxu0 0.0
        %3293 = vmatprep.subr.mxu0 0.0
        %3294 = vmatpush1.msra.mxu0 0.0
        %3295 = vmatprep.subr.mxu0 0.0
        %3296 = vmatpush1.msra.mxu0 0.0
        %3297 = vmatprep.subr.mxu0 0.0
        %3298 = vmatpush1.msra.mxu0 0.0
        %3299 = vmatprep.subr.mxu0 0.0
        %3300 = vmatpush1.msra.mxu0 0.0
        %3301 = vmatprep.subr.mxu0 0.0
        %3302 = vmatpush1.msra.mxu0 0.0
        %3303 = vmatprep.subr.mxu0 0.0
        %3304 = vmatpush1.msra.mxu0 0.0
        %3305 = vmatprep.subr.mxu0 0.0
        %3306 = vmatpush1.msra.mxu0 0.0
        %3307 = vmatprep.subr.mxu0 0.0
        %3308 = vmatpush1.msra.mxu0 0.0
        %3309 = vmatprep.subr.mxu0 0.0
        %3310 = vmatpush1.msra.mxu0 0.0
        %3311 = vmatprep.subr.mxu0 0.0
        %3312 = vmatpush1.msra.mxu0 0.0
        %3313 = vmatprep.subr.mxu0 0.0
        %3314 = vmatpush1.msra.mxu0 0.0
        %3315 = vmatprep.subr.mxu0 0.0
        %3316 = vmatpush1.msra.mxu0 0.0
        %3317 = vmatprep.subr.mxu0 0.0
        %3318 = vmatpush1.msra.mxu0 0.0
        %3319 = vmatprep.subr.mxu0 0.0
        %3320 = vmatpush1.msra.mxu0 0.0
        %3321 = vmatprep.subr.mxu0 0.0
        %3322 = vmatpush1.msra.mxu0 0.0
        %3323 = vmatprep.subr.mxu0 0.0
        %3324 = vmatpush1.msra.mxu0 0.0
        %3325 = vmatprep.subr.mxu0 0.0
        %3326 = vmatpush1.msra.mxu0 0.0
        %3327 = vmatprep.subr.mxu0 0.0
        %3328 = vmatpush1.msra.mxu0 0.0
        %3329 = vmatprep.subr.mxu0 0.0
        %3330 = vmatpush1.msra.mxu0 0.0
        %3331 = vmatprep.subr.mxu0 0.0
        %3332 = vmatpush1.msra.mxu0 0.0
        %3333 = vmatprep.subr.mxu0 0.0
        %3334 = vmatpush1.msra.mxu0 0.0
        %3335 = vmatprep.subr.mxu0 0.0
        %3336 = vmatpush1.msra.mxu0 0.0
        %3337 = vmatprep.subr.mxu0 0.0
        %3338 = vmatpush1.msra.mxu0 0.0
        %3339 = vmatprep.subr.mxu0 0.0
        %3340 = vmatpush1.msra.mxu0 0.0
        %3341 = vmatprep.subr.mxu0 0.0
        %3342 = vmatpush1.msra.mxu0 0.0
        %3343 = vmatprep.subr.mxu0 0.0
        %3344 = vmatpush1.msra.mxu0 0.0
        %3345 = vmatprep.subr.mxu0 0.0
        %3346 = vmatpush1.msra.mxu0 0.0
        %3347 = vmatprep.mubr.f32.mxu0 0.0
        %3348 = vmatmul.mubr.f32.gmra.mrb[0].mxu0 %v2866
        %v3349 = vpop.f32.mrb[0].mxu0
        %v3350 = vadd.f32 %v3281, %v3349
        %v3351 = vpop.f32.mrb[0].mxu0
        %3352 = vdwg.mxu0
        %s3353 = scalar_lea.vmem %s41, 32
        %v3354 = vld [vmem:[%s3353] sm:$0xff]
        %v3355 = vld [vmem:[%s3353 + $0x8] sm:$0xff]
        %v3356 = vld [vmem:[%s3353 + $0x10] sm:$0xff]
        %v3357 = vld [vmem:[%s3353 + $0x18] sm:$0xff]
        %s3358 = scalar_lea.vmem %s43, 1
        %v3359 = vld [vmem:[%s3358] sm:$0x1]
        %v3361 = vlaneseq
        %v3362 = vshrl.u32 %v3361, 7
        %v3363 = vsub.s32 0, %v3362
        %v3364 = vrot.slane %v3359, %v3363
        %3366 = vmatprep.subr.mxu0 0.0
        %3367 = vmatpush1.msra.mxu0 %v3354
        %3368 = vmatprep.subr.mxu0 0.0
        %3369 = vmatpush1.msra.mxu0 %v3355
        %3370 = vmatprep.subr.mxu0 0.0
        %3371 = vmatpush1.msra.mxu0 %v3356
        %3372 = vmatprep.subr.mxu0 0.0
        %3373 = vmatpush1.msra.mxu0 %v3357
        %3374 = vmatprep.subr.mxu0 0.0
        %3375 = vmatpush1.msra.mxu0 0.0
        %3376 = vmatprep.subr.mxu0 0.0
        %3377 = vmatpush1.msra.mxu0 0.0
        %3378 = vmatprep.subr.mxu0 0.0
        %3379 = vmatpush1.msra.mxu0 0.0
        %3380 = vmatprep.subr.mxu0 0.0
        %3381 = vmatpush1.msra.mxu0 0.0
        %3382 = vmatprep.subr.mxu0 0.0
        %3383 = vmatpush1.msra.mxu0 0.0
        %3384 = vmatprep.subr.mxu0 0.0
        %3385 = vmatpush1.msra.mxu0 0.0
        %3386 = vmatprep.subr.mxu0 0.0
        %3387 = vmatpush1.msra.mxu0 0.0
        %3388 = vmatprep.subr.mxu0 0.0
        %3389 = vmatpush1.msra.mxu0 0.0
        %3390 = vmatprep.subr.mxu0 0.0
        %3391 = vmatpush1.msra.mxu0 0.0
        %3392 = vmatprep.subr.mxu0 0.0
        %3393 = vmatpush1.msra.mxu0 0.0
        %3394 = vmatprep.subr.mxu0 0.0
        %3395 = vmatpush1.msra.mxu0 0.0
        %3396 = vmatprep.subr.mxu0 0.0
        %3397 = vmatpush1.msra.mxu0 0.0
        %3398 = vmatprep.subr.mxu0 0.0
        %3399 = vmatpush1.msra.mxu0 0.0
        %3400 = vmatprep.subr.mxu0 0.0
        %3401 = vmatpush1.msra.mxu0 0.0
        %3402 = vmatprep.subr.mxu0 0.0
        %3403 = vmatpush1.msra.mxu0 0.0
        %3404 = vmatprep.subr.mxu0 0.0
        %3405 = vmatpush1.msra.mxu0 0.0
        %3406 = vmatprep.subr.mxu0 0.0
        %3407 = vmatpush1.msra.mxu0 0.0
        %3408 = vmatprep.subr.mxu0 0.0
        %3409 = vmatpush1.msra.mxu0 0.0
        %3410 = vmatprep.subr.mxu0 0.0
        %3411 = vmatpush1.msra.mxu0 0.0
        %3412 = vmatprep.subr.mxu0 0.0
        %3413 = vmatpush1.msra.mxu0 0.0
        %3414 = vmatprep.subr.mxu0 0.0
        %3415 = vmatpush1.msra.mxu0 0.0
        %3416 = vmatprep.subr.mxu0 0.0
        %3417 = vmatpush1.msra.mxu0 0.0
        %3418 = vmatprep.subr.mxu0 0.0
        %3419 = vmatpush1.msra.mxu0 0.0
        %3420 = vmatprep.subr.mxu0 0.0
        %3421 = vmatpush1.msra.mxu0 0.0
        %3422 = vmatprep.subr.mxu0 0.0
        %3423 = vmatpush1.msra.mxu0 0.0
        %3424 = vmatprep.subr.mxu0 0.0
        %3425 = vmatpush1.msra.mxu0 0.0
        %3426 = vmatprep.subr.mxu0 0.0
        %3427 = vmatpush1.msra.mxu0 0.0
        %3428 = vmatprep.subr.mxu0 0.0
        %3429 = vmatpush1.msra.mxu0 0.0
        %3430 = vmatprep.mubr.f32.mxu0 0.0
        %3431 = vmatmul.mubr.f32.gmra.mrb[0].mxu0 %v2866
        %v3432 = vpop.f32.mrb[0].mxu0
        %v3433 = vadd.f32 %v3364, %v3432
        %v3434 = vpop.f32.mrb[0].mxu0
        %3435 = vdwg.mxu0
        %v3437 = vsel %vm1375, %v3267, 0
        %v3440 = vsel %vm1375, %v3350, 0
        %3442 = vmatprep.subr.mxu0 0.0
        %3443 = vmatpush1.xpose.msra.mxu0 %v3440
        %3444 = vmatprep.subr.mxu0 0.0
        %3445 = vmatpush1.xpose.msra.mxu0 0.0
        %3446 = vmatprep.subr.mxu0 0.0
        %3447 = vmatpush1.xpose.msra.mxu0 0.0
        %3448 = vmatprep.subr.mxu0 0.0
        %3449 = vmatpush1.xpose.msra.mxu0 0.0
        %3450 = vmatprep.subr.mxu0 0.0
        %3451 = vmatpush1.xpose.msra.mxu0 0.0
        %3452 = vmatprep.subr.mxu0 0.0
        %3453 = vmatpush1.xpose.msra.mxu0 0.0
        %3454 = vmatprep.subr.mxu0 0.0
        %3455 = vmatpush1.xpose.msra.mxu0 0.0
        %3456 = vmatprep.subr.mxu0 0.0
        %3457 = vmatpush1.xpose.msra.mxu0 0.0
        %3458 = vmatprep.subr.mxu0 0.0
        %3459 = vmatpush1.xpose.msra.mxu0 0.0
        %3460 = vmatprep.subr.mxu0 0.0
        %3461 = vmatpush1.xpose.msra.mxu0 0.0
        %3462 = vmatprep.subr.mxu0 0.0
        %3463 = vmatpush1.xpose.msra.mxu0 0.0
        %3464 = vmatprep.subr.mxu0 0.0
        %3465 = vmatpush1.xpose.msra.mxu0 0.0
        %3466 = vmatprep.subr.mxu0 0.0
        %3467 = vmatpush1.xpose.msra.mxu0 0.0
        %3468 = vmatprep.subr.mxu0 0.0
        %3469 = vmatpush1.xpose.msra.mxu0 0.0
        %3470 = vmatprep.subr.mxu0 0.0
        %3471 = vmatpush1.xpose.msra.mxu0 0.0
        %3472 = vmatprep.subr.mxu0 0.0
        %3473 = vmatpush1.xpose.msra.mxu0 0.0
        %3474 = vmatprep.subr.mxu0 0.0
        %3475 = vmatpush1.xpose.msra.mxu0 0.0
        %3476 = vmatprep.subr.mxu0 0.0
        %3477 = vmatpush1.xpose.msra.mxu0 0.0
        %3478 = vmatprep.subr.mxu0 0.0
        %3479 = vmatpush1.xpose.msra.mxu0 0.0
        %3480 = vmatprep.subr.mxu0 0.0
        %3481 = vmatpush1.xpose.msra.mxu0 0.0
        %3482 = vmatprep.subr.mxu0 0.0
        %3483 = vmatpush1.xpose.msra.mxu0 0.0
        %3484 = vmatprep.subr.mxu0 0.0
        %3485 = vmatpush1.xpose.msra.mxu0 0.0
        %3486 = vmatprep.subr.mxu0 0.0
        %3487 = vmatpush1.xpose.msra.mxu0 0.0
        %3488 = vmatprep.subr.mxu0 0.0
        %3489 = vmatpush1.xpose.msra.mxu0 0.0
        %3490 = vmatprep.subr.mxu0 0.0
        %3491 = vmatpush1.xpose.msra.mxu0 0.0
        %3492 = vmatprep.subr.mxu0 0.0
        %3493 = vmatpush1.xpose.msra.mxu0 0.0
        %3494 = vmatprep.subr.mxu0 0.0
        %3495 = vmatpush1.xpose.msra.mxu0 0.0
        %3496 = vmatprep.subr.mxu0 0.0
        %3497 = vmatpush1.xpose.msra.mxu0 0.0
        %3498 = vmatprep.subr.mxu0 0.0
        %3499 = vmatpush1.xpose.msra.mxu0 0.0
        %3500 = vmatprep.subr.mxu0 0.0
        %3501 = vmatpush1.xpose.msra.mxu0 0.0
        %3502 = vmatprep.subr.mxu0 0.0
        %3503 = vmatpush1.xpose.msra.mxu0 0.0
        %3504 = vmatprep.subr.mxu0 0.0
        %3505 = vmatpush1.xpose.msra.mxu0 0.0
        %3506 = vmatprep.mubr.f32.mxu0 0.0
        %3507 = vmatmul.mubr.f32.gmra.mrb[0].mxu0 %v3437
        %v3508 = vpop.f32.mrb[0].mxu0
        %v3509 = vadd.f32 0.0, %v3508
        %v3510 = vpop.f32.mrb[0].mxu0
        %3511 = vdwg.mxu0
        %v3512 = vsel %vm1375, %v3509, -inf
        %3513 = vmax.xlane.f32.xlu0 %v3512
        %v3514 = vpop.xlane.xlu0 %3513
        %v3515 = vsub.f32 %v3509, %v3514
        %v3516 = vmul.f32 %v3515, 1.442695
        %v3517 = vpow.pop %v3516
        %v3518 = vsel %vm1375, %v3517, 0.0
        %3519 = vadd.xlane.f32.xlu0 %v3518
        %v3520 = vpop.xlane.xlu0 %3519
        %v3521 = vrcp.pop %v3520
        %v3522 = vmul.f32 %v3517, %v3521
        %v3524 = vsel %vm1375, %v3522, 0
        %3526 = vmatprep.subr.mxu0 0.0
        %3527 = vmatpush1.msra.mxu0 %v3433
        %3528 = vmatprep.subr.mxu0 0.0
        %3529 = vmatpush1.msra.mxu0 0.0
        %3530 = vmatprep.subr.mxu0 0.0
        %3531 = vmatpush1.msra.mxu0 0.0
        %3532 = vmatprep.subr.mxu0 0.0
        %3533 = vmatpush1.msra.mxu0 0.0
        %3534 = vmatprep.subr.mxu0 0.0
        %3535 = vmatpush1.msra.mxu0 0.0
        %3536 = vmatprep.subr.mxu0 0.0
        %3537 = vmatpush1.msra.mxu0 0.0
        %3538 = vmatprep.subr.mxu0 0.0
        %3539 = vmatpush1.msra.mxu0 0.0
        %3540 = vmatprep.subr.mxu0 0.0
        %3541 = vmatpush1.msra.mxu0 0.0
        %3542 = vmatprep.subr.mxu0 0.0
        %3543 = vmatpush1.msra.mxu0 0.0
        %3544 = vmatprep.subr.mxu0 0.0
        %3545 = vmatpush1.msra.mxu0 0.0
        %3546 = vmatprep.subr.mxu0 0.0
        %3547 = vmatpush1.msra.mxu0 0.0
        %3548 = vmatprep.subr.mxu0 0.0
        %3549 = vmatpush1.msra.mxu0 0.0
        %3550 = vmatprep.subr.mxu0 0.0
        %3551 = vmatpush1.msra.mxu0 0.0
        %3552 = vmatprep.subr.mxu0 0.0
        %3553 = vmatpush1.msra.mxu0 0.0
        %3554 = vmatprep.subr.mxu0 0.0
        %3555 = vmatpush1.msra.mxu0 0.0
        %3556 = vmatprep.subr.mxu0 0.0
        %3557 = vmatpush1.msra.mxu0 0.0
        %3558 = vmatprep.subr.mxu0 0.0
        %3559 = vmatpush1.msra.mxu0 0.0
        %3560 = vmatprep.subr.mxu0 0.0
        %3561 = vmatpush1.msra.mxu0 0.0
        %3562 = vmatprep.subr.mxu0 0.0
        %3563 = vmatpush1.msra.mxu0 0.0
        %3564 = vmatprep.subr.mxu0 0.0
        %3565 = vmatpush1.msra.mxu0 0.0
        %3566 = vmatprep.subr.mxu0 0.0
        %3567 = vmatpush1.msra.mxu0 0.0
        %3568 = vmatprep.subr.mxu0 0.0
        %3569 = vmatpush1.msra.mxu0 0.0
        %3570 = vmatprep.subr.mxu0 0.0
        %3571 = vmatpush1.msra.mxu0 0.0
        %3572 = vmatprep.subr.mxu0 0.0
        %3573 = vmatpush1.msra.mxu0 0.0
        %3574 = vmatprep.subr.mxu0 0.0
        %3575 = vmatpush1.msra.mxu0 0.0
        %3576 = vmatprep.subr.mxu0 0.0
        %3577 = vmatpush1.msra.mxu0 0.0
        %3578 = vmatprep.subr.mxu0 0.0
        %3579 = vmatpush1.msra.mxu0 0.0
        %3580 = vmatprep.subr.mxu0 0.0
        %3581 = vmatpush1.msra.mxu0 0.0
        %3582 = vmatprep.subr.mxu0 0.0
        %3583 = vmatpush1.msra.mxu0 0.0
        %3584 = vmatprep.subr.mxu0 0.0
        %3585 = vmatpush1.msra.mxu0 0.0
        %3586 = vmatprep.subr.mxu0 0.0
        %3587 = vmatpush1.msra.mxu0 0.0
        %3588 = vmatprep.subr.mxu0 0.0
        %3589 = vmatpush1.msra.mxu0 0.0
        %3590 = vmatprep.mubr.f32.mxu0 0.0
        %3591 = vmatmul.mubr.f32.gmra.mrb[0].mxu0 %v3524
        %v3592 = vpop.f32.mrb[0].mxu0
        %v3593 = vadd.f32 0.0, %v3592
        %v3594 = vpop.f32.mrb[0].mxu0
        %3595 = vdwg.mxu0
        %v3597 = vsel %vm1375, %v3186, 0
        %3599 = vmatprep.subr.mxu0 0.0
        %3600 = vmatpush1.msra.mxu0 %v3097
        %3601 = vmatprep.subr.mxu0 0.0
        %3602 = vmatpush1.msra.mxu0 0.0
        %3603 = vmatprep.subr.mxu0 0.0
        %3604 = vmatpush1.msra.mxu0 0.0
        %3605 = vmatprep.subr.mxu0 0.0
        %3606 = vmatpush1.msra.mxu0 0.0
        %3607 = vmatprep.subr.mxu0 0.0
        %3608 = vmatpush1.msra.mxu0 0.0
        %3609 = vmatprep.subr.mxu0 0.0
        %3610 = vmatpush1.msra.mxu0 0.0
        %3611 = vmatprep.subr.mxu0 0.0
        %3612 = vmatpush1.msra.mxu0 0.0
        %3613 = vmatprep.subr.mxu0 0.0
        %3614 = vmatpush1.msra.mxu0 0.0
        %3615 = vmatprep.subr.mxu0 0.0
        %3616 = vmatpush1.msra.mxu0 0.0
        %3617 = vmatprep.subr.mxu0 0.0
        %3618 = vmatpush1.msra.mxu0 0.0
        %3619 = vmatprep.subr.mxu0 0.0
        %3620 = vmatpush1.msra.mxu0 0.0
        %3621 = vmatprep.subr.mxu0 0.0
        %3622 = vmatpush1.msra.mxu0 0.0
        %3623 = vmatprep.subr.mxu0 0.0
        %3624 = vmatpush1.msra.mxu0 0.0
        %3625 = vmatprep.subr.mxu0 0.0
        %3626 = vmatpush1.msra.mxu0 0.0
        %3627 = vmatprep.subr.mxu0 0.0
        %3628 = vmatpush1.msra.mxu0 0.0
        %3629 = vmatprep.subr.mxu0 0.0
        %3630 = vmatpush1.msra.mxu0 0.0
        %3631 = vmatprep.subr.mxu0 0.0
        %3632 = vmatpush1.msra.mxu0 0.0
        %3633 = vmatprep.subr.mxu0 0.0
        %3634 = vmatpush1.msra.mxu0 0.0
        %3635 = vmatprep.subr.mxu0 0.0
        %3636 = vmatpush1.msra.mxu0 0.0
        %3637 = vmatprep.subr.mxu0 0.0
        %3638 = vmatpush1.msra.mxu0 0.0
        %3639 = vmatprep.subr.mxu0 0.0
        %3640 = vmatpush1.msra.mxu0 0.0
        %3641 = vmatprep.subr.mxu0 0.0
        %3642 = vmatpush1.msra.mxu0 0.0
        %3643 = vmatprep.subr.mxu0 0.0
        %3644 = vmatpush1.msra.mxu0 0.0
        %3645 = vmatprep.subr.mxu0 0.0
        %3646 = vmatpush1.msra.mxu0 0.0
        %3647 = vmatprep.subr.mxu0 0.0
        %3648 = vmatpush1.msra.mxu0 0.0
        %3649 = vmatprep.subr.mxu0 0.0
        %3650 = vmatpush1.msra.mxu0 0.0
        %3651 = vmatprep.subr.mxu0 0.0
        %3652 = vmatpush1.msra.mxu0 0.0
        %3653 = vmatprep.subr.mxu0 0.0
        %3654 = vmatpush1.msra.mxu0 0.0
        %3655 = vmatprep.subr.mxu0 0.0
        %3656 = vmatpush1.msra.mxu0 0.0
        %3657 = vmatprep.subr.mxu0 0.0
        %3658 = vmatpush1.msra.mxu0 0.0
        %3659 = vmatprep.subr.mxu0 0.0
        %3660 = vmatpush1.msra.mxu0 0.0
        %3661 = vmatprep.subr.mxu0 0.0
        %3662 = vmatpush1.msra.mxu0 0.0
        %3663 = vmatprep.mubr.f32.mxu0 0.0
        %3664 = vmatmul.mubr.f32.gmra.mrb[0].mxu0 %v3597
        %v3665 = vpop.f32.mrb[0].mxu0
        %v3666 = vadd.f32 %v3593, %v3665
        %v3667 = vpop.f32.mrb[0].mxu0
        %3668 = vdwg.mxu0
        %s3669 = scalar_lea.vmem %s33, 64
        %v3670 = vld [vmem:[%s3669] sm:$0xff]
        %v3671 = vld [vmem:[%s3669 + $0x8] sm:$0xff]
        %v3672 = vld [vmem:[%s3669 + $0x10] sm:$0xff]
        %v3673 = vld [vmem:[%s3669 + $0x18] sm:$0xff]
        %s3674 = scalar_lea.vmem %s35, 2
        %v3675 = vld [vmem:[%s3674] sm:$0x1]
        %v3677 = vlaneseq
        %v3678 = vshrl.u32 %v3677, 7
        %v3679 = vsub.s32 0, %v3678
        %v3680 = vrot.slane %v3675, %v3679
        %3682 = vmatprep.subr.mxu0 0.0
        %3683 = vmatpush1.msra.mxu0 %v3670
        %3684 = vmatprep.subr.mxu0 0.0
        %3685 = vmatpush1.msra.mxu0 %v3671
        %3686 = vmatprep.subr.mxu0 0.0
        %3687 = vmatpush1.msra.mxu0 %v3672
        %3688 = vmatprep.subr.mxu0 0.0
        %3689 = vmatpush1.msra.mxu0 %v3673
        %3690 = vmatprep.subr.mxu0 0.0
        %3691 = vmatpush1.msra.mxu0 0.0
        %3692 = vmatprep.subr.mxu0 0.0
        %3693 = vmatpush1.msra.mxu0 0.0
        %3694 = vmatprep.subr.mxu0 0.0
        %3695 = vmatpush1.msra.mxu0 0.0
        %3696 = vmatprep.subr.mxu0 0.0
        %3697 = vmatpush1.msra.mxu0 0.0
        %3698 = vmatprep.subr.mxu0 0.0
        %3699 = vmatpush1.msra.mxu0 0.0
        %3700 = vmatprep.subr.mxu0 0.0
        %3701 = vmatpush1.msra.mxu0 0.0
        %3702 = vmatprep.subr.mxu0 0.0
        %3703 = vmatpush1.msra.mxu0 0.0
        %3704 = vmatprep.subr.mxu0 0.0
        %3705 = vmatpush1.msra.mxu0 0.0
        %3706 = vmatprep.subr.mxu0 0.0
        %3707 = vmatpush1.msra.mxu0 0.0
        %3708 = vmatprep.subr.mxu0 0.0
        %3709 = vmatpush1.msra.mxu0 0.0
        %3710 = vmatprep.subr.mxu0 0.0
        %3711 = vmatpush1.msra.mxu0 0.0
        %3712 = vmatprep.subr.mxu0 0.0
        %3713 = vmatpush1.msra.mxu0 0.0
        %3714 = vmatprep.subr.mxu0 0.0
        %3715 = vmatpush1.msra.mxu0 0.0
        %3716 = vmatprep.subr.mxu0 0.0
        %3717 = vmatpush1.msra.mxu0 0.0
        %3718 = vmatprep.subr.mxu0 0.0
        %3719 = vmatpush1.msra.mxu0 0.0
        %3720 = vmatprep.subr.mxu0 0.0
        %3721 = vmatpush1.msra.mxu0 0.0
        %3722 = vmatprep.subr.mxu0 0.0
        %3723 = vmatpush1.msra.mxu0 0.0
        %3724 = vmatprep.subr.mxu0 0.0
        %3725 = vmatpush1.msra.mxu0 0.0
        %3726 = vmatprep.subr.mxu0 0.0
        %3727 = vmatpush1.msra.mxu0 0.0
        %3728 = vmatprep.subr.mxu0 0.0
        %3729 = vmatpush1.msra.mxu0 0.0
        %3730 = vmatprep.subr.mxu0 0.0
        %3731 = vmatpush1.msra.mxu0 0.0
        %3732 = vmatprep.subr.mxu0 0.0
        %3733 = vmatpush1.msra.mxu0 0.0
        %3734 = vmatprep.subr.mxu0 0.0
        %3735 = vmatpush1.msra.mxu0 0.0
        %3736 = vmatprep.subr.mxu0 0.0
        %3737 = vmatpush1.msra.mxu0 0.0
        %3738 = vmatprep.subr.mxu0 0.0
        %3739 = vmatpush1.msra.mxu0 0.0
        %3740 = vmatprep.subr.mxu0 0.0
        %3741 = vmatpush1.msra.mxu0 0.0
        %3742 = vmatprep.subr.mxu0 0.0
        %3743 = vmatpush1.msra.mxu0 0.0
        %3744 = vmatprep.subr.mxu0 0.0
        %3745 = vmatpush1.msra.mxu0 0.0
        %3746 = vmatprep.mubr.f32.mxu0 0.0
        %3747 = vmatmul.mubr.f32.gmra.mrb[0].mxu0 %v2866
        %v3748 = vpop.f32.mrb[0].mxu0
        %v3749 = vadd.f32 %v3680, %v3748
        %v3750 = vpop.f32.mrb[0].mxu0
        %3751 = vdwg.mxu0
        %s3752 = scalar_lea.vmem %s37, 64
        %v3753 = vld [vmem:[%s3752] sm:$0xff]
        %v3754 = vld [vmem:[%s3752 + $0x8] sm:$0xff]
        %v3755 = vld [vmem:[%s3752 + $0x10] sm:$0xff]
        %v3756 = vld [vmem:[%s3752 + $0x18] sm:$0xff]
        %s3757 = scalar_lea.vmem %s39, 2
        %v3758 = vld [vmem:[%s3757] sm:$0x1]
        %v3760 = vlaneseq
        %v3761 = vshrl.u32 %v3760, 7
        %v3762 = vsub.s32 0, %v3761
        %v3763 = vrot.slane %v3758, %v3762
        %3765 = vmatprep.subr.mxu0 0.0
        %3766 = vmatpush1.msra.mxu0 %v3753
        %3767 = vmatprep.subr.mxu0 0.0
        %3768 = vmatpush1.msra.mxu0 %v3754
        %3769 = vmatprep.subr.mxu0 0.0
        %3770 = vmatpush1.msra.mxu0 %v3755
        %3771 = vmatprep.subr.mxu0 0.0
        %3772 = vmatpush1.msra.mxu0 %v3756
        %3773 = vmatprep.subr.mxu0 0.0
        %3774 = vmatpush1.msra.mxu0 0.0
        %3775 = vmatprep.subr.mxu0 0.0
        %3776 = vmatpush1.msra.mxu0 0.0
        %3777 = vmatprep.subr.mxu0 0.0
        %3778 = vmatpush1.msra.mxu0 0.0
        %3779 = vmatprep.subr.mxu0 0.0
        %3780 = vmatpush1.msra.mxu0 0.0
        %3781 = vmatprep.subr.mxu0 0.0
        %3782 = vmatpush1.msra.mxu0 0.0
        %3783 = vmatprep.subr.mxu0 0.0
        %3784 = vmatpush1.msra.mxu0 0.0
        %3785 = vmatprep.subr.mxu0 0.0
        %3786 = vmatpush1.msra.mxu0 0.0
        %3787 = vmatprep.subr.mxu0 0.0
        %3788 = vmatpush1.msra.mxu0 0.0
        %3789 = vmatprep.subr.mxu0 0.0
        %3790 = vmatpush1.msra.mxu0 0.0
        %3791 = vmatprep.subr.mxu0 0.0
        %3792 = vmatpush1.msra.mxu0 0.0
        %3793 = vmatprep.subr.mxu0 0.0
        %3794 = vmatpush1.msra.mxu0 0.0
        %3795 = vmatprep.subr.mxu0 0.0
        %3796 = vmatpush1.msra.mxu0 0.0
        %3797 = vmatprep.subr.mxu0 0.0
        %3798 = vmatpush1.msra.mxu0 0.0
        %3799 = vmatprep.subr.mxu0 0.0
        %3800 = vmatpush1.msra.mxu0 0.0
        %3801 = vmatprep.subr.mxu0 0.0
        %3802 = vmatpush1.msra.mxu0 0.0
        %3803 = vmatprep.subr.mxu0 0.0
        %3804 = vmatpush1.msra.mxu0 0.0
        %3805 = vmatprep.subr.mxu0 0.0
        %3806 = vmatpush1.msra.mxu0 0.0
        %3807 = vmatprep.subr.mxu0 0.0
        %3808 = vmatpush1.msra.mxu0 0.0
        %3809 = vmatprep.subr.mxu0 0.0
        %3810 = vmatpush1.msra.mxu0 0.0
        %3811 = vmatprep.subr.mxu0 0.0
        %3812 = vmatpush1.msra.mxu0 0.0
        %3813 = vmatprep.subr.mxu0 0.0
        %3814 = vmatpush1.msra.mxu0 0.0
        %3815 = vmatprep.subr.mxu0 0.0
        %3816 = vmatpush1.msra.mxu0 0.0
        %3817 = vmatprep.subr.mxu0 0.0
        %3818 = vmatpush1.msra.mxu0 0.0
        %3819 = vmatprep.subr.mxu0 0.0
        %3820 = vmatpush1.msra.mxu0 0.0
        %3821 = vmatprep.subr.mxu0 0.0
        %3822 = vmatpush1.msra.mxu0 0.0
        %3823 = vmatprep.subr.mxu0 0.0
        %3824 = vmatpush1.msra.mxu0 0.0
        %3825 = vmatprep.subr.mxu0 0.0
        %3826 = vmatpush1.msra.mxu0 0.0
        %3827 = vmatprep.subr.mxu0 0.0
        %3828 = vmatpush1.msra.mxu0 0.0
        %3829 = vmatprep.mubr.f32.mxu0 0.0
        %3830 = vmatmul.mubr.f32.gmra.mrb[0].mxu0 %v2866
        %v3831 = vpop.f32.mrb[0].mxu0
        %v3832 = vadd.f32 %v3763, %v3831
        %v3833 = vpop.f32.mrb[0].mxu0
        %3834 = vdwg.mxu0
        %s3835 = scalar_lea.vmem %s41, 64
        %v3836 = vld [vmem:[%s3835] sm:$0xff]
        %v3837 = vld [vmem:[%s3835 + $0x8] sm:$0xff]
        %v3838 = vld [vmem:[%s3835 + $0x10] sm:$0xff]
        %v3839 = vld [vmem:[%s3835 + $0x18] sm:$0xff]
        %s3840 = scalar_lea.vmem %s43, 2
        %v3841 = vld [vmem:[%s3840] sm:$0x1]
        %v3843 = vlaneseq
        %v3844 = vshrl.u32 %v3843, 7
        %v3845 = vsub.s32 0, %v3844
        %v3846 = vrot.slane %v3841, %v3845
        %3848 = vmatprep.subr.mxu0 0.0
        %3849 = vmatpush1.msra.mxu0 %v3836
        %3850 = vmatprep.subr.mxu0 0.0
        %3851 = vmatpush1.msra.mxu0 %v3837
        %3852 = vmatprep.subr.mxu0 0.0
        %3853 = vmatpush1.msra.mxu0 %v3838
        %3854 = vmatprep.subr.mxu0 0.0
        %3855 = vmatpush1.msra.mxu0 %v3839
        %3856 = vmatprep.subr.mxu0 0.0
        %3857 = vmatpush1.msra.mxu0 0.0
        %3858 = vmatprep.subr.mxu0 0.0
        %3859 = vmatpush1.msra.mxu0 0.0
        %3860 = vmatprep.subr.mxu0 0.0
        %3861 = vmatpush1.msra.mxu0 0.0
        %3862 = vmatprep.subr.mxu0 0.0
        %3863 = vmatpush1.msra.mxu0 0.0
        %3864 = vmatprep.subr.mxu0 0.0
        %3865 = vmatpush1.msra.mxu0 0.0
        %3866 = vmatprep.subr.mxu0 0.0
        %3867 = vmatpush1.msra.mxu0 0.0
        %3868 = vmatprep.subr.mxu0 0.0
        %3869 = vmatpush1.msra.mxu0 0.0
        %3870 = vmatprep.subr.mxu0 0.0
        %3871 = vmatpush1.msra.mxu0 0.0
        %3872 = vmatprep.subr.mxu0 0.0
        %3873 = vmatpush1.msra.mxu0 0.0
        %3874 = vmatprep.subr.mxu0 0.0
        %3875 = vmatpush1.msra.mxu0 0.0
        %3876 = vmatprep.subr.mxu0 0.0
        %3877 = vmatpush1.msra.mxu0 0.0
        %3878 = vmatprep.subr.mxu0 0.0
        %3879 = vmatpush1.msra.mxu0 0.0
        %3880 = vmatprep.subr.mxu0 0.0
        %3881 = vmatpush1.msra.mxu0 0.0
        %3882 = vmatprep.subr.mxu0 0.0
        %3883 = vmatpush1.msra.mxu0 0.0
        %3884 = vmatprep.subr.mxu0 0.0
        %3885 = vmatpush1.msra.mxu0 0.0
        %3886 = vmatprep.subr.mxu0 0.0
        %3887 = vmatpush1.msra.mxu0 0.0
        %3888 = vmatprep.subr.mxu0 0.0
        %3889 = vmatpush1.msra.mxu0 0.0
        %3890 = vmatprep.subr.mxu0 0.0
        %3891 = vmatpush1.msra.mxu0 0.0
        %3892 = vmatprep.subr.mxu0 0.0
        %3893 = vmatpush1.msra.mxu0 0.0
        %3894 = vmatprep.subr.mxu0 0.0
        %3895 = vmatpush1.msra.mxu0 0.0
        %3896 = vmatprep.subr.mxu0 0.0
        %3897 = vmatpush1.msra.mxu0 0.0
        %3898 = vmatprep.subr.mxu0 0.0
        %3899 = vmatpush1.msra.mxu0 0.0
        %3900 = vmatprep.subr.mxu0 0.0
        %3901 = vmatpush1.msra.mxu0 0.0
        %3902 = vmatprep.subr.mxu0 0.0
        %3903 = vmatpush1.msra.mxu0 0.0
        %3904 = vmatprep.subr.mxu0 0.0
        %3905 = vmatpush1.msra.mxu0 0.0
        %3906 = vmatprep.subr.mxu0 0.0
        %3907 = vmatpush1.msra.mxu0 0.0
        %3908 = vmatprep.subr.mxu0 0.0
        %3909 = vmatpush1.msra.mxu0 0.0
        %3910 = vmatprep.subr.mxu0 0.0
        %3911 = vmatpush1.msra.mxu0 0.0
        %3912 = vmatprep.mubr.f32.mxu0 0.0
        %3913 = vmatmul.mubr.f32.gmra.mrb[0].mxu0 %v2866
        %v3914 = vpop.f32.mrb[0].mxu0
        %v3915 = vadd.f32 %v3846, %v3914
        %v3916 = vpop.f32.mrb[0].mxu0
        %3917 = vdwg.mxu0
        %v3919 = vsel %vm1375, %v3749, 0
        %v3922 = vsel %vm1375, %v3832, 0
        %3924 = vmatprep.subr.mxu0 0.0
        %3925 = vmatpush1.xpose.msra.mxu0 %v3922
        %3926 = vmatprep.subr.mxu0 0.0
        %3927 = vmatpush1.xpose.msra.mxu0 0.0
        %3928 = vmatprep.subr.mxu0 0.0
        %3929 = vmatpush1.xpose.msra.mxu0 0.0
        %3930 = vmatprep.subr.mxu0 0.0
        %3931 = vmatpush1.xpose.msra.mxu0 0.0
        %3932 = vmatprep.subr.mxu0 0.0
        %3933 = vmatpush1.xpose.msra.mxu0 0.0
        %3934 = vmatprep.subr.mxu0 0.0
        %3935 = vmatpush1.xpose.msra.mxu0 0.0
        %3936 = vmatprep.subr.mxu0 0.0
        %3937 = vmatpush1.xpose.msra.mxu0 0.0
        %3938 = vmatprep.subr.mxu0 0.0
        %3939 = vmatpush1.xpose.msra.mxu0 0.0
        %3940 = vmatprep.subr.mxu0 0.0
        %3941 = vmatpush1.xpose.msra.mxu0 0.0
        %3942 = vmatprep.subr.mxu0 0.0
        %3943 = vmatpush1.xpose.msra.mxu0 0.0
        %3944 = vmatprep.subr.mxu0 0.0
        %3945 = vmatpush1.xpose.msra.mxu0 0.0
        %3946 = vmatprep.subr.mxu0 0.0
        %3947 = vmatpush1.xpose.msra.mxu0 0.0
        %3948 = vmatprep.subr.mxu0 0.0
        %3949 = vmatpush1.xpose.msra.mxu0 0.0
        %3950 = vmatprep.subr.mxu0 0.0
        %3951 = vmatpush1.xpose.msra.mxu0 0.0
        %3952 = vmatprep.subr.mxu0 0.0
        %3953 = vmatpush1.xpose.msra.mxu0 0.0
        %3954 = vmatprep.subr.mxu0 0.0
        %3955 = vmatpush1.xpose.msra.mxu0 0.0
        %3956 = vmatprep.subr.mxu0 0.0
        %3957 = vmatpush1.xpose.msra.mxu0 0.0
        %3958 = vmatprep.subr.mxu0 0.0
        %3959 = vmatpush1.xpose.msra.mxu0 0.0
        %3960 = vmatprep.subr.mxu0 0.0
        %3961 = vmatpush1.xpose.msra.mxu0 0.0
        %3962 = vmatprep.subr.mxu0 0.0
        %3963 = vmatpush1.xpose.msra.mxu0 0.0
        %3964 = vmatprep.subr.mxu0 0.0
        %3965 = vmatpush1.xpose.msra.mxu0 0.0
        %3966 = vmatprep.subr.mxu0 0.0
        %3967 = vmatpush1.xpose.msra.mxu0 0.0
        %3968 = vmatprep.subr.mxu0 0.0
        %3969 = vmatpush1.xpose.msra.mxu0 0.0
        %3970 = vmatprep.subr.mxu0 0.0
        %3971 = vmatpush1.xpose.msra.mxu0 0.0
        %3972 = vmatprep.subr.mxu0 0.0
        %3973 = vmatpush1.xpose.msra.mxu0 0.0
        %3974 = vmatprep.subr.mxu0 0.0
        %3975 = vmatpush1.xpose.msra.mxu0 0.0
        %3976 = vmatprep.subr.mxu0 0.0
        %3977 = vmatpush1.xpose.msra.mxu0 0.0
        %3978 = vmatprep.subr.mxu0 0.0
        %3979 = vmatpush1.xpose.msra.mxu0 0.0
        %3980 = vmatprep.subr.mxu0 0.0
        %3981 = vmatpush1.xpose.msra.mxu0 0.0
        %3982 = vmatprep.subr.mxu0 0.0
        %3983 = vmatpush1.xpose.msra.mxu0 0.0
        %3984 = vmatprep.subr.mxu0 0.0
        %3985 = vmatpush1.xpose.msra.mxu0 0.0
        %3986 = vmatprep.subr.mxu0 0.0
        %3987 = vmatpush1.xpose.msra.mxu0 0.0
        %3988 = vmatprep.mubr.f32.mxu0 0.0
        %3989 = vmatmul.mubr.f32.gmra.mrb[0].mxu0 %v3919
        %v3990 = vpop.f32.mrb[0].mxu0
        %v3991 = vadd.f32 0.0, %v3990
        %v3992 = vpop.f32.mrb[0].mxu0
        %3993 = vdwg.mxu0
        %v3994 = vsel %vm1375, %v3991, -inf
        %3995 = vmax.xlane.f32.xlu0 %v3994
        %v3996 = vpop.xlane.xlu0 %3995
        %v3997 = vsub.f32 %v3991, %v3996
        %v3998 = vmul.f32 %v3997, 1.442695
        %v3999 = vpow.pop %v3998
        %v4000 = vsel %vm1375, %v3999, 0.0
        %4001 = vadd.xlane.f32.xlu0 %v4000
        %v4002 = vpop.xlane.xlu0 %4001
        %v4003 = vrcp.pop %v4002
        %v4004 = vmul.f32 %v3999, %v4003
        %v4006 = vsel %vm1375, %v4004, 0
        %4008 = vmatprep.subr.mxu0 0.0
        %4009 = vmatpush1.msra.mxu0 %v3915
        %4010 = vmatprep.subr.mxu0 0.0
        %4011 = vmatpush1.msra.mxu0 0.0
        %4012 = vmatprep.subr.mxu0 0.0
        %4013 = vmatpush1.msra.mxu0 0.0
        %4014 = vmatprep.subr.mxu0 0.0
        %4015 = vmatpush1.msra.mxu0 0.0
        %4016 = vmatprep.subr.mxu0 0.0
        %4017 = vmatpush1.msra.mxu0 0.0
        %4018 = vmatprep.subr.mxu0 0.0
        %4019 = vmatpush1.msra.mxu0 0.0
        %4020 = vmatprep.subr.mxu0 0.0
        %4021 = vmatpush1.msra.mxu0 0.0
        %4022 = vmatprep.subr.mxu0 0.0
        %4023 = vmatpush1.msra.mxu0 0.0
        %4024 = vmatprep.subr.mxu0 0.0
        %4025 = vmatpush1.msra.mxu0 0.0
        %4026 = vmatprep.subr.mxu0 0.0
        %4027 = vmatpush1.msra.mxu0 0.0
        %4028 = vmatprep.subr.mxu0 0.0
        %4029 = vmatpush1.msra.mxu0 0.0
        %4030 = vmatprep.subr.mxu0 0.0
        %4031 = vmatpush1.msra.mxu0 0.0
        %4032 = vmatprep.subr.mxu0 0.0
        %4033 = vmatpush1.msra.mxu0 0.0
        %4034 = vmatprep.subr.mxu0 0.0
        %4035 = vmatpush1.msra.mxu0 0.0
        %4036 = vmatprep.subr.mxu0 0.0
        %4037 = vmatpush1.msra.mxu0 0.0
        %4038 = vmatprep.subr.mxu0 0.0
        %4039 = vmatpush1.msra.mxu0 0.0
        %4040 = vmatprep.subr.mxu0 0.0
        %4041 = vmatpush1.msra.mxu0 0.0
        %4042 = vmatprep.subr.mxu0 0.0
        %4043 = vmatpush1.msra.mxu0 0.0
        %4044 = vmatprep.subr.mxu0 0.0
        %4045 = vmatpush1.msra.mxu0 0.0
        %4046 = vmatprep.subr.mxu0 0.0
        %4047 = vmatpush1.msra.mxu0 0.0
        %4048 = vmatprep.subr.mxu0 0.0
        %4049 = vmatpush1.msra.mxu0 0.0
        %4050 = vmatprep.subr.mxu0 0.0
        %4051 = vmatpush1.msra.mxu0 0.0
        %4052 = vmatprep.subr.mxu0 0.0
        %4053 = vmatpush1.msra.mxu0 0.0
        %4054 = vmatprep.subr.mxu0 0.0
        %4055 = vmatpush1.msra.mxu0 0.0
        %4056 = vmatprep.subr.mxu0 0.0
        %4057 = vmatpush1.msra.mxu0 0.0
        %4058 = vmatprep.subr.mxu0 0.0
        %4059 = vmatpush1.msra.mxu0 0.0
        %4060 = vmatprep.subr.mxu0 0.0
        %4061 = vmatpush1.msra.mxu0 0.0
        %4062 = vmatprep.subr.mxu0 0.0
        %4063 = vmatpush1.msra.mxu0 0.0
        %4064 = vmatprep.subr.mxu0 0.0
        %4065 = vmatpush1.msra.mxu0 0.0
        %4066 = vmatprep.subr.mxu0 0.0
        %4067 = vmatpush1.msra.mxu0 0.0
        %4068 = vmatprep.subr.mxu0 0.0
        %4069 = vmatpush1.msra.mxu0 0.0
        %4070 = vmatprep.subr.mxu0 0.0
        %4071 = vmatpush1.msra.mxu0 0.0
        %4072 = vmatprep.mubr.f32.mxu0 0.0
        %4073 = vmatmul.mubr.f32.gmra.mrb[0].mxu0 %v4006
        %v4074 = vpop.f32.mrb[0].mxu0
        %v4075 = vadd.f32 0.0, %v4074
        %v4076 = vpop.f32.mrb[0].mxu0
        %4077 = vdwg.mxu0
        %v4078 = vadd.f32 %v3666, %v4075
        %s4079 = scalar_lea.vmem %s33, 96
        %v4080 = vld [vmem:[%s4079] sm:$0xff]
        %v4081 = vld [vmem:[%s4079 + $0x8] sm:$0xff]
        %v4082 = vld [vmem:[%s4079 + $0x10] sm:$0xff]
        %v4083 = vld [vmem:[%s4079 + $0x18] sm:$0xff]
        %s4084 = scalar_lea.vmem %s35, 3
        %v4085 = vld [vmem:[%s4084] sm:$0x1]
        %v4087 = vlaneseq
        %v4088 = vshrl.u32 %v4087, 7
        %v4089 = vsub.s32 0, %v4088
        %v4090 = vrot.slane %v4085, %v4089
        %4092 = vmatprep.subr.mxu0 0.0
        %4093 = vmatpush1.msra.mxu0 %v4080
        %4094 = vmatprep.subr.mxu0 0.0
        %4095 = vmatpush1.msra.mxu0 %v4081
        %4096 = vmatprep.subr.mxu0 0.0
        %4097 = vmatpush1.msra.mxu0 %v4082
        %4098 = vmatprep.subr.mxu0 0.0
        %4099 = vmatpush1.msra.mxu0 %v4083
        %4100 = vmatprep.subr.mxu0 0.0
        %4101 = vmatpush1.msra.mxu0 0.0
        %4102 = vmatprep.subr.mxu0 0.0
        %4103 = vmatpush1.msra.mxu0 0.0
        %4104 = vmatprep.subr.mxu0 0.0
        %4105 = vmatpush1.msra.mxu0 0.0
        %4106 = vmatprep.subr.mxu0 0.0
        %4107 = vmatpush1.msra.mxu0 0.0
        %4108 = vmatprep.subr.mxu0 0.0
        %4109 = vmatpush1.msra.mxu0 0.0
        %4110 = vmatprep.subr.mxu0 0.0
        %4111 = vmatpush1.msra.mxu0 0.0
        %4112 = vmatprep.subr.mxu0 0.0
        %4113 = vmatpush1.msra.mxu0 0.0
        %4114 = vmatprep.subr.mxu0 0.0
        %4115 = vmatpush1.msra.mxu0 0.0
        %4116 = vmatprep.subr.mxu0 0.0
        %4117 = vmatpush1.msra.mxu0 0.0
        %4118 = vmatprep.subr.mxu0 0.0
        %4119 = vmatpush1.msra.mxu0 0.0
        %4120 = vmatprep.subr.mxu0 0.0
        %4121 = vmatpush1.msra.mxu0 0.0
        %4122 = vmatprep.subr.mxu0 0.0
        %4123 = vmatpush1.msra.mxu0 0.0
        %4124 = vmatprep.subr.mxu0 0.0
        %4125 = vmatpush1.msra.mxu0 0.0
        %4126 = vmatprep.subr.mxu0 0.0
        %4127 = vmatpush1.msra.mxu0 0.0
        %4128 = vmatprep.subr.mxu0 0.0
        %4129 = vmatpush1.msra.mxu0 0.0
        %4130 = vmatprep.subr.mxu0 0.0
        %4131 = vmatpush1.msra.mxu0 0.0
        %4132 = vmatprep.subr.mxu0 0.0
        %4133 = vmatpush1.msra.mxu0 0.0
        %4134 = vmatprep.subr.mxu0 0.0
        %4135 = vmatpush1.msra.mxu0 0.0
        %4136 = vmatprep.subr.mxu0 0.0
        %4137 = vmatpush1.msra.mxu0 0.0
        %4138 = vmatprep.subr.mxu0 0.0
        %4139 = vmatpush1.msra.mxu0 0.0
        %4140 = vmatprep.subr.mxu0 0.0
        %4141 = vmatpush1.msra.mxu0 0.0
        %4142 = vmatprep.subr.mxu0 0.0
        %4143 = vmatpush1.msra.mxu0 0.0
        %4144 = vmatprep.subr.mxu0 0.0
        %4145 = vmatpush1.msra.mxu0 0.0
        %4146 = vmatprep.subr.mxu0 0.0
        %4147 = vmatpush1.msra.mxu0 0.0
        %4148 = vmatprep.subr.mxu0 0.0
        %4149 = vmatpush1.msra.mxu0 0.0
        %4150 = vmatprep.subr.mxu0 0.0
        %4151 = vmatpush1.msra.mxu0 0.0
        %4152 = vmatprep.subr.mxu0 0.0
        %4153 = vmatpush1.msra.mxu0 0.0
        %4154 = vmatprep.subr.mxu0 0.0
        %4155 = vmatpush1.msra.mxu0 0.0
        %4156 = vmatprep.mubr.f32.mxu0 0.0
        %4157 = vmatmul.mubr.f32.gmra.mrb[0].mxu0 %v2866
        %v4158 = vpop.f32.mrb[0].mxu0
        %v4159 = vadd.f32 %v4090, %v4158
        %v4160 = vpop.f32.mrb[0].mxu0
        %4161 = vdwg.mxu0
        %s4162 = scalar_lea.vmem %s37, 96
        %v4163 = vld [vmem:[%s4162] sm:$0xff]
        %v4164 = vld [vmem:[%s4162 + $0x8] sm:$0xff]
        %v4165 = vld [vmem:[%s4162 + $0x10] sm:$0xff]
        %v4166 = vld [vmem:[%s4162 + $0x18] sm:$0xff]
        %s4167 = scalar_lea.vmem %s39, 3
        %v4168 = vld [vmem:[%s4167] sm:$0x1]
        %v4170 = vlaneseq
        %v4171 = vshrl.u32 %v4170, 7
        %v4172 = vsub.s32 0, %v4171
        %v4173 = vrot.slane %v4168, %v4172
        %4175 = vmatprep.subr.mxu0 0.0
        %4176 = vmatpush1.msra.mxu0 %v4163
        %4177 = vmatprep.subr.mxu0 0.0
        %4178 = vmatpush1.msra.mxu0 %v4164
        %4179 = vmatprep.subr.mxu0 0.0
        %4180 = vmatpush1.msra.mxu0 %v4165
        %4181 = vmatprep.subr.mxu0 0.0
        %4182 = vmatpush1.msra.mxu0 %v4166
        %4183 = vmatprep.subr.mxu0 0.0
        %4184 = vmatpush1.msra.mxu0 0.0
        %4185 = vmatprep.subr.mxu0 0.0
        %4186 = vmatpush1.msra.mxu0 0.0
        %4187 = vmatprep.subr.mxu0 0.0
        %4188 = vmatpush1.msra.mxu0 0.0
        %4189 = vmatprep.subr.mxu0 0.0
        %4190 = vmatpush1.msra.mxu0 0.0
        %4191 = vmatprep.subr.mxu0 0.0
        %4192 = vmatpush1.msra.mxu0 0.0
        %4193 = vmatprep.subr.mxu0 0.0
        %4194 = vmatpush1.msra.mxu0 0.0
        %4195 = vmatprep.subr.mxu0 0.0
        %4196 = vmatpush1.msra.mxu0 0.0
        %4197 = vmatprep.subr.mxu0 0.0
        %4198 = vmatpush1.msra.mxu0 0.0
        %4199 = vmatprep.subr.mxu0 0.0
        %4200 = vmatpush1.msra.mxu0 0.0
        %4201 = vmatprep.subr.mxu0 0.0
        %4202 = vmatpush1.msra.mxu0 0.0
        %4203 = vmatprep.subr.mxu0 0.0
        %4204 = vmatpush1.msra.mxu0 0.0
        %4205 = vmatprep.subr.mxu0 0.0
        %4206 = vmatpush1.msra.mxu0 0.0
        %4207 = vmatprep.subr.mxu0 0.0
        %4208 = vmatpush1.msra.mxu0 0.0
        %4209 = vmatprep.subr.mxu0 0.0
        %4210 = vmatpush1.msra.mxu0 0.0
        %4211 = vmatprep.subr.mxu0 0.0
        %4212 = vmatpush1.msra.mxu0 0.0
        %4213 = vmatprep.subr.mxu0 0.0
        %4214 = vmatpush1.msra.mxu0 0.0
        %4215 = vmatprep.subr.mxu0 0.0
        %4216 = vmatpush1.msra.mxu0 0.0
        %4217 = vmatprep.subr.mxu0 0.0
        %4218 = vmatpush1.msra.mxu0 0.0
        %4219 = vmatprep.subr.mxu0 0.0
        %4220 = vmatpush1.msra.mxu0 0.0
        %4221 = vmatprep.subr.mxu0 0.0
        %4222 = vmatpush1.msra.mxu0 0.0
        %4223 = vmatprep.subr.mxu0 0.0
        %4224 = vmatpush1.msra.mxu0 0.0
        %4225 = vmatprep.subr.mxu0 0.0
        %4226 = vmatpush1.msra.mxu0 0.0
        %4227 = vmatprep.subr.mxu0 0.0
        %4228 = vmatpush1.msra.mxu0 0.0
        %4229 = vmatprep.subr.mxu0 0.0
        %4230 = vmatpush1.msra.mxu0 0.0
        %4231 = vmatprep.subr.mxu0 0.0
        %4232 = vmatpush1.msra.mxu0 0.0
        %4233 = vmatprep.subr.mxu0 0.0
        %4234 = vmatpush1.msra.mxu0 0.0
        %4235 = vmatprep.subr.mxu0 0.0
        %4236 = vmatpush1.msra.mxu0 0.0
        %4237 = vmatprep.subr.mxu0 0.0
        %4238 = vmatpush1.msra.mxu0 0.0
        %4239 = vmatprep.mubr.f32.mxu0 0.0
        %4240 = vmatmul.mubr.f32.gmra.mrb[0].mxu0 %v2866
        %v4241 = vpop.f32.mrb[0].mxu0
        %v4242 = vadd.f32 %v4173, %v4241
        %v4243 = vpop.f32.mrb[0].mxu0
        %4244 = vdwg.mxu0
        %s4245 = scalar_lea.vmem %s41, 96
        %v4246 = vld [vmem:[%s4245] sm:$0xff]
        %v4247 = vld [vmem:[%s4245 + $0x8] sm:$0xff]
        %v4248 = vld [vmem:[%s4245 + $0x10] sm:$0xff]
        %v4249 = vld [vmem:[%s4245 + $0x18] sm:$0xff]
        %s4250 = scalar_lea.vmem %s43, 3
        %v4251 = vld [vmem:[%s4250] sm:$0x1]
        %v4253 = vlaneseq
        %v4254 = vshrl.u32 %v4253, 7
        %v4255 = vsub.s32 0, %v4254
        %v4256 = vrot.slane %v4251, %v4255
        %4258 = vmatprep.subr.mxu0 0.0
        %4259 = vmatpush1.msra.mxu0 %v4246
        %4260 = vmatprep.subr.mxu0 0.0
        %4261 = vmatpush1.msra.mxu0 %v4247
        %4262 = vmatprep.subr.mxu0 0.0
        %4263 = vmatpush1.msra.mxu0 %v4248
        %4264 = vmatprep.subr.mxu0 0.0
        %4265 = vmatpush1.msra.mxu0 %v4249
        %4266 = vmatprep.subr.mxu0 0.0
        %4267 = vmatpush1.msra.mxu0 0.0
        %4268 = vmatprep.subr.mxu0 0.0
        %4269 = vmatpush1.msra.mxu0 0.0
        %4270 = vmatprep.subr.mxu0 0.0
        %4271 = vmatpush1.msra.mxu0 0.0
        %4272 = vmatprep.subr.mxu0 0.0
        %4273 = vmatpush1.msra.mxu0 0.0
        %4274 = vmatprep.subr.mxu0 0.0
        %4275 = vmatpush1.msra.mxu0 0.0
        %4276 = vmatprep.subr.mxu0 0.0
        %4277 = vmatpush1.msra.mxu0 0.0
        %4278 = vmatprep.subr.mxu0 0.0
        %4279 = vmatpush1.msra.mxu0 0.0
        %4280 = vmatprep.subr.mxu0 0.0
        %4281 = vmatpush1.msra.mxu0 0.0
        %4282 = vmatprep.subr.mxu0 0.0
        %4283 = vmatpush1.msra.mxu0 0.0
        %4284 = vmatprep.subr.mxu0 0.0
        %4285 = vmatpush1.msra.mxu0 0.0
        %4286 = vmatprep.subr.mxu0 0.0
        %4287 = vmatpush1.msra.mxu0 0.0
        %4288 = vmatprep.subr.mxu0 0.0
        %4289 = vmatpush1.msra.mxu0 0.0
        %4290 = vmatprep.subr.mxu0 0.0
        %4291 = vmatpush1.msra.mxu0 0.0
        %4292 = vmatprep.subr.mxu0 0.0
        %4293 = vmatpush1.msra.mxu0 0.0
        %4294 = vmatprep.subr.mxu0 0.0
        %4295 = vmatpush1.msra.mxu0 0.0
        %4296 = vmatprep.subr.mxu0 0.0
        %4297 = vmatpush1.msra.mxu0 0.0
        %4298 = vmatprep.subr.mxu0 0.0
        %4299 = vmatpush1.msra.mxu0 0.0
        %4300 = vmatprep.subr.mxu0 0.0
        %4301 = vmatpush1.msra.mxu0 0.0
        %4302 = vmatprep.subr.mxu0 0.0
        %4303 = vmatpush1.msra.mxu0 0.0
        %4304 = vmatprep.subr.mxu0 0.0
        %4305 = vmatpush1.msra.mxu0 0.0
        %4306 = vmatprep.subr.mxu0 0.0
        %4307 = vmatpush1.msra.mxu0 0.0
        %4308 = vmatprep.subr.mxu0 0.0
        %4309 = vmatpush1.msra.mxu0 0.0
        %4310 = vmatprep.subr.mxu0 0.0
        %4311 = vmatpush1.msra.mxu0 0.0
        %4312 = vmatprep.subr.mxu0 0.0
        %4313 = vmatpush1.msra.mxu0 0.0
        %4314 = vmatprep.subr.mxu0 0.0
        %4315 = vmatpush1.msra.mxu0 0.0
        %4316 = vmatprep.subr.mxu0 0.0
        %4317 = vmatpush1.msra.mxu0 0.0
        %4318 = vmatprep.subr.mxu0 0.0
        %4319 = vmatpush1.msra.mxu0 0.0
        %4320 = vmatprep.subr.mxu0 0.0
        %4321 = vmatpush1.msra.mxu0 0.0
        %4322 = vmatprep.mubr.f32.mxu0 0.0
        %4323 = vmatmul.mubr.f32.gmra.mrb[0].mxu0 %v2866
        %v4324 = vpop.f32.mrb[0].mxu0
        %v4325 = vadd.f32 %v4256, %v4324
        %v4326 = vpop.f32.mrb[0].mxu0
        %4327 = vdwg.mxu0
        %v4329 = vsel %vm1375, %v4159, 0
        %v4332 = vsel %vm1375, %v4242, 0
        %4334 = vmatprep.subr.mxu0 0.0
        %4335 = vmatpush1.xpose.msra.mxu0 %v4332
        %4336 = vmatprep.subr.mxu0 0.0
        %4337 = vmatpush1.xpose.msra.mxu0 0.0
        %4338 = vmatprep.subr.mxu0 0.0
        %4339 = vmatpush1.xpose.msra.mxu0 0.0
        %4340 = vmatprep.subr.mxu0 0.0
        %4341 = vmatpush1.xpose.msra.mxu0 0.0
        %4342 = vmatprep.subr.mxu0 0.0
        %4343 = vmatpush1.xpose.msra.mxu0 0.0
        %4344 = vmatprep.subr.mxu0 0.0
        %4345 = vmatpush1.xpose.msra.mxu0 0.0
        %4346 = vmatprep.subr.mxu0 0.0
        %4347 = vmatpush1.xpose.msra.mxu0 0.0
        %4348 = vmatprep.subr.mxu0 0.0
        %4349 = vmatpush1.xpose.msra.mxu0 0.0
        %4350 = vmatprep.subr.mxu0 0.0
        %4351 = vmatpush1.xpose.msra.mxu0 0.0
        %4352 = vmatprep.subr.mxu0 0.0
        %4353 = vmatpush1.xpose.msra.mxu0 0.0
        %4354 = vmatprep.subr.mxu0 0.0
        %4355 = vmatpush1.xpose.msra.mxu0 0.0
        %4356 = vmatprep.subr.mxu0 0.0
        %4357 = vmatpush1.xpose.msra.mxu0 0.0
        %4358 = vmatprep.subr.mxu0 0.0
        %4359 = vmatpush1.xpose.msra.mxu0 0.0
        %4360 = vmatprep.subr.mxu0 0.0
        %4361 = vmatpush1.xpose.msra.mxu0 0.0
        %4362 = vmatprep.subr.mxu0 0.0
        %4363 = vmatpush1.xpose.msra.mxu0 0.0
        %4364 = vmatprep.subr.mxu0 0.0
        %4365 = vmatpush1.xpose.msra.mxu0 0.0
        %4366 = vmatprep.subr.mxu0 0.0
        %4367 = vmatpush1.xpose.msra.mxu0 0.0
        %4368 = vmatprep.subr.mxu0 0.0
        %4369 = vmatpush1.xpose.msra.mxu0 0.0
        %4370 = vmatprep.subr.mxu0 0.0
        %4371 = vmatpush1.xpose.msra.mxu0 0.0
        %4372 = vmatprep.subr.mxu0 0.0
        %4373 = vmatpush1.xpose.msra.mxu0 0.0
        %4374 = vmatprep.subr.mxu0 0.0
        %4375 = vmatpush1.xpose.msra.mxu0 0.0
        %4376 = vmatprep.subr.mxu0 0.0
        %4377 = vmatpush1.xpose.msra.mxu0 0.0
        %4378 = vmatprep.subr.mxu0 0.0
        %4379 = vmatpush1.xpose.msra.mxu0 0.0
        %4380 = vmatprep.subr.mxu0 0.0
        %4381 = vmatpush1.xpose.msra.mxu0 0.0
        %4382 = vmatprep.subr.mxu0 0.0
        %4383 = vmatpush1.xpose.msra.mxu0 0.0
        %4384 = vmatprep.subr.mxu0 0.0
        %4385 = vmatpush1.xpose.msra.mxu0 0.0
        %4386 = vmatprep.subr.mxu0 0.0
        %4387 = vmatpush1.xpose.msra.mxu0 0.0
        %4388 = vmatprep.subr.mxu0 0.0
        %4389 = vmatpush1.xpose.msra.mxu0 0.0
        %4390 = vmatprep.subr.mxu0 0.0
        %4391 = vmatpush1.xpose.msra.mxu0 0.0
        %4392 = vmatprep.subr.mxu0 0.0
        %4393 = vmatpush1.xpose.msra.mxu0 0.0
        %4394 = vmatprep.subr.mxu0 0.0
        %4395 = vmatpush1.xpose.msra.mxu0 0.0
        %4396 = vmatprep.subr.mxu0 0.0
        %4397 = vmatpush1.xpose.msra.mxu0 0.0
        %4398 = vmatprep.mubr.f32.mxu0 0.0
        %4399 = vmatmul.mubr.f32.gmra.mrb[0].mxu0 %v4329
        %v4400 = vpop.f32.mrb[0].mxu0
        %v4401 = vadd.f32 0.0, %v4400
        %v4402 = vpop.f32.mrb[0].mxu0
        %4403 = vdwg.mxu0
        %v4404 = vsel %vm1375, %v4401, -inf
        %4405 = vmax.xlane.f32.xlu0 %v4404
        %v4406 = vpop.xlane.xlu0 %4405
        %v4407 = vsub.f32 %v4401, %v4406
        %v4408 = vmul.f32 %v4407, 1.442695
        %v4409 = vpow.pop %v4408
        %v4410 = vsel %vm1375, %v4409, 0.0
        %4411 = vadd.xlane.f32.xlu0 %v4410
        %v4412 = vpop.xlane.xlu0 %4411
        %v4413 = vrcp.pop %v4412
        %v4414 = vmul.f32 %v4409, %v4413
        %v4416 = vsel %vm1375, %v4414, 0
        %4418 = vmatprep.subr.mxu0 0.0
        %4419 = vmatpush1.msra.mxu0 %v4325
        %4420 = vmatprep.subr.mxu0 0.0
        %4421 = vmatpush1.msra.mxu0 0.0
        %4422 = vmatprep.subr.mxu0 0.0
        %4423 = vmatpush1.msra.mxu0 0.0
        %4424 = vmatprep.subr.mxu0 0.0
        %4425 = vmatpush1.msra.mxu0 0.0
        %4426 = vmatprep.subr.mxu0 0.0
        %4427 = vmatpush1.msra.mxu0 0.0
        %4428 = vmatprep.subr.mxu0 0.0
        %4429 = vmatpush1.msra.mxu0 0.0
        %4430 = vmatprep.subr.mxu0 0.0
        %4431 = vmatpush1.msra.mxu0 0.0
        %4432 = vmatprep.subr.mxu0 0.0
        %4433 = vmatpush1.msra.mxu0 0.0
        %4434 = vmatprep.subr.mxu0 0.0
        %4435 = vmatpush1.msra.mxu0 0.0
        %4436 = vmatprep.subr.mxu0 0.0
        %4437 = vmatpush1.msra.mxu0 0.0
        %4438 = vmatprep.subr.mxu0 0.0
        %4439 = vmatpush1.msra.mxu0 0.0
        %4440 = vmatprep.subr.mxu0 0.0
        %4441 = vmatpush1.msra.mxu0 0.0
        %4442 = vmatprep.subr.mxu0 0.0
        %4443 = vmatpush1.msra.mxu0 0.0
        %4444 = vmatprep.subr.mxu0 0.0
        %4445 = vmatpush1.msra.mxu0 0.0
        %4446 = vmatprep.subr.mxu0 0.0
        %4447 = vmatpush1.msra.mxu0 0.0
        %4448 = vmatprep.subr.mxu0 0.0
        %4449 = vmatpush1.msra.mxu0 0.0
        %4450 = vmatprep.subr.mxu0 0.0
        %4451 = vmatpush1.msra.mxu0 0.0
        %4452 = vmatprep.subr.mxu0 0.0
        %4453 = vmatpush1.msra.mxu0 0.0
        %4454 = vmatprep.subr.mxu0 0.0
        %4455 = vmatpush1.msra.mxu0 0.0
        %4456 = vmatprep.subr.mxu0 0.0
        %4457 = vmatpush1.msra.mxu0 0.0
        %4458 = vmatprep.subr.mxu0 0.0
        %4459 = vmatpush1.msra.mxu0 0.0
        %4460 = vmatprep.subr.mxu0 0.0
        %4461 = vmatpush1.msra.mxu0 0.0
        %4462 = vmatprep.subr.mxu0 0.0
        %4463 = vmatpush1.msra.mxu0 0.0
        %4464 = vmatprep.subr.mxu0 0.0
        %4465 = vmatpush1.msra.mxu0 0.0
        %4466 = vmatprep.subr.mxu0 0.0
        %4467 = vmatpush1.msra.mxu0 0.0
        %4468 = vmatprep.subr.mxu0 0.0
        %4469 = vmatpush1.msra.mxu0 0.0
        %4470 = vmatprep.subr.mxu0 0.0
        %4471 = vmatpush1.msra.mxu0 0.0
        %4472 = vmatprep.subr.mxu0 0.0
        %4473 = vmatpush1.msra.mxu0 0.0
        %4474 = vmatprep.subr.mxu0 0.0
        %4475 = vmatpush1.msra.mxu0 0.0
        %4476 = vmatprep.subr.mxu0 0.0
        %4477 = vmatpush1.msra.mxu0 0.0
        %4478 = vmatprep.subr.mxu0 0.0
        %4479 = vmatpush1.msra.mxu0 0.0
        %4480 = vmatprep.subr.mxu0 0.0
        %4481 = vmatpush1.msra.mxu0 0.0
        %4482 = vmatprep.mubr.f32.mxu0 0.0
        %4483 = vmatmul.mubr.f32.gmra.mrb[0].mxu0 %v4416
        %v4484 = vpop.f32.mrb[0].mxu0
        %v4485 = vadd.f32 0.0, %v4484
        %v4486 = vpop.f32.mrb[0].mxu0
        %4487 = vdwg.mxu0
        %v4488 = vadd.f32 %v4078, %v4485
        %v4489 = vld [vmem:[%s45] sm:$0x1]
        %v4491 = vlaneseq
        %v4492 = vshrl.u32 %v4491, 7
        %v4493 = vsub.s32 0, %v4492
        %v4494 = vrot.slane %v4489, %v4493
        %v4496 = vadd.f32 %v4488, %v4494
        %v4497 = vld [vmem:[%s47] sm:$0x1]
        %v4499 = vlaneseq
        %v4500 = vshrl.u32 %v4499, 7
        %v4501 = vsub.s32 0, %v4500
        %v4502 = vrot.slane %v4497, %v4501
        %v4504 = vmul.f32 %v4502, %v4496
        %v4505 = vadd.f32 %v2824, %v4504
        %v4506 = vld [vmem:[%s49] sm:$0x1]
        %v4507 = vld [vmem:[%s51] sm:$0x1]
        %v4508 = vsel %vm1078, %v4505, 0.0
        %4509 = vadd.xlane.f32.xlu0 %v4508
        %v4510 = vpop.xlane.xlu0 %4509
        %v4511 = vmul.f32 %v4510, %v1082
        %v4512 = vsub.f32 %v4505, %v4511
        %v4513 = vmul.f32 %v4512, %v4512
        %v4514 = vsel %vm1078, %v4513, 0.0
        %4515 = vadd.xlane.f32.xlu0 %v4514
        %v4516 = vpop.xlane.xlu0 %4515
        %v4517 = vmul.f32 %v4516, %v1082
        %v4518 = vadd.f32 %v4517, 1e-05
        %v4519 = vrsqrt.pop %v4518
        %v4520 = vmul.f32 %v4512, %v4519
        %v4522 = vlaneseq
        %v4523 = vshrl.u32 %v4522, 7
        %v4524 = vsub.s32 0, %v4523
        %v4525 = vrot.slane %v4506, %v4524
        %v4527 = vmul.f32 %v4520, %v4525
        %v4529 = vlaneseq
        %v4530 = vshrl.u32 %v4529, 7
        %v4531 = vsub.s32 0, %v4530
        %v4532 = vrot.slane %v4507, %v4531
        %v4534 = vadd.f32 %v4527, %v4532
        %v4535 = vld [vmem:[%s53] sm:$0xff]
        %v4536 = vld [vmem:[%s53 + $0x8] sm:$0xff]
        %v4537 = vld [vmem:[%s53 + $0x10] sm:$0xff]
        %v4538 = vld [vmem:[%s53 + $0x18] sm:$0xff]
        %v4539 = vld [vmem:[%s55] sm:$0x1]
        %v4541 = vlaneseq
        %v4542 = vshrl.u32 %v4541, 7
        %v4543 = vsub.s32 0, %v4542
        %v4544 = vrot.slane %v4539, %v4543
        %v4547 = vsel %vm1078, %v4534, 0
        %4549 = vmatprep.subr.mxu0 0.0
        %4550 = vmatpush1.msra.mxu0 %v4535
        %4551 = vmatprep.subr.mxu0 0.0
        %4552 = vmatpush1.msra.mxu0 %v4536
        %4553 = vmatprep.subr.mxu0 0.0
        %4554 = vmatpush1.msra.mxu0 %v4537
        %4555 = vmatprep.subr.mxu0 0.0
        %4556 = vmatpush1.msra.mxu0 %v4538
        %4557 = vmatprep.subr.mxu0 0.0
        %4558 = vmatpush1.msra.mxu0 0.0
        %4559 = vmatprep.subr.mxu0 0.0
        %4560 = vmatpush1.msra.mxu0 0.0
        %4561 = vmatprep.subr.mxu0 0.0
        %4562 = vmatpush1.msra.mxu0 0.0
        %4563 = vmatprep.subr.mxu0 0.0
        %4564 = vmatpush1.msra.mxu0 0.0
        %4565 = vmatprep.subr.mxu0 0.0
        %4566 = vmatpush1.msra.mxu0 0.0
        %4567 = vmatprep.subr.mxu0 0.0
        %4568 = vmatpush1.msra.mxu0 0.0
        %4569 = vmatprep.subr.mxu0 0.0
        %4570 = vmatpush1.msra.mxu0 0.0
        %4571 = vmatprep.subr.mxu0 0.0
        %4572 = vmatpush1.msra.mxu0 0.0
        %4573 = vmatprep.subr.mxu0 0.0
        %4574 = vmatpush1.msra.mxu0 0.0
        %4575 = vmatprep.subr.mxu0 0.0
        %4576 = vmatpush1.msra.mxu0 0.0
        %4577 = vmatprep.subr.mxu0 0.0
        %4578 = vmatpush1.msra.mxu0 0.0
        %4579 = vmatprep.subr.mxu0 0.0
        %4580 = vmatpush1.msra.mxu0 0.0
        %4581 = vmatprep.subr.mxu0 0.0
        %4582 = vmatpush1.msra.mxu0 0.0
        %4583 = vmatprep.subr.mxu0 0.0
        %4584 = vmatpush1.msra.mxu0 0.0
        %4585 = vmatprep.subr.mxu0 0.0
        %4586 = vmatpush1.msra.mxu0 0.0
        %4587 = vmatprep.subr.mxu0 0.0
        %4588 = vmatpush1.msra.mxu0 0.0
        %4589 = vmatprep.subr.mxu0 0.0
        %4590 = vmatpush1.msra.mxu0 0.0
        %4591 = vmatprep.subr.mxu0 0.0
        %4592 = vmatpush1.msra.mxu0 0.0
        %4593 = vmatprep.subr.mxu0 0.0
        %4594 = vmatpush1.msra.mxu0 0.0
        %4595 = vmatprep.subr.mxu0 0.0
        %4596 = vmatpush1.msra.mxu0 0.0
        %4597 = vmatprep.subr.mxu0 0.0
        %4598 = vmatpush1.msra.mxu0 0.0
        %4599 = vmatprep.subr.mxu0 0.0
        %4600 = vmatpush1.msra.mxu0 0.0
        %4601 = vmatprep.subr.mxu0 0.0
        %4602 = vmatpush1.msra.mxu0 0.0
        %4603 = vmatprep.subr.mxu0 0.0
        %4604 = vmatpush1.msra.mxu0 0.0
        %4605 = vmatprep.subr.mxu0 0.0
        %4606 = vmatpush1.msra.mxu0 0.0
        %4607 = vmatprep.subr.mxu0 0.0
        %4608 = vmatpush1.msra.mxu0 0.0
        %4609 = vmatprep.subr.mxu0 0.0
        %4610 = vmatpush1.msra.mxu0 0.0
        %4611 = vmatprep.subr.mxu0 0.0
        %4612 = vmatpush1.msra.mxu0 0.0
        %4613 = vmatprep.mubr.f32.mxu0 0.0
        %4614 = vmatmul.mubr.f32.gmra.mrb[0].mxu0 %v4547
        %v4615 = vpop.f32.mrb[0].mxu0
        %v4616 = vadd.f32 %v4544, %v4615
        %v4617 = vpop.f32.mrb[0].mxu0
        %4618 = vdwg.mxu0
        %v4619 = vmul.f32 %v4616, %v4616
        %v4620 = vmul.f32 %v4616, %v4619
        %v4621 = vmul.f32 %v4620, 0.044715
        %v4622 = vadd.f32 %v4616, %v4621
        %v4623 = vmul.f32 %v4622, 0.7978846
        %v4624 = vtanh.pop %v4623
        %v4625 = vadd.f32 %v4624, 1.0
        %v4626 = vmul.f32 %v4625, 0.5
        %v4627 = vmul.f32 %v4616, %v4626
        %v4628 = vld [vmem:[%s57] sm:$0xff]
        %v4629 = vld [vmem:[%s57 + $0x8] sm:$0xff]
        %v4630 = vld [vmem:[%s57 + $0x10] sm:$0xff]
        %v4631 = vld [vmem:[%s57 + $0x18] sm:$0xff]
        %v4632 = vld [vmem:[%s57 + $0x20] sm:$0xff]
        %v4633 = vld [vmem:[%s57 + $0x28] sm:$0xff]
        %v4634 = vld [vmem:[%s57 + $0x30] sm:$0xff]
        %v4635 = vld [vmem:[%s57 + $0x38] sm:$0xff]
        %v4636 = vld [vmem:[%s57 + $0x40] sm:$0xff]
        %v4637 = vld [vmem:[%s57 + $0x48] sm:$0xff]
        %v4638 = vld [vmem:[%s57 + $0x50] sm:$0xff]
        %v4639 = vld [vmem:[%s57 + $0x58] sm:$0xff]
        %v4640 = vld [vmem:[%s57 + $0x60] sm:$0xff]
        %v4641 = vld [vmem:[%s57 + $0x68] sm:$0xff]
        %v4642 = vld [vmem:[%s57 + $0x70] sm:$0xff]
        %v4643 = vld [vmem:[%s57 + $0x78] sm:$0xff]
        %v4644 = vld [vmem:[%s59] sm:$0x1]
        %v4646 = vlaneseq
        %v4647 = vshrl.u32 %v4646, 7
        %v4648 = vsub.s32 0, %v4647
        %v4649 = vrot.slane %v4644, %v4648
        %4651 = vmatprep.subr.mxu0 0.0
        %4652 = vmatpush1.msra.mxu0 %v4628
        %4653 = vmatprep.subr.mxu0 0.0
        %4654 = vmatpush1.msra.mxu0 %v4629
        %4655 = vmatprep.subr.mxu0 0.0
        %4656 = vmatpush1.msra.mxu0 %v4630
        %4657 = vmatprep.subr.mxu0 0.0
        %4658 = vmatpush1.msra.mxu0 %v4631
        %4659 = vmatprep.subr.mxu0 0.0
        %4660 = vmatpush1.msra.mxu0 %v4632
        %4661 = vmatprep.subr.mxu0 0.0
        %4662 = vmatpush1.msra.mxu0 %v4633
        %4663 = vmatprep.subr.mxu0 0.0
        %4664 = vmatpush1.msra.mxu0 %v4634
        %4665 = vmatprep.subr.mxu0 0.0
        %4666 = vmatpush1.msra.mxu0 %v4635
        %4667 = vmatprep.subr.mxu0 0.0
        %4668 = vmatpush1.msra.mxu0 %v4636
        %4669 = vmatprep.subr.mxu0 0.0
        %4670 = vmatpush1.msra.mxu0 %v4637
        %4671 = vmatprep.subr.mxu0 0.0
        %4672 = vmatpush1.msra.mxu0 %v4638
        %4673 = vmatprep.subr.mxu0 0.0
        %4674 = vmatpush1.msra.mxu0 %v4639
        %4675 = vmatprep.subr.mxu0 0.0
        %4676 = vmatpush1.msra.mxu0 %v4640
        %4677 = vmatprep.subr.mxu0 0.0
        %4678 = vmatpush1.msra.mxu0 %v4641
        %4679 = vmatprep.subr.mxu0 0.0
        %4680 = vmatpush1.msra.mxu0 %v4642
        %4681 = vmatprep.subr.mxu0 0.0
        %4682 = vmatpush1.msra.mxu0 %v4643
        %4683 = vmatprep.subr.mxu0 0.0
        %4684 = vmatpush1.msra.mxu0 0.0
        %4685 = vmatprep.subr.mxu0 0.0
        %4686 = vmatpush1.msra.mxu0 0.0
        %4687 = vmatprep.subr.mxu0 0.0
        %4688 = vmatpush1.msra.mxu0 0.0
        %4689 = vmatprep.subr.mxu0 0.0
        %4690 = vmatpush1.msra.mxu0 0.0
        %4691 = vmatprep.subr.mxu0 0.0
        %4692 = vmatpush1.msra.mxu0 0.0
        %4693 = vmatprep.subr.mxu0 0.0
        %4694 = vmatpush1.msra.mxu0 0.0
        %4695 = vmatprep.subr.mxu0 0.0
        %4696 = vmatpush1.msra.mxu0 0.0
        %4697 = vmatprep.subr.mxu0 0.0
        %4698 = vmatpush1.msra.mxu0 0.0
        %4699 = vmatprep.subr.mxu0 0.0
        %4700 = vmatpush1.msra.mxu0 0.0
        %4701 = vmatprep.subr.mxu0 0.0
        %4702 = vmatpush1.msra.mxu0 0.0
        %4703 = vmatprep.subr.mxu0 0.0
        %4704 = vmatpush1.msra.mxu0 0.0
        %4705 = vmatprep.subr.mxu0 0.0
        %4706 = vmatpush1.msra.mxu0 0.0
        %4707 = vmatprep.subr.mxu0 0.0
        %4708 = vmatpush1.msra.mxu0 0.0
        %4709 = vmatprep.subr.mxu0 0.0
        %4710 = vmatpush1.msra.mxu0 0.0
        %4711 = vmatprep.subr.mxu0 0.0
        %4712 = vmatpush1.msra.mxu0 0.0
        %4713 = vmatprep.subr.mxu0 0.0
        %4714 = vmatpush1.msra.mxu0 0.0
        %4715 = vmatprep.mubr.f32.mxu0 0.0
        %4716 = vmatmul.mubr.f32.gmra.mrb[0].mxu0 %v4627
        %v4717 = vpop.f32.mrb[0].mxu0
        %v4718 = vadd.f32 %v4649, %v4717
        %v4719 = vpop.f32.mrb[0].mxu0
        %4720 = vdwg.mxu0
        %v4721 = vld [vmem:[%s61] sm:$0x1]
        %v4723 = vlaneseq
        %v4724 = vshrl.u32 %v4723, 7
        %v4725 = vsub.s32 0, %v4724
        %v4726 = vrot.slane %v4721, %v4725
        %v4728 = vmul.f32 %v4726, %v4718
        %v4729 = vadd.f32 %v4505, %v4728
        %v4730 = vadd.f32 %v4729, %v1068
        %s4731 = scalar_lea.vmem %s9, 1
        %v4732 = vld [vmem:[%s4731] sm:$0x1]
        %s4733 = scalar_lea.vmem %s11, 1
        %v4734 = vld [vmem:[%s4733] sm:$0x1]
        %v4735 = vsel %vm1078, %v4730, 0.0
        %4736 = vadd.xlane.f32.xlu0 %v4735
        %v4737 = vpop.xlane.xlu0 %4736
        %v4738 = vmul.f32 %v4737, %v1082
        %v4739 = vsub.f32 %v4730, %v4738
        %v4740 = vmul.f32 %v4739, %v4739
        %v4741 = vsel %vm1078, %v4740, 0.0
        %4742 = vadd.xlane.f32.xlu0 %v4741
        %v4743 = vpop.xlane.xlu0 %4742
        %v4744 = vmul.f32 %v4743, %v1082
        %v4745 = vadd.f32 %v4744, 1e-05
        %v4746 = vrsqrt.pop %v4745
        %v4747 = vmul.f32 %v4739, %v4746
        %v4749 = vlaneseq
        %v4750 = vshrl.u32 %v4749, 7
        %v4751 = vsub.s32 0, %v4750
        %v4752 = vrot.slane %v4732, %v4751
        %v4754 = vmul.f32 %v4747, %v4752
        %v4756 = vlaneseq
        %v4757 = vshrl.u32 %v4756, 7
        %v4758 = vsub.s32 0, %v4757
        %v4759 = vrot.slane %v4734, %v4758
        %v4761 = vadd.f32 %v4754, %v4759
        %s4762 = scalar_lea.vmem %s13, 128
        %v4763 = vld [vmem:[%s4762] sm:$0xff]
        %v4764 = vld [vmem:[%s4762 + $0x8] sm:$0xff]
        %v4765 = vld [vmem:[%s4762 + $0x10] sm:$0xff]
        %v4766 = vld [vmem:[%s4762 + $0x18] sm:$0xff]
        %s4767 = scalar_lea.vmem %s15, 4
        %v4768 = vld [vmem:[%s4767] sm:$0x1]
        %v4770 = vlaneseq
        %v4771 = vshrl.u32 %v4770, 7
        %v4772 = vsub.s32 0, %v4771
        %v4773 = vrot.slane %v4768, %v4772
        %v4776 = vsel %vm1078, %v4761, 0
        %4778 = vmatprep.subr.mxu0 0.0
        %4779 = vmatpush1.msra.mxu0 %v4763
        %4780 = vmatprep.subr.mxu0 0.0
        %4781 = vmatpush1.msra.mxu0 %v4764
        %4782 = vmatprep.subr.mxu0 0.0
        %4783 = vmatpush1.msra.mxu0 %v4765
        %4784 = vmatprep.subr.mxu0 0.0
        %4785 = vmatpush1.msra.mxu0 %v4766
        %4786 = vmatprep.subr.mxu0 0.0
        %4787 = vmatpush1.msra.mxu0 0.0
        %4788 = vmatprep.subr.mxu0 0.0
        %4789 = vmatpush1.msra.mxu0 0.0
        %4790 = vmatprep.subr.mxu0 0.0
        %4791 = vmatpush1.msra.mxu0 0.0
        %4792 = vmatprep.subr.mxu0 0.0
        %4793 = vmatpush1.msra.mxu0 0.0
        %4794 = vmatprep.subr.mxu0 0.0
        %4795 = vmatpush1.msra.mxu0 0.0
        %4796 = vmatprep.subr.mxu0 0.0
        %4797 = vmatpush1.msra.mxu0 0.0
        %4798 = vmatprep.subr.mxu0 0.0
        %4799 = vmatpush1.msra.mxu0 0.0
        %4800 = vmatprep.subr.mxu0 0.0
        %4801 = vmatpush1.msra.mxu0 0.0
        %4802 = vmatprep.subr.mxu0 0.0
        %4803 = vmatpush1.msra.mxu0 0.0
        %4804 = vmatprep.subr.mxu0 0.0
        %4805 = vmatpush1.msra.mxu0 0.0
        %4806 = vmatprep.subr.mxu0 0.0
        %4807 = vmatpush1.msra.mxu0 0.0
        %4808 = vmatprep.subr.mxu0 0.0
        %4809 = vmatpush1.msra.mxu0 0.0
        %4810 = vmatprep.subr.mxu0 0.0
        %4811 = vmatpush1.msra.mxu0 0.0
        %4812 = vmatprep.subr.mxu0 0.0
        %4813 = vmatpush1.msra.mxu0 0.0
        %4814 = vmatprep.subr.mxu0 0.0
        %4815 = vmatpush1.msra.mxu0 0.0
        %4816 = vmatprep.subr.mxu0 0.0
        %4817 = vmatpush1.msra.mxu0 0.0
        %4818 = vmatprep.subr.mxu0 0.0
        %4819 = vmatpush1.msra.mxu0 0.0
        %4820 = vmatprep.subr.mxu0 0.0
        %4821 = vmatpush1.msra.mxu0 0.0
        %4822 = vmatprep.subr.mxu0 0.0
        %4823 = vmatpush1.msra.mxu0 0.0
        %4824 = vmatprep.subr.mxu0 0.0
        %4825 = vmatpush1.msra.mxu0 0.0
        %4826 = vmatprep.subr.mxu0 0.0
        %4827 = vmatpush1.msra.mxu0 0.0
        %4828 = vmatprep.subr.mxu0 0.0
        %4829 = vmatpush1.msra.mxu0 0.0
        %4830 = vmatprep.subr.mxu0 0.0
        %4831 = vmatpush1.msra.mxu0 0.0
        %4832 = vmatprep.subr.mxu0 0.0
        %4833 = vmatpush1.msra.mxu0 0.0
        %4834 = vmatprep.subr.mxu0 0.0
        %4835 = vmatpush1.msra.mxu0 0.0
        %4836 = vmatprep.subr.mxu0 0.0
        %4837 = vmatpush1.msra.mxu0 0.0
        %4838 = vmatprep.subr.mxu0 0.0
        %4839 = vmatpush1.msra.mxu0 0.0
        %4840 = vmatprep.subr.mxu0 0.0
        %4841 = vmatpush1.msra.mxu0 0.0
        %4842 = vmatprep.mubr.f32.mxu0 0.0
        %4843 = vmatmul.mubr.f32.gmra.mrb[0].mxu0 %v4776
        %v4844 = vpop.f32.mrb[0].mxu0
        %v4845 = vadd.f32 %v4773, %v4844
        %v4846 = vpop.f32.mrb[0].mxu0
        %4847 = vdwg.mxu0
        %s4848 = scalar_lea.vmem %s17, 128
        %v4849 = vld [vmem:[%s4848] sm:$0xff]
        %v4850 = vld [vmem:[%s4848 + $0x8] sm:$0xff]
        %v4851 = vld [vmem:[%s4848 + $0x10] sm:$0xff]
        %v4852 = vld [vmem:[%s4848 + $0x18] sm:$0xff]
        %s4853 = scalar_lea.vmem %s19, 4
        %v4854 = vld [vmem:[%s4853] sm:$0x1]
        %v4856 = vlaneseq
        %v4857 = vshrl.u32 %v4856, 7
        %v4858 = vsub.s32 0, %v4857
        %v4859 = vrot.slane %v4854, %v4858
        %4861 = vmatprep.subr.mxu0 0.0
        %4862 = vmatpush1.msra.mxu0 %v4849
        %4863 = vmatprep.subr.mxu0 0.0
        %4864 = vmatpush1.msra.mxu0 %v4850
        %4865 = vmatprep.subr.mxu0 0.0
        %4866 = vmatpush1.msra.mxu0 %v4851
        %4867 = vmatprep.subr.mxu0 0.0
        %4868 = vmatpush1.msra.mxu0 %v4852
        %4869 = vmatprep.subr.mxu0 0.0
        %4870 = vmatpush1.msra.mxu0 0.0
        %4871 = vmatprep.subr.mxu0 0.0
        %4872 = vmatpush1.msra.mxu0 0.0
        %4873 = vmatprep.subr.mxu0 0.0
        %4874 = vmatpush1.msra.mxu0 0.0
        %4875 = vmatprep.subr.mxu0 0.0
        %4876 = vmatpush1.msra.mxu0 0.0
        %4877 = vmatprep.subr.mxu0 0.0
        %4878 = vmatpush1.msra.mxu0 0.0
        %4879 = vmatprep.subr.mxu0 0.0
        %4880 = vmatpush1.msra.mxu0 0.0
        %4881 = vmatprep.subr.mxu0 0.0
        %4882 = vmatpush1.msra.mxu0 0.0
        %4883 = vmatprep.subr.mxu0 0.0
        %4884 = vmatpush1.msra.mxu0 0.0
        %4885 = vmatprep.subr.mxu0 0.0
        %4886 = vmatpush1.msra.mxu0 0.0
        %4887 = vmatprep.subr.mxu0 0.0
        %4888 = vmatpush1.msra.mxu0 0.0
        %4889 = vmatprep.subr.mxu0 0.0
        %4890 = vmatpush1.msra.mxu0 0.0
        %4891 = vmatprep.subr.mxu0 0.0
        %4892 = vmatpush1.msra.mxu0 0.0
        %4893 = vmatprep.subr.mxu0 0.0
        %4894 = vmatpush1.msra.mxu0 0.0
        %4895 = vmatprep.subr.mxu0 0.0
        %4896 = vmatpush1.msra.mxu0 0.0
        %4897 = vmatprep.subr.mxu0 0.0
        %4898 = vmatpush1.msra.mxu0 0.0
        %4899 = vmatprep.subr.mxu0 0.0
        %4900 = vmatpush1.msra.mxu0 0.0
        %4901 = vmatprep.subr.mxu0 0.0
        %4902 = vmatpush1.msra.mxu0 0.0
        %4903 = vmatprep.subr.mxu0 0.0
        %4904 = vmatpush1.msra.mxu0 0.0
        %4905 = vmatprep.subr.mxu0 0.0
        %4906 = vmatpush1.msra.mxu0 0.0
        %4907 = vmatprep.subr.mxu0 0.0
        %4908 = vmatpush1.msra.mxu0 0.0
        %4909 = vmatprep.subr.mxu0 0.0
        %4910 = vmatpush1.msra.mxu0 0.0
        %4911 = vmatprep.subr.mxu0 0.0
        %4912 = vmatpush1.msra.mxu0 0.0
        %4913 = vmatprep.subr.mxu0 0.0
        %4914 = vmatpush1.msra.mxu0 0.0
        %4915 = vmatprep.subr.mxu0 0.0
        %4916 = vmatpush1.msra.mxu0 0.0
        %4917 = vmatprep.subr.mxu0 0.0
        %4918 = vmatpush1.msra.mxu0 0.0
        %4919 = vmatprep.subr.mxu0 0.0
        %4920 = vmatpush1.msra.mxu0 0.0
        %4921 = vmatprep.subr.mxu0 0.0
        %4922 = vmatpush1.msra.mxu0 0.0
        %4923 = vmatprep.subr.mxu0 0.0
        %4924 = vmatpush1.msra.mxu0 0.0
        %4925 = vmatprep.mubr.f32.mxu0 0.0
        %4926 = vmatmul.mubr.f32.gmra.mrb[0].mxu0 %v1203
        %v4927 = vpop.f32.mrb[0].mxu0
        %v4928 = vadd.f32 %v4859, %v4927
        %v4929 = vpop.f32.mrb[0].mxu0
        %4930 = vmatprep.mubr.f32.mxu0 0.0
        %4931 = vmatmul.mubr.f32.gmra.mrb[0].mxu0 %v1206
        %v4932 = vpop.f32.mrb[0].mxu0
        %v4933 = vadd.f32 %v4859, %v4932
        %v4934 = vpop.f32.mrb[0].mxu0
        %4935 = vdwg.mxu0
        %s4936 = scalar_lea.vmem %s21, 128
        %v4937 = vld [vmem:[%s4936] sm:$0xff]
        %v4938 = vld [vmem:[%s4936 + $0x8] sm:$0xff]
        %v4939 = vld [vmem:[%s4936 + $0x10] sm:$0xff]
        %v4940 = vld [vmem:[%s4936 + $0x18] sm:$0xff]
        %s4941 = scalar_lea.vmem %s23, 4
        %v4942 = vld [vmem:[%s4941] sm:$0x1]
        %v4944 = vlaneseq
        %v4945 = vshrl.u32 %v4944, 7
        %v4946 = vsub.s32 0, %v4945
        %v4947 = vrot.slane %v4942, %v4946
        %4949 = vmatprep.subr.mxu0 0.0
        %4950 = vmatpush1.msra.mxu0 %v4937
        %4951 = vmatprep.subr.mxu0 0.0
        %4952 = vmatpush1.msra.mxu0 %v4938
        %4953 = vmatprep.subr.mxu0 0.0
        %4954 = vmatpush1.msra.mxu0 %v4939
        %4955 = vmatprep.subr.mxu0 0.0
        %4956 = vmatpush1.msra.mxu0 %v4940
        %4957 = vmatprep.subr.mxu0 0.0
        %4958 = vmatpush1.msra.mxu0 0.0
        %4959 = vmatprep.subr.mxu0 0.0
        %4960 = vmatpush1.msra.mxu0 0.0
        %4961 = vmatprep.subr.mxu0 0.0
        %4962 = vmatpush1.msra.mxu0 0.0
        %4963 = vmatprep.subr.mxu0 0.0
        %4964 = vmatpush1.msra.mxu0 0.0
        %4965 = vmatprep.subr.mxu0 0.0
        %4966 = vmatpush1.msra.mxu0 0.0
        %4967 = vmatprep.subr.mxu0 0.0
        %4968 = vmatpush1.msra.mxu0 0.0
        %4969 = vmatprep.subr.mxu0 0.0
        %4970 = vmatpush1.msra.mxu0 0.0
        %4971 = vmatprep.subr.mxu0 0.0
        %4972 = vmatpush1.msra.mxu0 0.0
        %4973 = vmatprep.subr.mxu0 0.0
        %4974 = vmatpush1.msra.mxu0 0.0
        %4975 = vmatprep.subr.mxu0 0.0
        %4976 = vmatpush1.msra.mxu0 0.0
        %4977 = vmatprep.subr.mxu0 0.0
        %4978 = vmatpush1.msra.mxu0 0.0
        %4979 = vmatprep.subr.mxu0 0.0
        %4980 = vmatpush1.msra.mxu0 0.0
        %4981 = vmatprep.subr.mxu0 0.0
        %4982 = vmatpush1.msra.mxu0 0.0
        %4983 = vmatprep.subr.mxu0 0.0
        %4984 = vmatpush1.msra.mxu0 0.0
        %4985 = vmatprep.subr.mxu0 0.0
        %4986 = vmatpush1.msra.mxu0 0.0
        %4987 = vmatprep.subr.mxu0 0.0
        %4988 = vmatpush1.msra.mxu0 0.0
        %4989 = vmatprep.subr.mxu0 0.0
        %4990 = vmatpush1.msra.mxu0 0.0
        %4991 = vmatprep.subr.mxu0 0.0
        %4992 = vmatpush1.msra.mxu0 0.0
        %4993 = vmatprep.subr.mxu0 0.0
        %4994 = vmatpush1.msra.mxu0 0.0
        %4995 = vmatprep.subr.mxu0 0.0
        %4996 = vmatpush1.msra.mxu0 0.0
        %4997 = vmatprep.subr.mxu0 0.0
        %4998 = vmatpush1.msra.mxu0 0.0
        %4999 = vmatprep.subr.mxu0 0.0
        %5000 = vmatpush1.msra.mxu0 0.0
        %5001 = vmatprep.subr.mxu0 0.0
        %5002 = vmatpush1.msra.mxu0 0.0
        %5003 = vmatprep.subr.mxu0 0.0
        %5004 = vmatpush1.msra.mxu0 0.0
        %5005 = vmatprep.subr.mxu0 0.0
        %5006 = vmatpush1.msra.mxu0 0.0
        %5007 = vmatprep.subr.mxu0 0.0
        %5008 = vmatpush1.msra.mxu0 0.0
        %5009 = vmatprep.subr.mxu0 0.0
        %5010 = vmatpush1.msra.mxu0 0.0
        %5011 = vmatprep.subr.mxu0 0.0
        %5012 = vmatpush1.msra.mxu0 0.0
        %5013 = vmatprep.mubr.f32.mxu0 0.0
        %5014 = vmatmul.mubr.f32.gmra.mrb[0].mxu0 %v1295
        %v5015 = vpop.f32.mrb[0].mxu0
        %v5016 = vadd.f32 %v4947, %v5015
        %v5017 = vpop.f32.mrb[0].mxu0
        %5018 = vmatprep.mubr.f32.mxu0 0.0
        %5019 = vmatmul.mubr.f32.gmra.mrb[0].mxu0 %v1298
        %v5020 = vpop.f32.mrb[0].mxu0
        %v5021 = vadd.f32 %v4947, %v5020
        %v5022 = vpop.f32.mrb[0].mxu0
        %5023 = vdwg.mxu0
        %v5025 = vsel %vm1375, %v4845, 0
        %v5028 = vsel %vm1375, %v4928, 0
        %v5031 = vsel %vm1375, %v4933, 0
        %5033 = vmatprep.subr.mxu0 0.0
        %5034 = vmatpush1.xpose.msra.mxu0 %v5028
        %5035 = vmatprep.subr.mxu0 0.0
        %5036 = vmatpush1.xpose.msra.mxu0 %v5031
        %5037 = vmatprep.subr.mxu0 0.0
        %5038 = vmatpush1.xpose.msra.mxu0 0.0
        %5039 = vmatprep.subr.mxu0 0.0
        %5040 = vmatpush1.xpose.msra.mxu0 0.0
        %5041 = vmatprep.subr.mxu0 0.0
        %5042 = vmatpush1.xpose.msra.mxu0 0.0
        %5043 = vmatprep.subr.mxu0 0.0
        %5044 = vmatpush1.xpose.msra.mxu0 0.0
        %5045 = vmatprep.subr.mxu0 0.0
        %5046 = vmatpush1.xpose.msra.mxu0 0.0
        %5047 = vmatprep.subr.mxu0 0.0
        %5048 = vmatpush1.xpose.msra.mxu0 0.0
        %5049 = vmatprep.subr.mxu0 0.0
        %5050 = vmatpush1.xpose.msra.mxu0 0.0
        %5051 = vmatprep.subr.mxu0 0.0
        %5052 = vmatpush1.xpose.msra.mxu0 0.0
        %5053 = vmatprep.subr.mxu0 0.0
        %5054 = vmatpush1.xpose.msra.mxu0 0.0
        %5055 = vmatprep.subr.mxu0 0.0
        %5056 = vmatpush1.xpose.msra.mxu0 0.0
        %5057 = vmatprep.subr.mxu0 0.0
        %5058 = vmatpush1.xpose.msra.mxu0 0.0
        %5059 = vmatprep.subr.mxu0 0.0
        %5060 = vmatpush1.xpose.msra.mxu0 0.0
        %5061 = vmatprep.subr.mxu0 0.0
        %5062 = vmatpush1.xpose.msra.mxu0 0.0
        %5063 = vmatprep.subr.mxu0 0.0
        %5064 = vmatpush1.xpose.msra.mxu0 0.0
        %5065 = vmatprep.subr.mxu0 0.0
        %5066 = vmatpush1.xpose.msra.mxu0 0.0
        %5067 = vmatprep.subr.mxu0 0.0
        %5068 = vmatpush1.xpose.msra.mxu0 0.0
        %5069 = vmatprep.subr.mxu0 0.0
        %5070 = vmatpush1.xpose.msra.mxu0 0.0
        %5071 = vmatprep.subr.mxu0 0.0
        %5072 = vmatpush1.xpose.msra.mxu0 0.0
        %5073 = vmatprep.subr.mxu0 0.0
        %5074 = vmatpush1.xpose.msra.mxu0 0.0
        %5075 = vmatprep.subr.mxu0 0.0
        %5076 = vmatpush1.xpose.msra.mxu0 0.0
        %5077 = vmatprep.subr.mxu0 0.0
        %5078 = vmatpush1.xpose.msra.mxu0 0.0
        %5079 = vmatprep.subr.mxu0 0.0
        %5080 = vmatpush1.xpose.msra.mxu0 0.0
        %5081 = vmatprep.subr.mxu0 0.0
        %5082 = vmatpush1.xpose.msra.mxu0 0.0
        %5083 = vmatprep.subr.mxu0 0.0
        %5084 = vmatpush1.xpose.msra.mxu0 0.0
        %5085 = vmatprep.subr.mxu0 0.0
        %5086 = vmatpush1.xpose.msra.mxu0 0.0
        %5087 = vmatprep.subr.mxu0 0.0
        %5088 = vmatpush1.xpose.msra.mxu0 0.0
        %5089 = vmatprep.subr.mxu0 0.0
        %5090 = vmatpush1.xpose.msra.mxu0 0.0
        %5091 = vmatprep.subr.mxu0 0.0
        %5092 = vmatpush1.xpose.msra.mxu0 0.0
        %5093 = vmatprep.subr.mxu0 0.0
        %5094 = vmatpush1.xpose.msra.mxu0 0.0
        %5095 = vmatprep.subr.mxu0 0.0
        %5096 = vmatpush1.xpose.msra.mxu0 0.0
        %5097 = vmatprep.mubr.f32.mxu0 0.0
        %5098 = vmatmul.mubr.f32.gmra.mrb[0].mxu0 %v5025
        %v5099 = vpop.f32.mrb[0].mxu0
        %v5100 = vadd.f32 0.0, %v5099
        %v5101 = vpop.f32.mrb[0].mxu0
        %5102 = vdwg.mxu0
        %v5103 = vsel %vm1455, %v5100, -inf
        %5104 = vmax.xlane.f32.xlu0 %v5103
        %v5105 = vpop.xlane.xlu0 %5104
        %v5106 = vsub.f32 %v5100, %v5105
        %v5107 = vmul.f32 %v5106, 1.442695
        %v5108 = vpow.pop %v5107
        %v5109 = vsel %vm1455, %v5108, 0.0
        %5110 = vadd.xlane.f32.xlu0 %v5109
        %v5111 = vpop.xlane.xlu0 %5110
        %v5112 = vrcp.pop %v5111
        %v5113 = vmul.f32 %v5108, %v5112
        %s5114 = scalar_lea.vmem %s13, 160
        %v5115 = vld [vmem:[%s5114] sm:$0xff]
        %v5116 = vld [vmem:[%s5114 + $0x8] sm:$0xff]
        %v5117 = vld [vmem:[%s5114 + $0x10] sm:$0xff]
        %v5118 = vld [vmem:[%s5114 + $0x18] sm:$0xff]
        %s5119 = scalar_lea.vmem %s15, 5
        %v5120 = vld [vmem:[%s5119] sm:$0x1]
        %v5122 = vlaneseq
        %v5123 = vshrl.u32 %v5122, 7
        %v5124 = vsub.s32 0, %v5123
        %v5125 = vrot.slane %v5120, %v5124
        %5127 = vmatprep.subr.mxu0 0.0
        %5128 = vmatpush1.msra.mxu0 %v5115
        %5129 = vmatprep.subr.mxu0 0.0
        %5130 = vmatpush1.msra.mxu0 %v5116
        %5131 = vmatprep.subr.mxu0 0.0
        %5132 = vmatpush1.msra.mxu0 %v5117
        %5133 = vmatprep.subr.mxu0 0.0
        %5134 = vmatpush1.msra.mxu0 %v5118
        %5135 = vmatprep.subr.mxu0 0.0
        %5136 = vmatpush1.msra.mxu0 0.0
        %5137 = vmatprep.subr.mxu0 0.0
        %5138 = vmatpush1.msra.mxu0 0.0
        %5139 = vmatprep.subr.mxu0 0.0
        %5140 = vmatpush1.msra.mxu0 0.0
        %5141 = vmatprep.subr.mxu0 0.0
        %5142 = vmatpush1.msra.mxu0 0.0
        %5143 = vmatprep.subr.mxu0 0.0
        %5144 = vmatpush1.msra.mxu0 0.0
        %5145 = vmatprep.subr.mxu0 0.0
        %5146 = vmatpush1.msra.mxu0 0.0
        %5147 = vmatprep.subr.mxu0 0.0
        %5148 = vmatpush1.msra.mxu0 0.0
        %5149 = vmatprep.subr.mxu0 0.0
        %5150 = vmatpush1.msra.mxu0 0.0
        %5151 = vmatprep.subr.mxu0 0.0
        %5152 = vmatpush1.msra.mxu0 0.0
        %5153 = vmatprep.subr.mxu0 0.0
        %5154 = vmatpush1.msra.mxu0 0.0
        %5155 = vmatprep.subr.mxu0 0.0
        %5156 = vmatpush1.msra.mxu0 0.0
        %5157 = vmatprep.subr.mxu0 0.0
        %5158 = vmatpush1.msra.mxu0 0.0
        %5159 = vmatprep.subr.mxu0 0.0
        %5160 = vmatpush1.msra.mxu0 0.0
        %5161 = vmatprep.subr.mxu0 0.0
        %5162 = vmatpush1.msra.mxu0 0.0
        %5163 = vmatprep.subr.mxu0 0.0
        %5164 = vmatpush1.msra.mxu0 0.0
        %5165 = vmatprep.subr.mxu0 0.0
        %5166 = vmatpush1.msra.mxu0 0.0
        %5167 = vmatprep.subr.mxu0 0.0
        %5168 = vmatpush1.msra.mxu0 0.0
        %5169 = vmatprep.subr.mxu0 0.0
        %5170 = vmatpush1.msra.mxu0 0.0
        %5171 = vmatprep.subr.mxu0 0.0
        %5172 = vmatpush1.msra.mxu0 0.0
        %5173 = vmatprep.subr.mxu0 0.0
        %5174 = vmatpush1.msra.mxu0 0.0
        %5175 = vmatprep.subr.mxu0 0.0
        %5176 = vmatpush1.msra.mxu0 0.0
        %5177 = vmatprep.subr.mxu0 0.0
        %5178 = vmatpush1.msra.mxu0 0.0
        %5179 = vmatprep.subr.mxu0 0.0
        %5180 = vmatpush1.msra.mxu0 0.0
        %5181 = vmatprep.subr.mxu0 0.0
        %5182 = vmatpush1.msra.mxu0 0.0
        %5183 = vmatprep.subr.mxu0 0.0
        %5184 = vmatpush1.msra.mxu0 0.0
        %5185 = vmatprep.subr.mxu0 0.0
        %5186 = vmatpush1.msra.mxu0 0.0
        %5187 = vmatprep.subr.mxu0 0.0
        %5188 = vmatpush1.msra.mxu0 0.0
        %5189 = vmatprep.subr.mxu0 0.0
        %5190 = vmatpush1.msra.mxu0 0.0
        %5191 = vmatprep.mubr.f32.mxu0 0.0
        %5192 = vmatmul.mubr.f32.gmra.mrb[0].mxu0 %v4776
        %v5193 = vpop.f32.mrb[0].mxu0
        %v5194 = vadd.f32 %v5125, %v5193
        %v5195 = vpop.f32.mrb[0].mxu0
        %5196 = vdwg.mxu0
        %s5197 = scalar_lea.vmem %s17, 160
        %v5198 = vld [vmem:[%s5197] sm:$0xff]
        %v5199 = vld [vmem:[%s5197 + $0x8] sm:$0xff]
        %v5200 = vld [vmem:[%s5197 + $0x10] sm:$0xff]
        %v5201 = vld [vmem:[%s5197 + $0x18] sm:$0xff]
        %s5202 = scalar_lea.vmem %s19, 5
        %v5203 = vld [vmem:[%s5202] sm:$0x1]
        %v5205 = vlaneseq
        %v5206 = vshrl.u32 %v5205, 7
        %v5207 = vsub.s32 0, %v5206
        %v5208 = vrot.slane %v5203, %v5207
        %5210 = vmatprep.subr.mxu0 0.0
        %5211 = vmatpush1.msra.mxu0 %v5198
        %5212 = vmatprep.subr.mxu0 0.0
        %5213 = vmatpush1.msra.mxu0 %v5199
        %5214 = vmatprep.subr.mxu0 0.0
        %5215 = vmatpush1.msra.mxu0 %v5200
        %5216 = vmatprep.subr.mxu0 0.0
        %5217 = vmatpush1.msra.mxu0 %v5201
        %5218 = vmatprep.subr.mxu0 0.0
        %5219 = vmatpush1.msra.mxu0 0.0
        %5220 = vmatprep.subr.mxu0 0.0
        %5221 = vmatpush1.msra.mxu0 0.0
        %5222 = vmatprep.subr.mxu0 0.0
        %5223 = vmatpush1.msra.mxu0 0.0
        %5224 = vmatprep.subr.mxu0 0.0
        %5225 = vmatpush1.msra.mxu0 0.0
        %5226 = vmatprep.subr.mxu0 0.0
        %5227 = vmatpush1.msra.mxu0 0.0
        %5228 = vmatprep.subr.mxu0 0.0
        %5229 = vmatpush1.msra.mxu0 0.0
        %5230 = vmatprep.subr.mxu0 0.0
        %5231 = vmatpush1.msra.mxu0 0.0
        %5232 = vmatprep.subr.mxu0 0.0
        %5233 = vmatpush1.msra.mxu0 0.0
        %5234 = vmatprep.subr.mxu0 0.0
        %5235 = vmatpush1.msra.mxu0 0.0
        %5236 = vmatprep.subr.mxu0 0.0
        %5237 = vmatpush1.msra.mxu0 0.0
        %5238 = vmatprep.subr.mxu0 0.0
        %5239 = vmatpush1.msra.mxu0 0.0
        %5240 = vmatprep.subr.mxu0 0.0
        %5241 = vmatpush1.msra.mxu0 0.0
        %5242 = vmatprep.subr.mxu0 0.0
        %5243 = vmatpush1.msra.mxu0 0.0
        %5244 = vmatprep.subr.mxu0 0.0
        %5245 = vmatpush1.msra.mxu0 0.0
        %5246 = vmatprep.subr.mxu0 0.0
        %5247 = vmatpush1.msra.mxu0 0.0
        %5248 = vmatprep.subr.mxu0 0.0
        %5249 = vmatpush1.msra.mxu0 0.0
        %5250 = vmatprep.subr.mxu0 0.0
        %5251 = vmatpush1.msra.mxu0 0.0
        %5252 = vmatprep.subr.mxu0 0.0
        %5253 = vmatpush1.msra.mxu0 0.0
        %5254 = vmatprep.subr.mxu0 0.0
        %5255 = vmatpush1.msra.mxu0 0.0
        %5256 = vmatprep.subr.mxu0 0.0
        %5257 = vmatpush1.msra.mxu0 0.0
        %5258 = vmatprep.subr.mxu0 0.0
        %5259 = vmatpush1.msra.mxu0 0.0
        %5260 = vmatprep.subr.mxu0 0.0
        %5261 = vmatpush1.msra.mxu0 0.0
        %5262 = vmatprep.subr.mxu0 0.0
        %5263 = vmatpush1.msra.mxu0 0.0
        %5264 = vmatprep.subr.mxu0 0.0
        %5265 = vmatpush1.msra.mxu0 0.0
        %5266 = vmatprep.subr.mxu0 0.0
        %5267 = vmatpush1.msra.mxu0 0.0
        %5268 = vmatprep.subr.mxu0 0.0
        %5269 = vmatpush1.msra.mxu0 0.0
        %5270 = vmatprep.subr.mxu0 0.0
        %5271 = vmatpush1.msra.mxu0 0.0
        %5272 = vmatprep.subr.mxu0 0.0
        %5273 = vmatpush1.msra.mxu0 0.0
        %5274 = vmatprep.mubr.f32.mxu0 0.0
        %5275 = vmatmul.mubr.f32.gmra.mrb[0].mxu0 %v1203
        %v5276 = vpop.f32.mrb[0].mxu0
        %v5277 = vadd.f32 %v5208, %v5276
        %v5278 = vpop.f32.mrb[0].mxu0
        %5279 = vmatprep.mubr.f32.mxu0 0.0
        %5280 = vmatmul.mubr.f32.gmra.mrb[0].mxu0 %v1206
        %v5281 = vpop.f32.mrb[0].mxu0
        %v5282 = vadd.f32 %v5208, %v5281
        %v5283 = vpop.f32.mrb[0].mxu0
        %5284 = vdwg.mxu0
        %s5285 = scalar_lea.vmem %s21, 160
        %v5286 = vld [vmem:[%s5285] sm:$0xff]
        %v5287 = vld [vmem:[%s5285 + $0x8] sm:$0xff]
        %v5288 = vld [vmem:[%s5285 + $0x10] sm:$0xff]
        %v5289 = vld [vmem:[%s5285 + $0x18] sm:$0xff]
        %s5290 = scalar_lea.vmem %s23, 5
        %v5291 = vld [vmem:[%s5290] sm:$0x1]
        %v5293 = vlaneseq
        %v5294 = vshrl.u32 %v5293, 7
        %v5295 = vsub.s32 0, %v5294
        %v5296 = vrot.slane %v5291, %v5295
        %5298 = vmatprep.subr.mxu0 0.0
        %5299 = vmatpush1.msra.mxu0 %v5286
        %5300 = vmatprep.subr.mxu0 0.0
        %5301 = vmatpush1.msra.mxu0 %v5287
        %5302 = vmatprep.subr.mxu0 0.0
        %5303 = vmatpush1.msra.mxu0 %v5288
        %5304 = vmatprep.subr.mxu0 0.0
        %5305 = vmatpush1.msra.mxu0 %v5289
        %5306 = vmatprep.subr.mxu0 0.0
        %5307 = vmatpush1.msra.mxu0 0.0
        %5308 = vmatprep.subr.mxu0 0.0
        %5309 = vmatpush1.msra.mxu0 0.0
        %5310 = vmatprep.subr.mxu0 0.0
        %5311 = vmatpush1.msra.mxu0 0.0
        %5312 = vmatprep.subr.mxu0 0.0
        %5313 = vmatpush1.msra.mxu0 0.0
        %5314 = vmatprep.subr.mxu0 0.0
        %5315 = vmatpush1.msra.mxu0 0.0
        %5316 = vmatprep.subr.mxu0 0.0
        %5317 = vmatpush1.msra.mxu0 0.0
        %5318 = vmatprep.subr.mxu0 0.0
        %5319 = vmatpush1.msra.mxu0 0.0
        %5320 = vmatprep.subr.mxu0 0.0
        %5321 = vmatpush1.msra.mxu0 0.0
        %5322 = vmatprep.subr.mxu0 0.0
        %5323 = vmatpush1.msra.mxu0 0.0
        %5324 = vmatprep.subr.mxu0 0.0
        %5325 = vmatpush1.msra.mxu0 0.0
        %5326 = vmatprep.subr.mxu0 0.0
        %5327 = vmatpush1.msra.mxu0 0.0
        %5328 = vmatprep.subr.mxu0 0.0
        %5329 = vmatpush1.msra.mxu0 0.0
        %5330 = vmatprep.subr.mxu0 0.0
        %5331 = vmatpush1.msra.mxu0 0.0
        %5332 = vmatprep.subr.mxu0 0.0
        %5333 = vmatpush1.msra.mxu0 0.0
        %5334 = vmatprep.subr.mxu0 0.0
        %5335 = vmatpush1.msra.mxu0 0.0
        %5336 = vmatprep.subr.mxu0 0.0
        %5337 = vmatpush1.msra.mxu0 0.0
        %5338 = vmatprep.subr.mxu0 0.0
        %5339 = vmatpush1.msra.mxu0 0.0
        %5340 = vmatprep.subr.mxu0 0.0
        %5341 = vmatpush1.msra.mxu0 0.0
        %5342 = vmatprep.subr.mxu0 0.0
        %5343 = vmatpush1.msra.mxu0 0.0
        %5344 = vmatprep.subr.mxu0 0.0
        %5345 = vmatpush1.msra.mxu0 0.0
        %5346 = vmatprep.subr.mxu0 0.0
        %5347 = vmatpush1.msra.mxu0 0.0
        %5348 = vmatprep.subr.mxu0 0.0
        %5349 = vmatpush1.msra.mxu0 0.0
        %5350 = vmatprep.subr.mxu0 0.0
        %5351 = vmatpush1.msra.mxu0 0.0
        %5352 = vmatprep.subr.mxu0 0.0
        %5353 = vmatpush1.msra.mxu0 0.0
        %5354 = vmatprep.subr.mxu0 0.0
        %5355 = vmatpush1.msra.mxu0 0.0
        %5356 = vmatprep.subr.mxu0 0.0
        %5357 = vmatpush1.msra.mxu0 0.0
        %5358 = vmatprep.subr.mxu0 0.0
        %5359 = vmatpush1.msra.mxu0 0.0
        %5360 = vmatprep.subr.mxu0 0.0
        %5361 = vmatpush1.msra.mxu0 0.0
        %5362 = vmatprep.mubr.f32.mxu0 0.0
        %5363 = vmatmul.mubr.f32.gmra.mrb[0].mxu0 %v1295
        %v5364 = vpop.f32.mrb[0].mxu0
        %v5365 = vadd.f32 %v5296, %v5364
        %v5366 = vpop.f32.mrb[0].mxu0
        %5367 = vmatprep.mubr.f32.mxu0 0.0
        %5368 = vmatmul.mubr.f32.gmra.mrb[0].mxu0 %v1298
        %v5369 = vpop.f32.mrb[0].mxu0
        %v5370 = vadd.f32 %v5296, %v5369
        %v5371 = vpop.f32.mrb[0].mxu0
        %5372 = vdwg.mxu0
        %v5374 = vsel %vm1375, %v5194, 0
        %v5377 = vsel %vm1375, %v5277, 0
        %v5380 = vsel %vm1375, %v5282, 0
        %5382 = vmatprep.subr.mxu0 0.0
        %5383 = vmatpush1.xpose.msra.mxu0 %v5377
        %5384 = vmatprep.subr.mxu0 0.0
        %5385 = vmatpush1.xpose.msra.mxu0 %v5380
        %5386 = vmatprep.subr.mxu0 0.0
        %5387 = vmatpush1.xpose.msra.mxu0 0.0
        %5388 = vmatprep.subr.mxu0 0.0
        %5389 = vmatpush1.xpose.msra.mxu0 0.0
        %5390 = vmatprep.subr.mxu0 0.0
        %5391 = vmatpush1.xpose.msra.mxu0 0.0
        %5392 = vmatprep.subr.mxu0 0.0
        %5393 = vmatpush1.xpose.msra.mxu0 0.0
        %5394 = vmatprep.subr.mxu0 0.0
        %5395 = vmatpush1.xpose.msra.mxu0 0.0
        %5396 = vmatprep.subr.mxu0 0.0
        %5397 = vmatpush1.xpose.msra.mxu0 0.0
        %5398 = vmatprep.subr.mxu0 0.0
        %5399 = vmatpush1.xpose.msra.mxu0 0.0
        %5400 = vmatprep.subr.mxu0 0.0
        %5401 = vmatpush1.xpose.msra.mxu0 0.0
        %5402 = vmatprep.subr.mxu0 0.0
        %5403 = vmatpush1.xpose.msra.mxu0 0.0
        %5404 = vmatprep.subr.mxu0 0.0
        %5405 = vmatpush1.xpose.msra.mxu0 0.0
        %5406 = vmatprep.subr.mxu0 0.0
        %5407 = vmatpush1.xpose.msra.mxu0 0.0
        %5408 = vmatprep.subr.mxu0 0.0
        %5409 = vmatpush1.xpose.msra.mxu0 0.0
        %5410 = vmatprep.subr.mxu0 0.0
        %5411 = vmatpush1.xpose.msra.mxu0 0.0
        %5412 = vmatprep.subr.mxu0 0.0
        %5413 = vmatpush1.xpose.msra.mxu0 0.0
        %5414 = vmatprep.subr.mxu0 0.0
        %5415 = vmatpush1.xpose.msra.mxu0 0.0
        %5416 = vmatprep.subr.mxu0 0.0
        %5417 = vmatpush1.xpose.msra.mxu0 0.0
        %5418 = vmatprep.subr.mxu0 0.0
        %5419 = vmatpush1.xpose.msra.mxu0 0.0
        %5420 = vmatprep.subr.mxu0 0.0
        %5421 = vmatpush1.xpose.msra.mxu0 0.0
        %5422 = vmatprep.subr.mxu0 0.0
        %5423 = vmatpush1.xpose.msra.mxu0 0.0
        %5424 = vmatprep.subr.mxu0 0.0
        %5425 = vmatpush1.xpose.msra.mxu0 0.0
        %5426 = vmatprep.subr.mxu0 0.0
        %5427 = vmatpush1.xpose.msra.mxu0 0.0
        %5428 = vmatprep.subr.mxu0 0.0
        %5429 = vmatpush1.xpose.msra.mxu0 0.0
        %5430 = vmatprep.subr.mxu0 0.0
        %5431 = vmatpush1.xpose.msra.mxu0 0.0
        %5432 = vmatprep.subr.mxu0 0.0
        %5433 = vmatpush1.xpose.msra.mxu0 0.0
        %5434 = vmatprep.subr.mxu0 0.0
        %5435 = vmatpush1.xpose.msra.mxu0 0.0
        %5436 = vmatprep.subr.mxu0 0.0
        %5437 = vmatpush1.xpose.msra.mxu0 0.0
        %5438 = vmatprep.subr.mxu0 0.0
        %5439 = vmatpush1.xpose.msra.mxu0 0.0
        %5440 = vmatprep.subr.mxu0 0.0
        %5441 = vmatpush1.xpose.msra.mxu0 0.0
        %5442 = vmatprep.subr.mxu0 0.0
        %5443 = vmatpush1.xpose.msra.mxu0 0.0
        %5444 = vmatprep.subr.mxu0 0.0
        %5445 = vmatpush1.xpose.msra.mxu0 0.0
        %5446 = vmatprep.mubr.f32.mxu0 0.0
        %5447 = vmatmul.mubr.f32.gmra.mrb[0].mxu0 %v5374
        %v5448 = vpop.f32.mrb[0].mxu0
        %v5449 = vadd.f32 0.0, %v5448
        %v5450 = vpop.f32.mrb[0].mxu0
        %5451 = vdwg.mxu0
        %v5452 = vsel %vm1455, %v5449, -inf
        %5453 = vmax.xlane.f32.xlu0 %v5452
        %v5454 = vpop.xlane.xlu0 %5453
        %v5455 = vsub.f32 %v5449, %v5454
        %v5456 = vmul.f32 %v5455, 1.442695
        %v5457 = vpow.pop %v5456
        %v5458 = vsel %vm1455, %v5457, 0.0
        %5459 = vadd.xlane.f32.xlu0 %v5458
        %v5460 = vpop.xlane.xlu0 %5459
        %v5461 = vrcp.pop %v5460
        %v5462 = vmul.f32 %v5457, %v5461
        %v5464 = vsel %vm1455, %v5462, 0
        %5466 = vmatprep.subr.mxu0 0.0
        %5467 = vmatpush1.msra.mxu0 %v5365
        %5468 = vmatprep.subr.mxu0 0.0
        %5469 = vmatpush1.msra.mxu0 %v5370
        %5470 = vmatprep.subr.mxu0 0.0
        %5471 = vmatpush1.msra.mxu0 0.0
        %5472 = vmatprep.subr.mxu0 0.0
        %5473 = vmatpush1.msra.mxu0 0.0
        %5474 = vmatprep.subr.mxu0 0.0
        %5475 = vmatpush1.msra.mxu0 0.0
        %5476 = vmatprep.subr.mxu0 0.0
        %5477 = vmatpush1.msra.mxu0 0.0
        %5478 = vmatprep.subr.mxu0 0.0
        %5479 = vmatpush1.msra.mxu0 0.0
        %5480 = vmatprep.subr.mxu0 0.0
        %5481 = vmatpush1.msra.mxu0 0.0
        %5482 = vmatprep.subr.mxu0 0.0
        %5483 = vmatpush1.msra.mxu0 0.0
        %5484 = vmatprep.subr.mxu0 0.0
        %5485 = vmatpush1.msra.mxu0 0.0
        %5486 = vmatprep.subr.mxu0 0.0
        %5487 = vmatpush1.msra.mxu0 0.0
        %5488 = vmatprep.subr.mxu0 0.0
        %5489 = vmatpush1.msra.mxu0 0.0
        %5490 = vmatprep.subr.mxu0 0.0
        %5491 = vmatpush1.msra.mxu0 0.0
        %5492 = vmatprep.subr.mxu0 0.0
        %5493 = vmatpush1.msra.mxu0 0.0
        %5494 = vmatprep.subr.mxu0 0.0
        %5495 = vmatpush1.msra.mxu0 0.0
        %5496 = vmatprep.subr.mxu0 0.0
        %5497 = vmatpush1.msra.mxu0 0.0
        %5498 = vmatprep.subr.mxu0 0.0
        %5499 = vmatpush1.msra.mxu0 0.0
        %5500 = vmatprep.subr.mxu0 0.0
        %5501 = vmatpush1.msra.mxu0 0.0
        %5502 = vmatprep.subr.mxu0 0.0
        %5503 = vmatpush1.msra.mxu0 0.0
        %5504 = vmatprep.subr.mxu0 0.0
        %5505 = vmatpush1.msra.mxu0 0.0
        %5506 = vmatprep.subr.mxu0 0.0
        %5507 = vmatpush1.msra.mxu0 0.0
        %5508 = vmatprep.subr.mxu0 0.0
        %5509 = vmatpush1.msra.mxu0 0.0
        %5510 = vmatprep.subr.mxu0 0.0
        %5511 = vmatpush1.msra.mxu0 0.0
        %5512 = vmatprep.subr.mxu0 0.0
        %5513 = vmatpush1.msra.mxu0 0.0
        %5514 = vmatprep.subr.mxu0 0.0
        %5515 = vmatpush1.msra.mxu0 0.0
        %5516 = vmatprep.subr.mxu0 0.0
        %5517 = vmatpush1.msra.mxu0 0.0
        %5518 = vmatprep.subr.mxu0 0.0
        %5519 = vmatpush1.msra.mxu0 0.0
        %5520 = vmatprep.subr.mxu0 0.0
        %5521 = vmatpush1.msra.mxu0 0.0
        %5522 = vmatprep.subr.mxu0 0.0
        %5523 = vmatpush1.msra.mxu0 0.0
        %5524 = vmatprep.subr.mxu0 0.0
        %5525 = vmatpush1.msra.mxu0 0.0
        %5526 = vmatprep.subr.mxu0 0.0
        %5527 = vmatpush1.msra.mxu0 0.0
        %5528 = vmatprep.subr.mxu0 0.0
        %5529 = vmatpush1.msra.mxu0 0.0
        %5530 = vmatprep.mubr.f32.mxu0 0.0
        %5531 = vmatmul.mubr.f32.gmra.mrb[0].mxu0 %v5464
        %v5532 = vpop.f32.mrb[0].mxu0
        %v5533 = vadd.f32 0.0, %v5532
        %v5534 = vpop.f32.mrb[0].mxu0
        %5535 = vdwg.mxu0
        %v5537 = vsel %vm1455, %v5113, 0
        %5539 = vmatprep.subr.mxu0 0.0
        %5540 = vmatpush1.msra.mxu0 %v5016
        %5541 = vmatprep.subr.mxu0 0.0
        %5542 = vmatpush1.msra.mxu0 %v5021
        %5543 = vmatprep.subr.mxu0 0.0
        %5544 = vmatpush1.msra.mxu0 0.0
        %5545 = vmatprep.subr.mxu0 0.0
        %5546 = vmatpush1.msra.mxu0 0.0
        %5547 = vmatprep.subr.mxu0 0.0
        %5548 = vmatpush1.msra.mxu0 0.0
        %5549 = vmatprep.subr.mxu0 0.0
        %5550 = vmatpush1.msra.mxu0 0.0
        %5551 = vmatprep.subr.mxu0 0.0
        %5552 = vmatpush1.msra.mxu0 0.0
        %5553 = vmatprep.subr.mxu0 0.0
        %5554 = vmatpush1.msra.mxu0 0.0
        %5555 = vmatprep.subr.mxu0 0.0
        %5556 = vmatpush1.msra.mxu0 0.0
        %5557 = vmatprep.subr.mxu0 0.0
        %5558 = vmatpush1.msra.mxu0 0.0
        %5559 = vmatprep.subr.mxu0 0.0
        %5560 = vmatpush1.msra.mxu0 0.0
        %5561 = vmatprep.subr.mxu0 0.0
        %5562 = vmatpush1.msra.mxu0 0.0
        %5563 = vmatprep.subr.mxu0 0.0
        %5564 = vmatpush1.msra.mxu0 0.0
        %5565 = vmatprep.subr.mxu0 0.0
        %5566 = vmatpush1.msra.mxu0 0.0
        %5567 = vmatprep.subr.mxu0 0.0
        %5568 = vmatpush1.msra.mxu0 0.0
        %5569 = vmatprep.subr.mxu0 0.0
        %5570 = vmatpush1.msra.mxu0 0.0
        %5571 = vmatprep.subr.mxu0 0.0
        %5572 = vmatpush1.msra.mxu0 0.0
        %5573 = vmatprep.subr.mxu0 0.0
        %5574 = vmatpush1.msra.mxu0 0.0
        %5575 = vmatprep.subr.mxu0 0.0
        %5576 = vmatpush1.msra.mxu0 0.0
        %5577 = vmatprep.subr.mxu0 0.0
        %5578 = vmatpush1.msra.mxu0 0.0
        %5579 = vmatprep.subr.mxu0 0.0
        %5580 = vmatpush1.msra.mxu0 0.0
        %5581 = vmatprep.subr.mxu0 0.0
        %5582 = vmatpush1.msra.mxu0 0.0
        %5583 = vmatprep.subr.mxu0 0.0
        %5584 = vmatpush1.msra.mxu0 0.0
        %5585 = vmatprep.subr.mxu0 0.0
        %5586 = vmatpush1.msra.mxu0 0.0
        %5587 = vmatprep.subr.mxu0 0.0
        %5588 = vmatpush1.msra.mxu0 0.0
        %5589 = vmatprep.subr.mxu0 0.0
        %5590 = vmatpush1.msra.mxu0 0.0
        %5591 = vmatprep.subr.mxu0 0.0
        %5592 = vmatpush1.msra.mxu0 0.0
        %5593 = vmatprep.subr.mxu0 0.0
        %5594 = vmatpush1.msra.mxu0 0.0
        %5595 = vmatprep.subr.mxu0 0.0
        %5596 = vmatpush1.msra.mxu0 0.0
        %5597 = vmatprep.subr.mxu0 0.0
        %5598 = vmatpush1.msra.mxu0 0.0
        %5599 = vmatprep.subr.mxu0 0.0
        %5600 = vmatpush1.msra.mxu0 0.0
        %5601 = vmatprep.subr.mxu0 0.0
        %5602 = vmatpush1.msra.mxu0 0.0
        %5603 = vmatprep.mubr.f32.mxu0 0.0
        %5604 = vmatmul.mubr.f32.gmra.mrb[0].mxu0 %v5537
        %v5605 = vpop.f32.mrb[0].mxu0
        %v5606 = vadd.f32 %v5533, %v5605
        %v5607 = vpop.f32.mrb[0].mxu0
        %5608 = vdwg.mxu0
        %s5609 = scalar_lea.vmem %s13, 192
        %v5610 = vld [vmem:[%s5609] sm:$0xff]
        %v5611 = vld [vmem:[%s5609 + $0x8] sm:$0xff]
        %v5612 = vld [vmem:[%s5609 + $0x10] sm:$0xff]
        %v5613 = vld [vmem:[%s5609 + $0x18] sm:$0xff]
        %s5614 = scalar_lea.vmem %s15, 6
        %v5615 = vld [vmem:[%s5614] sm:$0x1]
        %v5617 = vlaneseq
        %v5618 = vshrl.u32 %v5617, 7
        %v5619 = vsub.s32 0, %v5618
        %v5620 = vrot.slane %v5615, %v5619
        %5622 = vmatprep.subr.mxu0 0.0
        %5623 = vmatpush1.msra.mxu0 %v5610
        %5624 = vmatprep.subr.mxu0 0.0
        %5625 = vmatpush1.msra.mxu0 %v5611
        %5626 = vmatprep.subr.mxu0 0.0
        %5627 = vmatpush1.msra.mxu0 %v5612
        %5628 = vmatprep.subr.mxu0 0.0
        %5629 = vmatpush1.msra.mxu0 %v5613
        %5630 = vmatprep.subr.mxu0 0.0
        %5631 = vmatpush1.msra.mxu0 0.0
        %5632 = vmatprep.subr.mxu0 0.0
        %5633 = vmatpush1.msra.mxu0 0.0
        %5634 = vmatprep.subr.mxu0 0.0
        %5635 = vmatpush1.msra.mxu0 0.0
        %5636 = vmatprep.subr.mxu0 0.0
        %5637 = vmatpush1.msra.mxu0 0.0
        %5638 = vmatprep.subr.mxu0 0.0
        %5639 = vmatpush1.msra.mxu0 0.0
        %5640 = vmatprep.subr.mxu0 0.0
        %5641 = vmatpush1.msra.mxu0 0.0
        %5642 = vmatprep.subr.mxu0 0.0
        %5643 = vmatpush1.msra.mxu0 0.0
        %5644 = vmatprep.subr.mxu0 0.0
        %5645 = vmatpush1.msra.mxu0 0.0
        %5646 = vmatprep.subr.mxu0 0.0
        %5647 = vmatpush1.msra.mxu0 0.0
        %5648 = vmatprep.subr.mxu0 0.0
        %5649 = vmatpush1.msra.mxu0 0.0
        %5650 = vmatprep.subr.mxu0 0.0
        %5651 = vmatpush1.msra.mxu0 0.0
        %5652 = vmatprep.subr.mxu0 0.0
        %5653 = vmatpush1.msra.mxu0 0.0
        %5654 = vmatprep.subr.mxu0 0.0
        %5655 = vmatpush1.msra.mxu0 0.0
        %5656 = vmatprep.subr.mxu0 0.0
        %5657 = vmatpush1.msra.mxu0 0.0
        %5658 = vmatprep.subr.mxu0 0.0
        %5659 = vmatpush1.msra.mxu0 0.0
        %5660 = vmatprep.subr.mxu0 0.0
        %5661 = vmatpush1.msra.mxu0 0.0
        %5662 = vmatprep.subr.mxu0 0.0
        %5663 = vmatpush1.msra.mxu0 0.0
        %5664 = vmatprep.subr.mxu0 0.0
        %5665 = vmatpush1.msra.mxu0 0.0
        %5666 = vmatprep.subr.mxu0 0.0
        %5667 = vmatpush1.msra.mxu0 0.0
        %5668 = vmatprep.subr.mxu0 0.0
        %5669 = vmatpush1.msra.mxu0 0.0
        %5670 = vmatprep.subr.mxu0 0.0
        %5671 = vmatpush1.msra.mxu0 0.0
        %5672 = vmatprep.subr.mxu0 0.0
        %5673 = vmatpush1.msra.mxu0 0.0
        %5674 = vmatprep.subr.mxu0 0.0
        %5675 = vmatpush1.msra.mxu0 0.0
        %5676 = vmatprep.subr.mxu0 0.0
        %5677 = vmatpush1.msra.mxu0 0.0
        %5678 = vmatprep.subr.mxu0 0.0
        %5679 = vmatpush1.msra.mxu0 0.0
        %5680 = vmatprep.subr.mxu0 0.0
        %5681 = vmatpush1.msra.mxu0 0.0
        %5682 = vmatprep.subr.mxu0 0.0
        %5683 = vmatpush1.msra.mxu0 0.0
        %5684 = vmatprep.subr.mxu0 0.0
        %5685 = vmatpush1.msra.mxu0 0.0
        %5686 = vmatprep.mubr.f32.mxu0 0.0
        %5687 = vmatmul.mubr.f32.gmra.mrb[0].mxu0 %v4776
        %v5688 = vpop.f32.mrb[0].mxu0
        %v5689 = vadd.f32 %v5620, %v5688
        %v5690 = vpop.f32.mrb[0].mxu0
        %5691 = vdwg.mxu0
        %s5692 = scalar_lea.vmem %s17, 192
        %v5693 = vld [vmem:[%s5692] sm:$0xff]
        %v5694 = vld [vmem:[%s5692 + $0x8] sm:$0xff]
        %v5695 = vld [vmem:[%s5692 + $0x10] sm:$0xff]
        %v5696 = vld [vmem:[%s5692 + $0x18] sm:$0xff]
        %s5697 = scalar_lea.vmem %s19, 6
        %v5698 = vld [vmem:[%s5697] sm:$0x1]
        %v5700 = vlaneseq
        %v5701 = vshrl.u32 %v5700, 7
        %v5702 = vsub.s32 0, %v5701
        %v5703 = vrot.slane %v5698, %v5702
        %5705 = vmatprep.subr.mxu0 0.0
        %5706 = vmatpush1.msra.mxu0 %v5693
        %5707 = vmatprep.subr.mxu0 0.0
        %5708 = vmatpush1.msra.mxu0 %v5694
        %5709 = vmatprep.subr.mxu0 0.0
        %5710 = vmatpush1.msra.mxu0 %v5695
        %5711 = vmatprep.subr.mxu0 0.0
        %5712 = vmatpush1.msra.mxu0 %v5696
        %5713 = vmatprep.subr.mxu0 0.0
        %5714 = vmatpush1.msra.mxu0 0.0
        %5715 = vmatprep.subr.mxu0 0.0
        %5716 = vmatpush1.msra.mxu0 0.0
        %5717 = vmatprep.subr.mxu0 0.0
        %5718 = vmatpush1.msra.mxu0 0.0
        %5719 = vmatprep.subr.mxu0 0.0
        %5720 = vmatpush1.msra.mxu0 0.0
        %5721 = vmatprep.subr.mxu0 0.0
        %5722 = vmatpush1.msra.mxu0 0.0
        %5723 = vmatprep.subr.mxu0 0.0
        %5724 = vmatpush1.msra.mxu0 0.0
        %5725 = vmatprep.subr.mxu0 0.0
        %5726 = vmatpush1.msra.mxu0 0.0
        %5727 = vmatprep.subr.mxu0 0.0
        %5728 = vmatpush1.msra.mxu0 0.0
        %5729 = vmatprep.subr.mxu0 0.0
        %5730 = vmatpush1.msra.mxu0 0.0
        %5731 = vmatprep.subr.mxu0 0.0
        %5732 = vmatpush1.msra.mxu0 0.0
        %5733 = vmatprep.subr.mxu0 0.0
        %5734 = vmatpush1.msra.mxu0 0.0
        %5735 = vmatprep.subr.mxu0 0.0
        %5736 = vmatpush1.msra.mxu0 0.0
        %5737 = vmatprep.subr.mxu0 0.0
        %5738 = vmatpush1.msra.mxu0 0.0
        %5739 = vmatprep.subr.mxu0 0.0
        %5740 = vmatpush1.msra.mxu0 0.0
        %5741 = vmatprep.subr.mxu0 0.0
        %5742 = vmatpush1.msra.mxu0 0.0
        %5743 = vmatprep.subr.mxu0 0.0
        %5744 = vmatpush1.msra.mxu0 0.0
        %5745 = vmatprep.subr.mxu0 0.0
        %5746 = vmatpush1.msra.mxu0 0.0
        %5747 = vmatprep.subr.mxu0 0.0
        %5748 = vmatpush1.msra.mxu0 0.0
        %5749 = vmatprep.subr.mxu0 0.0
        %5750 = vmatpush1.msra.mxu0 0.0
        %5751 = vmatprep.subr.mxu0 0.0
        %5752 = vmatpush1.msra.mxu0 0.0
        %5753 = vmatprep.subr.mxu0 0.0
        %5754 = vmatpush1.msra.mxu0 0.0
        %5755 = vmatprep.subr.mxu0 0.0
        %5756 = vmatpush1.msra.mxu0 0.0
        %5757 = vmatprep.subr.mxu0 0.0
        %5758 = vmatpush1.msra.mxu0 0.0
        %5759 = vmatprep.subr.mxu0 0.0
        %5760 = vmatpush1.msra.mxu0 0.0
        %5761 = vmatprep.subr.mxu0 0.0
        %5762 = vmatpush1.msra.mxu0 0.0
        %5763 = vmatprep.subr.mxu0 0.0
        %5764 = vmatpush1.msra.mxu0 0.0
        %5765 = vmatprep.subr.mxu0 0.0
        %5766 = vmatpush1.msra.mxu0 0.0
        %5767 = vmatprep.subr.mxu0 0.0
        %5768 = vmatpush1.msra.mxu0 0.0
        %5769 = vmatprep.mubr.f32.mxu0 0.0
        %5770 = vmatmul.mubr.f32.gmra.mrb[0].mxu0 %v1203
        %v5771 = vpop.f32.mrb[0].mxu0
        %v5772 = vadd.f32 %v5703, %v5771
        %v5773 = vpop.f32.mrb[0].mxu0
        %5774 = vmatprep.mubr.f32.mxu0 0.0
        %5775 = vmatmul.mubr.f32.gmra.mrb[0].mxu0 %v1206
        %v5776 = vpop.f32.mrb[0].mxu0
        %v5777 = vadd.f32 %v5703, %v5776
        %v5778 = vpop.f32.mrb[0].mxu0
        %5779 = vdwg.mxu0
        %s5780 = scalar_lea.vmem %s21, 192
        %v5781 = vld [vmem:[%s5780] sm:$0xff]
        %v5782 = vld [vmem:[%s5780 + $0x8] sm:$0xff]
        %v5783 = vld [vmem:[%s5780 + $0x10] sm:$0xff]
        %v5784 = vld [vmem:[%s5780 + $0x18] sm:$0xff]
        %s5785 = scalar_lea.vmem %s23, 6
        %v5786 = vld [vmem:[%s5785] sm:$0x1]
        %v5788 = vlaneseq
        %v5789 = vshrl.u32 %v5788, 7
        %v5790 = vsub.s32 0, %v5789
        %v5791 = vrot.slane %v5786, %v5790
        %5793 = vmatprep.subr.mxu0 0.0
        %5794 = vmatpush1.msra.mxu0 %v5781
        %5795 = vmatprep.subr.mxu0 0.0
        %5796 = vmatpush1.msra.mxu0 %v5782
        %5797 = vmatprep.subr.mxu0 0.0
        %5798 = vmatpush1.msra.mxu0 %v5783
        %5799 = vmatprep.subr.mxu0 0.0
        %5800 = vmatpush1.msra.mxu0 %v5784
        %5801 = vmatprep.subr.mxu0 0.0
        %5802 = vmatpush1.msra.mxu0 0.0
        %5803 = vmatprep.subr.mxu0 0.0
        %5804 = vmatpush1.msra.mxu0 0.0
        %5805 = vmatprep.subr.mxu0 0.0
        %5806 = vmatpush1.msra.mxu0 0.0
        %5807 = vmatprep.subr.mxu0 0.0
        %5808 = vmatpush1.msra.mxu0 0.0
        %5809 = vmatprep.subr.mxu0 0.0
        %5810 = vmatpush1.msra.mxu0 0.0
        %5811 = vmatprep.subr.mxu0 0.0
        %5812 = vmatpush1.msra.mxu0 0.0
        %5813 = vmatprep.subr.mxu0 0.0
        %5814 = vmatpush1.msra.mxu0 0.0
        %5815 = vmatprep.subr.mxu0 0.0
        %5816 = vmatpush1.msra.mxu0 0.0
        %5817 = vmatprep.subr.mxu0 0.0
        %5818 = vmatpush1.msra.mxu0 0.0
        %5819 = vmatprep.subr.mxu0 0.0
        %5820 = vmatpush1.msra.mxu0 0.0
        %5821 = vmatprep.subr.mxu0 0.0
        %5822 = vmatpush1.msra.mxu0 0.0
        %5823 = vmatprep.subr.mxu0 0.0
        %5824 = vmatpush1.msra.mxu0 0.0
        %5825 = vmatprep.subr.mxu0 0.0
        %5826 = vmatpush1.msra.mxu0 0.0
        %5827 = vmatprep.subr.mxu0 0.0
        %5828 = vmatpush1.msra.mxu0 0.0
        %5829 = vmatprep.subr.mxu0 0.0
        %5830 = vmatpush1.msra.mxu0 0.0
        %5831 = vmatprep.subr.mxu0 0.0
        %5832 = vmatpush1.msra.mxu0 0.0
        %5833 = vmatprep.subr.mxu0 0.0
        %5834 = vmatpush1.msra.mxu0 0.0
        %5835 = vmatprep.subr.mxu0 0.0
        %5836 = vmatpush1.msra.mxu0 0.0
        %5837 = vmatprep.subr.mxu0 0.0
        %5838 = vmatpush1.msra.mxu0 0.0
        %5839 = vmatprep.subr.mxu0 0.0
        %5840 = vmatpush1.msra.mxu0 0.0
        %5841 = vmatprep.subr.mxu0 0.0
        %5842 = vmatpush1.msra.mxu0 0.0
        %5843 = vmatprep.subr.mxu0 0.0
        %5844 = vmatpush1.msra.mxu0 0.0
        %5845 = vmatprep.subr.mxu0 0.0
        %5846 = vmatpush1.msra.mxu0 0.0
        %5847 = vmatprep.subr.mxu0 0.0
        %5848 = vmatpush1.msra.mxu0 0.0
        %5849 = vmatprep.subr.mxu0 0.0
        %5850 = vmatpush1.msra.mxu0 0.0
        %5851 = vmatprep.subr.mxu0 0.0
        %5852 = vmatpush1.msra.mxu0 0.0
        %5853 = vmatprep.subr.mxu0 0.0
        %5854 = vmatpush1.msra.mxu0 0.0
        %5855 = vmatprep.subr.mxu0 0.0
        %5856 = vmatpush1.msra.mxu0 0.0
        %5857 = vmatprep.mubr.f32.mxu0 0.0
        %5858 = vmatmul.mubr.f32.gmra.mrb[0].mxu0 %v1295
        %v5859 = vpop.f32.mrb[0].mxu0
        %v5860 = vadd.f32 %v5791, %v5859
        %v5861 = vpop.f32.mrb[0].mxu0
        %5862 = vmatprep.mubr.f32.mxu0 0.0
        %5863 = vmatmul.mubr.f32.gmra.mrb[0].mxu0 %v1298
        %v5864 = vpop.f32.mrb[0].mxu0
        %v5865 = vadd.f32 %v5791, %v5864
        %v5866 = vpop.f32.mrb[0].mxu0
        %5867 = vdwg.mxu0
        %v5869 = vsel %vm1375, %v5689, 0
        %v5872 = vsel %vm1375, %v5772, 0
        %v5875 = vsel %vm1375, %v5777, 0
        %5877 = vmatprep.subr.mxu0 0.0
        %5878 = vmatpush1.xpose.msra.mxu0 %v5872
        %5879 = vmatprep.subr.mxu0 0.0
        %5880 = vmatpush1.xpose.msra.mxu0 %v5875
        %5881 = vmatprep.subr.mxu0 0.0
        %5882 = vmatpush1.xpose.msra.mxu0 0.0
        %5883 = vmatprep.subr.mxu0 0.0
        %5884 = vmatpush1.xpose.msra.mxu0 0.0
        %5885 = vmatprep.subr.mxu0 0.0
        %5886 = vmatpush1.xpose.msra.mxu0 0.0
        %5887 = vmatprep.subr.mxu0 0.0
        %5888 = vmatpush1.xpose.msra.mxu0 0.0
        %5889 = vmatprep.subr.mxu0 0.0
        %5890 = vmatpush1.xpose.msra.mxu0 0.0
        %5891 = vmatprep.subr.mxu0 0.0
        %5892 = vmatpush1.xpose.msra.mxu0 0.0
        %5893 = vmatprep.subr.mxu0 0.0
        %5894 = vmatpush1.xpose.msra.mxu0 0.0
        %5895 = vmatprep.subr.mxu0 0.0
        %5896 = vmatpush1.xpose.msra.mxu0 0.0
        %5897 = vmatprep.subr.mxu0 0.0
        %5898 = vmatpush1.xpose.msra.mxu0 0.0
        %5899 = vmatprep.subr.mxu0 0.0
        %5900 = vmatpush1.xpose.msra.mxu0 0.0
        %5901 = vmatprep.subr.mxu0 0.0
        %5902 = vmatpush1.xpose.msra.mxu0 0.0
        %5903 = vmatprep.subr.mxu0 0.0
        %5904 = vmatpush1.xpose.msra.mxu0 0.0
        %5905 = vmatprep.subr.mxu0 0.0
        %5906 = vmatpush1.xpose.msra.mxu0 0.0
        %5907 = vmatprep.subr.mxu0 0.0
        %5908 = vmatpush1.xpose.msra.mxu0 0.0
        %5909 = vmatprep.subr.mxu0 0.0
        %5910 = vmatpush1.xpose.msra.mxu0 0.0
        %5911 = vmatprep.subr.mxu0 0.0
        %5912 = vmatpush1.xpose.msra.mxu0 0.0
        %5913 = vmatprep.subr.mxu0 0.0
        %5914 = vmatpush1.xpose.msra.mxu0 0.0
        %5915 = vmatprep.subr.mxu0 0.0
        %5916 = vmatpush1.xpose.msra.mxu0 0.0
        %5917 = vmatprep.subr.mxu0 0.0
        %5918 = vmatpush1.xpose.msra.mxu0 0.0
        %5919 = vmatprep.subr.mxu0 0.0
        %5920 = vmatpush1.xpose.msra.mxu0 0.0
        %5921 = vmatprep.subr.mxu0 0.0
        %5922 = vmatpush1.xpose.msra.mxu0 0.0
        %5923 = vmatprep.subr.mxu0 0.0
        %5924 = vmatpush1.xpose.msra.mxu0 0.0
        %5925 = vmatprep.subr.mxu0 0.0
        %5926 = vmatpush1.xpose.msra.mxu0 0.0
        %5927 = vmatprep.subr.mxu0 0.0
        %5928 = vmatpush1.xpose.msra.mxu0 0.0
        %5929 = vmatprep.subr.mxu0 0.0
        %5930 = vmatpush1.xpose.msra.mxu0 0.0
        %5931 = vmatprep.subr.mxu0 0.0
        %5932 = vmatpush1.xpose.msra.mxu0 0.0
        %5933 = vmatprep.subr.mxu0 0.0
        %5934 = vmatpush1.xpose.msra.mxu0 0.0
        %5935 = vmatprep.subr.mxu0 0.0
        %5936 = vmatpush1.xpose.msra.mxu0 0.0
        %5937 = vmatprep.subr.mxu0 0.0
        %5938 = vmatpush1.xpose.msra.mxu0 0.0
        %5939 = vmatprep.subr.mxu0 0.0
        %5940 = vmatpush1.xpose.msra.mxu0 0.0
        %5941 = vmatprep.mubr.f32.mxu0 0.0
        %5942 = vmatmul.mubr.f32.gmra.mrb[0].mxu0 %v5869
        %v5943 = vpop.f32.mrb[0].mxu0
        %v5944 = vadd.f32 0.0, %v5943
        %v5945 = vpop.f32.mrb[0].mxu0
        %5946 = vdwg.mxu0
        %v5947 = vsel %vm1455, %v5944, -inf
        %5948 = vmax.xlane.f32.xlu0 %v5947
        %v5949 = vpop.xlane.xlu0 %5948
        %v5950 = vsub.f32 %v5944, %v5949
        %v5951 = vmul.f32 %v5950, 1.442695
        %v5952 = vpow.pop %v5951
        %v5953 = vsel %vm1455, %v5952, 0.0
        %5954 = vadd.xlane.f32.xlu0 %v5953
        %v5955 = vpop.xlane.xlu0 %5954
        %v5956 = vrcp.pop %v5955
        %v5957 = vmul.f32 %v5952, %v5956
        %v5959 = vsel %vm1455, %v5957, 0
        %5961 = vmatprep.subr.mxu0 0.0
        %5962 = vmatpush1.msra.mxu0 %v5860
        %5963 = vmatprep.subr.mxu0 0.0
        %5964 = vmatpush1.msra.mxu0 %v5865
        %5965 = vmatprep.subr.mxu0 0.0
        %5966 = vmatpush1.msra.mxu0 0.0
        %5967 = vmatprep.subr.mxu0 0.0
        %5968 = vmatpush1.msra.mxu0 0.0
        %5969 = vmatprep.subr.mxu0 0.0
        %5970 = vmatpush1.msra.mxu0 0.0
        %5971 = vmatprep.subr.mxu0 0.0
        %5972 = vmatpush1.msra.mxu0 0.0
        %5973 = vmatprep.subr.mxu0 0.0
        %5974 = vmatpush1.msra.mxu0 0.0
        %5975 = vmatprep.subr.mxu0 0.0
        %5976 = vmatpush1.msra.mxu0 0.0
        %5977 = vmatprep.subr.mxu0 0.0
        %5978 = vmatpush1.msra.mxu0 0.0
        %5979 = vmatprep.subr.mxu0 0.0
        %5980 = vmatpush1.msra.mxu0 0.0
        %5981 = vmatprep.subr.mxu0 0.0
        %5982 = vmatpush1.msra.mxu0 0.0
        %5983 = vmatprep.subr.mxu0 0.0
        %5984 = vmatpush1.msra.mxu0 0.0
        %5985 = vmatprep.subr.mxu0 0.0
        %5986 = vmatpush1.msra.mxu0 0.0
        %5987 = vmatprep.subr.mxu0 0.0
        %5988 = vmatpush1.msra.mxu0 0.0
        %5989 = vmatprep.subr.mxu0 0.0
        %5990 = vmatpush1.msra.mxu0 0.0
        %5991 = vmatprep.subr.mxu0 0.0
        %5992 = vmatpush1.msra.mxu0 0.0
        %5993 = vmatprep.subr.mxu0 0.0
        %5994 = vmatpush1.msra.mxu0 0.0
        %5995 = vmatprep.subr.mxu0 0.0
        %5996 = vmatpush1.msra.mxu0 0.0
        %5997 = vmatprep.subr.mxu0 0.0
        %5998 = vmatpush1.msra.mxu0 0.0
        %5999 = vmatprep.subr.mxu0 0.0
        %6000 = vmatpush1.msra.mxu0 0.0
        %6001 = vmatprep.subr.mxu0 0.0
        %6002 = vmatpush1.msra.mxu0 0.0
        %6003 = vmatprep.subr.mxu0 0.0
        %6004 = vmatpush1.msra.mxu0 0.0
        %6005 = vmatprep.subr.mxu0 0.0
        %6006 = vmatpush1.msra.mxu0 0.0
        %6007 = vmatprep.subr.mxu0 0.0
        %6008 = vmatpush1.msra.mxu0 0.0
        %6009 = vmatprep.subr.mxu0 0.0
        %6010 = vmatpush1.msra.mxu0 0.0
        %6011 = vmatprep.subr.mxu0 0.0
        %6012 = vmatpush1.msra.mxu0 0.0
        %6013 = vmatprep.subr.mxu0 0.0
        %6014 = vmatpush1.msra.mxu0 0.0
        %6015 = vmatprep.subr.mxu0 0.0
        %6016 = vmatpush1.msra.mxu0 0.0
        %6017 = vmatprep.subr.mxu0 0.0
        %6018 = vmatpush1.msra.mxu0 0.0
        %6019 = vmatprep.subr.mxu0 0.0
        %6020 = vmatpush1.msra.mxu0 0.0
        %6021 = vmatprep.subr.mxu0 0.0
        %6022 = vmatpush1.msra.mxu0 0.0
        %6023 = vmatprep.subr.mxu0 0.0
        %6024 = vmatpush1.msra.mxu0 0.0
        %6025 = vmatprep.mubr.f32.mxu0 0.0
        %6026 = vmatmul.mubr.f32.gmra.mrb[0].mxu0 %v5959
        %v6027 = vpop.f32.mrb[0].mxu0
        %v6028 = vadd.f32 0.0, %v6027
        %v6029 = vpop.f32.mrb[0].mxu0
        %6030 = vdwg.mxu0
        %v6031 = vadd.f32 %v5606, %v6028
        %s6032 = scalar_lea.vmem %s13, 224
        %v6033 = vld [vmem:[%s6032] sm:$0xff]
        %v6034 = vld [vmem:[%s6032 + $0x8] sm:$0xff]
        %v6035 = vld [vmem:[%s6032 + $0x10] sm:$0xff]
        %v6036 = vld [vmem:[%s6032 + $0x18] sm:$0xff]
        %s6037 = scalar_lea.vmem %s15, 7
        %v6038 = vld [vmem:[%s6037] sm:$0x1]
        %v6040 = vlaneseq
        %v6041 = vshrl.u32 %v6040, 7
        %v6042 = vsub.s32 0, %v6041
        %v6043 = vrot.slane %v6038, %v6042
        %6045 = vmatprep.subr.mxu0 0.0
        %6046 = vmatpush1.msra.mxu0 %v6033
        %6047 = vmatprep.subr.mxu0 0.0
        %6048 = vmatpush1.msra.mxu0 %v6034
        %6049 = vmatprep.subr.mxu0 0.0
        %6050 = vmatpush1.msra.mxu0 %v6035
        %6051 = vmatprep.subr.mxu0 0.0
        %6052 = vmatpush1.msra.mxu0 %v6036
        %6053 = vmatprep.subr.mxu0 0.0
        %6054 = vmatpush1.msra.mxu0 0.0
        %6055 = vmatprep.subr.mxu0 0.0
        %6056 = vmatpush1.msra.mxu0 0.0
        %6057 = vmatprep.subr.mxu0 0.0
        %6058 = vmatpush1.msra.mxu0 0.0
        %6059 = vmatprep.subr.mxu0 0.0
        %6060 = vmatpush1.msra.mxu0 0.0
        %6061 = vmatprep.subr.mxu0 0.0
        %6062 = vmatpush1.msra.mxu0 0.0
        %6063 = vmatprep.subr.mxu0 0.0
        %6064 = vmatpush1.msra.mxu0 0.0
        %6065 = vmatprep.subr.mxu0 0.0
        %6066 = vmatpush1.msra.mxu0 0.0
        %6067 = vmatprep.subr.mxu0 0.0
        %6068 = vmatpush1.msra.mxu0 0.0
        %6069 = vmatprep.subr.mxu0 0.0
        %6070 = vmatpush1.msra.mxu0 0.0
        %6071 = vmatprep.subr.mxu0 0.0
        %6072 = vmatpush1.msra.mxu0 0.0
        %6073 = vmatprep.subr.mxu0 0.0
        %6074 = vmatpush1.msra.mxu0 0.0
        %6075 = vmatprep.subr.mxu0 0.0
        %6076 = vmatpush1.msra.mxu0 0.0
        %6077 = vmatprep.subr.mxu0 0.0
        %6078 = vmatpush1.msra.mxu0 0.0
        %6079 = vmatprep.subr.mxu0 0.0
        %6080 = vmatpush1.msra.mxu0 0.0
        %6081 = vmatprep.subr.mxu0 0.0
        %6082 = vmatpush1.msra.mxu0 0.0
        %6083 = vmatprep.subr.mxu0 0.0
        %6084 = vmatpush1.msra.mxu0 0.0
        %6085 = vmatprep.subr.mxu0 0.0
        %6086 = vmatpush1.msra.mxu0 0.0
        %6087 = vmatprep.subr.mxu0 0.0
        %6088 = vmatpush1.msra.mxu0 0.0
        %6089 = vmatprep.subr.mxu0 0.0
        %6090 = vmatpush1.msra.mxu0 0.0
        %6091 = vmatprep.subr.mxu0 0.0
        %6092 = vmatpush1.msra.mxu0 0.0
        %6093 = vmatprep.subr.mxu0 0.0
        %6094 = vmatpush1.msra.mxu0 0.0
        %6095 = vmatprep.subr.mxu0 0.0
        %6096 = vmatpush1.msra.mxu0 0.0
        %6097 = vmatprep.subr.mxu0 0.0
        %6098 = vmatpush1.msra.mxu0 0.0
        %6099 = vmatprep.subr.mxu0 0.0
        %6100 = vmatpush1.msra.mxu0 0.0
        %6101 = vmatprep.subr.mxu0 0.0
        %6102 = vmatpush1.msra.mxu0 0.0
        %6103 = vmatprep.subr.mxu0 0.0
        %6104 = vmatpush1.msra.mxu0 0.0
        %6105 = vmatprep.subr.mxu0 0.0
        %6106 = vmatpush1.msra.mxu0 0.0
        %6107 = vmatprep.subr.mxu0 0.0
        %6108 = vmatpush1.msra.mxu0 0.0
        %6109 = vmatprep.mubr.f32.mxu0 0.0
        %6110 = vmatmul.mubr.f32.gmra.mrb[0].mxu0 %v4776
        %v6111 = vpop.f32.mrb[0].mxu0
        %v6112 = vadd.f32 %v6043, %v6111
        %v6113 = vpop.f32.mrb[0].mxu0
        %6114 = vdwg.mxu0
        %s6115 = scalar_lea.vmem %s17, 224
        %v6116 = vld [vmem:[%s6115] sm:$0xff]
        %v6117 = vld [vmem:[%s6115 + $0x8] sm:$0xff]
        %v6118 = vld [vmem:[%s6115 + $0x10] sm:$0xff]
        %v6119 = vld [vmem:[%s6115 + $0x18] sm:$0xff]
        %s6120 = scalar_lea.vmem %s19, 7
        %v6121 = vld [vmem:[%s6120] sm:$0x1]
        %v6123 = vlaneseq
        %v6124 = vshrl.u32 %v6123, 7
        %v6125 = vsub.s32 0, %v6124
        %v6126 = vrot.slane %v6121, %v6125
        %6128 = vmatprep.subr.mxu0 0.0
        %6129 = vmatpush1.msra.mxu0 %v6116
        %6130 = vmatprep.subr.mxu0 0.0
        %6131 = vmatpush1.msra.mxu0 %v6117
        %6132 = vmatprep.subr.mxu0 0.0
        %6133 = vmatpush1.msra.mxu0 %v6118
        %6134 = vmatprep.subr.mxu0 0.0
        %6135 = vmatpush1.msra.mxu0 %v6119
        %6136 = vmatprep.subr.mxu0 0.0
        %6137 = vmatpush1.msra.mxu0 0.0
        %6138 = vmatprep.subr.mxu0 0.0
        %6139 = vmatpush1.msra.mxu0 0.0
        %6140 = vmatprep.subr.mxu0 0.0
        %6141 = vmatpush1.msra.mxu0 0.0
        %6142 = vmatprep.subr.mxu0 0.0
        %6143 = vmatpush1.msra.mxu0 0.0
        %6144 = vmatprep.subr.mxu0 0.0
        %6145 = vmatpush1.msra.mxu0 0.0
        %6146 = vmatprep.subr.mxu0 0.0
        %6147 = vmatpush1.msra.mxu0 0.0
        %6148 = vmatprep.subr.mxu0 0.0
        %6149 = vmatpush1.msra.mxu0 0.0
        %6150 = vmatprep.subr.mxu0 0.0
        %6151 = vmatpush1.msra.mxu0 0.0
        %6152 = vmatprep.subr.mxu0 0.0
        %6153 = vmatpush1.msra.mxu0 0.0
        %6154 = vmatprep.subr.mxu0 0.0
        %6155 = vmatpush1.msra.mxu0 0.0
        %6156 = vmatprep.subr.mxu0 0.0
        %6157 = vmatpush1.msra.mxu0 0.0
        %6158 = vmatprep.subr.mxu0 0.0
        %6159 = vmatpush1.msra.mxu0 0.0
        %6160 = vmatprep.subr.mxu0 0.0
        %6161 = vmatpush1.msra.mxu0 0.0
        %6162 = vmatprep.subr.mxu0 0.0
        %6163 = vmatpush1.msra.mxu0 0.0
        %6164 = vmatprep.subr.mxu0 0.0
        %6165 = vmatpush1.msra.mxu0 0.0
        %6166 = vmatprep.subr.mxu0 0.0
        %6167 = vmatpush1.msra.mxu0 0.0
        %6168 = vmatprep.subr.mxu0 0.0
        %6169 = vmatpush1.msra.mxu0 0.0
        %6170 = vmatprep.subr.mxu0 0.0
        %6171 = vmatpush1.msra.mxu0 0.0
        %6172 = vmatprep.subr.mxu0 0.0
        %6173 = vmatpush1.msra.mxu0 0.0
        %6174 = vmatprep.subr.mxu0 0.0
        %6175 = vmatpush1.msra.mxu0 0.0
        %6176 = vmatprep.subr.mxu0 0.0
        %6177 = vmatpush1.msra.mxu0 0.0
        %6178 = vmatprep.subr.mxu0 0.0
        %6179 = vmatpush1.msra.mxu0 0.0
        %6180 = vmatprep.subr.mxu0 0.0
        %6181 = vmatpush1.msra.mxu0 0.0
        %6182 = vmatprep.subr.mxu0 0.0
        %6183 = vmatpush1.msra.mxu0 0.0
        %6184 = vmatprep.subr.mxu0 0.0
        %6185 = vmatpush1.msra.mxu0 0.0
        %6186 = vmatprep.subr.mxu0 0.0
        %6187 = vmatpush1.msra.mxu0 0.0
        %6188 = vmatprep.subr.mxu0 0.0
        %6189 = vmatpush1.msra.mxu0 0.0
        %6190 = vmatprep.subr.mxu0 0.0
        %6191 = vmatpush1.msra.mxu0 0.0
        %6192 = vmatprep.mubr.f32.mxu0 0.0
        %6193 = vmatmul.mubr.f32.gmra.mrb[0].mxu0 %v1203
        %v6194 = vpop.f32.mrb[0].mxu0
        %v6195 = vadd.f32 %v6126, %v6194
        %v6196 = vpop.f32.mrb[0].mxu0
        %6197 = vmatprep.mubr.f32.mxu0 0.0
        %6198 = vmatmul.mubr.f32.gmra.mrb[0].mxu0 %v1206
        %v6199 = vpop.f32.mrb[0].mxu0
        %v6200 = vadd.f32 %v6126, %v6199
        %v6201 = vpop.f32.mrb[0].mxu0
        %6202 = vdwg.mxu0
        %s6203 = scalar_lea.vmem %s21, 224
        %v6204 = vld [vmem:[%s6203] sm:$0xff]
        %v6205 = vld [vmem:[%s6203 + $0x8] sm:$0xff]
        %v6206 = vld [vmem:[%s6203 + $0x10] sm:$0xff]
        %v6207 = vld [vmem:[%s6203 + $0x18] sm:$0xff]
        %s6208 = scalar_lea.vmem %s23, 7
        %v6209 = vld [vmem:[%s6208] sm:$0x1]
        %v6211 = vlaneseq
        %v6212 = vshrl.u32 %v6211, 7
        %v6213 = vsub.s32 0, %v6212
        %v6214 = vrot.slane %v6209, %v6213
        %6216 = vmatprep.subr.mxu0 0.0
        %6217 = vmatpush1.msra.mxu0 %v6204
        %6218 = vmatprep.subr.mxu0 0.0
        %6219 = vmatpush1.msra.mxu0 %v6205
        %6220 = vmatprep.subr.mxu0 0.0
        %6221 = vmatpush1.msra.mxu0 %v6206
        %6222 = vmatprep.subr.mxu0 0.0
        %6223 = vmatpush1.msra.mxu0 %v6207
        %6224 = vmatprep.subr.mxu0 0.0
        %6225 = vmatpush1.msra.mxu0 0.0
        %6226 = vmatprep.subr.mxu0 0.0
        %6227 = vmatpush1.msra.mxu0 0.0
        %6228 = vmatprep.subr.mxu0 0.0
        %6229 = vmatpush1.msra.mxu0 0.0
        %6230 = vmatprep.subr.mxu0 0.0
        %6231 = vmatpush1.msra.mxu0 0.0
        %6232 = vmatprep.subr.mxu0 0.0
        %6233 = vmatpush1.msra.mxu0 0.0
        %6234 = vmatprep.subr.mxu0 0.0
        %6235 = vmatpush1.msra.mxu0 0.0
        %6236 = vmatprep.subr.mxu0 0.0
        %6237 = vmatpush1.msra.mxu0 0.0
        %6238 = vmatprep.subr.mxu0 0.0
        %6239 = vmatpush1.msra.mxu0 0.0
        %6240 = vmatprep.subr.mxu0 0.0
        %6241 = vmatpush1.msra.mxu0 0.0
        %6242 = vmatprep.subr.mxu0 0.0
        %6243 = vmatpush1.msra.mxu0 0.0
        %6244 = vmatprep.subr.mxu0 0.0
        %6245 = vmatpush1.msra.mxu0 0.0
        %6246 = vmatprep.subr.mxu0 0.0
        %6247 = vmatpush1.msra.mxu0 0.0
        %6248 = vmatprep.subr.mxu0 0.0
        %6249 = vmatpush1.msra.mxu0 0.0
        %6250 = vmatprep.subr.mxu0 0.0
        %6251 = vmatpush1.msra.mxu0 0.0
        %6252 = vmatprep.subr.mxu0 0.0
        %6253 = vmatpush1.msra.mxu0 0.0
        %6254 = vmatprep.subr.mxu0 0.0
        %6255 = vmatpush1.msra.mxu0 0.0
        %6256 = vmatprep.subr.mxu0 0.0
        %6257 = vmatpush1.msra.mxu0 0.0
        %6258 = vmatprep.subr.mxu0 0.0
        %6259 = vmatpush1.msra.mxu0 0.0
        %6260 = vmatprep.subr.mxu0 0.0
        %6261 = vmatpush1.msra.mxu0 0.0
        %6262 = vmatprep.subr.mxu0 0.0
        %6263 = vmatpush1.msra.mxu0 0.0
        %6264 = vmatprep.subr.mxu0 0.0
        %6265 = vmatpush1.msra.mxu0 0.0
        %6266 = vmatprep.subr.mxu0 0.0
        %6267 = vmatpush1.msra.mxu0 0.0
        %6268 = vmatprep.subr.mxu0 0.0
        %6269 = vmatpush1.msra.mxu0 0.0
        %6270 = vmatprep.subr.mxu0 0.0
        %6271 = vmatpush1.msra.mxu0 0.0
        %6272 = vmatprep.subr.mxu0 0.0
        %6273 = vmatpush1.msra.mxu0 0.0
        %6274 = vmatprep.subr.mxu0 0.0
        %6275 = vmatpush1.msra.mxu0 0.0
        %6276 = vmatprep.subr.mxu0 0.0
        %6277 = vmatpush1.msra.mxu0 0.0
        %6278 = vmatprep.subr.mxu0 0.0
        %6279 = vmatpush1.msra.mxu0 0.0
        %6280 = vmatprep.mubr.f32.mxu0 0.0
        %6281 = vmatmul.mubr.f32.gmra.mrb[0].mxu0 %v1295
        %v6282 = vpop.f32.mrb[0].mxu0
        %v6283 = vadd.f32 %v6214, %v6282
        %v6284 = vpop.f32.mrb[0].mxu0
        %6285 = vmatprep.mubr.f32.mxu0 0.0
        %6286 = vmatmul.mubr.f32.gmra.mrb[0].mxu0 %v1298
        %v6287 = vpop.f32.mrb[0].mxu0
        %v6288 = vadd.f32 %v6214, %v6287
        %v6289 = vpop.f32.mrb[0].mxu0
        %6290 = vdwg.mxu0
        %v6292 = vsel %vm1375, %v6112, 0
        %v6295 = vsel %vm1375, %v6195, 0
        %v6298 = vsel %vm1375, %v6200, 0
        %6300 = vmatprep.subr.mxu0 0.0
        %6301 = vmatpush1.xpose.msra.mxu0 %v6295
        %6302 = vmatprep.subr.mxu0 0.0
        %6303 = vmatpush1.xpose.msra.mxu0 %v6298
        %6304 = vmatprep.subr.mxu0 0.0
        %6305 = vmatpush1.xpose.msra.mxu0 0.0
        %6306 = vmatprep.subr.mxu0 0.0
        %6307 = vmatpush1.xpose.msra.mxu0 0.0
        %6308 = vmatprep.subr.mxu0 0.0
        %6309 = vmatpush1.xpose.msra.mxu0 0.0
        %6310 = vmatprep.subr.mxu0 0.0
        %6311 = vmatpush1.xpose.msra.mxu0 0.0
        %6312 = vmatprep.subr.mxu0 0.0
        %6313 = vmatpush1.xpose.msra.mxu0 0.0
        %6314 = vmatprep.subr.mxu0 0.0
        %6315 = vmatpush1.xpose.msra.mxu0 0.0
        %6316 = vmatprep.subr.mxu0 0.0
        %6317 = vmatpush1.xpose.msra.mxu0 0.0
        %6318 = vmatprep.subr.mxu0 0.0
        %6319 = vmatpush1.xpose.msra.mxu0 0.0
        %6320 = vmatprep.subr.mxu0 0.0
        %6321 = vmatpush1.xpose.msra.mxu0 0.0
        %6322 = vmatprep.subr.mxu0 0.0
        %6323 = vmatpush1.xpose.msra.mxu0 0.0
        %6324 = vmatprep.subr.mxu0 0.0
        %6325 = vmatpush1.xpose.msra.mxu0 0.0
        %6326 = vmatprep.subr.mxu0 0.0
        %6327 = vmatpush1.xpose.msra.mxu0 0.0
        %6328 = vmatprep.subr.mxu0 0.0
        %6329 = vmatpush1.xpose.msra.mxu0 0.0
        %6330 = vmatprep.subr.mxu0 0.0
        %6331 = vmatpush1.xpose.msra.mxu0 0.0
        %6332 = vmatprep.subr.mxu0 0.0
        %6333 = vmatpush1.xpose.msra.mxu0 0.0
        %6334 = vmatprep.subr.mxu0 0.0
        %6335 = vmatpush1.xpose.msra.mxu0 0.0
        %6336 = vmatprep.subr.mxu0 0.0
        %6337 = vmatpush1.xpose.msra.mxu0 0.0
        %6338 = vmatprep.subr.mxu0 0.0
        %6339 = vmatpush1.xpose.msra.mxu0 0.0
        %6340 = vmatprep.subr.mxu0 0.0
        %6341 = vmatpush1.xpose.msra.mxu0 0.0
        %6342 = vmatprep.subr.mxu0 0.0
        %6343 = vmatpush1.xpose.msra.mxu0 0.0
        %6344 = vmatprep.subr.mxu0 0.0
        %6345 = vmatpush1.xpose.msra.mxu0 0.0
        %6346 = vmatprep.subr.mxu0 0.0
        %6347 = vmatpush1.xpose.msra.mxu0 0.0
        %6348 = vmatprep.subr.mxu0 0.0
        %6349 = vmatpush1.xpose.msra.mxu0 0.0
        %6350 = vmatprep.subr.mxu0 0.0
        %6351 = vmatpush1.xpose.msra.mxu0 0.0
        %6352 = vmatprep.subr.mxu0 0.0
        %6353 = vmatpush1.xpose.msra.mxu0 0.0
        %6354 = vmatprep.subr.mxu0 0.0
        %6355 = vmatpush1.xpose.msra.mxu0 0.0
        %6356 = vmatprep.subr.mxu0 0.0
        %6357 = vmatpush1.xpose.msra.mxu0 0.0
        %6358 = vmatprep.subr.mxu0 0.0
        %6359 = vmatpush1.xpose.msra.mxu0 0.0
        %6360 = vmatprep.subr.mxu0 0.0
        %6361 = vmatpush1.xpose.msra.mxu0 0.0
        %6362 = vmatprep.subr.mxu0 0.0
        %6363 = vmatpush1.xpose.msra.mxu0 0.0
        %6364 = vmatprep.mubr.f32.mxu0 0.0
        %6365 = vmatmul.mubr.f32.gmra.mrb[0].mxu0 %v6292
        %v6366 = vpop.f32.mrb[0].mxu0
        %v6367 = vadd.f32 0.0, %v6366
        %v6368 = vpop.f32.mrb[0].mxu0
        %6369 = vdwg.mxu0
        %v6370 = vsel %vm1455, %v6367, -inf
        %6371 = vmax.xlane.f32.xlu0 %v6370
        %v6372 = vpop.xlane.xlu0 %6371
        %v6373 = vsub.f32 %v6367, %v6372
        %v6374 = vmul.f32 %v6373, 1.442695
        %v6375 = vpow.pop %v6374
        %v6376 = vsel %vm1455, %v6375, 0.0
        %6377 = vadd.xlane.f32.xlu0 %v6376
        %v6378 = vpop.xlane.xlu0 %6377
        %v6379 = vrcp.pop %v6378
        %v6380 = vmul.f32 %v6375, %v6379
        %v6382 = vsel %vm1455, %v6380, 0
        %6384 = vmatprep.subr.mxu0 0.0
        %6385 = vmatpush1.msra.mxu0 %v6283
        %6386 = vmatprep.subr.mxu0 0.0
        %6387 = vmatpush1.msra.mxu0 %v6288
        %6388 = vmatprep.subr.mxu0 0.0
        %6389 = vmatpush1.msra.mxu0 0.0
        %6390 = vmatprep.subr.mxu0 0.0
        %6391 = vmatpush1.msra.mxu0 0.0
        %6392 = vmatprep.subr.mxu0 0.0
        %6393 = vmatpush1.msra.mxu0 0.0
        %6394 = vmatprep.subr.mxu0 0.0
        %6395 = vmatpush1.msra.mxu0 0.0
        %6396 = vmatprep.subr.mxu0 0.0
        %6397 = vmatpush1.msra.mxu0 0.0
        %6398 = vmatprep.subr.mxu0 0.0
        %6399 = vmatpush1.msra.mxu0 0.0
        %6400 = vmatprep.subr.mxu0 0.0
        %6401 = vmatpush1.msra.mxu0 0.0
        %6402 = vmatprep.subr.mxu0 0.0
        %6403 = vmatpush1.msra.mxu0 0.0
        %6404 = vmatprep.subr.mxu0 0.0
        %6405 = vmatpush1.msra.mxu0 0.0
        %6406 = vmatprep.subr.mxu0 0.0
        %6407 = vmatpush1.msra.mxu0 0.0
        %6408 = vmatprep.subr.mxu0 0.0
        %6409 = vmatpush1.msra.mxu0 0.0
        %6410 = vmatprep.subr.mxu0 0.0
        %6411 = vmatpush1.msra.mxu0 0.0
        %6412 = vmatprep.subr.mxu0 0.0
        %6413 = vmatpush1.msra.mxu0 0.0
        %6414 = vmatprep.subr.mxu0 0.0
        %6415 = vmatpush1.msra.mxu0 0.0
        %6416 = vmatprep.subr.mxu0 0.0
        %6417 = vmatpush1.msra.mxu0 0.0
        %6418 = vmatprep.subr.mxu0 0.0
        %6419 = vmatpush1.msra.mxu0 0.0
        %6420 = vmatprep.subr.mxu0 0.0
        %6421 = vmatpush1.msra.mxu0 0.0
        %6422 = vmatprep.subr.mxu0 0.0
        %6423 = vmatpush1.msra.mxu0 0.0
        %6424 = vmatprep.subr.mxu0 0.0
        %6425 = vmatpush1.msra.mxu0 0.0
        %6426 = vmatprep.subr.mxu0 0.0
        %6427 = vmatpush1.msra.mxu0 0.0
        %6428 = vmatprep.subr.mxu0 0.0
        %6429 = vmatpush1.msra.mxu0 0.0
        %6430 = vmatprep.subr.mxu0 0.0
        %6431 = vmatpush1.msra.mxu0 0.0
        %6432 = vmatprep.subr.mxu0 0.0
        %6433 = vmatpush1.msra.mxu0 0.0
        %6434 = vmatprep.subr.mxu0 0.0
        %6435 = vmatpush1.msra.mxu0 0.0
        %6436 = vmatprep.subr.mxu0 0.0
        %6437 = vmatpush1.msra.mxu0 0.0
        %6438 = vmatprep.subr.mxu0 0.0
        %6439 = vmatpush1.msra.mxu0 0.0
        %6440 = vmatprep.subr.mxu0 0.0
        %6441 = vmatpush1.msra.mxu0 0.0
        %6442 = vmatprep.subr.mxu0 0.0
        %6443 = vmatpush1.msra.mxu0 0.0
        %6444 = vmatprep.subr.mxu0 0.0
        %6445 = vmatpush1.msra.mxu0 0.0
        %6446 = vmatprep.subr.mxu0 0.0
        %6447 = vmatpush1.msra.mxu0 0.0
        %6448 = vmatprep.mubr.f32.mxu0 0.0
        %6449 = vmatmul.mubr.f32.gmra.mrb[0].mxu0 %v6382
        %v6450 = vpop.f32.mrb[0].mxu0
        %v6451 = vadd.f32 0.0, %v6450
        %v6452 = vpop.f32.mrb[0].mxu0
        %6453 = vdwg.mxu0
        %v6454 = vadd.f32 %v6031, %v6451
        %s6455 = scalar_lea.vmem %s25, 1
        %v6456 = vld [vmem:[%s6455] sm:$0x1]
        %v6458 = vlaneseq
        %v6459 = vshrl.u32 %v6458, 7
        %v6460 = vsub.s32 0, %v6459
        %v6461 = vrot.slane %v6456, %v6460
        %v6463 = vadd.f32 %v6454, %v6461
        %s6464 = scalar_lea.vmem %s27, 1
        %v6465 = vld [vmem:[%s6464] sm:$0x1]
        %v6467 = vlaneseq
        %v6468 = vshrl.u32 %v6467, 7
        %v6469 = vsub.s32 0, %v6468
        %v6470 = vrot.slane %v6465, %v6469
        %v6472 = vmul.f32 %v6470, %v6463
        %v6473 = vadd.f32 %v4730, %v6472
        %s6474 = scalar_lea.vmem %s29, 1
        %v6475 = vld [vmem:[%s6474] sm:$0x1]
        %s6476 = scalar_lea.vmem %s31, 1
        %v6477 = vld [vmem:[%s6476] sm:$0x1]
        %v6478 = vsel %vm1078, %v6473, 0.0
        %6479 = vadd.xlane.f32.xlu0 %v6478
        %v6480 = vpop.xlane.xlu0 %6479
        %v6481 = vmul.f32 %v6480, %v1082
        %v6482 = vsub.f32 %v6473, %v6481
        %v6483 = vmul.f32 %v6482, %v6482
        %v6484 = vsel %vm1078, %v6483, 0.0
        %6485 = vadd.xlane.f32.xlu0 %v6484
        %v6486 = vpop.xlane.xlu0 %6485
        %v6487 = vmul.f32 %v6486, %v1082
        %v6488 = vadd.f32 %v6487, 1e-05
        %v6489 = vrsqrt.pop %v6488
        %v6490 = vmul.f32 %v6482, %v6489
        %v6492 = vlaneseq
        %v6493 = vshrl.u32 %v6492, 7
        %v6494 = vsub.s32 0, %v6493
        %v6495 = vrot.slane %v6475, %v6494
        %v6497 = vmul.f32 %v6490, %v6495
        %v6499 = vlaneseq
        %v6500 = vshrl.u32 %v6499, 7
        %v6501 = vsub.s32 0, %v6500
        %v6502 = vrot.slane %v6477, %v6501
        %v6504 = vadd.f32 %v6497, %v6502
        %s6505 = scalar_lea.vmem %s33, 128
        %v6506 = vld [vmem:[%s6505] sm:$0xff]
        %v6507 = vld [vmem:[%s6505 + $0x8] sm:$0xff]
        %v6508 = vld [vmem:[%s6505 + $0x10] sm:$0xff]
        %v6509 = vld [vmem:[%s6505 + $0x18] sm:$0xff]
        %s6510 = scalar_lea.vmem %s35, 4
        %v6511 = vld [vmem:[%s6510] sm:$0x1]
        %v6513 = vlaneseq
        %v6514 = vshrl.u32 %v6513, 7
        %v6515 = vsub.s32 0, %v6514
        %v6516 = vrot.slane %v6511, %v6515
        %v6519 = vsel %vm1078, %v6504, 0
        %6521 = vmatprep.subr.mxu0 0.0
        %6522 = vmatpush1.msra.mxu0 %v6506
        %6523 = vmatprep.subr.mxu0 0.0
        %6524 = vmatpush1.msra.mxu0 %v6507
        %6525 = vmatprep.subr.mxu0 0.0
        %6526 = vmatpush1.msra.mxu0 %v6508
        %6527 = vmatprep.subr.mxu0 0.0
        %6528 = vmatpush1.msra.mxu0 %v6509
        %6529 = vmatprep.subr.mxu0 0.0
        %6530 = vmatpush1.msra.mxu0 0.0
        %6531 = vmatprep.subr.mxu0 0.0
        %6532 = vmatpush1.msra.mxu0 0.0
        %6533 = vmatprep.subr.mxu0 0.0
        %6534 = vmatpush1.msra.mxu0 0.0
        %6535 = vmatprep.subr.mxu0 0.0
        %6536 = vmatpush1.msra.mxu0 0.0
        %6537 = vmatprep.subr.mxu0 0.0
        %6538 = vmatpush1.msra.mxu0 0.0
        %6539 = vmatprep.subr.mxu0 0.0
        %6540 = vmatpush1.msra.mxu0 0.0
        %6541 = vmatprep.subr.mxu0 0.0
        %6542 = vmatpush1.msra.mxu0 0.0
        %6543 = vmatprep.subr.mxu0 0.0
        %6544 = vmatpush1.msra.mxu0 0.0
        %6545 = vmatprep.subr.mxu0 0.0
        %6546 = vmatpush1.msra.mxu0 0.0
        %6547 = vmatprep.subr.mxu0 0.0
        %6548 = vmatpush1.msra.mxu0 0.0
        %6549 = vmatprep.subr.mxu0 0.0
        %6550 = vmatpush1.msra.mxu0 0.0
        %6551 = vmatprep.subr.mxu0 0.0
        %6552 = vmatpush1.msra.mxu0 0.0
        %6553 = vmatprep.subr.mxu0 0.0
        %6554 = vmatpush1.msra.mxu0 0.0
        %6555 = vmatprep.subr.mxu0 0.0
        %6556 = vmatpush1.msra.mxu0 0.0
        %6557 = vmatprep.subr.mxu0 0.0
        %6558 = vmatpush1.msra.mxu0 0.0
        %6559 = vmatprep.subr.mxu0 0.0
        %6560 = vmatpush1.msra.mxu0 0.0
        %6561 = vmatprep.subr.mxu0 0.0
        %6562 = vmatpush1.msra.mxu0 0.0
        %6563 = vmatprep.subr.mxu0 0.0
        %6564 = vmatpush1.msra.mxu0 0.0
        %6565 = vmatprep.subr.mxu0 0.0
        %6566 = vmatpush1.msra.mxu0 0.0
        %6567 = vmatprep.subr.mxu0 0.0
        %6568 = vmatpush1.msra.mxu0 0.0
        %6569 = vmatprep.subr.mxu0 0.0
        %6570 = vmatpush1.msra.mxu0 0.0
        %6571 = vmatprep.subr.mxu0 0.0
        %6572 = vmatpush1.msra.mxu0 0.0
        %6573 = vmatprep.subr.mxu0 0.0
        %6574 = vmatpush1.msra.mxu0 0.0
        %6575 = vmatprep.subr.mxu0 0.0
        %6576 = vmatpush1.msra.mxu0 0.0
        %6577 = vmatprep.subr.mxu0 0.0
        %6578 = vmatpush1.msra.mxu0 0.0
        %6579 = vmatprep.subr.mxu0 0.0
        %6580 = vmatpush1.msra.mxu0 0.0
        %6581 = vmatprep.subr.mxu0 0.0
        %6582 = vmatpush1.msra.mxu0 0.0
        %6583 = vmatprep.subr.mxu0 0.0
        %6584 = vmatpush1.msra.mxu0 0.0
        %6585 = vmatprep.mubr.f32.mxu0 0.0
        %6586 = vmatmul.mubr.f32.gmra.mrb[0].mxu0 %v6519
        %v6587 = vpop.f32.mrb[0].mxu0
        %v6588 = vadd.f32 %v6516, %v6587
        %v6589 = vpop.f32.mrb[0].mxu0
        %6590 = vdwg.mxu0
        %s6591 = scalar_lea.vmem %s37, 128
        %v6592 = vld [vmem:[%s6591] sm:$0xff]
        %v6593 = vld [vmem:[%s6591 + $0x8] sm:$0xff]
        %v6594 = vld [vmem:[%s6591 + $0x10] sm:$0xff]
        %v6595 = vld [vmem:[%s6591 + $0x18] sm:$0xff]
        %s6596 = scalar_lea.vmem %s39, 4
        %v6597 = vld [vmem:[%s6596] sm:$0x1]
        %v6599 = vlaneseq
        %v6600 = vshrl.u32 %v6599, 7
        %v6601 = vsub.s32 0, %v6600
        %v6602 = vrot.slane %v6597, %v6601
        %6604 = vmatprep.subr.mxu0 0.0
        %6605 = vmatpush1.msra.mxu0 %v6592
        %6606 = vmatprep.subr.mxu0 0.0
        %6607 = vmatpush1.msra.mxu0 %v6593
        %6608 = vmatprep.subr.mxu0 0.0
        %6609 = vmatpush1.msra.mxu0 %v6594
        %6610 = vmatprep.subr.mxu0 0.0
        %6611 = vmatpush1.msra.mxu0 %v6595
        %6612 = vmatprep.subr.mxu0 0.0
        %6613 = vmatpush1.msra.mxu0 0.0
        %6614 = vmatprep.subr.mxu0 0.0
        %6615 = vmatpush1.msra.mxu0 0.0
        %6616 = vmatprep.subr.mxu0 0.0
        %6617 = vmatpush1.msra.mxu0 0.0
        %6618 = vmatprep.subr.mxu0 0.0
        %6619 = vmatpush1.msra.mxu0 0.0
        %6620 = vmatprep.subr.mxu0 0.0
        %6621 = vmatpush1.msra.mxu0 0.0
        %6622 = vmatprep.subr.mxu0 0.0
        %6623 = vmatpush1.msra.mxu0 0.0
        %6624 = vmatprep.subr.mxu0 0.0
        %6625 = vmatpush1.msra.mxu0 0.0
        %6626 = vmatprep.subr.mxu0 0.0
        %6627 = vmatpush1.msra.mxu0 0.0
        %6628 = vmatprep.subr.mxu0 0.0
        %6629 = vmatpush1.msra.mxu0 0.0
        %6630 = vmatprep.subr.mxu0 0.0
        %6631 = vmatpush1.msra.mxu0 0.0
        %6632 = vmatprep.subr.mxu0 0.0
        %6633 = vmatpush1.msra.mxu0 0.0
        %6634 = vmatprep.subr.mxu0 0.0
        %6635 = vmatpush1.msra.mxu0 0.0
        %6636 = vmatprep.subr.mxu0 0.0
        %6637 = vmatpush1.msra.mxu0 0.0
        %6638 = vmatprep.subr.mxu0 0.0
        %6639 = vmatpush1.msra.mxu0 0.0
        %6640 = vmatprep.subr.mxu0 0.0
        %6641 = vmatpush1.msra.mxu0 0.0
        %6642 = vmatprep.subr.mxu0 0.0
        %6643 = vmatpush1.msra.mxu0 0.0
        %6644 = vmatprep.subr.mxu0 0.0
        %6645 = vmatpush1.msra.mxu0 0.0
        %6646 = vmatprep.subr.mxu0 0.0
        %6647 = vmatpush1.msra.mxu0 0.0
        %6648 = vmatprep.subr.mxu0 0.0
        %6649 = vmatpush1.msra.mxu0 0.0
        %6650 = vmatprep.subr.mxu0 0.0
        %6651 = vmatpush1.msra.mxu0 0.0
        %6652 = vmatprep.subr.mxu0 0.0
        %6653 = vmatpush1.msra.mxu0 0.0
        %6654 = vmatprep.subr.mxu0 0.0
        %6655 = vmatpush1.msra.mxu0 0.0
        %6656 = vmatprep.subr.mxu0 0.0
        %6657 = vmatpush1.msra.mxu0 0.0
        %6658 = vmatprep.subr.mxu0 0.0
        %6659 = vmatpush1.msra.mxu0 0.0
        %6660 = vmatprep.subr.mxu0 0.0
        %6661 = vmatpush1.msra.mxu0 0.0
        %6662 = vmatprep.subr.mxu0 0.0
        %6663 = vmatpush1.msra.mxu0 0.0
        %6664 = vmatprep.subr.mxu0 0.0
        %6665 = vmatpush1.msra.mxu0 0.0
        %6666 = vmatprep.subr.mxu0 0.0
        %6667 = vmatpush1.msra.mxu0 0.0
        %6668 = vmatprep.mubr.f32.mxu0 0.0
        %6669 = vmatmul.mubr.f32.gmra.mrb[0].mxu0 %v6519
        %v6670 = vpop.f32.mrb[0].mxu0
        %v6671 = vadd.f32 %v6602, %v6670
        %v6672 = vpop.f32.mrb[0].mxu0
        %6673 = vdwg.mxu0
        %s6674 = scalar_lea.vmem %s41, 128
        %v6675 = vld [vmem:[%s6674] sm:$0xff]
        %v6676 = vld [vmem:[%s6674 + $0x8] sm:$0xff]
        %v6677 = vld [vmem:[%s6674 + $0x10] sm:$0xff]
        %v6678 = vld [vmem:[%s6674 + $0x18] sm:$0xff]
        %s6679 = scalar_lea.vmem %s43, 4
        %v6680 = vld [vmem:[%s6679] sm:$0x1]
        %v6682 = vlaneseq
        %v6683 = vshrl.u32 %v6682, 7
        %v6684 = vsub.s32 0, %v6683
        %v6685 = vrot.slane %v6680, %v6684
        %6687 = vmatprep.subr.mxu0 0.0
        %6688 = vmatpush1.msra.mxu0 %v6675
        %6689 = vmatprep.subr.mxu0 0.0
        %6690 = vmatpush1.msra.mxu0 %v6676
        %6691 = vmatprep.subr.mxu0 0.0
        %6692 = vmatpush1.msra.mxu0 %v6677
        %6693 = vmatprep.subr.mxu0 0.0
        %6694 = vmatpush1.msra.mxu0 %v6678
        %6695 = vmatprep.subr.mxu0 0.0
        %6696 = vmatpush1.msra.mxu0 0.0
        %6697 = vmatprep.subr.mxu0 0.0
        %6698 = vmatpush1.msra.mxu0 0.0
        %6699 = vmatprep.subr.mxu0 0.0
        %6700 = vmatpush1.msra.mxu0 0.0
        %6701 = vmatprep.subr.mxu0 0.0
        %6702 = vmatpush1.msra.mxu0 0.0
        %6703 = vmatprep.subr.mxu0 0.0
        %6704 = vmatpush1.msra.mxu0 0.0
        %6705 = vmatprep.subr.mxu0 0.0
        %6706 = vmatpush1.msra.mxu0 0.0
        %6707 = vmatprep.subr.mxu0 0.0
        %6708 = vmatpush1.msra.mxu0 0.0
        %6709 = vmatprep.subr.mxu0 0.0
        %6710 = vmatpush1.msra.mxu0 0.0
        %6711 = vmatprep.subr.mxu0 0.0
        %6712 = vmatpush1.msra.mxu0 0.0
        %6713 = vmatprep.subr.mxu0 0.0
        %6714 = vmatpush1.msra.mxu0 0.0
        %6715 = vmatprep.subr.mxu0 0.0
        %6716 = vmatpush1.msra.mxu0 0.0
        %6717 = vmatprep.subr.mxu0 0.0
        %6718 = vmatpush1.msra.mxu0 0.0
        %6719 = vmatprep.subr.mxu0 0.0
        %6720 = vmatpush1.msra.mxu0 0.0
        %6721 = vmatprep.subr.mxu0 0.0
        %6722 = vmatpush1.msra.mxu0 0.0
        %6723 = vmatprep.subr.mxu0 0.0
        %6724 = vmatpush1.msra.mxu0 0.0
        %6725 = vmatprep.subr.mxu0 0.0
        %6726 = vmatpush1.msra.mxu0 0.0
        %6727 = vmatprep.subr.mxu0 0.0
        %6728 = vmatpush1.msra.mxu0 0.0
        %6729 = vmatprep.subr.mxu0 0.0
        %6730 = vmatpush1.msra.mxu0 0.0
        %6731 = vmatprep.subr.mxu0 0.0
        %6732 = vmatpush1.msra.mxu0 0.0
        %6733 = vmatprep.subr.mxu0 0.0
        %6734 = vmatpush1.msra.mxu0 0.0
        %6735 = vmatprep.subr.mxu0 0.0
        %6736 = vmatpush1.msra.mxu0 0.0
        %6737 = vmatprep.subr.mxu0 0.0
        %6738 = vmatpush1.msra.mxu0 0.0
        %6739 = vmatprep.subr.mxu0 0.0
        %6740 = vmatpush1.msra.mxu0 0.0
        %6741 = vmatprep.subr.mxu0 0.0
        %6742 = vmatpush1.msra.mxu0 0.0
        %6743 = vmatprep.subr.mxu0 0.0
        %6744 = vmatpush1.msra.mxu0 0.0
        %6745 = vmatprep.subr.mxu0 0.0
        %6746 = vmatpush1.msra.mxu0 0.0
        %6747 = vmatprep.subr.mxu0 0.0
        %6748 = vmatpush1.msra.mxu0 0.0
        %6749 = vmatprep.subr.mxu0 0.0
        %6750 = vmatpush1.msra.mxu0 0.0
        %6751 = vmatprep.mubr.f32.mxu0 0.0
        %6752 = vmatmul.mubr.f32.gmra.mrb[0].mxu0 %v6519
        %v6753 = vpop.f32.mrb[0].mxu0
        %v6754 = vadd.f32 %v6685, %v6753
        %v6755 = vpop.f32.mrb[0].mxu0
        %6756 = vdwg.mxu0
        %v6758 = vsel %vm1375, %v6588, 0
        %v6761 = vsel %vm1375, %v6671, 0
        %6763 = vmatprep.subr.mxu0 0.0
        %6764 = vmatpush1.xpose.msra.mxu0 %v6761
        %6765 = vmatprep.subr.mxu0 0.0
        %6766 = vmatpush1.xpose.msra.mxu0 0.0
        %6767 = vmatprep.subr.mxu0 0.0
        %6768 = vmatpush1.xpose.msra.mxu0 0.0
        %6769 = vmatprep.subr.mxu0 0.0
        %6770 = vmatpush1.xpose.msra.mxu0 0.0
        %6771 = vmatprep.subr.mxu0 0.0
        %6772 = vmatpush1.xpose.msra.mxu0 0.0
        %6773 = vmatprep.subr.mxu0 0.0
        %6774 = vmatpush1.xpose.msra.mxu0 0.0
        %6775 = vmatprep.subr.mxu0 0.0
        %6776 = vmatpush1.xpose.msra.mxu0 0.0
        %6777 = vmatprep.subr.mxu0 0.0
        %6778 = vmatpush1.xpose.msra.mxu0 0.0
        %6779 = vmatprep.subr.mxu0 0.0
        %6780 = vmatpush1.xpose.msra.mxu0 0.0
        %6781 = vmatprep.subr.mxu0 0.0
        %6782 = vmatpush1.xpose.msra.mxu0 0.0
        %6783 = vmatprep.subr.mxu0 0.0
        %6784 = vmatpush1.xpose.msra.mxu0 0.0
        %6785 = vmatprep.subr.mxu0 0.0
        %6786 = vmatpush1.xpose.msra.mxu0 0.0
        %6787 = vmatprep.subr.mxu0 0.0
        %6788 = vmatpush1.xpose.msra.mxu0 0.0
        %6789 = vmatprep.subr.mxu0 0.0
        %6790 = vmatpush1.xpose.msra.mxu0 0.0
        %6791 = vmatprep.subr.mxu0 0.0
        %6792 = vmatpush1.xpose.msra.mxu0 0.0
        %6793 = vmatprep.subr.mxu0 0.0
        %6794 = vmatpush1.xpose.msra.mxu0 0.0
        %6795 = vmatprep.subr.mxu0 0.0
        %6796 = vmatpush1.xpose.msra.mxu0 0.0
        %6797 = vmatprep.subr.mxu0 0.0
        %6798 = vmatpush1.xpose.msra.mxu0 0.0
        %6799 = vmatprep.subr.mxu0 0.0
        %6800 = vmatpush1.xpose.msra.mxu0 0.0
        %6801 = vmatprep.subr.mxu0 0.0
        %6802 = vmatpush1.xpose.msra.mxu0 0.0
        %6803 = vmatprep.subr.mxu0 0.0
        %6804 = vmatpush1.xpose.msra.mxu0 0.0
        %6805 = vmatprep.subr.mxu0 0.0
        %6806 = vmatpush1.xpose.msra.mxu0 0.0
        %6807 = vmatprep.subr.mxu0 0.0
        %6808 = vmatpush1.xpose.msra.mxu0 0.0
        %6809 = vmatprep.subr.mxu0 0.0
        %6810 = vmatpush1.xpose.msra.mxu0 0.0
        %6811 = vmatprep.subr.mxu0 0.0
        %6812 = vmatpush1.xpose.msra.mxu0 0.0
        %6813 = vmatprep.subr.mxu0 0.0
        %6814 = vmatpush1.xpose.msra.mxu0 0.0
        %6815 = vmatprep.subr.mxu0 0.0
        %6816 = vmatpush1.xpose.msra.mxu0 0.0
        %6817 = vmatprep.subr.mxu0 0.0
        %6818 = vmatpush1.xpose.msra.mxu0 0.0
        %6819 = vmatprep.subr.mxu0 0.0
        %6820 = vmatpush1.xpose.msra.mxu0 0.0
        %6821 = vmatprep.subr.mxu0 0.0
        %6822 = vmatpush1.xpose.msra.mxu0 0.0
        %6823 = vmatprep.subr.mxu0 0.0
        %6824 = vmatpush1.xpose.msra.mxu0 0.0
        %6825 = vmatprep.subr.mxu0 0.0
        %6826 = vmatpush1.xpose.msra.mxu0 0.0
        %6827 = vmatprep.mubr.f32.mxu0 0.0
        %6828 = vmatmul.mubr.f32.gmra.mrb[0].mxu0 %v6758
        %v6829 = vpop.f32.mrb[0].mxu0
        %v6830 = vadd.f32 0.0, %v6829
        %v6831 = vpop.f32.mrb[0].mxu0
        %6832 = vdwg.mxu0
        %v6833 = vsel %vm1375, %v6830, -inf
        %6834 = vmax.xlane.f32.xlu0 %v6833
        %v6835 = vpop.xlane.xlu0 %6834
        %v6836 = vsub.f32 %v6830, %v6835
        %v6837 = vmul.f32 %v6836, 1.442695
        %v6838 = vpow.pop %v6837
        %v6839 = vsel %vm1375, %v6838, 0.0
        %6840 = vadd.xlane.f32.xlu0 %v6839
        %v6841 = vpop.xlane.xlu0 %6840
        %v6842 = vrcp.pop %v6841
        %v6843 = vmul.f32 %v6838, %v6842
        %s6844 = scalar_lea.vmem %s33, 160
        %v6845 = vld [vmem:[%s6844] sm:$0xff]
        %v6846 = vld [vmem:[%s6844 + $0x8] sm:$0xff]
        %v6847 = vld [vmem:[%s6844 + $0x10] sm:$0xff]
        %v6848 = vld [vmem:[%s6844 + $0x18] sm:$0xff]
        %s6849 = scalar_lea.vmem %s35, 5
        %v6850 = vld [vmem:[%s6849] sm:$0x1]
        %v6852 = vlaneseq
        %v6853 = vshrl.u32 %v6852, 7
        %v6854 = vsub.s32 0, %v6853
        %v6855 = vrot.slane %v6850, %v6854
        %6857 = vmatprep.subr.mxu0 0.0
        %6858 = vmatpush1.msra.mxu0 %v6845
        %6859 = vmatprep.subr.mxu0 0.0
        %6860 = vmatpush1.msra.mxu0 %v6846
        %6861 = vmatprep.subr.mxu0 0.0
        %6862 = vmatpush1.msra.mxu0 %v6847
        %6863 = vmatprep.subr.mxu0 0.0
        %6864 = vmatpush1.msra.mxu0 %v6848
        %6865 = vmatprep.subr.mxu0 0.0
        %6866 = vmatpush1.msra.mxu0 0.0
        %6867 = vmatprep.subr.mxu0 0.0
        %6868 = vmatpush1.msra.mxu0 0.0
        %6869 = vmatprep.subr.mxu0 0.0
        %6870 = vmatpush1.msra.mxu0 0.0
        %6871 = vmatprep.subr.mxu0 0.0
        %6872 = vmatpush1.msra.mxu0 0.0
        %6873 = vmatprep.subr.mxu0 0.0
        %6874 = vmatpush1.msra.mxu0 0.0
        %6875 = vmatprep.subr.mxu0 0.0
        %6876 = vmatpush1.msra.mxu0 0.0
        %6877 = vmatprep.subr.mxu0 0.0
        %6878 = vmatpush1.msra.mxu0 0.0
        %6879 = vmatprep.subr.mxu0 0.0
        %6880 = vmatpush1.msra.mxu0 0.0
        %6881 = vmatprep.subr.mxu0 0.0
        %6882 = vmatpush1.msra.mxu0 0.0
        %6883 = vmatprep.subr.mxu0 0.0
        %6884 = vmatpush1.msra.mxu0 0.0
        %6885 = vmatprep.subr.mxu0 0.0
        %6886 = vmatpush1.msra.mxu0 0.0
        %6887 = vmatprep.subr.mxu0 0.0
        %6888 = vmatpush1.msra.mxu0 0.0
        %6889 = vmatprep.subr.mxu0 0.0
        %6890 = vmatpush1.msra.mxu0 0.0
        %6891 = vmatprep.subr.mxu0 0.0
        %6892 = vmatpush1.msra.mxu0 0.0
        %6893 = vmatprep.subr.mxu0 0.0
        %6894 = vmatpush1.msra.mxu0 0.0
        %6895 = vmatprep.subr.mxu0 0.0
        %6896 = vmatpush1.msra.mxu0 0.0
        %6897 = vmatprep.subr.mxu0 0.0
        %6898 = vmatpush1.msra.mxu0 0.0
        %6899 = vmatprep.subr.mxu0 0.0
        %6900 = vmatpush1.msra.mxu0 0.0
        %6901 = vmatprep.subr.mxu0 0.0
        %6902 = vmatpush1.msra.mxu0 0.0
        %6903 = vmatprep.subr.mxu0 0.0
        %6904 = vmatpush1.msra.mxu0 0.0
        %6905 = vmatprep.subr.mxu0 0.0
        %6906 = vmatpush1.msra.mxu0 0.0
        %6907 = vmatprep.subr.mxu0 0.0
        %6908 = vmatpush1.msra.mxu0 0.0
        %6909 = vmatprep.subr.mxu0 0.0
        %6910 = vmatpush1.msra.mxu0 0.0
        %6911 = vmatprep.subr.mxu0 0.0
        %6912 = vmatpush1.msra.mxu0 0.0
        %6913 = vmatprep.subr.mxu0 0.0
        %6914 = vmatpush1.msra.mxu0 0.0
        %6915 = vmatprep.subr.mxu0 0.0
        %6916 = vmatpush1.msra.mxu0 0.0
        %6917 = vmatprep.subr.mxu0 0.0
        %6918 = vmatpush1.msra.mxu0 0.0
        %6919 = vmatprep.subr.mxu0 0.0
        %6920 = vmatpush1.msra.mxu0 0.0
        %6921 = vmatprep.mubr.f32.mxu0 0.0
        %6922 = vmatmul.mubr.f32.gmra.mrb[0].mxu0 %v6519
        %v6923 = vpop.f32.mrb[0].mxu0
        %v6924 = vadd.f32 %v6855, %v6923
        %v6925 = vpop.f32.mrb[0].mxu0
        %6926 = vdwg.mxu0
        %s6927 = scalar_lea.vmem %s37, 160
        %v6928 = vld [vmem:[%s6927] sm:$0xff]
        %v6929 = vld [vmem:[%s6927 + $0x8] sm:$0xff]
        %v6930 = vld [vmem:[%s6927 + $0x10] sm:$0xff]
        %v6931 = vld [vmem:[%s6927 + $0x18] sm:$0xff]
        %s6932 = scalar_lea.vmem %s39, 5
        %v6933 = vld [vmem:[%s6932] sm:$0x1]
        %v6935 = vlaneseq
        %v6936 = vshrl.u32 %v6935, 7
        %v6937 = vsub.s32 0, %v6936
        %v6938 = vrot.slane %v6933, %v6937
        %6940 = vmatprep.subr.mxu0 0.0
        %6941 = vmatpush1.msra.mxu0 %v6928
        %6942 = vmatprep.subr.mxu0 0.0
        %6943 = vmatpush1.msra.mxu0 %v6929
        %6944 = vmatprep.subr.mxu0 0.0
        %6945 = vmatpush1.msra.mxu0 %v6930
        %6946 = vmatprep.subr.mxu0 0.0
        %6947 = vmatpush1.msra.mxu0 %v6931
        %6948 = vmatprep.subr.mxu0 0.0
        %6949 = vmatpush1.msra.mxu0 0.0
        %6950 = vmatprep.subr.mxu0 0.0
        %6951 = vmatpush1.msra.mxu0 0.0
        %6952 = vmatprep.subr.mxu0 0.0
        %6953 = vmatpush1.msra.mxu0 0.0
        %6954 = vmatprep.subr.mxu0 0.0
        %6955 = vmatpush1.msra.mxu0 0.0
        %6956 = vmatprep.subr.mxu0 0.0
        %6957 = vmatpush1.msra.mxu0 0.0
        %6958 = vmatprep.subr.mxu0 0.0
        %6959 = vmatpush1.msra.mxu0 0.0
        %6960 = vmatprep.subr.mxu0 0.0
        %6961 = vmatpush1.msra.mxu0 0.0
        %6962 = vmatprep.subr.mxu0 0.0
        %6963 = vmatpush1.msra.mxu0 0.0
        %6964 = vmatprep.subr.mxu0 0.0
        %6965 = vmatpush1.msra.mxu0 0.0
        %6966 = vmatprep.subr.mxu0 0.0
        %6967 = vmatpush1.msra.mxu0 0.0
        %6968 = vmatprep.subr.mxu0 0.0
        %6969 = vmatpush1.msra.mxu0 0.0
        %6970 = vmatprep.subr.mxu0 0.0
        %6971 = vmatpush1.msra.mxu0 0.0
        %6972 = vmatprep.subr.mxu0 0.0
        %6973 = vmatpush1.msra.mxu0 0.0
        %6974 = vmatprep.subr.mxu0 0.0
        %6975 = vmatpush1.msra.mxu0 0.0
        %6976 = vmatprep.subr.mxu0 0.0
        %6977 = vmatpush1.msra.mxu0 0.0
        %6978 = vmatprep.subr.mxu0 0.0
        %6979 = vmatpush1.msra.mxu0 0.0
        %6980 = vmatprep.subr.mxu0 0.0
        %6981 = vmatpush1.msra.mxu0 0.0
        %6982 = vmatprep.subr.mxu0 0.0
        %6983 = vmatpush1.msra.mxu0 0.0
        %6984 = vmatprep.subr.mxu0 0.0
        %6985 = vmatpush1.msra.mxu0 0.0
        %6986 = vmatprep.subr.mxu0 0.0
        %6987 = vmatpush1.msra.mxu0 0.0
        %6988 = vmatprep.subr.mxu0 0.0
        %6989 = vmatpush1.msra.mxu0 0.0
        %6990 = vmatprep.subr.mxu0 0.0
        %6991 = vmatpush1.msra.mxu0 0.0
        %6992 = vmatprep.subr.mxu0 0.0
        %6993 = vmatpush1.msra.mxu0 0.0
        %6994 = vmatprep.subr.mxu0 0.0
        %6995 = vmatpush1.msra.mxu0 0.0
        %6996 = vmatprep.subr.mxu0 0.0
        %6997 = vmatpush1.msra.mxu0 0.0
        %6998 = vmatprep.subr.mxu0 0.0
        %6999 = vmatpush1.msra.mxu0 0.0
        %7000 = vmatprep.subr.mxu0 0.0
        %7001 = vmatpush1.msra.mxu0 0.0
        %7002 = vmatprep.subr.mxu0 0.0
        %7003 = vmatpush1.msra.mxu0 0.0
        %7004 = vmatprep.mubr.f32.mxu0 0.0
        %7005 = vmatmul.mubr.f32.gmra.mrb[0].mxu0 %v6519
        %v7006 = vpop.f32.mrb[0].mxu0
        %v7007 = vadd.f32 %v6938, %v7006
        %v7008 = vpop.f32.mrb[0].mxu0
        %7009 = vdwg.mxu0
        %s7010 = scalar_lea.vmem %s41, 160
        %v7011 = vld [vmem:[%s7010] sm:$0xff]
        %v7012 = vld [vmem:[%s7010 + $0x8] sm:$0xff]
        %v7013 = vld [vmem:[%s7010 + $0x10] sm:$0xff]
        %v7014 = vld [vmem:[%s7010 + $0x18] sm:$0xff]
        %s7015 = scalar_lea.vmem %s43, 5
        %v7016 = vld [vmem:[%s7015] sm:$0x1]
        %v7018 = vlaneseq
        %v7019 = vshrl.u32 %v7018, 7
        %v7020 = vsub.s32 0, %v7019
        %v7021 = vrot.slane %v7016, %v7020
        %7023 = vmatprep.subr.mxu0 0.0
        %7024 = vmatpush1.msra.mxu0 %v7011
        %7025 = vmatprep.subr.mxu0 0.0
        %7026 = vmatpush1.msra.mxu0 %v7012
        %7027 = vmatprep.subr.mxu0 0.0
        %7028 = vmatpush1.msra.mxu0 %v7013
        %7029 = vmatprep.subr.mxu0 0.0
        %7030 = vmatpush1.msra.mxu0 %v7014
        %7031 = vmatprep.subr.mxu0 0.0
        %7032 = vmatpush1.msra.mxu0 0.0
        %7033 = vmatprep.subr.mxu0 0.0
        %7034 = vmatpush1.msra.mxu0 0.0
        %7035 = vmatprep.subr.mxu0 0.0
        %7036 = vmatpush1.msra.mxu0 0.0
        %7037 = vmatprep.subr.mxu0 0.0
        %7038 = vmatpush1.msra.mxu0 0.0
        %7039 = vmatprep.subr.mxu0 0.0
        %7040 = vmatpush1.msra.mxu0 0.0
        %7041 = vmatprep.subr.mxu0 0.0
        %7042 = vmatpush1.msra.mxu0 0.0
        %7043 = vmatprep.subr.mxu0 0.0
        %7044 = vmatpush1.msra.mxu0 0.0
        %7045 = vmatprep.subr.mxu0 0.0
        %7046 = vmatpush1.msra.mxu0 0.0
        %7047 = vmatprep.subr.mxu0 0.0
        %7048 = vmatpush1.msra.mxu0 0.0
        %7049 = vmatprep.subr.mxu0 0.0
        %7050 = vmatpush1.msra.mxu0 0.0
        %7051 = vmatprep.subr.mxu0 0.0
        %7052 = vmatpush1.msra.mxu0 0.0
        %7053 = vmatprep.subr.mxu0 0.0
        %7054 = vmatpush1.msra.mxu0 0.0
        %7055 = vmatprep.subr.mxu0 0.0
        %7056 = vmatpush1.msra.mxu0 0.0
        %7057 = vmatprep.subr.mxu0 0.0
        %7058 = vmatpush1.msra.mxu0 0.0
        %7059 = vmatprep.subr.mxu0 0.0
        %7060 = vmatpush1.msra.mxu0 0.0
        %7061 = vmatprep.subr.mxu0 0.0
        %7062 = vmatpush1.msra.mxu0 0.0
        %7063 = vmatprep.subr.mxu0 0.0
        %7064 = vmatpush1.msra.mxu0 0.0
        %7065 = vmatprep.subr.mxu0 0.0
        %7066 = vmatpush1.msra.mxu0 0.0
        %7067 = vmatprep.subr.mxu0 0.0
        %7068 = vmatpush1.msra.mxu0 0.0
        %7069 = vmatprep.subr.mxu0 0.0
        %7070 = vmatpush1.msra.mxu0 0.0
        %7071 = vmatprep.subr.mxu0 0.0
        %7072 = vmatpush1.msra.mxu0 0.0
        %7073 = vmatprep.subr.mxu0 0.0
        %7074 = vmatpush1.msra.mxu0 0.0
        %7075 = vmatprep.subr.mxu0 0.0
        %7076 = vmatpush1.msra.mxu0 0.0
        %7077 = vmatprep.subr.mxu0 0.0
        %7078 = vmatpush1.msra.mxu0 0.0
        %7079 = vmatprep.subr.mxu0 0.0
        %7080 = vmatpush1.msra.mxu0 0.0
        %7081 = vmatprep.subr.mxu0 0.0
        %7082 = vmatpush1.msra.mxu0 0.0
        %7083 = vmatprep.subr.mxu0 0.0
        %7084 = vmatpush1.msra.mxu0 0.0
        %7085 = vmatprep.subr.mxu0 0.0
        %7086 = vmatpush1.msra.mxu0 0.0
        %7087 = vmatprep.mubr.f32.mxu0 0.0
        %7088 = vmatmul.mubr.f32.gmra.mrb[0].mxu0 %v6519
        %v7089 = vpop.f32.mrb[0].mxu0
        %v7090 = vadd.f32 %v7021, %v7089
        %v7091 = vpop.f32.mrb[0].mxu0
        %7092 = vdwg.mxu0
        %v7094 = vsel %vm1375, %v6924, 0
        %v7097 = vsel %vm1375, %v7007, 0
        %7099 = vmatprep.subr.mxu0 0.0
        %7100 = vmatpush1.xpose.msra.mxu0 %v7097
        %7101 = vmatprep.subr.mxu0 0.0
        %7102 = vmatpush1.xpose.msra.mxu0 0.0
        %7103 = vmatprep.subr.mxu0 0.0
        %7104 = vmatpush1.xpose.msra.mxu0 0.0
        %7105 = vmatprep.subr.mxu0 0.0
        %7106 = vmatpush1.xpose.msra.mxu0 0.0
        %7107 = vmatprep.subr.mxu0 0.0
        %7108 = vmatpush1.xpose.msra.mxu0 0.0
        %7109 = vmatprep.subr.mxu0 0.0
        %7110 = vmatpush1.xpose.msra.mxu0 0.0
        %7111 = vmatprep.subr.mxu0 0.0
        %7112 = vmatpush1.xpose.msra.mxu0 0.0
        %7113 = vmatprep.subr.mxu0 0.0
        %7114 = vmatpush1.xpose.msra.mxu0 0.0
        %7115 = vmatprep.subr.mxu0 0.0
        %7116 = vmatpush1.xpose.msra.mxu0 0.0
        %7117 = vmatprep.subr.mxu0 0.0
        %7118 = vmatpush1.xpose.msra.mxu0 0.0
        %7119 = vmatprep.subr.mxu0 0.0
        %7120 = vmatpush1.xpose.msra.mxu0 0.0
        %7121 = vmatprep.subr.mxu0 0.0
        %7122 = vmatpush1.xpose.msra.mxu0 0.0
        %7123 = vmatprep.subr.mxu0 0.0
        %7124 = vmatpush1.xpose.msra.mxu0 0.0
        %7125 = vmatprep.subr.mxu0 0.0
        %7126 = vmatpush1.xpose.msra.mxu0 0.0
        %7127 = vmatprep.subr.mxu0 0.0
        %7128 = vmatpush1.xpose.msra.mxu0 0.0
        %7129 = vmatprep.subr.mxu0 0.0
        %7130 = vmatpush1.xpose.msra.mxu0 0.0
        %7131 = vmatprep.subr.mxu0 0.0
        %7132 = vmatpush1.xpose.msra.mxu0 0.0
        %7133 = vmatprep.subr.mxu0 0.0
        %7134 = vmatpush1.xpose.msra.mxu0 0.0
        %7135 = vmatprep.subr.mxu0 0.0
        %7136 = vmatpush1.xpose.msra.mxu0 0.0
        %7137 = vmatprep.subr.mxu0 0.0
        %7138 = vmatpush1.xpose.msra.mxu0 0.0
        %7139 = vmatprep.subr.mxu0 0.0
        %7140 = vmatpush1.xpose.msra.mxu0 0.0
        %7141 = vmatprep.subr.mxu0 0.0
        %7142 = vmatpush1.xpose.msra.mxu0 0.0
        %7143 = vmatprep.subr.mxu0 0.0
        %7144 = vmatpush1.xpose.msra.mxu0 0.0
        %7145 = vmatprep.subr.mxu0 0.0
        %7146 = vmatpush1.xpose.msra.mxu0 0.0
        %7147 = vmatprep.subr.mxu0 0.0
        %7148 = vmatpush1.xpose.msra.mxu0 0.0
        %7149 = vmatprep.subr.mxu0 0.0
        %7150 = vmatpush1.xpose.msra.mxu0 0.0
        %7151 = vmatprep.subr.mxu0 0.0
        %7152 = vmatpush1.xpose.msra.mxu0 0.0
        %7153 = vmatprep.subr.mxu0 0.0
        %7154 = vmatpush1.xpose.msra.mxu0 0.0
        %7155 = vmatprep.subr.mxu0 0.0
        %7156 = vmatpush1.xpose.msra.mxu0 0.0
        %7157 = vmatprep.subr.mxu0 0.0
        %7158 = vmatpush1.xpose.msra.mxu0 0.0
        %7159 = vmatprep.subr.mxu0 0.0
        %7160 = vmatpush1.xpose.msra.mxu0 0.0
        %7161 = vmatprep.subr.mxu0 0.0
        %7162 = vmatpush1.xpose.msra.mxu0 0.0
        %7163 = vmatprep.mubr.f32.mxu0 0.0
        %7164 = vmatmul.mubr.f32.gmra.mrb[0].mxu0 %v7094
        %v7165 = vpop.f32.mrb[0].mxu0
        %v7166 = vadd.f32 0.0, %v7165
        %v7167 = vpop.f32.mrb[0].mxu0
        %7168 = vdwg.mxu0
        %v7169 = vsel %vm1375, %v7166, -inf
        %7170 = vmax.xlane.f32.xlu0 %v7169
        %v7171 = vpop.xlane.xlu0 %7170
        %v7172 = vsub.f32 %v7166, %v7171
        %v7173 = vmul.f32 %v7172, 1.442695
        %v7174 = vpow.pop %v7173
        %v7175 = vsel %vm1375, %v7174, 0.0
        %7176 = vadd.xlane.f32.xlu0 %v7175
        %v7177 = vpop.xlane.xlu0 %7176
        %v7178 = vrcp.pop %v7177
        %v7179 = vmul.f32 %v7174, %v7178
        %v7181 = vsel %vm1375, %v7179, 0
        %7183 = vmatprep.subr.mxu0 0.0
        %7184 = vmatpush1.msra.mxu0 %v7090
        %7185 = vmatprep.subr.mxu0 0.0
        %7186 = vmatpush1.msra.mxu0 0.0
        %7187 = vmatprep.subr.mxu0 0.0
        %7188 = vmatpush1.msra.mxu0 0.0
        %7189 = vmatprep.subr.mxu0 0.0
        %7190 = vmatpush1.msra.mxu0 0.0
        %7191 = vmatprep.subr.mxu0 0.0
        %7192 = vmatpush1.msra.mxu0 0.0
        %7193 = vmatprep.subr.mxu0 0.0
        %7194 = vmatpush1.msra.mxu0 0.0
        %7195 = vmatprep.subr.mxu0 0.0
        %7196 = vmatpush1.msra.mxu0 0.0
        %7197 = vmatprep.subr.mxu0 0.0
        %7198 = vmatpush1.msra.mxu0 0.0
        %7199 = vmatprep.subr.mxu0 0.0
        %7200 = vmatpush1.msra.mxu0 0.0
        %7201 = vmatprep.subr.mxu0 0.0
        %7202 = vmatpush1.msra.mxu0 0.0
        %7203 = vmatprep.subr.mxu0 0.0
        %7204 = vmatpush1.msra.mxu0 0.0
        %7205 = vmatprep.subr.mxu0 0.0
        %7206 = vmatpush1.msra.mxu0 0.0
        %7207 = vmatprep.subr.mxu0 0.0
        %7208 = vmatpush1.msra.mxu0 0.0
        %7209 = vmatprep.subr.mxu0 0.0
        %7210 = vmatpush1.msra.mxu0 0.0
        %7211 = vmatprep.subr.mxu0 0.0
        %7212 = vmatpush1.msra.mxu0 0.0
        %7213 = vmatprep.subr.mxu0 0.0
        %7214 = vmatpush1.msra.mxu0 0.0
        %7215 = vmatprep.subr.mxu0 0.0
        %7216 = vmatpush1.msra.mxu0 0.0
        %7217 = vmatprep.subr.mxu0 0.0
        %7218 = vmatpush1.msra.mxu0 0.0
        %7219 = vmatprep.subr.mxu0 0.0
        %7220 = vmatpush1.msra.mxu0 0.0
        %7221 = vmatprep.subr.mxu0 0.0
        %7222 = vmatpush1.msra.mxu0 0.0
        %7223 = vmatprep.subr.mxu0 0.0
        %7224 = vmatpush1.msra.mxu0 0.0
        %7225 = vmatprep.subr.mxu0 0.0
        %7226 = vmatpush1.msra.mxu0 0.0
        %7227 = vmatprep.subr.mxu0 0.0
        %7228 = vmatpush1.msra.mxu0 0.0
        %7229 = vmatprep.subr.mxu0 0.0
        %7230 = vmatpush1.msra.mxu0 0.0
        %7231 = vmatprep.subr.mxu0 0.0
        %7232 = vmatpush1.msra.mxu0 0.0
        %7233 = vmatprep.subr.mxu0 0.0
        %7234 = vmatpush1.msra.mxu0 0.0
        %7235 = vmatprep.subr.mxu0 0.0
        %7236 = vmatpush1.msra.mxu0 0.0
        %7237 = vmatprep.subr.mxu0 0.0
        %7238 = vmatpush1.msra.mxu0 0.0
        %7239 = vmatprep.subr.mxu0 0.0
        %7240 = vmatpush1.msra.mxu0 0.0
        %7241 = vmatprep.subr.mxu0 0.0
        %7242 = vmatpush1.msra.mxu0 0.0
        %7243 = vmatprep.subr.mxu0 0.0
        %7244 = vmatpush1.msra.mxu0 0.0
        %7245 = vmatprep.subr.mxu0 0.0
        %7246 = vmatpush1.msra.mxu0 0.0
        %7247 = vmatprep.mubr.f32.mxu0 0.0
        %7248 = vmatmul.mubr.f32.gmra.mrb[0].mxu0 %v7181
        %v7249 = vpop.f32.mrb[0].mxu0
        %v7250 = vadd.f32 0.0, %v7249
        %v7251 = vpop.f32.mrb[0].mxu0
        %7252 = vdwg.mxu0
        %v7254 = vsel %vm1375, %v6843, 0
        %7256 = vmatprep.subr.mxu0 0.0
        %7257 = vmatpush1.msra.mxu0 %v6754
        %7258 = vmatprep.subr.mxu0 0.0
        %7259 = vmatpush1.msra.mxu0 0.0
        %7260 = vmatprep.subr.mxu0 0.0
        %7261 = vmatpush1.msra.mxu0 0.0
        %7262 = vmatprep.subr.mxu0 0.0
        %7263 = vmatpush1.msra.mxu0 0.0
        %7264 = vmatprep.subr.mxu0 0.0
        %7265 = vmatpush1.msra.mxu0 0.0
        %7266 = vmatprep.subr.mxu0 0.0
        %7267 = vmatpush1.msra.mxu0 0.0
        %7268 = vmatprep.subr.mxu0 0.0
        %7269 = vmatpush1.msra.mxu0 0.0
        %7270 = vmatprep.subr.mxu0 0.0
        %7271 = vmatpush1.msra.mxu0 0.0
        %7272 = vmatprep.subr.mxu0 0.0
        %7273 = vmatpush1.msra.mxu0 0.0
        %7274 = vmatprep.subr.mxu0 0.0
        %7275 = vmatpush1.msra.mxu0 0.0
        %7276 = vmatprep.subr.mxu0 0.0
        %7277 = vmatpush1.msra.mxu0 0.0
        %7278 = vmatprep.subr.mxu0 0.0
        %7279 = vmatpush1.msra.mxu0 0.0
        %7280 = vmatprep.subr.mxu0 0.0
        %7281 = vmatpush1.msra.mxu0 0.0
        %7282 = vmatprep.subr.mxu0 0.0
        %7283 = vmatpush1.msra.mxu0 0.0
        %7284 = vmatprep.subr.mxu0 0.0
        %7285 = vmatpush1.msra.mxu0 0.0
        %7286 = vmatprep.subr.mxu0 0.0
        %7287 = vmatpush1.msra.mxu0 0.0
        %7288 = vmatprep.subr.mxu0 0.0
        %7289 = vmatpush1.msra.mxu0 0.0
        %7290 = vmatprep.subr.mxu0 0.0
        %7291 = vmatpush1.msra.mxu0 0.0
        %7292 = vmatprep.subr.mxu0 0.0
        %7293 = vmatpush1.msra.mxu0 0.0
        %7294 = vmatprep.subr.mxu0 0.0
        %7295 = vmatpush1.msra.mxu0 0.0
        %7296 = vmatprep.subr.mxu0 0.0
        %7297 = vmatpush1.msra.mxu0 0.0
        %7298 = vmatprep.subr.mxu0 0.0
        %7299 = vmatpush1.msra.mxu0 0.0
        %7300 = vmatprep.subr.mxu0 0.0
        %7301 = vmatpush1.msra.mxu0 0.0
        %7302 = vmatprep.subr.mxu0 0.0
        %7303 = vmatpush1.msra.mxu0 0.0
        %7304 = vmatprep.subr.mxu0 0.0
        %7305 = vmatpush1.msra.mxu0 0.0
        %7306 = vmatprep.subr.mxu0 0.0
        %7307 = vmatpush1.msra.mxu0 0.0
        %7308 = vmatprep.subr.mxu0 0.0
        %7309 = vmatpush1.msra.mxu0 0.0
        %7310 = vmatprep.subr.mxu0 0.0
        %7311 = vmatpush1.msra.mxu0 0.0
        %7312 = vmatprep.subr.mxu0 0.0
        %7313 = vmatpush1.msra.mxu0 0.0
        %7314 = vmatprep.subr.mxu0 0.0
        %7315 = vmatpush1.msra.mxu0 0.0
        %7316 = vmatprep.subr.mxu0 0.0
        %7317 = vmatpush1.msra.mxu0 0.0
        %7318 = vmatprep.subr.mxu0 0.0
        %7319 = vmatpush1.msra.mxu0 0.0
        %7320 = vmatprep.mubr.f32.mxu0 0.0
        %7321 = vmatmul.mubr.f32.gmra.mrb[0].mxu0 %v7254
        %v7322 = vpop.f32.mrb[0].mxu0
        %v7323 = vadd.f32 %v7250, %v7322
        %v7324 = vpop.f32.mrb[0].mxu0
        %7325 = vdwg.mxu0
        %s7326 = scalar_lea.vmem %s33, 192
        %v7327 = vld [vmem:[%s7326] sm:$0xff]
        %v7328 = vld [vmem:[%s7326 + $0x8] sm:$0xff]
        %v7329 = vld [vmem:[%s7326 + $0x10] sm:$0xff]
        %v7330 = vld [vmem:[%s7326 + $0x18] sm:$0xff]
        %s7331 = scalar_lea.vmem %s35, 6
        %v7332 = vld [vmem:[%s7331] sm:$0x1]
        %v7334 = vlaneseq
        %v7335 = vshrl.u32 %v7334, 7
        %v7336 = vsub.s32 0, %v7335
        %v7337 = vrot.slane %v7332, %v7336
        %7339 = vmatprep.subr.mxu0 0.0
        %7340 = vmatpush1.msra.mxu0 %v7327
        %7341 = vmatprep.subr.mxu0 0.0
        %7342 = vmatpush1.msra.mxu0 %v7328
        %7343 = vmatprep.subr.mxu0 0.0
        %7344 = vmatpush1.msra.mxu0 %v7329
        %7345 = vmatprep.subr.mxu0 0.0
        %7346 = vmatpush1.msra.mxu0 %v7330
        %7347 = vmatprep.subr.mxu0 0.0
        %7348 = vmatpush1.msra.mxu0 0.0
        %7349 = vmatprep.subr.mxu0 0.0
        %7350 = vmatpush1.msra.mxu0 0.0
        %7351 = vmatprep.subr.mxu0 0.0
        %7352 = vmatpush1.msra.mxu0 0.0
        %7353 = vmatprep.subr.mxu0 0.0
        %7354 = vmatpush1.msra.mxu0 0.0
        %7355 = vmatprep.subr.mxu0 0.0
        %7356 = vmatpush1.msra.mxu0 0.0
        %7357 = vmatprep.subr.mxu0 0.0
        %7358 = vmatpush1.msra.mxu0 0.0
        %7359 = vmatprep.subr.mxu0 0.0
        %7360 = vmatpush1.msra.mxu0 0.0
        %7361 = vmatprep.subr.mxu0 0.0
        %7362 = vmatpush1.msra.mxu0 0.0
        %7363 = vmatprep.subr.mxu0 0.0
        %7364 = vmatpush1.msra.mxu0 0.0
        %7365 = vmatprep.subr.mxu0 0.0
        %7366 = vmatpush1.msra.mxu0 0.0
        %7367 = vmatprep.subr.mxu0 0.0
        %7368 = vmatpush1.msra.mxu0 0.0
        %7369 = vmatprep.subr.mxu0 0.0
        %7370 = vmatpush1.msra.mxu0 0.0
        %7371 = vmatprep.subr.mxu0 0.0
        %7372 = vmatpush1.msra.mxu0 0.0
        %7373 = vmatprep.subr.mxu0 0.0
        %7374 = vmatpush1.msra.mxu0 0.0
        %7375 = vmatprep.subr.mxu0 0.0
        %7376 = vmatpush1.msra.mxu0 0.0
        %7377 = vmatprep.subr.mxu0 0.0
        %7378 = vmatpush1.msra.mxu0 0.0
        %7379 = vmatprep.subr.mxu0 0.0
        %7380 = vmatpush1.msra.mxu0 0.0
        %7381 = vmatprep.subr.mxu0 0.0
        %7382 = vmatpush1.msra.mxu0 0.0
        %7383 = vmatprep.subr.mxu0 0.0
        %7384 = vmatpush1.msra.mxu0 0.0
        %7385 = vmatprep.subr.mxu0 0.0
        %7386 = vmatpush1.msra.mxu0 0.0
        %7387 = vmatprep.subr.mxu0 0.0
        %7388 = vmatpush1.msra.mxu0 0.0
        %7389 = vmatprep.subr.mxu0 0.0
        %7390 = vmatpush1.msra.mxu0 0.0
        %7391 = vmatprep.subr.mxu0 0.0
        %7392 = vmatpush1.msra.mxu0 0.0
        %7393 = vmatprep.subr.mxu0 0.0
        %7394 = vmatpush1.msra.mxu0 0.0
        %7395 = vmatprep.subr.mxu0 0.0
        %7396 = vmatpush1.msra.mxu0 0.0
        %7397 = vmatprep.subr.mxu0 0.0
        %7398 = vmatpush1.msra.mxu0 0.0
        %7399 = vmatprep.subr.mxu0 0.0
        %7400 = vmatpush1.msra.mxu0 0.0
        %7401 = vmatprep.subr.mxu0 0.0
        %7402 = vmatpush1.msra.mxu0 0.0
        %7403 = vmatprep.mubr.f32.mxu0 0.0
        %7404 = vmatmul.mubr.f32.gmra.mrb[0].mxu0 %v6519
        %v7405 = vpop.f32.mrb[0].mxu0
        %v7406 = vadd.f32 %v7337, %v7405
        %v7407 = vpop.f32.mrb[0].mxu0
        %7408 = vdwg.mxu0
        %s7409 = scalar_lea.vmem %s37, 192
        %v7410 = vld [vmem:[%s7409] sm:$0xff]
        %v7411 = vld [vmem:[%s7409 + $0x8] sm:$0xff]
        %v7412 = vld [vmem:[%s7409 + $0x10] sm:$0xff]
        %v7413 = vld [vmem:[%s7409 + $0x18] sm:$0xff]
        %s7414 = scalar_lea.vmem %s39, 6
        %v7415 = vld [vmem:[%s7414] sm:$0x1]
        %v7417 = vlaneseq
        %v7418 = vshrl.u32 %v7417, 7
        %v7419 = vsub.s32 0, %v7418
        %v7420 = vrot.slane %v7415, %v7419
        %7422 = vmatprep.subr.mxu0 0.0
        %7423 = vmatpush1.msra.mxu0 %v7410
        %7424 = vmatprep.subr.mxu0 0.0
        %7425 = vmatpush1.msra.mxu0 %v7411
        %7426 = vmatprep.subr.mxu0 0.0
        %7427 = vmatpush1.msra.mxu0 %v7412
        %7428 = vmatprep.subr.mxu0 0.0
        %7429 = vmatpush1.msra.mxu0 %v7413
        %7430 = vmatprep.subr.mxu0 0.0
        %7431 = vmatpush1.msra.mxu0 0.0
        %7432 = vmatprep.subr.mxu0 0.0
        %7433 = vmatpush1.msra.mxu0 0.0
        %7434 = vmatprep.subr.mxu0 0.0
        %7435 = vmatpush1.msra.mxu0 0.0
        %7436 = vmatprep.subr.mxu0 0.0
        %7437 = vmatpush1.msra.mxu0 0.0
        %7438 = vmatprep.subr.mxu0 0.0
        %7439 = vmatpush1.msra.mxu0 0.0
        %7440 = vmatprep.subr.mxu0 0.0
        %7441 = vmatpush1.msra.mxu0 0.0
        %7442 = vmatprep.subr.mxu0 0.0
        %7443 = vmatpush1.msra.mxu0 0.0
        %7444 = vmatprep.subr.mxu0 0.0
        %7445 = vmatpush1.msra.mxu0 0.0
        %7446 = vmatprep.subr.mxu0 0.0
        %7447 = vmatpush1.msra.mxu0 0.0
        %7448 = vmatprep.subr.mxu0 0.0
        %7449 = vmatpush1.msra.mxu0 0.0
        %7450 = vmatprep.subr.mxu0 0.0
        %7451 = vmatpush1.msra.mxu0 0.0
        %7452 = vmatprep.subr.mxu0 0.0
        %7453 = vmatpush1.msra.mxu0 0.0
        %7454 = vmatprep.subr.mxu0 0.0
        %7455 = vmatpush1.msra.mxu0 0.0
        %7456 = vmatprep.subr.mxu0 0.0
        %7457 = vmatpush1.msra.mxu0 0.0
        %7458 = vmatprep.subr.mxu0 0.0
        %7459 = vmatpush1.msra.mxu0 0.0
        %7460 = vmatprep.subr.mxu0 0.0
        %7461 = vmatpush1.msra.mxu0 0.0
        %7462 = vmatprep.subr.mxu0 0.0
        %7463 = vmatpush1.msra.mxu0 0.0
        %7464 = vmatprep.subr.mxu0 0.0
        %7465 = vmatpush1.msra.mxu0 0.0
        %7466 = vmatprep.subr.mxu0 0.0
        %7467 = vmatpush1.msra.mxu0 0.0
        %7468 = vmatprep.subr.mxu0 0.0
        %7469 = vmatpush1.msra.mxu0 0.0
        %7470 = vmatprep.subr.mxu0 0.0
        %7471 = vmatpush1.msra.mxu0 0.0
        %7472 = vmatprep.subr.mxu0 0.0
        %7473 = vmatpush1.msra.mxu0 0.0
        %7474 = vmatprep.subr.mxu0 0.0
        %7475 = vmatpush1.msra.mxu0 0.0
        %7476 = vmatprep.subr.mxu0 0.0
        %7477 = vmatpush1.msra.mxu0 0.0
        %7478 = vmatprep.subr.mxu0 0.0
        %7479 = vmatpush1.msra.mxu0 0.0
        %7480 = vmatprep.subr.mxu0 0.0
        %7481 = vmatpush1.msra.mxu0 0.0
        %7482 = vmatprep.subr.mxu0 0.0
        %7483 = vmatpush1.msra.mxu0 0.0
        %7484 = vmatprep.subr.mxu0 0.0
        %7485 = vmatpush1.msra.mxu0 0.0
        %7486 = vmatprep.mubr.f32.mxu0 0.0
        %7487 = vmatmul.mubr.f32.gmra.mrb[0].mxu0 %v6519
        %v7488 = vpop.f32.mrb[0].mxu0
        %v7489 = vadd.f32 %v7420, %v7488
        %v7490 = vpop.f32.mrb[0].mxu0
        %7491 = vdwg.mxu0
        %s7492 = scalar_lea.vmem %s41, 192
        %v7493 = vld [vmem:[%s7492] sm:$0xff]
        %v7494 = vld [vmem:[%s7492 + $0x8] sm:$0xff]
        %v7495 = vld [vmem:[%s7492 + $0x10] sm:$0xff]
        %v7496 = vld [vmem:[%s7492 + $0x18] sm:$0xff]
        %s7497 = scalar_lea.vmem %s43, 6
        %v7498 = vld [vmem:[%s7497] sm:$0x1]
        %v7500 = vlaneseq
        %v7501 = vshrl.u32 %v7500, 7
        %v7502 = vsub.s32 0, %v7501
        %v7503 = vrot.slane %v7498, %v7502
        %7505 = vmatprep.subr.mxu0 0.0
        %7506 = vmatpush1.msra.mxu0 %v7493
        %7507 = vmatprep.subr.mxu0 0.0
        %7508 = vmatpush1.msra.mxu0 %v7494
        %7509 = vmatprep.subr.mxu0 0.0
        %7510 = vmatpush1.msra.mxu0 %v7495
        %7511 = vmatprep.subr.mxu0 0.0
        %7512 = vmatpush1.msra.mxu0 %v7496
        %7513 = vmatprep.subr.mxu0 0.0
        %7514 = vmatpush1.msra.mxu0 0.0
        %7515 = vmatprep.subr.mxu0 0.0
        %7516 = vmatpush1.msra.mxu0 0.0
        %7517 = vmatprep.subr.mxu0 0.0
        %7518 = vmatpush1.msra.mxu0 0.0
        %7519 = vmatprep.subr.mxu0 0.0
        %7520 = vmatpush1.msra.mxu0 0.0
        %7521 = vmatprep.subr.mxu0 0.0
        %7522 = vmatpush1.msra.mxu0 0.0
        %7523 = vmatprep.subr.mxu0 0.0
        %7524 = vmatpush1.msra.mxu0 0.0
        %7525 = vmatprep.subr.mxu0 0.0
        %7526 = vmatpush1.msra.mxu0 0.0
        %7527 = vmatprep.subr.mxu0 0.0
        %7528 = vmatpush1.msra.mxu0 0.0
        %7529 = vmatprep.subr.mxu0 0.0
        %7530 = vmatpush1.msra.mxu0 0.0
        %7531 = vmatprep.subr.mxu0 0.0
        %7532 = vmatpush1.msra.mxu0 0.0
        %7533 = vmatprep.subr.mxu0 0.0
        %7534 = vmatpush1.msra.mxu0 0.0
        %7535 = vmatprep.subr.mxu0 0.0
        %7536 = vmatpush1.msra.mxu0 0.0
        %7537 = vmatprep.subr.mxu0 0.0
        %7538 = vmatpush1.msra.mxu0 0.0
        %7539 = vmatprep.subr.mxu0 0.0
        %7540 = vmatpush1.msra.mxu0 0.0
        %7541 = vmatprep.subr.mxu0 0.0
        %7542 = vmatpush1.msra.mxu0 0.0
        %7543 = vmatprep.subr.mxu0 0.0
        %7544 = vmatpush1.msra.mxu0 0.0
        %7545 = vmatprep.subr.mxu0 0.0
        %7546 = vmatpush1.msra.mxu0 0.0
        %7547 = vmatprep.subr.mxu0 0.0
        %7548 = vmatpush1.msra.mxu0 0.0
        %7549 = vmatprep.subr.mxu0 0.0
        %7550 = vmatpush1.msra.mxu0 0.0
        %7551 = vmatprep.subr.mxu0 0.0
        %7552 = vmatpush1.msra.mxu0 0.0
        %7553 = vmatprep.subr.mxu0 0.0
        %7554 = vmatpush1.msra.mxu0 0.0
        %7555 = vmatprep.subr.mxu0 0.0
        %7556 = vmatpush1.msra.mxu0 0.0
        %7557 = vmatprep.subr.mxu0 0.0
        %7558 = vmatpush1.msra.mxu0 0.0
        %7559 = vmatprep.subr.mxu0 0.0
        %7560 = vmatpush1.msra.mxu0 0.0
        %7561 = vmatprep.subr.mxu0 0.0
        %7562 = vmatpush1.msra.mxu0 0.0
        %7563 = vmatprep.subr.mxu0 0.0
        %7564 = vmatpush1.msra.mxu0 0.0
        %7565 = vmatprep.subr.mxu0 0.0
        %7566 = vmatpush1.msra.mxu0 0.0
        %7567 = vmatprep.subr.mxu0 0.0
        %7568 = vmatpush1.msra.mxu0 0.0
        %7569 = vmatprep.mubr.f32.mxu0 0.0
        %7570 = vmatmul.mubr.f32.gmra.mrb[0].mxu0 %v6519
        %v7571 = vpop.f32.mrb[0].mxu0
        %v7572 = vadd.f32 %v7503, %v7571
        %v7573 = vpop.f32.mrb[0].mxu0
        %7574 = vdwg.mxu0
        %v7576 = vsel %vm1375, %v7406, 0
        %v7579 = vsel %vm1375, %v7489, 0
        %7581 = vmatprep.subr.mxu0 0.0
        %7582 = vmatpush1.xpose.msra.mxu0 %v7579
        %7583 = vmatprep.subr.mxu0 0.0
        %7584 = vmatpush1.xpose.msra.mxu0 0.0
        %7585 = vmatprep.subr.mxu0 0.0
        %7586 = vmatpush1.xpose.msra.mxu0 0.0
        %7587 = vmatprep.subr.mxu0 0.0
        %7588 = vmatpush1.xpose.msra.mxu0 0.0
        %7589 = vmatprep.subr.mxu0 0.0
        %7590 = vmatpush1.xpose.msra.mxu0 0.0
        %7591 = vmatprep.subr.mxu0 0.0
        %7592 = vmatpush1.xpose.msra.mxu0 0.0
        %7593 = vmatprep.subr.mxu0 0.0
        %7594 = vmatpush1.xpose.msra.mxu0 0.0
        %7595 = vmatprep.subr.mxu0 0.0
        %7596 = vmatpush1.xpose.msra.mxu0 0.0
        %7597 = vmatprep.subr.mxu0 0.0
        %7598 = vmatpush1.xpose.msra.mxu0 0.0
        %7599 = vmatprep.subr.mxu0 0.0
        %7600 = vmatpush1.xpose.msra.mxu0 0.0
        %7601 = vmatprep.subr.mxu0 0.0
        %7602 = vmatpush1.xpose.msra.mxu0 0.0
        %7603 = vmatprep.subr.mxu0 0.0
        %7604 = vmatpush1.xpose.msra.mxu0 0.0
        %7605 = vmatprep.subr.mxu0 0.0
        %7606 = vmatpush1.xpose.msra.mxu0 0.0
        %7607 = vmatprep.subr.mxu0 0.0
        %7608 = vmatpush1.xpose.msra.mxu0 0.0
        %7609 = vmatprep.subr.mxu0 0.0
        %7610 = vmatpush1.xpose.msra.mxu0 0.0
        %7611 = vmatprep.subr.mxu0 0.0
        %7612 = vmatpush1.xpose.msra.mxu0 0.0
        %7613 = vmatprep.subr.mxu0 0.0
        %7614 = vmatpush1.xpose.msra.mxu0 0.0
        %7615 = vmatprep.subr.mxu0 0.0
        %7616 = vmatpush1.xpose.msra.mxu0 0.0
        %7617 = vmatprep.subr.mxu0 0.0
        %7618 = vmatpush1.xpose.msra.mxu0 0.0
        %7619 = vmatprep.subr.mxu0 0.0
        %7620 = vmatpush1.xpose.msra.mxu0 0.0
        %7621 = vmatprep.subr.mxu0 0.0
        %7622 = vmatpush1.xpose.msra.mxu0 0.0
        %7623 = vmatprep.subr.mxu0 0.0
        %7624 = vmatpush1.xpose.msra.mxu0 0.0
        %7625 = vmatprep.subr.mxu0 0.0
        %7626 = vmatpush1.xpose.msra.mxu0 0.0
        %7627 = vmatprep.subr.mxu0 0.0
        %7628 = vmatpush1.xpose.msra.mxu0 0.0
        %7629 = vmatprep.subr.mxu0 0.0
        %7630 = vmatpush1.xpose.msra.mxu0 0.0
        %7631 = vmatprep.subr.mxu0 0.0
        %7632 = vmatpush1.xpose.msra.mxu0 0.0
        %7633 = vmatprep.subr.mxu0 0.0
        %7634 = vmatpush1.xpose.msra.mxu0 0.0
        %7635 = vmatprep.subr.mxu0 0.0
        %7636 = vmatpush1.xpose.msra.mxu0 0.0
        %7637 = vmatprep.subr.mxu0 0.0
        %7638 = vmatpush1.xpose.msra.mxu0 0.0
        %7639 = vmatprep.subr.mxu0 0.0
        %7640 = vmatpush1.xpose.msra.mxu0 0.0
        %7641 = vmatprep.subr.mxu0 0.0
        %7642 = vmatpush1.xpose.msra.mxu0 0.0
        %7643 = vmatprep.subr.mxu0 0.0
        %7644 = vmatpush1.xpose.msra.mxu0 0.0
        %7645 = vmatprep.mubr.f32.mxu0 0.0
        %7646 = vmatmul.mubr.f32.gmra.mrb[0].mxu0 %v7576
        %v7647 = vpop.f32.mrb[0].mxu0
        %v7648 = vadd.f32 0.0, %v7647
        %v7649 = vpop.f32.mrb[0].mxu0
        %7650 = vdwg.mxu0
        %v7651 = vsel %vm1375, %v7648, -inf
        %7652 = vmax.xlane.f32.xlu0 %v7651
        %v7653 = vpop.xlane.xlu0 %7652
        %v7654 = vsub.f32 %v7648, %v7653
        %v7655 = vmul.f32 %v7654, 1.442695
        %v7656 = vpow.pop %v7655
        %v7657 = vsel %vm1375, %v7656, 0.0
        %7658 = vadd.xlane.f32.xlu0 %v7657
        %v7659 = vpop.xlane.xlu0 %7658
        %v7660 = vrcp.pop %v7659
        %v7661 = vmul.f32 %v7656, %v7660
        %v7663 = vsel %vm1375, %v7661, 0
        %7665 = vmatprep.subr.mxu0 0.0
        %7666 = vmatpush1.msra.mxu0 %v7572
        %7667 = vmatprep.subr.mxu0 0.0
        %7668 = vmatpush1.msra.mxu0 0.0
        %7669 = vmatprep.subr.mxu0 0.0
        %7670 = vmatpush1.msra.mxu0 0.0
        %7671 = vmatprep.subr.mxu0 0.0
        %7672 = vmatpush1.msra.mxu0 0.0
        %7673 = vmatprep.subr.mxu0 0.0
        %7674 = vmatpush1.msra.mxu0 0.0
        %7675 = vmatprep.subr.mxu0 0.0
        %7676 = vmatpush1.msra.mxu0 0.0
        %7677 = vmatprep.subr.mxu0 0.0
        %7678 = vmatpush1.msra.mxu0 0.0
        %7679 = vmatprep.subr.mxu0 0.0
        %7680 = vmatpush1.msra.mxu0 0.0
        %7681 = vmatprep.subr.mxu0 0.0
        %7682 = vmatpush1.msra.mxu0 0.0
        %7683 = vmatprep.subr.mxu0 0.0
        %7684 = vmatpush1.msra.mxu0 0.0
        %7685 = vmatprep.subr.mxu0 0.0
        %7686 = vmatpush1.msra.mxu0 0.0
        %7687 = vmatprep.subr.mxu0 0.0
        %7688 = vmatpush1.msra.mxu0 0.0
        %7689 = vmatprep.subr.mxu0 0.0
        %7690 = vmatpush1.msra.mxu0 0.0
        %7691 = vmatprep.subr.mxu0 0.0
        %7692 = vmatpush1.msra.mxu0 0.0
        %7693 = vmatprep.subr.mxu0 0.0
        %7694 = vmatpush1.msra.mxu0 0.0
        %7695 = vmatprep.subr.mxu0 0.0
        %7696 = vmatpush1.msra.mxu0 0.0
        %7697 = vmatprep.subr.mxu0 0.0
        %7698 = vmatpush1.msra.mxu0 0.0
        %7699 = vmatprep.subr.mxu0 0.0
        %7700 = vmatpush1.msra.mxu0 0.0
        %7701 = vmatprep.subr.mxu0 0.0
        %7702 = vmatpush1.msra.mxu0 0.0
        %7703 = vmatprep.subr.mxu0 0.0
        %7704 = vmatpush1.msra.mxu0 0.0
        %7705 = vmatprep.subr.mxu0 0.0
        %7706 = vmatpush1.msra.mxu0 0.0
        %7707 = vmatprep.subr.mxu0 0.0
        %7708 = vmatpush1.msra.mxu0 0.0
        %7709 = vmatprep.subr.mxu0 0.0
        %7710 = vmatpush1.msra.mxu0 0.0
        %7711 = vmatprep.subr.mxu0 0.0
        %7712 = vmatpush1.msra.mxu0 0.0
        %7713 = vmatprep.subr.mxu0 0.0
        %7714 = vmatpush1.msra.mxu0 0.0
        %7715 = vmatprep.subr.mxu0 0.0
        %7716 = vmatpush1.msra.mxu0 0.0
        %7717 = vmatprep.subr.mxu0 0.0
        %7718 = vmatpush1.msra.mxu0 0.0
        %7719 = vmatprep.subr.mxu0 0.0
        %7720 = vmatpush1.msra.mxu0 0.0
        %7721 = vmatprep.subr.mxu0 0.0
        %7722 = vmatpush1.msra.mxu0 0.0
        %7723 = vmatprep.subr.mxu0 0.0
        %7724 = vmatpush1.msra.mxu0 0.0
        %7725 = vmatprep.subr.mxu0 0.0
        %7726 = vmatpush1.msra.mxu0 0.0
        %7727 = vmatprep.subr.mxu0 0.0
        %7728 = vmatpush1.msra.mxu0 0.0
        %7729 = vmatprep.mubr.f32.mxu0 0.0
        %7730 = vmatmul.mubr.f32.gmra.mrb[0].mxu0 %v7663
        %v7731 = vpop.f32.mrb[0].mxu0
        %v7732 = vadd.f32 0.0, %v7731
        %v7733 = vpop.f32.mrb[0].mxu0
        %7734 = vdwg.mxu0
        %v7735 = vadd.f32 %v7323, %v7732
        %s7736 = scalar_lea.vmem %s33, 224
        %v7737 = vld [vmem:[%s7736] sm:$0xff]
        %v7738 = vld [vmem:[%s7736 + $0x8] sm:$0xff]
        %v7739 = vld [vmem:[%s7736 + $0x10] sm:$0xff]
        %v7740 = vld [vmem:[%s7736 + $0x18] sm:$0xff]
        %s7741 = scalar_lea.vmem %s35, 7
        %v7742 = vld [vmem:[%s7741] sm:$0x1]
        %v7744 = vlaneseq
        %v7745 = vshrl.u32 %v7744, 7
        %v7746 = vsub.s32 0, %v7745
        %v7747 = vrot.slane %v7742, %v7746
        %7749 = vmatprep.subr.mxu0 0.0
        %7750 = vmatpush1.msra.mxu0 %v7737
        %7751 = vmatprep.subr.mxu0 0.0
        %7752 = vmatpush1.msra.mxu0 %v7738
        %7753 = vmatprep.subr.mxu0 0.0
        %7754 = vmatpush1.msra.mxu0 %v7739
        %7755 = vmatprep.subr.mxu0 0.0
        %7756 = vmatpush1.msra.mxu0 %v7740
        %7757 = vmatprep.subr.mxu0 0.0
        %7758 = vmatpush1.msra.mxu0 0.0
        %7759 = vmatprep.subr.mxu0 0.0
        %7760 = vmatpush1.msra.mxu0 0.0
        %7761 = vmatprep.subr.mxu0 0.0
        %7762 = vmatpush1.msra.mxu0 0.0
        %7763 = vmatprep.subr.mxu0 0.0
        %7764 = vmatpush1.msra.mxu0 0.0
        %7765 = vmatprep.subr.mxu0 0.0
        %7766 = vmatpush1.msra.mxu0 0.0
        %7767 = vmatprep.subr.mxu0 0.0
        %7768 = vmatpush1.msra.mxu0 0.0
        %7769 = vmatprep.subr.mxu0 0.0
        %7770 = vmatpush1.msra.mxu0 0.0
        %7771 = vmatprep.subr.mxu0 0.0
        %7772 = vmatpush1.msra.mxu0 0.0
        %7773 = vmatprep.subr.mxu0 0.0
        %7774 = vmatpush1.msra.mxu0 0.0
        %7775 = vmatprep.subr.mxu0 0.0
        %7776 = vmatpush1.msra.mxu0 0.0
        %7777 = vmatprep.subr.mxu0 0.0
        %7778 = vmatpush1.msra.mxu0 0.0
        %7779 = vmatprep.subr.mxu0 0.0
        %7780 = vmatpush1.msra.mxu0 0.0
        %7781 = vmatprep.subr.mxu0 0.0
        %7782 = vmatpush1.msra.mxu0 0.0
        %7783 = vmatprep.subr.mxu0 0.0
        %7784 = vmatpush1.msra.mxu0 0.0
        %7785 = vmatprep.subr.mxu0 0.0
        %7786 = vmatpush1.msra.mxu0 0.0
        %7787 = vmatprep.subr.mxu0 0.0
        %7788 = vmatpush1.msra.mxu0 0.0
        %7789 = vmatprep.subr.mxu0 0.0
        %7790 = vmatpush1.msra.mxu0 0.0
        %7791 = vmatprep.subr.mxu0 0.0
        %7792 = vmatpush1.msra.mxu0 0.0
        %7793 = vmatprep.subr.mxu0 0.0
        %7794 = vmatpush1.msra.mxu0 0.0
        %7795 = vmatprep.subr.mxu0 0.0
        %7796 = vmatpush1.msra.mxu0 0.0
        %7797 = vmatprep.subr.mxu0 0.0
        %7798 = vmatpush1.msra.mxu0 0.0
        %7799 = vmatprep.subr.mxu0 0.0
        %7800 = vmatpush1.msra.mxu0 0.0
        %7801 = vmatprep.subr.mxu0 0.0
        %7802 = vmatpush1.msra.mxu0 0.0
        %7803 = vmatprep.subr.mxu0 0.0
        %7804 = vmatpush1.msra.mxu0 0.0
        %7805 = vmatprep.subr.mxu0 0.0
        %7806 = vmatpush1.msra.mxu0 0.0
        %7807 = vmatprep.subr.mxu0 0.0
        %7808 = vmatpush1.msra.mxu0 0.0
        %7809 = vmatprep.subr.mxu0 0.0
        %7810 = vmatpush1.msra.mxu0 0.0
        %7811 = vmatprep.subr.mxu0 0.0
        %7812 = vmatpush1.msra.mxu0 0.0
        %7813 = vmatprep.mubr.f32.mxu0 0.0
        %7814 = vmatmul.mubr.f32.gmra.mrb[0].mxu0 %v6519
        %v7815 = vpop.f32.mrb[0].mxu0
        %v7816 = vadd.f32 %v7747, %v7815
        %v7817 = vpop.f32.mrb[0].mxu0
        %7818 = vdwg.mxu0
        %s7819 = scalar_lea.vmem %s37, 224
        %v7820 = vld [vmem:[%s7819] sm:$0xff]
        %v7821 = vld [vmem:[%s7819 + $0x8] sm:$0xff]
        %v7822 = vld [vmem:[%s7819 + $0x10] sm:$0xff]
        %v7823 = vld [vmem:[%s7819 + $0x18] sm:$0xff]
        %s7824 = scalar_lea.vmem %s39, 7
        %v7825 = vld [vmem:[%s7824] sm:$0x1]
        %v7827 = vlaneseq
        %v7828 = vshrl.u32 %v7827, 7
        %v7829 = vsub.s32 0, %v7828
        %v7830 = vrot.slane %v7825, %v7829
        %7832 = vmatprep.subr.mxu0 0.0
        %7833 = vmatpush1.msra.mxu0 %v7820
        %7834 = vmatprep.subr.mxu0 0.0
        %7835 = vmatpush1.msra.mxu0 %v7821
        %7836 = vmatprep.subr.mxu0 0.0
        %7837 = vmatpush1.msra.mxu0 %v7822
        %7838 = vmatprep.subr.mxu0 0.0
        %7839 = vmatpush1.msra.mxu0 %v7823
        %7840 = vmatprep.subr.mxu0 0.0
        %7841 = vmatpush1.msra.mxu0 0.0
        %7842 = vmatprep.subr.mxu0 0.0
        %7843 = vmatpush1.msra.mxu0 0.0
        %7844 = vmatprep.subr.mxu0 0.0
        %7845 = vmatpush1.msra.mxu0 0.0
        %7846 = vmatprep.subr.mxu0 0.0
        %7847 = vmatpush1.msra.mxu0 0.0
        %7848 = vmatprep.subr.mxu0 0.0
        %7849 = vmatpush1.msra.mxu0 0.0
        %7850 = vmatprep.subr.mxu0 0.0
        %7851 = vmatpush1.msra.mxu0 0.0
        %7852 = vmatprep.subr.mxu0 0.0
        %7853 = vmatpush1.msra.mxu0 0.0
        %7854 = vmatprep.subr.mxu0 0.0
        %7855 = vmatpush1.msra.mxu0 0.0
        %7856 = vmatprep.subr.mxu0 0.0
        %7857 = vmatpush1.msra.mxu0 0.0
        %7858 = vmatprep.subr.mxu0 0.0
        %7859 = vmatpush1.msra.mxu0 0.0
        %7860 = vmatprep.subr.mxu0 0.0
        %7861 = vmatpush1.msra.mxu0 0.0
        %7862 = vmatprep.subr.mxu0 0.0
        %7863 = vmatpush1.msra.mxu0 0.0
        %7864 = vmatprep.subr.mxu0 0.0
        %7865 = vmatpush1.msra.mxu0 0.0
        %7866 = vmatprep.subr.mxu0 0.0
        %7867 = vmatpush1.msra.mxu0 0.0
        %7868 = vmatprep.subr.mxu0 0.0
        %7869 = vmatpush1.msra.mxu0 0.0
        %7870 = vmatprep.subr.mxu0 0.0
        %7871 = vmatpush1.msra.mxu0 0.0
        %7872 = vmatprep.subr.mxu0 0.0
        %7873 = vmatpush1.msra.mxu0 0.0
        %7874 = vmatprep.subr.mxu0 0.0
        %7875 = vmatpush1.msra.mxu0 0.0
        %7876 = vmatprep.subr.mxu0 0.0
        %7877 = vmatpush1.msra.mxu0 0.0
        %7878 = vmatprep.subr.mxu0 0.0
        %7879 = vmatpush1.msra.mxu0 0.0
        %7880 = vmatprep.subr.mxu0 0.0
        %7881 = vmatpush1.msra.mxu0 0.0
        %7882 = vmatprep.subr.mxu0 0.0
        %7883 = vmatpush1.msra.mxu0 0.0
        %7884 = vmatprep.subr.mxu0 0.0
        %7885 = vmatpush1.msra.mxu0 0.0
        %7886 = vmatprep.subr.mxu0 0.0
        %7887 = vmatpush1.msra.mxu0 0.0
        %7888 = vmatprep.subr.mxu0 0.0
        %7889 = vmatpush1.msra.mxu0 0.0
        %7890 = vmatprep.subr.mxu0 0.0
        %7891 = vmatpush1.msra.mxu0 0.0
        %7892 = vmatprep.subr.mxu0 0.0
        %7893 = vmatpush1.msra.mxu0 0.0
        %7894 = vmatprep.subr.mxu0 0.0
        %7895 = vmatpush1.msra.mxu0 0.0
        %7896 = vmatprep.mubr.f32.mxu0 0.0
        %7897 = vmatmul.mubr.f32.gmra.mrb[0].mxu0 %v6519
        %v7898 = vpop.f32.mrb[0].mxu0
        %v7899 = vadd.f32 %v7830, %v7898
        %v7900 = vpop.f32.mrb[0].mxu0
        %7901 = vdwg.mxu0
        %s7902 = scalar_lea.vmem %s41, 224
        %v7903 = vld [vmem:[%s7902] sm:$0xff]
        %v7904 = vld [vmem:[%s7902 + $0x8] sm:$0xff]
        %v7905 = vld [vmem:[%s7902 + $0x10] sm:$0xff]
        %v7906 = vld [vmem:[%s7902 + $0x18] sm:$0xff]
        %s7907 = scalar_lea.vmem %s43, 7
        %v7908 = vld [vmem:[%s7907] sm:$0x1]
        %v7910 = vlaneseq
        %v7911 = vshrl.u32 %v7910, 7
        %v7912 = vsub.s32 0, %v7911
        %v7913 = vrot.slane %v7908, %v7912
        %7915 = vmatprep.subr.mxu0 0.0
        %7916 = vmatpush1.msra.mxu0 %v7903
        %7917 = vmatprep.subr.mxu0 0.0
        %7918 = vmatpush1.msra.mxu0 %v7904
        %7919 = vmatprep.subr.mxu0 0.0
        %7920 = vmatpush1.msra.mxu0 %v7905
        %7921 = vmatprep.subr.mxu0 0.0
        %7922 = vmatpush1.msra.mxu0 %v7906
        %7923 = vmatprep.subr.mxu0 0.0
        %7924 = vmatpush1.msra.mxu0 0.0
        %7925 = vmatprep.subr.mxu0 0.0
        %7926 = vmatpush1.msra.mxu0 0.0
        %7927 = vmatprep.subr.mxu0 0.0
        %7928 = vmatpush1.msra.mxu0 0.0
        %7929 = vmatprep.subr.mxu0 0.0
        %7930 = vmatpush1.msra.mxu0 0.0
        %7931 = vmatprep.subr.mxu0 0.0
        %7932 = vmatpush1.msra.mxu0 0.0
        %7933 = vmatprep.subr.mxu0 0.0
        %7934 = vmatpush1.msra.mxu0 0.0
        %7935 = vmatprep.subr.mxu0 0.0
        %7936 = vmatpush1.msra.mxu0 0.0
        %7937 = vmatprep.subr.mxu0 0.0
        %7938 = vmatpush1.msra.mxu0 0.0
        %7939 = vmatprep.subr.mxu0 0.0
        %7940 = vmatpush1.msra.mxu0 0.0
        %7941 = vmatprep.subr.mxu0 0.0
        %7942 = vmatpush1.msra.mxu0 0.0
        %7943 = vmatprep.subr.mxu0 0.0
        %7944 = vmatpush1.msra.mxu0 0.0
        %7945 = vmatprep.subr.mxu0 0.0
        %7946 = vmatpush1.msra.mxu0 0.0
        %7947 = vmatprep.subr.mxu0 0.0
        %7948 = vmatpush1.msra.mxu0 0.0
        %7949 = vmatprep.subr.mxu0 0.0
        %7950 = vmatpush1.msra.mxu0 0.0
        %7951 = vmatprep.subr.mxu0 0.0
        %7952 = vmatpush1.msra.mxu0 0.0
        %7953 = vmatprep.subr.mxu0 0.0
        %7954 = vmatpush1.msra.mxu0 0.0
        %7955 = vmatprep.subr.mxu0 0.0
        %7956 = vmatpush1.msra.mxu0 0.0
        %7957 = vmatprep.subr.mxu0 0.0
        %7958 = vmatpush1.msra.mxu0 0.0
        %7959 = vmatprep.subr.mxu0 0.0
        %7960 = vmatpush1.msra.mxu0 0.0
        %7961 = vmatprep.subr.mxu0 0.0
        %7962 = vmatpush1.msra.mxu0 0.0
        %7963 = vmatprep.subr.mxu0 0.0
        %7964 = vmatpush1.msra.mxu0 0.0
        %7965 = vmatprep.subr.mxu0 0.0
        %7966 = vmatpush1.msra.mxu0 0.0
        %7967 = vmatprep.subr.mxu0 0.0
        %7968 = vmatpush1.msra.mxu0 0.0
        %7969 = vmatprep.subr.mxu0 0.0
        %7970 = vmatpush1.msra.mxu0 0.0
        %7971 = vmatprep.subr.mxu0 0.0
        %7972 = vmatpush1.msra.mxu0 0.0
        %7973 = vmatprep.subr.mxu0 0.0
        %7974 = vmatpush1.msra.mxu0 0.0
        %7975 = vmatprep.subr.mxu0 0.0
        %7976 = vmatpush1.msra.mxu0 0.0
        %7977 = vmatprep.subr.mxu0 0.0
        %7978 = vmatpush1.msra.mxu0 0.0
        %7979 = vmatprep.mubr.f32.mxu0 0.0
        %7980 = vmatmul.mubr.f32.gmra.mrb[0].mxu0 %v6519
        %v7981 = vpop.f32.mrb[0].mxu0
        %v7982 = vadd.f32 %v7913, %v7981
        %v7983 = vpop.f32.mrb[0].mxu0
        %7984 = vdwg.mxu0
        %v7986 = vsel %vm1375, %v7816, 0
        %v7989 = vsel %vm1375, %v7899, 0
        %7991 = vmatprep.subr.mxu0 0.0
        %7992 = vmatpush1.xpose.msra.mxu0 %v7989
        %7993 = vmatprep.subr.mxu0 0.0
        %7994 = vmatpush1.xpose.msra.mxu0 0.0
        %7995 = vmatprep.subr.mxu0 0.0
        %7996 = vmatpush1.xpose.msra.mxu0 0.0
        %7997 = vmatprep.subr.mxu0 0.0
        %7998 = vmatpush1.xpose.msra.mxu0 0.0
        %7999 = vmatprep.subr.mxu0 0.0
        %8000 = vmatpush1.xpose.msra.mxu0 0.0
        %8001 = vmatprep.subr.mxu0 0.0
        %8002 = vmatpush1.xpose.msra.mxu0 0.0
        %8003 = vmatprep.subr.mxu0 0.0
        %8004 = vmatpush1.xpose.msra.mxu0 0.0
        %8005 = vmatprep.subr.mxu0 0.0
        %8006 = vmatpush1.xpose.msra.mxu0 0.0
        %8007 = vmatprep.subr.mxu0 0.0
        %8008 = vmatpush1.xpose.msra.mxu0 0.0
        %8009 = vmatprep.subr.mxu0 0.0
        %8010 = vmatpush1.xpose.msra.mxu0 0.0
        %8011 = vmatprep.subr.mxu0 0.0
        %8012 = vmatpush1.xpose.msra.mxu0 0.0
        %8013 = vmatprep.subr.mxu0 0.0
        %8014 = vmatpush1.xpose.msra.mxu0 0.0
        %8015 = vmatprep.subr.mxu0 0.0
        %8016 = vmatpush1.xpose.msra.mxu0 0.0
        %8017 = vmatprep.subr.mxu0 0.0
        %8018 = vmatpush1.xpose.msra.mxu0 0.0
        %8019 = vmatprep.subr.mxu0 0.0
        %8020 = vmatpush1.xpose.msra.mxu0 0.0
        %8021 = vmatprep.subr.mxu0 0.0
        %8022 = vmatpush1.xpose.msra.mxu0 0.0
        %8023 = vmatprep.subr.mxu0 0.0
        %8024 = vmatpush1.xpose.msra.mxu0 0.0
        %8025 = vmatprep.subr.mxu0 0.0
        %8026 = vmatpush1.xpose.msra.mxu0 0.0
        %8027 = vmatprep.subr.mxu0 0.0
        %8028 = vmatpush1.xpose.msra.mxu0 0.0
        %8029 = vmatprep.subr.mxu0 0.0
        %8030 = vmatpush1.xpose.msra.mxu0 0.0
        %8031 = vmatprep.subr.mxu0 0.0
        %8032 = vmatpush1.xpose.msra.mxu0 0.0
        %8033 = vmatprep.subr.mxu0 0.0
        %8034 = vmatpush1.xpose.msra.mxu0 0.0
        %8035 = vmatprep.subr.mxu0 0.0
        %8036 = vmatpush1.xpose.msra.mxu0 0.0
        %8037 = vmatprep.subr.mxu0 0.0
        %8038 = vmatpush1.xpose.msra.mxu0 0.0
        %8039 = vmatprep.subr.mxu0 0.0
        %8040 = vmatpush1.xpose.msra.mxu0 0.0
        %8041 = vmatprep.subr.mxu0 0.0
        %8042 = vmatpush1.xpose.msra.mxu0 0.0
        %8043 = vmatprep.subr.mxu0 0.0
        %8044 = vmatpush1.xpose.msra.mxu0 0.0
        %8045 = vmatprep.subr.mxu0 0.0
        %8046 = vmatpush1.xpose.msra.mxu0 0.0
        %8047 = vmatprep.subr.mxu0 0.0
        %8048 = vmatpush1.xpose.msra.mxu0 0.0
        %8049 = vmatprep.subr.mxu0 0.0
        %8050 = vmatpush1.xpose.msra.mxu0 0.0
        %8051 = vmatprep.subr.mxu0 0.0
        %8052 = vmatpush1.xpose.msra.mxu0 0.0
        %8053 = vmatprep.subr.mxu0 0.0
        %8054 = vmatpush1.xpose.msra.mxu0 0.0
        %8055 = vmatprep.mubr.f32.mxu0 0.0
        %8056 = vmatmul.mubr.f32.gmra.mrb[0].mxu0 %v7986
        %v8057 = vpop.f32.mrb[0].mxu0
        %v8058 = vadd.f32 0.0, %v8057
        %v8059 = vpop.f32.mrb[0].mxu0
        %8060 = vdwg.mxu0
        %v8061 = vsel %vm1375, %v8058, -inf
        %8062 = vmax.xlane.f32.xlu0 %v8061
        %v8063 = vpop.xlane.xlu0 %8062
        %v8064 = vsub.f32 %v8058, %v8063
        %v8065 = vmul.f32 %v8064, 1.442695
        %v8066 = vpow.pop %v8065
        %v8067 = vsel %vm1375, %v8066, 0.0
        %8068 = vadd.xlane.f32.xlu0 %v8067
        %v8069 = vpop.xlane.xlu0 %8068
        %v8070 = vrcp.pop %v8069
        %v8071 = vmul.f32 %v8066, %v8070
        %v8073 = vsel %vm1375, %v8071, 0
        %8075 = vmatprep.subr.mxu0 0.0
        %8076 = vmatpush1.msra.mxu0 %v7982
        %8077 = vmatprep.subr.mxu0 0.0
        %8078 = vmatpush1.msra.mxu0 0.0
        %8079 = vmatprep.subr.mxu0 0.0
        %8080 = vmatpush1.msra.mxu0 0.0
        %8081 = vmatprep.subr.mxu0 0.0
        %8082 = vmatpush1.msra.mxu0 0.0
        %8083 = vmatprep.subr.mxu0 0.0
        %8084 = vmatpush1.msra.mxu0 0.0
        %8085 = vmatprep.subr.mxu0 0.0
        %8086 = vmatpush1.msra.mxu0 0.0
        %8087 = vmatprep.subr.mxu0 0.0
        %8088 = vmatpush1.msra.mxu0 0.0
        %8089 = vmatprep.subr.mxu0 0.0
        %8090 = vmatpush1.msra.mxu0 0.0
        %8091 = vmatprep.subr.mxu0 0.0
        %8092 = vmatpush1.msra.mxu0 0.0
        %8093 = vmatprep.subr.mxu0 0.0
        %8094 = vmatpush1.msra.mxu0 0.0
        %8095 = vmatprep.subr.mxu0 0.0
        %8096 = vmatpush1.msra.mxu0 0.0
        %8097 = vmatprep.subr.mxu0 0.0
        %8098 = vmatpush1.msra.mxu0 0.0
        %8099 = vmatprep.subr.mxu0 0.0
        %8100 = vmatpush1.msra.mxu0 0.0
        %8101 = vmatprep.subr.mxu0 0.0
        %8102 = vmatpush1.msra.mxu0 0.0
        %8103 = vmatprep.subr.mxu0 0.0
        %8104 = vmatpush1.msra.mxu0 0.0
        %8105 = vmatprep.subr.mxu0 0.0
        %8106 = vmatpush1.msra.mxu0 0.0
        %8107 = vmatprep.subr.mxu0 0.0
        %8108 = vmatpush1.msra.mxu0 0.0
        %8109 = vmatprep.subr.mxu0 0.0
        %8110 = vmatpush1.msra.mxu0 0.0
        %8111 = vmatprep.subr.mxu0 0.0
        %8112 = vmatpush1.msra.mxu0 0.0
        %8113 = vmatprep.subr.mxu0 0.0
        %8114 = vmatpush1.msra.mxu0 0.0
        %8115 = vmatprep.subr.mxu0 0.0
        %8116 = vmatpush1.msra.mxu0 0.0
        %8117 = vmatprep.subr.mxu0 0.0
        %8118 = vmatpush1.msra.mxu0 0.0
        %8119 = vmatprep.subr.mxu0 0.0
        %8120 = vmatpush1.msra.mxu0 0.0
        %8121 = vmatprep.subr.mxu0 0.0
        %8122 = vmatpush1.msra.mxu0 0.0
        %8123 = vmatprep.subr.mxu0 0.0
        %8124 = vmatpush1.msra.mxu0 0.0
        %8125 = vmatprep.subr.mxu0 0.0
        %8126 = vmatpush1.msra.mxu0 0.0
        %8127 = vmatprep.subr.mxu0 0.0
        %8128 = vmatpush1.msra.mxu0 0.0
        %8129 = vmatprep.subr.mxu0 0.0
        %8130 = vmatpush1.msra.mxu0 0.0
        %8131 = vmatprep.subr.mxu0 0.0
        %8132 = vmatpush1.msra.mxu0 0.0
        %8133 = vmatprep.subr.mxu0 0.0
        %8134 = vmatpush1.msra.mxu0 0.0
        %8135 = vmatprep.subr.mxu0 0.0
        %8136 = vmatpush1.msra.mxu0 0.0
        %8137 = vmatprep.subr.mxu0 0.0
        %8138 = vmatpush1.msra.mxu0 0.0
        %8139 = vmatprep.mubr.f32.mxu0 0.0
        %8140 = vmatmul.mubr.f32.gmra.mrb[0].mxu0 %v8073
        %v8141 = vpop.f32.mrb[0].mxu0
        %v8142 = vadd.f32 0.0, %v8141
        %v8143 = vpop.f32.mrb[0].mxu0
        %8144 = vdwg.mxu0
        %v8145 = vadd.f32 %v7735, %v8142
        %s8146 = scalar_lea.vmem %s45, 1
        %v8147 = vld [vmem:[%s8146] sm:$0x1]
        %v8149 = vlaneseq
        %v8150 = vshrl.u32 %v8149, 7
        %v8151 = vsub.s32 0, %v8150
        %v8152 = vrot.slane %v8147, %v8151
        %v8154 = vadd.f32 %v8145, %v8152
        %s8155 = scalar_lea.vmem %s47, 1
        %v8156 = vld [vmem:[%s8155] sm:$0x1]
        %v8158 = vlaneseq
        %v8159 = vshrl.u32 %v8158, 7
        %v8160 = vsub.s32 0, %v8159
        %v8161 = vrot.slane %v8156, %v8160
        %v8163 = vmul.f32 %v8161, %v8154
        %v8164 = vadd.f32 %v6473, %v8163
        %s8165 = scalar_lea.vmem %s49, 1
        %v8166 = vld [vmem:[%s8165] sm:$0x1]
        %s8167 = scalar_lea.vmem %s51, 1
        %v8168 = vld [vmem:[%s8167] sm:$0x1]
        %v8169 = vsel %vm1078, %v8164, 0.0
        %8170 = vadd.xlane.f32.xlu0 %v8169
        %v8171 = vpop.xlane.xlu0 %8170
        %v8172 = vmul.f32 %v8171, %v1082
        %v8173 = vsub.f32 %v8164, %v8172
        %v8174 = vmul.f32 %v8173, %v8173
        %v8175 = vsel %vm1078, %v8174, 0.0
        %8176 = vadd.xlane.f32.xlu0 %v8175
        %v8177 = vpop.xlane.xlu0 %8176
        %v8178 = vmul.f32 %v8177, %v1082
        %v8179 = vadd.f32 %v8178, 1e-05
        %v8180 = vrsqrt.pop %v8179
        %v8181 = vmul.f32 %v8173, %v8180
        %v8183 = vlaneseq
        %v8184 = vshrl.u32 %v8183, 7
        %v8185 = vsub.s32 0, %v8184
        %v8186 = vrot.slane %v8166, %v8185
        %v8188 = vmul.f32 %v8181, %v8186
        %v8190 = vlaneseq
        %v8191 = vshrl.u32 %v8190, 7
        %v8192 = vsub.s32 0, %v8191
        %v8193 = vrot.slane %v8168, %v8192
        %v8195 = vadd.f32 %v8188, %v8193
        %s8196 = scalar_lea.vmem %s53, 32
        %v8197 = vld [vmem:[%s8196] sm:$0xff]
        %v8198 = vld [vmem:[%s8196 + $0x8] sm:$0xff]
        %v8199 = vld [vmem:[%s8196 + $0x10] sm:$0xff]
        %v8200 = vld [vmem:[%s8196 + $0x18] sm:$0xff]
        %s8201 = scalar_lea.vmem %s55, 1
        %v8202 = vld [vmem:[%s8201] sm:$0x1]
        %v8204 = vlaneseq
        %v8205 = vshrl.u32 %v8204, 7
        %v8206 = vsub.s32 0, %v8205
        %v8207 = vrot.slane %v8202, %v8206
        %v8210 = vsel %vm1078, %v8195, 0
        %8212 = vmatprep.subr.mxu0 0.0
        %8213 = vmatpush1.msra.mxu0 %v8197
        %8214 = vmatprep.subr.mxu0 0.0
        %8215 = vmatpush1.msra.mxu0 %v8198
        %8216 = vmatprep.subr.mxu0 0.0
        %8217 = vmatpush1.msra.mxu0 %v8199
        %8218 = vmatprep.subr.mxu0 0.0
        %8219 = vmatpush1.msra.mxu0 %v8200
        %8220 = vmatprep.subr.mxu0 0.0
        %8221 = vmatpush1.msra.mxu0 0.0
        %8222 = vmatprep.subr.mxu0 0.0
        %8223 = vmatpush1.msra.mxu0 0.0
        %8224 = vmatprep.subr.mxu0 0.0
        %8225 = vmatpush1.msra.mxu0 0.0
        %8226 = vmatprep.subr.mxu0 0.0
        %8227 = vmatpush1.msra.mxu0 0.0
        %8228 = vmatprep.subr.mxu0 0.0
        %8229 = vmatpush1.msra.mxu0 0.0
        %8230 = vmatprep.subr.mxu0 0.0
        %8231 = vmatpush1.msra.mxu0 0.0
        %8232 = vmatprep.subr.mxu0 0.0
        %8233 = vmatpush1.msra.mxu0 0.0
        %8234 = vmatprep.subr.mxu0 0.0
        %8235 = vmatpush1.msra.mxu0 0.0
        %8236 = vmatprep.subr.mxu0 0.0
        %8237 = vmatpush1.msra.mxu0 0.0
        %8238 = vmatprep.subr.mxu0 0.0
        %8239 = vmatpush1.msra.mxu0 0.0
        %8240 = vmatprep.subr.mxu0 0.0
        %8241 = vmatpush1.msra.mxu0 0.0
        %8242 = vmatprep.subr.mxu0 0.0
        %8243 = vmatpush1.msra.mxu0 0.0
        %8244 = vmatprep.subr.mxu0 0.0
        %8245 = vmatpush1.msra.mxu0 0.0
        %8246 = vmatprep.subr.mxu0 0.0
        %8247 = vmatpush1.msra.mxu0 0.0
        %8248 = vmatprep.subr.mxu0 0.0
        %8249 = vmatpush1.msra.mxu0 0.0
        %8250 = vmatprep.subr.mxu0 0.0
        %8251 = vmatpush1.msra.mxu0 0.0
        %8252 = vmatprep.subr.mxu0 0.0
        %8253 = vmatpush1.msra.mxu0 0.0
        %8254 = vmatprep.subr.mxu0 0.0
        %8255 = vmatpush1.msra.mxu0 0.0
        %8256 = vmatprep.subr.mxu0 0.0
        %8257 = vmatpush1.msra.mxu0 0.0
        %8258 = vmatprep.subr.mxu0 0.0
        %8259 = vmatpush1.msra.mxu0 0.0
        %8260 = vmatprep.subr.mxu0 0.0
        %8261 = vmatpush1.msra.mxu0 0.0
        %8262 = vmatprep.subr.mxu0 0.0
        %8263 = vmatpush1.msra.mxu0 0.0
        %8264 = vmatprep.subr.mxu0 0.0
        %8265 = vmatpush1.msra.mxu0 0.0
        %8266 = vmatprep.subr.mxu0 0.0
        %8267 = vmatpush1.msra.mxu0 0.0
        %8268 = vmatprep.subr.mxu0 0.0
        %8269 = vmatpush1.msra.mxu0 0.0
        %8270 = vmatprep.subr.mxu0 0.0
        %8271 = vmatpush1.msra.mxu0 0.0
        %8272 = vmatprep.subr.mxu0 0.0
        %8273 = vmatpush1.msra.mxu0 0.0
        %8274 = vmatprep.subr.mxu0 0.0
        %8275 = vmatpush1.msra.mxu0 0.0
        %8276 = vmatprep.mubr.f32.mxu0 0.0
        %8277 = vmatmul.mubr.f32.gmra.mrb[0].mxu0 %v8210
        %v8278 = vpop.f32.mrb[0].mxu0
        %v8279 = vadd.f32 %v8207, %v8278
        %v8280 = vpop.f32.mrb[0].mxu0
        %8281 = vdwg.mxu0
        %v8282 = vmul.f32 %v8279, %v8279
        %v8283 = vmul.f32 %v8279, %v8282
        %v8284 = vmul.f32 %v8283, 0.044715
        %v8285 = vadd.f32 %v8279, %v8284
        %v8286 = vmul.f32 %v8285, 0.7978846
        %v8287 = vtanh.pop %v8286
        %v8288 = vadd.f32 %v8287, 1.0
        %v8289 = vmul.f32 %v8288, 0.5
        %v8290 = vmul.f32 %v8279, %v8289
        %s8291 = scalar_lea.vmem %s57, 128
        %v8292 = vld [vmem:[%s8291] sm:$0xff]
        %v8293 = vld [vmem:[%s8291 + $0x8] sm:$0xff]
        %v8294 = vld [vmem:[%s8291 + $0x10] sm:$0xff]
        %v8295 = vld [vmem:[%s8291 + $0x18] sm:$0xff]
        %v8296 = vld [vmem:[%s8291 + $0x20] sm:$0xff]
        %v8297 = vld [vmem:[%s8291 + $0x28] sm:$0xff]
        %v8298 = vld [vmem:[%s8291 + $0x30] sm:$0xff]
        %v8299 = vld [vmem:[%s8291 + $0x38] sm:$0xff]
        %v8300 = vld [vmem:[%s8291 + $0x40] sm:$0xff]
        %v8301 = vld [vmem:[%s8291 + $0x48] sm:$0xff]
        %v8302 = vld [vmem:[%s8291 + $0x50] sm:$0xff]
        %v8303 = vld [vmem:[%s8291 + $0x58] sm:$0xff]
        %v8304 = vld [vmem:[%s8291 + $0x60] sm:$0xff]
        %v8305 = vld [vmem:[%s8291 + $0x68] sm:$0xff]
        %v8306 = vld [vmem:[%s8291 + $0x70] sm:$0xff]
        %v8307 = vld [vmem:[%s8291 + $0x78] sm:$0xff]
        %s8308 = scalar_lea.vmem %s59, 1
        %v8309 = vld [vmem:[%s8308] sm:$0x1]
        %v8311 = vlaneseq
        %v8312 = vshrl.u32 %v8311, 7
        %v8313 = vsub.s32 0, %v8312
        %v8314 = vrot.slane %v8309, %v8313
        %8316 = vmatprep.subr.mxu0 0.0
        %8317 = vmatpush1.msra.mxu0 %v8292
        %8318 = vmatprep.subr.mxu0 0.0
        %8319 = vmatpush1.msra.mxu0 %v8293
        %8320 = vmatprep.subr.mxu0 0.0
        %8321 = vmatpush1.msra.mxu0 %v8294
        %8322 = vmatprep.subr.mxu0 0.0
        %8323 = vmatpush1.msra.mxu0 %v8295
        %8324 = vmatprep.subr.mxu0 0.0
        %8325 = vmatpush1.msra.mxu0 %v8296
        %8326 = vmatprep.subr.mxu0 0.0
        %8327 = vmatpush1.msra.mxu0 %v8297
        %8328 = vmatprep.subr.mxu0 0.0
        %8329 = vmatpush1.msra.mxu0 %v8298
        %8330 = vmatprep.subr.mxu0 0.0
        %8331 = vmatpush1.msra.mxu0 %v8299
        %8332 = vmatprep.subr.mxu0 0.0
        %8333 = vmatpush1.msra.mxu0 %v8300
        %8334 = vmatprep.subr.mxu0 0.0
        %8335 = vmatpush1.msra.mxu0 %v8301
        %8336 = vmatprep.subr.mxu0 0.0
        %8337 = vmatpush1.msra.mxu0 %v8302
        %8338 = vmatprep.subr.mxu0 0.0
        %8339 = vmatpush1.msra.mxu0 %v8303
        %8340 = vmatprep.subr.mxu0 0.0
        %8341 = vmatpush1.msra.mxu0 %v8304
        %8342 = vmatprep.subr.mxu0 0.0
        %8343 = vmatpush1.msra.mxu0 %v8305
        %8344 = vmatprep.subr.mxu0 0.0
        %8345 = vmatpush1.msra.mxu0 %v8306
        %8346 = vmatprep.subr.mxu0 0.0
        %8347 = vmatpush1.msra.mxu0 %v8307
        %8348 = vmatprep.subr.mxu0 0.0
        %8349 = vmatpush1.msra.mxu0 0.0
        %8350 = vmatprep.subr.mxu0 0.0
        %8351 = vmatpush1.msra.mxu0 0.0
        %8352 = vmatprep.subr.mxu0 0.0
        %8353 = vmatpush1.msra.mxu0 0.0
        %8354 = vmatprep.subr.mxu0 0.0
        %8355 = vmatpush1.msra.mxu0 0.0
        %8356 = vmatprep.subr.mxu0 0.0
        %8357 = vmatpush1.msra.mxu0 0.0
        %8358 = vmatprep.subr.mxu0 0.0
        %8359 = vmatpush1.msra.mxu0 0.0
        %8360 = vmatprep.subr.mxu0 0.0
        %8361 = vmatpush1.msra.mxu0 0.0
        %8362 = vmatprep.subr.mxu0 0.0
        %8363 = vmatpush1.msra.mxu0 0.0
        %8364 = vmatprep.subr.mxu0 0.0
        %8365 = vmatpush1.msra.mxu0 0.0
        %8366 = vmatprep.subr.mxu0 0.0
        %8367 = vmatpush1.msra.mxu0 0.0
        %8368 = vmatprep.subr.mxu0 0.0
        %8369 = vmatpush1.msra.mxu0 0.0
        %8370 = vmatprep.subr.mxu0 0.0
        %8371 = vmatpush1.msra.mxu0 0.0
        %8372 = vmatprep.subr.mxu0 0.0
        %8373 = vmatpush1.msra.mxu0 0.0
        %8374 = vmatprep.subr.mxu0 0.0
        %8375 = vmatpush1.msra.mxu0 0.0
        %8376 = vmatprep.subr.mxu0 0.0
        %8377 = vmatpush1.msra.mxu0 0.0
        %8378 = vmatprep.subr.mxu0 0.0
        %8379 = vmatpush1.msra.mxu0 0.0
        %8380 = vmatprep.mubr.f32.mxu0 0.0
        %8381 = vmatmul.mubr.f32.gmra.mrb[0].mxu0 %v8290
        %v8382 = vpop.f32.mrb[0].mxu0
        %v8383 = vadd.f32 %v8314, %v8382
        %v8384 = vpop.f32.mrb[0].mxu0
        %8385 = vdwg.mxu0
        %s8386 = scalar_lea.vmem %s61, 1
        %v8387 = vld [vmem:[%s8386] sm:$0x1]
        %v8389 = vlaneseq
        %v8390 = vshrl.u32 %v8389, 7
        %v8391 = vsub.s32 0, %v8390
        %v8392 = vrot.slane %v8387, %v8391
        %v8394 = vmul.f32 %v8392, %v8383
        %v8395 = vadd.f32 %v8164, %v8394
        %v8396 = vld [vmem:[%s63] sm:$0x1]
        %v8397 = vld [vmem:[%s65] sm:$0x1]
        %v8398 = vsel %vm1078, %v8395, 0.0
        %8399 = vadd.xlane.f32.xlu0 %v8398
        %v8400 = vpop.xlane.xlu0 %8399
        %v8401 = vmul.f32 %v8400, %v1082
        %v8402 = vsub.f32 %v8395, %v8401
        %v8403 = vmul.f32 %v8402, %v8402
        %v8404 = vsel %vm1078, %v8403, 0.0
        %8405 = vadd.xlane.f32.xlu0 %v8404
        %v8406 = vpop.xlane.xlu0 %8405
        %v8407 = vmul.f32 %v8406, %v1082
        %v8408 = vadd.f32 %v8407, 1e-05
        %v8409 = vrsqrt.pop %v8408
        %v8410 = vmul.f32 %v8402, %v8409
        %v8412 = vlaneseq
        %v8413 = vshrl.u32 %v8412, 7
        %v8414 = vsub.s32 0, %v8413
        %v8415 = vrot.slane %v8396, %v8414
        %v8417 = vmul.f32 %v8410, %v8415
        %v8419 = vlaneseq
        %v8420 = vshrl.u32 %v8419, 7
        %v8421 = vsub.s32 0, %v8420
        %v8422 = vrot.slane %v8397, %v8421
        %v8424 = vadd.f32 %v8417, %v8422
        %8425 = vst.msk [vmem:[%s1048] sm:$0xff] %vm1078, %v8424
        %s8426 = sand.u32 %s802, 1
        %s8427 = scalar_lea.sflag [#allocation3], %s8426
        %s8428 = sand.u32 %s802, 1
        %s8429 = smul.addr %s8428, 8
        %s8430 = scalar_lea.vmem [#allocation2], %s8429
        // Predicated region
        $region153: #{transformer_forward.1} parent=151 // pred_check
          %p8431 = pneg %p812
        $region154: #{transformer_forward.1} parent=151 // pred_check_branch
          %8433 = sbr.rel (%p8431) target = $region156
        $region155: #{transformer_forward.1} parent=151 // pred_region
          %s8435 = ssub.s32 128, 128
          %8436 = vsyncadd %s8427, %s8435
          %s8437 = smul.addr %s81, 128
          %s8438 = scalar_lea.hbm %s67, %s8437
          %s8440 = sshll.u32 %s8430, 4
          %s8441 = int_to_ptr.vmem [resolvable:$true] %s8440
          %8443 = dma.vmem_to_hbm [thread:$0]  %s8441, 128, %s8438, %s8427
        $region156: #{transformer_forward.1} parent=151 // pred_fallthru
          _
      $region152: #{transformer_forward.1} parent=5 // pred_fallthru
        _
      %p8444 = scmp.le.s32.totalorder 2, %s76
      // Predicated region
      $region157: #{transformer_forward.1} parent=5 // pred_check
        %p8445 = pneg %p8444
      $region158: #{transformer_forward.1} parent=5 // pred_check_branch
        %8447 = sbr.rel (%p8445) target = $region160
      $region159: #{transformer_forward.1} parent=5 // pred_region
        %s8448 = ssub.s32 %s76, 2
        // Predicated region
        $region161: #{transformer_forward.1} parent=159 // pred_check
          %p8449 = pneg %p818
        $region162: #{transformer_forward.1} parent=159 // pred_check_branch
          %8451 = sbr.rel (%p8449) target = $region164
        $region163: #{transformer_forward.1} parent=159 // pred_region
          %s8452 = sand.u32 %s803, 1
          %s8453 = scalar_lea.sflag [#allocation3], %s8452
          %s8454 = sand.u32 %s803, 1
          %s8455 = smul.addr %s8454, 8
          %s8456 = scalar_lea.vmem [#allocation2], %s8455
          %8457 = dma.done %s8453, 128
        $region164: #{transformer_forward.1} parent=159 // pred_fallthru
          _
      $region160: #{transformer_forward.1} parent=5 // pred_fallthru
        _
    $region6: #{transformer_forward.1} parent=1 // loop_footer
      %s80 = sadd.s32 1, %s76
    $region7: #{transformer_forward.1} parent=1 // loop_footer_branch
      %75 = sbr.rel target = $region3
    $region8: #{transformer_forward.1} parent=1 // loop_exit
      _
    %8458 = vsyncpa [#allocation3], 1
    %s8459 = scalar_lea.sflag [#allocation3], 1
    %8460 = vsyncpa %s8459, 1

</llo_original>
